<compile_context>
chip_gen: v7x
topology: tpu7x:2x2x1
jax: 0.10.0
libtpu: 0.0.40
codegen_flags: <defaults>
</compile_context>

<pallas_src>
import jax
import jax.numpy as jnp
from jax.experimental import pallas as pl
from jax.experimental.pallas import tpu as pltpu

TB = 8            # images per grid step; lanes hold (w, batch) fused
HP1, WP1 = 32, 32  # padded 28x28 grid for conv1 input  (28 + 2*2)
HP2, WP2 = 18, 18  # padded 14x14 grid for conv2 input  (14 + 2*2)


# ----------------------------------------------------------------------------
# Fused kernel: whole forward pass for one batch tile (TB images)
# ----------------------------------------------------------------------------
def _cnn_fused_kernel(x_ref, a1_ref, bc1_ref, sw1_ref, sel1_ref,
                      a2_ref, bc2_ref, sw2_ref, sel2_ref,
                      wl1_ref, bl1_ref, wl2_ref, bl2_ref, wl3_ref, bl3_ref,
                      out_ref,
                      b1s, b2s, r1s, xp2s, r2s):
    f32 = jnp.float32

    # ---- conv1 (1->6, k5, SAME) + ReLU -------------------------------------
    x1 = x_ref[0]                                            # (32, 32*TB), zero padded
    for kw in range(5):                                      # patch rows: (kw, h_in)
        b1s[kw * HP1:(kw + 1) * HP1, :] = x1[:, kw * TB: kw * TB + 28 * TB]
    c1 = jnp.dot(a1_ref[...], b1s[...], preferred_element_type=f32)
    c1 = jnp.maximum(c1 + bc1_ref[...], 0.0)                 # (168, 224): rows (co,h), lanes (w,b)

    # ---- maxpool1 2x2/2: elementwise max + 0/1 selection matmuls -----------
    mw1 = jnp.maximum(c1[:, :27 * TB], c1[:, TB:28 * TB])                 # (168, 216)
    r1s[...] = jnp.dot(mw1, sw1_ref[...], preferred_element_type=f32)     # (168, 144)
    mh1 = jnp.maximum(r1s[0:167, :], r1s[1:168, :])                       # (167, 144)
    xp2s[...] = jnp.dot(sel1_ref[...], mh1, preferred_element_type=f32)   # (108, 144) = padded conv2 input

    # ---- conv2 (6->16, k5, SAME) + ReLU ------------------------------------
    for ci in range(6):
        for kw in range(5):
            dst = (ci * 5 + kw) * HP2
            b2s[dst:dst + HP2, :] = xp2s[ci * HP2:(ci + 1) * HP2,
                                         kw * TB: kw * TB + 14 * TB]
    c2 = jnp.dot(a2_ref[...], b2s[...], preferred_element_type=f32)
    c2 = jnp.maximum(c2 + bc2_ref[...], 0.0)                 # (224, 112): rows (co,h), lanes (w,b)

    # ---- maxpool2 -----------------------------------------------------------
    mw2 = jnp.maximum(c2[:, :13 * TB], c2[:, TB:14 * TB])                 # (224, 104)
    r2s[...] = jnp.dot(mw2, sw2_ref[...], preferred_element_type=f32)     # (224, 56)
    mh2 = jnp.maximum(r2s[0:223, :], r2s[1:224, :])                       # (223, 56)
    t = jnp.dot(sel2_ref[...], mh2, preferred_element_type=f32)           # (112, 56): rows (c*7+h), lanes (w,b)

    # ---- MLP head: lin1+ReLU, lin2+ReLU, lin3 --------------------------------
    acc = jnp.dot(wl1_ref[0], t[:, 0:TB], preferred_element_type=f32)
    for wo in range(1, 7):
        acc = acc + jnp.dot(wl1_ref[wo], t[:, wo * TB:(wo + 1) * TB],
                            preferred_element_type=f32)
    z1 = jnp.maximum(acc + bl1_ref[...], 0.0)                # (120, TB)
    z2 = jnp.maximum(jnp.dot(wl2_ref[...], z1, preferred_element_type=f32)
                     + bl2_ref[...], 0.0)                    # (84, TB)
    z3 = jnp.dot(wl3_ref[...], z2, preferred_element_type=f32) + bl3_ref[...]
    out_ref[0] = z3                                          # (10, TB)


# ----------------------------------------------------------------------------
# Wrapper-side constant packing (pure weight/layout plumbing, all tiny)
# ----------------------------------------------------------------------------
def _build_constants(params):
    f32 = jnp.float32
    w1 = params["w1"].astype(f32)           # (6, 1, 5, 5)
    w2 = params["w2"].astype(f32)           # (16, 6, 5, 5)

    # Banded conv->matmul weights: A[co*H + h, (ci*5+kw)*Hp + hi] = w[co,ci,hi-h,kw]
    oneh1 = (jnp.arange(HP1)[None, None, :] ==
             (jnp.arange(5)[:, None, None] + jnp.arange(28)[None, :, None])).astype(f32)
    a1 = jnp.einsum("okw,khp->ohwp", w1[:, 0], oneh1).reshape(6 * 28, 5 * HP1)      # (168, 160)

    oneh2 = (jnp.arange(HP2)[None, None, :] ==
             (jnp.arange(5)[:, None, None] + jnp.arange(14)[None, :, None])).astype(f32)
    a2 = jnp.einsum("ockw,khp->ohcwp", w2, oneh2).reshape(16 * 14, 6 * 5 * HP2)     # (224, 540)

    bc1 = jnp.repeat(params["b1"].astype(f32), 28)[:, None]                         # (168, 1)
    bc2 = jnp.repeat(params["b2"].astype(f32), 14)[:, None]                         # (224, 1)

    # Pooling subsample / re-pad selection matrices (exact 0/1).
    eye_tb = jnp.eye(TB, dtype=f32)
    sel_w1 = jnp.zeros((27, WP2), f32).at[2 * jnp.arange(14), jnp.arange(14) + 2].set(1.0)
    sw1 = jnp.kron(sel_w1, eye_tb)                                                  # (216, 144)
    base1 = jnp.zeros((HP2, 28), f32).at[jnp.arange(14) + 2, 2 * jnp.arange(14)].set(1.0)
    sel1 = jnp.kron(jnp.eye(6, dtype=f32), base1)[:, :167]                          # (108, 167)

    sel_w2 = jnp.zeros((13, 7), f32).at[2 * jnp.arange(7), jnp.arange(7)].set(1.0)
    sw2 = jnp.kron(sel_w2, eye_tb)                                                  # (104, 56)
    base2 = jnp.zeros((7, 14), f32).at[jnp.arange(7), 2 * jnp.arange(7)].set(1.0)
    sel2 = jnp.kron(jnp.eye(16, dtype=f32), base2)[:, :223]                         # (112, 223)

    # Linear weights (stored (in,out) = torch weight.T in params) -> (out,in).
    wl1 = params["wl1"].astype(f32).T                                               # (120, 784)
    wl1s = wl1.reshape(120, 16, 7, 7).transpose(3, 0, 1, 2).reshape(7, 120, 112)    # per-wo slices
    bl1 = params["bl1"].astype(f32)[:, None]
    wl2 = params["wl2"].astype(f32).T                                               # (84, 120)
    bl2 = params["bl2"].astype(f32)[:, None]
    wl3 = params["wl3"].astype(f32).T                                               # (10, 84)
    bl3 = params["bl3"].astype(f32)[:, None]

    return (a1, bc1, sw1, sel1, a2, bc2, sw2, sel2, wl1s, bl1, wl2, bl2, wl3, bl3)


def _const_spec(arr):
    ndim = arr.ndim

    def idx(i, _ndim=ndim):
        return (0,) * _ndim

    return pl.BlockSpec(arr.shape, idx)


# ----------------------------------------------------------------------------
# Full forward pass (single pallas_call, grid over batch tiles)
# ----------------------------------------------------------------------------
def cnn_forward(params, x):
    """x: (B, 1, 28, 28) float32 NCHW -> logits (B, 10)."""
    B = x.shape[0]
    assert x.shape[1:] == (1, 28, 28)
    nT = (B + TB - 1) // TB
    Bp = nT * TB

    consts = _build_constants(params)

    # Layout plumbing on the raw input only: (B,1,28,28) -> (nT, 32, 32*TB),
    # element (t, h+2, (w+2)*TB + b) = image[t*TB+b, h, w], zeros in the pad.
    xb = x[:, 0].astype(jnp.float32)
    xb = jnp.pad(xb, ((0, Bp - B), (0, 0), (0, 0)))
    xb = xb.reshape(nT, TB, 28, 28).transpose(0, 2, 3, 1)
    xb = jnp.pad(xb, ((0, 0), (2, 2), (2, 2), (0, 0)))
    xk = xb.reshape(nT, HP1, WP1 * TB)

    macs_per_tile = (168 * 160 * 224 + 168 * 216 * 144 + 108 * 167 * 144
                     + 224 * 540 * 112 + 224 * 104 * 56 + 112 * 223 * 56
                     + 7 * 120 * 112 * TB + 84 * 120 * TB + 10 * 84 * TB)
    const_bytes = sum(int(c.size) * 4 for c in consts)
    cost = pl.CostEstimate(
        flops=2 * macs_per_tile * nT,
        transcendentals=0,
        bytes_accessed=int(xk.size) * 4 + const_bytes + nT * 10 * TB * 4,
    )

    out = pl.pallas_call(
        _cnn_fused_kernel,
        out_shape=jax.ShapeDtypeStruct((nT, 10, TB), jnp.float32),
        grid=(nT,),
        in_specs=[pl.BlockSpec((1, HP1, WP1 * TB), lambda i: (i, 0, 0))]
                 + [_const_spec(c) for c in consts],
        out_specs=pl.BlockSpec((1, 10, TB), lambda i: (i, 0, 0)),
        scratch_shapes=[
            pltpu.VMEM((5 * HP1, 28 * TB), jnp.float32),    # conv1 patch matrix
            pltpu.VMEM((30 * HP2, 14 * TB), jnp.float32),   # conv2 patch matrix
            pltpu.VMEM((168, WP2 * TB), jnp.float32),       # pool1 w-subsampled
            pltpu.VMEM((6 * HP2, WP2 * TB), jnp.float32),   # conv2 padded input
            pltpu.VMEM((224, 7 * TB), jnp.float32),         # pool2 w-subsampled
        ],
        compiler_params=pltpu.CompilerParams(
            dimension_semantics=("parallel",)),
        cost_estimate=cost,
    )(xk, *consts)

    logits = out.transpose(0, 2, 1).reshape(Bp, 10)[:B]
    return logits


# ----------------------------------------------------------------------------
# Pure-JAX reference (for numerical verification only)
# ----------------------------------------------------------------------------
def reference_forward(params, x):
    hi = jax.lax.Precision.HIGHEST
    dn = ("NCHW", "OIHW", "NCHW")
    a1 = jax.lax.conv_general_dilated(x, params["w1"], (1, 1), "SAME",
                                      dimension_numbers=dn, precision=hi)
    a1 = jnp.maximum(a1 + params["b1"][None, :, None, None], 0.0)
    p1 = jax.lax.reduce_window(a1, -jnp.inf, jax.lax.max,
                               (1, 1, 2, 2), (1, 1, 2, 2), "VALID")
    a2 = jax.lax.conv_general_dilated(p1, params["w2"], (1, 1), "SAME",
                                      dimension_numbers=dn, precision=hi)
    a2 = jnp.maximum(a2 + params["b2"][None, :, None, None], 0.0)
    p2 = jax.lax.reduce_window(a2, -jnp.inf, jax.lax.max,
                               (1, 1, 2, 2), (1, 1, 2, 2), "VALID")
    flat = p2.reshape(x.shape[0], 16 * 7 * 7)
    h1 = jnp.maximum(jnp.dot(flat, params["wl1"], precision=hi) + params["bl1"], 0.0)
    h2 = jnp.maximum(jnp.dot(h1, params["wl2"], precision=hi) + params["bl2"], 0.0)
    return jnp.dot(h2, params["wl3"], precision=hi) + params["bl3"]


# ----------------------------------------------------------------------------
# Deterministic parameter init (PyTorch-style uniform(-1/sqrt(fan_in), +))
# ----------------------------------------------------------------------------
def init_params(key):
    def uni(k, shape, fan_in):
        bound = 1.0 / jnp.sqrt(jnp.float32(fan_in))
        return jax.random.uniform(k, shape, jnp.float32, -bound, bound)

    ks = jax.random.split(key, 10)
    return {
        "w1": uni(ks[0], (6, 1, 5, 5), 1 * 25),
        "b1": uni(ks[1], (6,), 1 * 25),
        "w2": uni(ks[2], (16, 6, 5, 5), 6 * 25),
        "b2": uni(ks[3], (16,), 6 * 25),
        # Linear weights stored as (in, out), i.e. torch weight.T
        "wl1": uni(ks[4], (16 * 7 * 7, 120), 16 * 7 * 7),
        "bl1": uni(ks[5], (120,), 16 * 7 * 7),
        "wl2": uni(ks[6], (120, 84), 120),
        "bl2": uni(ks[7], (84,), 120),
        "wl3": uni(ks[8], (84, 10), 84),
        "bl3": uni(ks[9], (10,), 84),
    }


if __name__ == "__main__":
    root = jax.random.PRNGKey(0)
    kx, kp = jax.random.split(root)

    # MNIST-shaped batch: (B=2, C=1, H=28, W=28); 28x28 is required by the
    # 16*7*7 flatten in the module.
    x = jax.random.normal(kx, (2, 1, 28, 28), dtype=jnp.float32)
    params = init_params(kp)

    logits = jax.block_until_ready(jax.jit(cnn_forward)(params, x))
    assert logits.shape == (2, 10), logits.shape
    assert logits.dtype == jnp.float32

    ref = jax.block_until_ready(jax.jit(reference_forward)(params, x))
    err = float(jnp.max(jnp.abs(logits - ref)))
    assert err < 2e-2, f"mismatch vs reference: max abs err = {err}"

    print("KERNEL_OK")
</pallas_src>

<mosaic_0001>
module attributes {stable_mosaic.version = 11 : i64} {
  func.func @_cnn_fused_kernel(%arg0: i32, %arg1: memref<1x32x256xf32, #tpu.memory_space<vmem>>, %arg2: memref<168x160xf32, #tpu.memory_space<vmem>>, %arg3: memref<168x1xf32, #tpu.memory_space<vmem>>, %arg4: memref<216x144xf32, #tpu.memory_space<vmem>>, %arg5: memref<108x167xf32, #tpu.memory_space<vmem>>, %arg6: memref<224x540xf32, #tpu.memory_space<vmem>>, %arg7: memref<224x1xf32, #tpu.memory_space<vmem>>, %arg8: memref<104x56xf32, #tpu.memory_space<vmem>>, %arg9: memref<112x223xf32, #tpu.memory_space<vmem>>, %arg10: memref<7x120x112xf32, #tpu.memory_space<vmem>>, %arg11: memref<120x1xf32, #tpu.memory_space<vmem>>, %arg12: memref<84x120xf32, #tpu.memory_space<vmem>>, %arg13: memref<84x1xf32, #tpu.memory_space<vmem>>, %arg14: memref<10x84xf32, #tpu.memory_space<vmem>>, %arg15: memref<10x1xf32, #tpu.memory_space<vmem>>, %arg16: memref<1x10x8xf32, #tpu.memory_space<vmem>>, %arg17: memref<160x224xf32, #tpu.memory_space<vmem>>, %arg18: memref<540x112xf32, #tpu.memory_space<vmem>>, %arg19: memref<168x144xf32, #tpu.memory_space<vmem>>, %arg20: memref<108x144xf32, #tpu.memory_space<vmem>>, %arg21: memref<224x56xf32, #tpu.memory_space<vmem>>) attributes {dimension_semantics = [#tpu.dimension_semantics<parallel>], iteration_bounds = array<i64: 1>, scalar_prefetch = 0 : i64, scratch_operands = 5 : i64, tpu.core_type = #tpu.core_type<tc>, window_params = [{transform_indices = @transform_0, window_bounds = array<i64: 1, 32, 256>}, {pipeline_mode = #tpu.pipeline_mode<synchronous>, transform_indices = @transform_1, window_bounds = array<i64: 168, 160>}, {pipeline_mode = #tpu.pipeline_mode<synchronous>, transform_indices = @transform_2, window_bounds = array<i64: 168, 1>}, {pipeline_mode = #tpu.pipeline_mode<synchronous>, transform_indices = @transform_3, window_bounds = array<i64: 216, 144>}, {pipeline_mode = #tpu.pipeline_mode<synchronous>, transform_indices = @transform_4, window_bounds = array<i64: 108, 167>}, {pipeline_mode = #tpu.pipeline_mode<synchronous>, transform_indices = @transform_5, window_bounds = array<i64: 224, 540>}, {pipeline_mode = #tpu.pipeline_mode<synchronous>, transform_indices = @transform_6, window_bounds = array<i64: 224, 1>}, {pipeline_mode = #tpu.pipeline_mode<synchronous>, transform_indices = @transform_7, window_bounds = array<i64: 104, 56>}, {pipeline_mode = #tpu.pipeline_mode<synchronous>, transform_indices = @transform_8, window_bounds = array<i64: 112, 223>}, {pipeline_mode = #tpu.pipeline_mode<synchronous>, transform_indices = @transform_9, window_bounds = array<i64: 7, 120, 112>}, {pipeline_mode = #tpu.pipeline_mode<synchronous>, transform_indices = @transform_10, window_bounds = array<i64: 120, 1>}, {pipeline_mode = #tpu.pipeline_mode<synchronous>, transform_indices = @transform_11, window_bounds = array<i64: 84, 120>}, {pipeline_mode = #tpu.pipeline_mode<synchronous>, transform_indices = @transform_12, window_bounds = array<i64: 84, 1>}, {pipeline_mode = #tpu.pipeline_mode<synchronous>, transform_indices = @transform_13, window_bounds = array<i64: 10, 84>}, {pipeline_mode = #tpu.pipeline_mode<synchronous>, transform_indices = @transform_14, window_bounds = array<i64: 10, 1>}, {transform_indices = @transform_15, window_bounds = array<i64: 1, 10, 8>}]} {
    %c0 = arith.constant 0 : index
    %c0_0 = arith.constant 0 : index
    %c0_1 = arith.constant 0 : index
    %0 = vector.load %arg1[%c0, %c0_0, %c0_1] : memref<1x32x256xf32, #tpu.memory_space<vmem>>, vector<1x32x256xf32>
    %1 = vector.shape_cast %0 : vector<1x32x256xf32> to vector<32x256xf32>
    %2 = vector.extract_strided_slice %1 {offsets = [0, 0], sizes = [32, 224], strides = [1, 1]} : vector<32x256xf32> to vector<32x224xf32>
    %c0_2 = arith.constant 0 : index
    %c0_3 = arith.constant 0 : index
    %3 = vector.load %arg17[%c0_2, %c0_3] : memref<160x224xf32, #tpu.memory_space<vmem>>, vector<32x224xf32>
    tpu.vector_store %arg17[%c0_2, %c0_3], %2 {strides = array<i32>} : memref<160x224xf32, #tpu.memory_space<vmem>>, vector<32x224xf32>,
    %4 = vector.extract_strided_slice %1 {offsets = [0, 8], sizes = [32, 224], strides = [1, 1]} : vector<32x256xf32> to vector<32x224xf32>
    %c32 = arith.constant 32 : index
    %c0_4 = arith.constant 0 : index
    %5 = vector.load %arg17[%c32, %c0_4] : memref<160x224xf32, #tpu.memory_space<vmem>>, vector<32x224xf32>
    tpu.vector_store %arg17[%c32, %c0_4], %4 {strides = array<i32>} : memref<160x224xf32, #tpu.memory_space<vmem>>, vector<32x224xf32>,
    %6 = vector.extract_strided_slice %1 {offsets = [0, 16], sizes = [32, 224], strides = [1, 1]} : vector<32x256xf32> to vector<32x224xf32>
    %c64 = arith.constant 64 : index
    %c0_5 = arith.constant 0 : index
    %7 = vector.load %arg17[%c64, %c0_5] : memref<160x224xf32, #tpu.memory_space<vmem>>, vector<32x224xf32>
    tpu.vector_store %arg17[%c64, %c0_5], %6 {strides = array<i32>} : memref<160x224xf32, #tpu.memory_space<vmem>>, vector<32x224xf32>,
    %8 = vector.extract_strided_slice %1 {offsets = [0, 24], sizes = [32, 224], strides = [1, 1]} : vector<32x256xf32> to vector<32x224xf32>
    %c96 = arith.constant 96 : index
    %c0_6 = arith.constant 0 : index
    %9 = vector.load %arg17[%c96, %c0_6] : memref<160x224xf32, #tpu.memory_space<vmem>>, vector<32x224xf32>
    tpu.vector_store %arg17[%c96, %c0_6], %8 {strides = array<i32>} : memref<160x224xf32, #tpu.memory_space<vmem>>, vector<32x224xf32>,
    %10 = vector.extract_strided_slice %1 {offsets = [0, 32], sizes = [32, 224], strides = [1, 1]} : vector<32x256xf32> to vector<32x224xf32>
    %c128 = arith.constant 128 : index
    %c0_7 = arith.constant 0 : index
    %11 = vector.load %arg17[%c128, %c0_7] : memref<160x224xf32, #tpu.memory_space<vmem>>, vector<32x224xf32>
    tpu.vector_store %arg17[%c128, %c0_7], %10 {strides = array<i32>} : memref<160x224xf32, #tpu.memory_space<vmem>>, vector<32x224xf32>,
    %c0_8 = arith.constant 0 : index
    %c0_9 = arith.constant 0 : index
    %12 = vector.load %arg2[%c0_8, %c0_9] : memref<168x160xf32, #tpu.memory_space<vmem>>, vector<168x160xf32>
    %c0_10 = arith.constant 0 : index
    %c0_11 = arith.constant 0 : index
    %13 = vector.load %arg17[%c0_10, %c0_11] : memref<160x224xf32, #tpu.memory_space<vmem>>, vector<160x224xf32>
    %cst = arith.constant dense<0.000000e+00> : vector<168x224xf32>
    %14 = tpu.matmul %12, %13, %cst {dimension_numbers = #tpu.dot_dimension_numbers<[1], [0], [0], [1], [0, 0, 1, 1], [], []>} : vector<168x160xf32>, vector<160x224xf32>, vector<168x224xf32> -> vector<168x224xf32>
    %c0_12 = arith.constant 0 : index
    %c0_13 = arith.constant 0 : index
    %15 = vector.load %arg3[%c0_12, %c0_13] : memref<168x1xf32, #tpu.memory_space<vmem>>, vector<168x1xf32>
    %16 = vector.broadcast %15 : vector<168x1xf32> to vector<168x224xf32>
    %17 = arith.addf %14, %16 : vector<168x224xf32>
    %cst_14 = arith.constant 0.000000e+00 : f32
    %18 = vector.broadcast %cst_14 : f32 to vector<168x224xf32>
    %19 = arith.maximumf %17, %18 : vector<168x224xf32>
    %20 = vector.extract_strided_slice %19 {offsets = [0, 0], sizes = [168, 216], strides = [1, 1]} : vector<168x224xf32> to vector<168x216xf32>
    %21 = vector.extract_strided_slice %19 {offsets = [0, 8], sizes = [168, 216], strides = [1, 1]} : vector<168x224xf32> to vector<168x216xf32>
    %22 = arith.maximumf %20, %21 : vector<168x216xf32>
    %c0_15 = arith.constant 0 : index
    %c0_16 = arith.constant 0 : index
    %23 = vector.load %arg4[%c0_15, %c0_16] : memref<216x144xf32, #tpu.memory_space<vmem>>, vector<216x144xf32>
    %cst_17 = arith.constant dense<0.000000e+00> : vector<168x144xf32>
    %24 = tpu.matmul %22, %23, %cst_17 {dimension_numbers = #tpu.dot_dimension_numbers<[1], [0], [0], [1], [0, 0, 1, 1], [], []>} : vector<168x216xf32>, vector<216x144xf32>, vector<168x144xf32> -> vector<168x144xf32>
    %c0_18 = arith.constant 0 : index
    %c0_19 = arith.constant 0 : index
    %25 = vector.load %arg19[%c0_18, %c0_19] : memref<168x144xf32, #tpu.memory_space<vmem>>, vector<168x144xf32>
    tpu.vector_store %arg19[%c0_18, %c0_19], %24 {strides = array<i32>} : memref<168x144xf32, #tpu.memory_space<vmem>>, vector<168x144xf32>,
    %c0_20 = arith.constant 0 : index
    %c0_21 = arith.constant 0 : index
    %26 = vector.load %arg19[%c0_20, %c0_21] : memref<168x144xf32, #tpu.memory_space<vmem>>, vector<167x144xf32>
    %c1 = arith.constant 1 : index
    %c0_22 = arith.constant 0 : index
    %27 = vector.load %arg19[%c1, %c0_22] : memref<168x144xf32, #tpu.memory_space<vmem>>, vector<167x144xf32>
    %28 = arith.maximumf %26, %27 : vector<167x144xf32>
    %c0_23 = arith.constant 0 : index
    %c0_24 = arith.constant 0 : index
    %29 = vector.load %arg5[%c0_23, %c0_24] : memref<108x167xf32, #tpu.memory_space<vmem>>, vector<108x167xf32>
    %cst_25 = arith.constant dense<0.000000e+00> : vector<108x144xf32>
    %30 = tpu.matmul %29, %28, %cst_25 {dimension_numbers = #tpu.dot_dimension_numbers<[1], [0], [0], [1], [0, 0, 1, 1], [], []>} : vector<108x167xf32>, vector<167x144xf32>, vector<108x144xf32> -> vector<108x144xf32>
    %c0_26 = arith.constant 0 : index
    %c0_27 = arith.constant 0 : index
    %31 = vector.load %arg20[%c0_26, %c0_27] : memref<108x144xf32, #tpu.memory_space<vmem>>, vector<108x144xf32>
    tpu.vector_store %arg20[%c0_26, %c0_27], %30 {strides = array<i32>} : memref<108x144xf32, #tpu.memory_space<vmem>>, vector<108x144xf32>,
    %c0_28 = arith.constant 0 : index
    %c0_29 = arith.constant 0 : index
    %32 = vector.load %arg20[%c0_28, %c0_29] : memref<108x144xf32, #tpu.memory_space<vmem>>, vector<18x112xf32>
    %c0_30 = arith.constant 0 : index
    %c0_31 = arith.constant 0 : index
    %33 = vector.load %arg18[%c0_30, %c0_31] : memref<540x112xf32, #tpu.memory_space<vmem>>, vector<18x112xf32>
    tpu.vector_store %arg18[%c0_30, %c0_31], %32 {strides = array<i32>} : memref<540x112xf32, #tpu.memory_space<vmem>>, vector<18x112xf32>,
    %c0_32 = arith.constant 0 : index
    %c8 = arith.constant 8 : index
    %34 = vector.load %arg20[%c0_32, %c8] : memref<108x144xf32, #tpu.memory_space<vmem>>, vector<18x112xf32>
    %c18 = arith.constant 18 : index
    %c0_33 = arith.constant 0 : index
    %35 = vector.load %arg18[%c18, %c0_33] : memref<540x112xf32, #tpu.memory_space<vmem>>, vector<18x112xf32>
    tpu.vector_store %arg18[%c18, %c0_33], %34 {strides = array<i32>} : memref<540x112xf32, #tpu.memory_space<vmem>>, vector<18x112xf32>,
    %c0_34 = arith.constant 0 : index
    %c16 = arith.constant 16 : index
    %36 = vector.load %arg20[%c0_34, %c16] : memref<108x144xf32, #tpu.memory_space<vmem>>, vector<18x112xf32>
    %c36 = arith.constant 36 : index
    %c0_35 = arith.constant 0 : index
    %37 = vector.load %arg18[%c36, %c0_35] : memref<540x112xf32, #tpu.memory_space<vmem>>, vector<18x112xf32>
    tpu.vector_store %arg18[%c36, %c0_35], %36 {strides = array<i32>} : memref<540x112xf32, #tpu.memory_space<vmem>>, vector<18x112xf32>,
    %c0_36 = arith.constant 0 : index
    %c24 = arith.constant 24 : index
    %38 = vector.load %arg20[%c0_36, %c24] : memref<108x144xf32, #tpu.memory_space<vmem>>, vector<18x112xf32>
    %c54 = arith.constant 54 : index
    %c0_37 = arith.constant 0 : index
    %39 = vector.load %arg18[%c54, %c0_37] : memref<540x112xf32, #tpu.memory_space<vmem>>, vector<18x112xf32>
    tpu.vector_store %arg18[%c54, %c0_37], %38 {strides = array<i32>} : memref<540x112xf32, #tpu.memory_space<vmem>>, vector<18x112xf32>,
    %c0_38 = arith.constant 0 : index
    %c32_39 = arith.constant 32 : index
    %40 = vector.load %arg20[%c0_38, %c32_39] : memref<108x144xf32, #tpu.memory_space<vmem>>, vector<18x112xf32>
    %c72 = arith.constant 72 : index
    %c0_40 = arith.constant 0 : index
    %41 = vector.load %arg18[%c72, %c0_40] : memref<540x112xf32, #tpu.memory_space<vmem>>, vector<18x112xf32>
    tpu.vector_store %arg18[%c72, %c0_40], %40 {strides = array<i32>} : memref<540x112xf32, #tpu.memory_space<vmem>>, vector<18x112xf32>,
    %c18_41 = arith.constant 18 : index
    %c0_42 = arith.constant 0 : index
    %42 = vector.load %arg20[%c18_41, %c0_42] : memref<108x144xf32, #tpu.memory_space<vmem>>, vector<18x112xf32>
    %c90 = arith.constant 90 : index
    %c0_43 = arith.constant 0 : index
    %43 = vector.load %arg18[%c90, %c0_43] : memref<540x112xf32, #tpu.memory_space<vmem>>, vector<18x112xf32>
    tpu.vector_store %arg18[%c90, %c0_43], %42 {strides = array<i32>} : memref<540x112xf32, #tpu.memory_space<vmem>>, vector<18x112xf32>,
    %c18_44 = arith.constant 18 : index
    %c8_45 = arith.constant 8 : index
    %44 = vector.load %arg20[%c18_44, %c8_45] : memref<108x144xf32, #tpu.memory_space<vmem>>, vector<18x112xf32>
    %c108 = arith.constant 108 : index
    %c0_46 = arith.constant 0 : index
    %45 = vector.load %arg18[%c108, %c0_46] : memref<540x112xf32, #tpu.memory_space<vmem>>, vector<18x112xf32>
    tpu.vector_store %arg18[%c108, %c0_46], %44 {strides = array<i32>} : memref<540x112xf32, #tpu.memory_space<vmem>>, vector<18x112xf32>,
    %c18_47 = arith.constant 18 : index
    %c16_48 = arith.constant 16 : index
    %46 = vector.load %arg20[%c18_47, %c16_48] : memref<108x144xf32, #tpu.memory_space<vmem>>, vector<18x112xf32>
    %c126 = arith.constant 126 : index
    %c0_49 = arith.constant 0 : index
    %47 = vector.load %arg18[%c126, %c0_49] : memref<540x112xf32, #tpu.memory_space<vmem>>, vector<18x112xf32>
    tpu.vector_store %arg18[%c126, %c0_49], %46 {strides = array<i32>} : memref<540x112xf32, #tpu.memory_space<vmem>>, vector<18x112xf32>,
    %c18_50 = arith.constant 18 : index
    %c24_51 = arith.constant 24 : index
    %48 = vector.load %arg20[%c18_50, %c24_51] : memref<108x144xf32, #tpu.memory_space<vmem>>, vector<18x112xf32>
    %c144 = arith.constant 144 : index
    %c0_52 = arith.constant 0 : index
    %49 = vector.load %arg18[%c144, %c0_52] : memref<540x112xf32, #tpu.memory_space<vmem>>, vector<18x112xf32>
    tpu.vector_store %arg18[%c144, %c0_52], %48 {strides = array<i32>} : memref<540x112xf32, #tpu.memory_space<vmem>>, vector<18x112xf32>,
    %c18_53 = arith.constant 18 : index
    %c32_54 = arith.constant 32 : index
    %50 = vector.load %arg20[%c18_53, %c32_54] : memref<108x144xf32, #tpu.memory_space<vmem>>, vector<18x112xf32>
    %c162 = arith.constant 162 : index
    %c0_55 = arith.constant 0 : index
    %51 = vector.load %arg18[%c162, %c0_55] : memref<540x112xf32, #tpu.memory_space<vmem>>, vector<18x112xf32>
    tpu.vector_store %arg18[%c162, %c0_55], %50 {strides = array<i32>} : memref<540x112xf32, #tpu.memory_space<vmem>>, vector<18x112xf32>,
    %c36_56 = arith.constant 36 : index
    %c0_57 = arith.constant 0 : index
    %52 = vector.load %arg20[%c36_56, %c0_57] : memref<108x144xf32, #tpu.memory_space<vmem>>, vector<18x112xf32>
    %c180 = arith.constant 180 : index
    %c0_58 = arith.constant 0 : index
    %53 = vector.load %arg18[%c180, %c0_58] : memref<540x112xf32, #tpu.memory_space<vmem>>, vector<18x112xf32>
    tpu.vector_store %arg18[%c180, %c0_58], %52 {strides = array<i32>} : memref<540x112xf32, #tpu.memory_space<vmem>>, vector<18x112xf32>,
    %c36_59 = arith.constant 36 : index
    %c8_60 = arith.constant 8 : index
    %54 = vector.load %arg20[%c36_59, %c8_60] : memref<108x144xf32, #tpu.memory_space<vmem>>, vector<18x112xf32>
    %c198 = arith.constant 198 : index
    %c0_61 = arith.constant 0 : index
    %55 = vector.load %arg18[%c198, %c0_61] : memref<540x112xf32, #tpu.memory_space<vmem>>, vector<18x112xf32>
    tpu.vector_store %arg18[%c198, %c0_61], %54 {strides = array<i32>} : memref<540x112xf32, #tpu.memory_space<vmem>>, vector<18x112xf32>,
    %c36_62 = arith.constant 36 : index
    %c16_63 = arith.constant 16 : index
    %56 = vector.load %arg20[%c36_62, %c16_63] : memref<108x144xf32, #tpu.memory_space<vmem>>, vector<18x112xf32>
    %c216 = arith.constant 216 : index
    %c0_64 = arith.constant 0 : index
    %57 = vector.load %arg18[%c216, %c0_64] : memref<540x112xf32, #tpu.memory_space<vmem>>, vector<18x112xf32>
    tpu.vector_store %arg18[%c216, %c0_64], %56 {strides = array<i32>} : memref<540x112xf32, #tpu.memory_space<vmem>>, vector<18x112xf32>,
    %c36_65 = arith.constant 36 : index
    %c24_66 = arith.constant 24 : index
    %58 = vector.load %arg20[%c36_65, %c24_66] : memref<108x144xf32, #tpu.memory_space<vmem>>, vector<18x112xf32>
    %c234 = arith.constant 234 : index
    %c0_67 = arith.constant 0 : index
    %59 = vector.load %arg18[%c234, %c0_67] : memref<540x112xf32, #tpu.memory_space<vmem>>, vector<18x112xf32>
    tpu.vector_store %arg18[%c234, %c0_67], %58 {strides = array<i32>} : memref<540x112xf32, #tpu.memory_space<vmem>>, vector<18x112xf32>,
    %c36_68 = arith.constant 36 : index
    %c32_69 = arith.constant 32 : index
    %60 = vector.load %arg20[%c36_68, %c32_69] : memref<108x144xf32, #tpu.memory_space<vmem>>, vector<18x112xf32>
    %c252 = arith.constant 252 : index
    %c0_70 = arith.constant 0 : index
    %61 = vector.load %arg18[%c252, %c0_70] : memref<540x112xf32, #tpu.memory_space<vmem>>, vector<18x112xf32>
    tpu.vector_store %arg18[%c252, %c0_70], %60 {strides = array<i32>} : memref<540x112xf32, #tpu.memory_space<vmem>>, vector<18x112xf32>,
    %c54_71 = arith.constant 54 : index
    %c0_72 = arith.constant 0 : index
    %62 = vector.load %arg20[%c54_71, %c0_72] : memref<108x144xf32, #tpu.memory_space<vmem>>, vector<18x112xf32>
    %c270 = arith.constant 270 : index
    %c0_73 = arith.constant 0 : index
    %63 = vector.load %arg18[%c270, %c0_73] : memref<540x112xf32, #tpu.memory_space<vmem>>, vector<18x112xf32>
    tpu.vector_store %arg18[%c270, %c0_73], %62 {strides = array<i32>} : memref<540x112xf32, #tpu.memory_space<vmem>>, vector<18x112xf32>,
    %c54_74 = arith.constant 54 : index
    %c8_75 = arith.constant 8 : index
    %64 = vector.load %arg20[%c54_74, %c8_75] : memref<108x144xf32, #tpu.memory_space<vmem>>, vector<18x112xf32>
    %c288 = arith.constant 288 : index
    %c0_76 = arith.constant 0 : index
    %65 = vector.load %arg18[%c288, %c0_76] : memref<540x112xf32, #tpu.memory_space<vmem>>, vector<18x112xf32>
    tpu.vector_store %arg18[%c288, %c0_76], %64 {strides = array<i32>} : memref<540x112xf32, #tpu.memory_space<vmem>>, vector<18x112xf32>,
    %c54_77 = arith.constant 54 : index
    %c16_78 = arith.constant 16 : index
    %66 = vector.load %arg20[%c54_77, %c16_78] : memref<108x144xf32, #tpu.memory_space<vmem>>, vector<18x112xf32>
    %c306 = arith.constant 306 : index
    %c0_79 = arith.constant 0 : index
    %67 = vector.load %arg18[%c306, %c0_79] : memref<540x112xf32, #tpu.memory_space<vmem>>, vector<18x112xf32>
    tpu.vector_store %arg18[%c306, %c0_79], %66 {strides = array<i32>} : memref<540x112xf32, #tpu.memory_space<vmem>>, vector<18x112xf32>,
    %c54_80 = arith.constant 54 : index
    %c24_81 = arith.constant 24 : index
    %68 = vector.load %arg20[%c54_80, %c24_81] : memref<108x144xf32, #tpu.memory_space<vmem>>, vector<18x112xf32>
    %c324 = arith.constant 324 : index
    %c0_82 = arith.constant 0 : index
    %69 = vector.load %arg18[%c324, %c0_82] : memref<540x112xf32, #tpu.memory_space<vmem>>, vector<18x112xf32>
    tpu.vector_store %arg18[%c324, %c0_82], %68 {strides = array<i32>} : memref<540x112xf32, #tpu.memory_space<vmem>>, vector<18x112xf32>,
    %c54_83 = arith.constant 54 : index
    %c32_84 = arith.constant 32 : index
    %70 = vector.load %arg20[%c54_83, %c32_84] : memref<108x144xf32, #tpu.memory_space<vmem>>, vector<18x112xf32>
    %c342 = arith.constant 342 : index
    %c0_85 = arith.constant 0 : index
    %71 = vector.load %arg18[%c342, %c0_85] : memref<540x112xf32, #tpu.memory_space<vmem>>, vector<18x112xf32>
    tpu.vector_store %arg18[%c342, %c0_85], %70 {strides = array<i32>} : memref<540x112xf32, #tpu.memory_space<vmem>>, vector<18x112xf32>,
    %c72_86 = arith.constant 72 : index
    %c0_87 = arith.constant 0 : index
    %72 = vector.load %arg20[%c72_86, %c0_87] : memref<108x144xf32, #tpu.memory_space<vmem>>, vector<18x112xf32>
    %c360 = arith.constant 360 : index
    %c0_88 = arith.constant 0 : index
    %73 = vector.load %arg18[%c360, %c0_88] : memref<540x112xf32, #tpu.memory_space<vmem>>, vector<18x112xf32>
    tpu.vector_store %arg18[%c360, %c0_88], %72 {strides = array<i32>} : memref<540x112xf32, #tpu.memory_space<vmem>>, vector<18x112xf32>,
    %c72_89 = arith.constant 72 : index
    %c8_90 = arith.constant 8 : index
    %74 = vector.load %arg20[%c72_89, %c8_90] : memref<108x144xf32, #tpu.memory_space<vmem>>, vector<18x112xf32>
    %c378 = arith.constant 378 : index
    %c0_91 = arith.constant 0 : index
    %75 = vector.load %arg18[%c378, %c0_91] : memref<540x112xf32, #tpu.memory_space<vmem>>, vector<18x112xf32>
    tpu.vector_store %arg18[%c378, %c0_91], %74 {strides = array<i32>} : memref<540x112xf32, #tpu.memory_space<vmem>>, vector<18x112xf32>,
    %c72_92 = arith.constant 72 : index
    %c16_93 = arith.constant 16 : index
    %76 = vector.load %arg20[%c72_92, %c16_93] : memref<108x144xf32, #tpu.memory_space<vmem>>, vector<18x112xf32>
    %c396 = arith.constant 396 : index
    %c0_94 = arith.constant 0 : index
    %77 = vector.load %arg18[%c396, %c0_94] : memref<540x112xf32, #tpu.memory_space<vmem>>, vector<18x112xf32>
    tpu.vector_store %arg18[%c396, %c0_94], %76 {strides = array<i32>} : memref<540x112xf32, #tpu.memory_space<vmem>>, vector<18x112xf32>,
    %c72_95 = arith.constant 72 : index
    %c24_96 = arith.constant 24 : index
    %78 = vector.load %arg20[%c72_95, %c24_96] : memref<108x144xf32, #tpu.memory_space<vmem>>, vector<18x112xf32>
    %c414 = arith.constant 414 : index
    %c0_97 = arith.constant 0 : index
    %79 = vector.load %arg18[%c414, %c0_97] : memref<540x112xf32, #tpu.memory_space<vmem>>, vector<18x112xf32>
    tpu.vector_store %arg18[%c414, %c0_97], %78 {strides = array<i32>} : memref<540x112xf32, #tpu.memory_space<vmem>>, vector<18x112xf32>,
    %c72_98 = arith.constant 72 : index
    %c32_99 = arith.constant 32 : index
    %80 = vector.load %arg20[%c72_98, %c32_99] : memref<108x144xf32, #tpu.memory_space<vmem>>, vector<18x112xf32>
    %c432 = arith.constant 432 : index
    %c0_100 = arith.constant 0 : index
    %81 = vector.load %arg18[%c432, %c0_100] : memref<540x112xf32, #tpu.memory_space<vmem>>, vector<18x112xf32>
    tpu.vector_store %arg18[%c432, %c0_100], %80 {strides = array<i32>} : memref<540x112xf32, #tpu.memory_space<vmem>>, vector<18x112xf32>,
    %c90_101 = arith.constant 90 : index
    %c0_102 = arith.constant 0 : index
    %82 = vector.load %arg20[%c90_101, %c0_102] : memref<108x144xf32, #tpu.memory_space<vmem>>, vector<18x112xf32>
    %c450 = arith.constant 450 : index
    %c0_103 = arith.constant 0 : index
    %83 = vector.load %arg18[%c450, %c0_103] : memref<540x112xf32, #tpu.memory_space<vmem>>, vector<18x112xf32>
    tpu.vector_store %arg18[%c450, %c0_103], %82 {strides = array<i32>} : memref<540x112xf32, #tpu.memory_space<vmem>>, vector<18x112xf32>,
    %c90_104 = arith.constant 90 : index
    %c8_105 = arith.constant 8 : index
    %84 = vector.load %arg20[%c90_104, %c8_105] : memref<108x144xf32, #tpu.memory_space<vmem>>, vector<18x112xf32>
    %c468 = arith.constant 468 : index
    %c0_106 = arith.constant 0 : index
    %85 = vector.load %arg18[%c468, %c0_106] : memref<540x112xf32, #tpu.memory_space<vmem>>, vector<18x112xf32>
    tpu.vector_store %arg18[%c468, %c0_106], %84 {strides = array<i32>} : memref<540x112xf32, #tpu.memory_space<vmem>>, vector<18x112xf32>,
    %c90_107 = arith.constant 90 : index
    %c16_108 = arith.constant 16 : index
    %86 = vector.load %arg20[%c90_107, %c16_108] : memref<108x144xf32, #tpu.memory_space<vmem>>, vector<18x112xf32>
    %c486 = arith.constant 486 : index
    %c0_109 = arith.constant 0 : index
    %87 = vector.load %arg18[%c486, %c0_109] : memref<540x112xf32, #tpu.memory_space<vmem>>, vector<18x112xf32>
    tpu.vector_store %arg18[%c486, %c0_109], %86 {strides = array<i32>} : memref<540x112xf32, #tpu.memory_space<vmem>>, vector<18x112xf32>,
    %c90_110 = arith.constant 90 : index
    %c24_111 = arith.constant 24 : index
    %88 = vector.load %arg20[%c90_110, %c24_111] : memref<108x144xf32, #tpu.memory_space<vmem>>, vector<18x112xf32>
    %c504 = arith.constant 504 : index
    %c0_112 = arith.constant 0 : index
    %89 = vector.load %arg18[%c504, %c0_112] : memref<540x112xf32, #tpu.memory_space<vmem>>, vector<18x112xf32>
    tpu.vector_store %arg18[%c504, %c0_112], %88 {strides = array<i32>} : memref<540x112xf32, #tpu.memory_space<vmem>>, vector<18x112xf32>,
    %c90_113 = arith.constant 90 : index
    %c32_114 = arith.constant 32 : index
    %90 = vector.load %arg20[%c90_113, %c32_114] : memref<108x144xf32, #tpu.memory_space<vmem>>, vector<18x112xf32>
    %c522 = arith.constant 522 : index
    %c0_115 = arith.constant 0 : index
    %91 = vector.load %arg18[%c522, %c0_115] : memref<540x112xf32, #tpu.memory_space<vmem>>, vector<18x112xf32>
    tpu.vector_store %arg18[%c522, %c0_115], %90 {strides = array<i32>} : memref<540x112xf32, #tpu.memory_space<vmem>>, vector<18x112xf32>,
    %c0_116 = arith.constant 0 : index
    %c0_117 = arith.constant 0 : index
    %92 = vector.load %arg6[%c0_116, %c0_117] : memref<224x540xf32, #tpu.memory_space<vmem>>, vector<224x540xf32>
    %c0_118 = arith.constant 0 : index
    %c0_119 = arith.constant 0 : index
    %93 = vector.load %arg18[%c0_118, %c0_119] : memref<540x112xf32, #tpu.memory_space<vmem>>, vector<540x112xf32>
    %cst_120 = arith.constant dense<0.000000e+00> : vector<224x112xf32>
    %94 = tpu.matmul %92, %93, %cst_120 {dimension_numbers = #tpu.dot_dimension_numbers<[1], [0], [0], [1], [0, 0, 1, 1], [], []>} : vector<224x540xf32>, vector<540x112xf32>, vector<224x112xf32> -> vector<224x112xf32>
    %c0_121 = arith.constant 0 : index
    %c0_122 = arith.constant 0 : index
    %95 = vector.load %arg7[%c0_121, %c0_122] : memref<224x1xf32, #tpu.memory_space<vmem>>, vector<224x1xf32>
    %96 = vector.broadcast %95 : vector<224x1xf32> to vector<224x112xf32>
    %97 = arith.addf %94, %96 : vector<224x112xf32>
    %cst_123 = arith.constant 0.000000e+00 : f32
    %98 = vector.broadcast %cst_123 : f32 to vector<224x112xf32>
    %99 = arith.maximumf %97, %98 : vector<224x112xf32>
    %100 = vector.extract_strided_slice %99 {offsets = [0, 0], sizes = [224, 104], strides = [1, 1]} : vector<224x112xf32> to vector<224x104xf32>
    %101 = vector.extract_strided_slice %99 {offsets = [0, 8], sizes = [224, 104], strides = [1, 1]} : vector<224x112xf32> to vector<224x104xf32>
    %102 = arith.maximumf %100, %101 : vector<224x104xf32>
    %c0_124 = arith.constant 0 : index
    %c0_125 = arith.constant 0 : index
    %103 = vector.load %arg8[%c0_124, %c0_125] : memref<104x56xf32, #tpu.memory_space<vmem>>, vector<104x56xf32>
    %cst_126 = arith.constant dense<0.000000e+00> : vector<224x56xf32>
    %104 = tpu.matmul %102, %103, %cst_126 {dimension_numbers = #tpu.dot_dimension_numbers<[1], [0], [0], [1], [0, 0, 1, 1], [], []>} : vector<224x104xf32>, vector<104x56xf32>, vector<224x56xf32> -> vector<224x56xf32>
    %c0_127 = arith.constant 0 : index
    %c0_128 = arith.constant 0 : index
    %105 = vector.load %arg21[%c0_127, %c0_128] : memref<224x56xf32, #tpu.memory_space<vmem>>, vector<224x56xf32>
    tpu.vector_store %arg21[%c0_127, %c0_128], %104 {strides = array<i32>} : memref<224x56xf32, #tpu.memory_space<vmem>>, vector<224x56xf32>,
    %c0_129 = arith.constant 0 : index
    %c0_130 = arith.constant 0 : index
    %106 = vector.load %arg21[%c0_129, %c0_130] : memref<224x56xf32, #tpu.memory_space<vmem>>, vector<223x56xf32>
    %c1_131 = arith.constant 1 : index
    %c0_132 = arith.constant 0 : index
    %107 = vector.load %arg21[%c1_131, %c0_132] : memref<224x56xf32, #tpu.memory_space<vmem>>, vector<223x56xf32>
    %108 = arith.maximumf %106, %107 : vector<223x56xf32>
    %c0_133 = arith.constant 0 : index
    %c0_134 = arith.constant 0 : index
    %109 = vector.load %arg9[%c0_133, %c0_134] : memref<112x223xf32, #tpu.memory_space<vmem>>, vector<112x223xf32>
    %cst_135 = arith.constant dense<0.000000e+00> : vector<112x56xf32>
    %110 = tpu.matmul %109, %108, %cst_135 {dimension_numbers = #tpu.dot_dimension_numbers<[1], [0], [0], [1], [0, 0, 1, 1], [], []>} : vector<112x223xf32>, vector<223x56xf32>, vector<112x56xf32> -> vector<112x56xf32>
    %c0_136 = arith.constant 0 : index
    %c0_137 = arith.constant 0 : index
    %c0_138 = arith.constant 0 : index
    %111 = vector.load %arg10[%c0_136, %c0_137, %c0_138] : memref<7x120x112xf32, #tpu.memory_space<vmem>>, vector<1x120x112xf32>
    %112 = vector.shape_cast %111 : vector<1x120x112xf32> to vector<120x112xf32>
    %113 = vector.extract_strided_slice %110 {offsets = [0, 0], sizes = [112, 8], strides = [1, 1]} : vector<112x56xf32> to vector<112x8xf32>
    %cst_139 = arith.constant dense<0.000000e+00> : vector<120x8xf32>
    %114 = tpu.matmul %112, %113, %cst_139 {dimension_numbers = #tpu.dot_dimension_numbers<[1], [0], [0], [1], [0, 0, 1, 1], [], []>} : vector<120x112xf32>, vector<112x8xf32>, vector<120x8xf32> -> vector<120x8xf32>
    %c1_140 = arith.constant 1 : index
    %c0_141 = arith.constant 0 : index
    %c0_142 = arith.constant 0 : index
    %115 = vector.load %arg10[%c1_140, %c0_141, %c0_142] : memref<7x120x112xf32, #tpu.memory_space<vmem>>, vector<1x120x112xf32>
    %116 = vector.shape_cast %115 : vector<1x120x112xf32> to vector<120x112xf32>
    %117 = vector.extract_strided_slice %110 {offsets = [0, 8], sizes = [112, 8], strides = [1, 1]} : vector<112x56xf32> to vector<112x8xf32>
    %cst_143 = arith.constant dense<0.000000e+00> : vector<120x8xf32>
    %118 = tpu.matmul %116, %117, %cst_143 {dimension_numbers = #tpu.dot_dimension_numbers<[1], [0], [0], [1], [0, 0, 1, 1], [], []>} : vector<120x112xf32>, vector<112x8xf32>, vector<120x8xf32> -> vector<120x8xf32>
    %119 = arith.addf %114, %118 : vector<120x8xf32>
    %c2 = arith.constant 2 : index
    %c0_144 = arith.constant 0 : index
    %c0_145 = arith.constant 0 : index
    %120 = vector.load %arg10[%c2, %c0_144, %c0_145] : memref<7x120x112xf32, #tpu.memory_space<vmem>>, vector<1x120x112xf32>
    %121 = vector.shape_cast %120 : vector<1x120x112xf32> to vector<120x112xf32>
    %122 = vector.extract_strided_slice %110 {offsets = [0, 16], sizes = [112, 8], strides = [1, 1]} : vector<112x56xf32> to vector<112x8xf32>
    %cst_146 = arith.constant dense<0.000000e+00> : vector<120x8xf32>
    %123 = tpu.matmul %121, %122, %cst_146 {dimension_numbers = #tpu.dot_dimension_numbers<[1], [0], [0], [1], [0, 0, 1, 1], [], []>} : vector<120x112xf32>, vector<112x8xf32>, vector<120x8xf32> -> vector<120x8xf32>
    %124 = arith.addf %119, %123 : vector<120x8xf32>
    %c3 = arith.constant 3 : index
    %c0_147 = arith.constant 0 : index
    %c0_148 = arith.constant 0 : index
    %125 = vector.load %arg10[%c3, %c0_147, %c0_148] : memref<7x120x112xf32, #tpu.memory_space<vmem>>, vector<1x120x112xf32>
    %126 = vector.shape_cast %125 : vector<1x120x112xf32> to vector<120x112xf32>
    %127 = vector.extract_strided_slice %110 {offsets = [0, 24], sizes = [112, 8], strides = [1, 1]} : vector<112x56xf32> to vector<112x8xf32>
    %cst_149 = arith.constant dense<0.000000e+00> : vector<120x8xf32>
    %128 = tpu.matmul %126, %127, %cst_149 {dimension_numbers = #tpu.dot_dimension_numbers<[1], [0], [0], [1], [0, 0, 1, 1], [], []>} : vector<120x112xf32>, vector<112x8xf32>, vector<120x8xf32> -> vector<120x8xf32>
    %129 = arith.addf %124, %128 : vector<120x8xf32>
    %c4 = arith.constant 4 : index
    %c0_150 = arith.constant 0 : index
    %c0_151 = arith.constant 0 : index
    %130 = vector.load %arg10[%c4, %c0_150, %c0_151] : memref<7x120x112xf32, #tpu.memory_space<vmem>>, vector<1x120x112xf32>
    %131 = vector.shape_cast %130 : vector<1x120x112xf32> to vector<120x112xf32>
    %132 = vector.extract_strided_slice %110 {offsets = [0, 32], sizes = [112, 8], strides = [1, 1]} : vector<112x56xf32> to vector<112x8xf32>
    %cst_152 = arith.constant dense<0.000000e+00> : vector<120x8xf32>
    %133 = tpu.matmul %131, %132, %cst_152 {dimension_numbers = #tpu.dot_dimension_numbers<[1], [0], [0], [1], [0, 0, 1, 1], [], []>} : vector<120x112xf32>, vector<112x8xf32>, vector<120x8xf32> -> vector<120x8xf32>
    %134 = arith.addf %129, %133 : vector<120x8xf32>
    %c5 = arith.constant 5 : index
    %c0_153 = arith.constant 0 : index
    %c0_154 = arith.constant 0 : index
    %135 = vector.load %arg10[%c5, %c0_153, %c0_154] : memref<7x120x112xf32, #tpu.memory_space<vmem>>, vector<1x120x112xf32>
    %136 = vector.shape_cast %135 : vector<1x120x112xf32> to vector<120x112xf32>
    %137 = vector.extract_strided_slice %110 {offsets = [0, 40], sizes = [112, 8], strides = [1, 1]} : vector<112x56xf32> to vector<112x8xf32>
    %cst_155 = arith.constant dense<0.000000e+00> : vector<120x8xf32>
    %138 = tpu.matmul %136, %137, %cst_155 {dimension_numbers = #tpu.dot_dimension_numbers<[1], [0], [0], [1], [0, 0, 1, 1], [], []>} : vector<120x112xf32>, vector<112x8xf32>, vector<120x8xf32> -> vector<120x8xf32>
    %139 = arith.addf %134, %138 : vector<120x8xf32>
    %c6 = arith.constant 6 : index
    %c0_156 = arith.constant 0 : index
    %c0_157 = arith.constant 0 : index
    %140 = vector.load %arg10[%c6, %c0_156, %c0_157] : memref<7x120x112xf32, #tpu.memory_space<vmem>>, vector<1x120x112xf32>
    %141 = vector.shape_cast %140 : vector<1x120x112xf32> to vector<120x112xf32>
    %142 = vector.extract_strided_slice %110 {offsets = [0, 48], sizes = [112, 8], strides = [1, 1]} : vector<112x56xf32> to vector<112x8xf32>
    %cst_158 = arith.constant dense<0.000000e+00> : vector<120x8xf32>
    %143 = tpu.matmul %141, %142, %cst_158 {dimension_numbers = #tpu.dot_dimension_numbers<[1], [0], [0], [1], [0, 0, 1, 1], [], []>} : vector<120x112xf32>, vector<112x8xf32>, vector<120x8xf32> -> vector<120x8xf32>
    %144 = arith.addf %139, %143 : vector<120x8xf32>
    %c0_159 = arith.constant 0 : index
    %c0_160 = arith.constant 0 : index
    %145 = vector.load %arg11[%c0_159, %c0_160] : memref<120x1xf32, #tpu.memory_space<vmem>>, vector<120x1xf32>
    %146 = vector.broadcast %145 : vector<120x1xf32> to vector<120x8xf32>
    %147 = arith.addf %144, %146 : vector<120x8xf32>
    %cst_161 = arith.constant 0.000000e+00 : f32
    %148 = vector.broadcast %cst_161 : f32 to vector<120x8xf32>
    %149 = arith.maximumf %147, %148 : vector<120x8xf32>
    %c0_162 = arith.constant 0 : index
    %c0_163 = arith.constant 0 : index
    %150 = vector.load %arg12[%c0_162, %c0_163] : memref<84x120xf32, #tpu.memory_space<vmem>>, vector<84x120xf32>
    %cst_164 = arith.constant dense<0.000000e+00> : vector<84x8xf32>
    %151 = tpu.matmul %150, %149, %cst_164 {dimension_numbers = #tpu.dot_dimension_numbers<[1], [0], [0], [1], [0, 0, 1, 1], [], []>} : vector<84x120xf32>, vector<120x8xf32>, vector<84x8xf32> -> vector<84x8xf32>
    %c0_165 = arith.constant 0 : index
    %c0_166 = arith.constant 0 : index
    %152 = vector.load %arg13[%c0_165, %c0_166] : memref<84x1xf32, #tpu.memory_space<vmem>>, vector<84x1xf32>
    %153 = vector.broadcast %152 : vector<84x1xf32> to vector<84x8xf32>
    %154 = arith.addf %151, %153 : vector<84x8xf32>
    %cst_167 = arith.constant 0.000000e+00 : f32
    %155 = vector.broadcast %cst_167 : f32 to vector<84x8xf32>
    %156 = arith.maximumf %154, %155 : vector<84x8xf32>
    %c0_168 = arith.constant 0 : index
    %c0_169 = arith.constant 0 : index
    %157 = vector.load %arg14[%c0_168, %c0_169] : memref<10x84xf32, #tpu.memory_space<vmem>>, vector<10x84xf32>
    %cst_170 = arith.constant dense<0.000000e+00> : vector<10x8xf32>
    %158 = tpu.matmul %157, %156, %cst_170 {dimension_numbers = #tpu.dot_dimension_numbers<[1], [0], [0], [1], [0, 0, 1, 1], [], []>} : vector<10x84xf32>, vector<84x8xf32>, vector<10x8xf32> -> vector<10x8xf32>
    %c0_171 = arith.constant 0 : index
    %c0_172 = arith.constant 0 : index
    %159 = vector.load %arg15[%c0_171, %c0_172] : memref<10x1xf32, #tpu.memory_space<vmem>>, vector<10x1xf32>
    %160 = vector.broadcast %159 : vector<10x1xf32> to vector<10x8xf32>
    %161 = arith.addf %158, %160 : vector<10x8xf32>
    %c0_173 = arith.constant 0 : index
    %c0_174 = arith.constant 0 : index
    %c0_175 = arith.constant 0 : index
    %162 = vector.load %arg16[%c0_173, %c0_174, %c0_175] : memref<1x10x8xf32, #tpu.memory_space<vmem>>, vector<1x10x8xf32>
    %163 = vector.shape_cast %162 : vector<1x10x8xf32> to vector<10x8xf32>
    %164 = vector.shape_cast %161 : vector<10x8xf32> to vector<1x10x8xf32>
    tpu.vector_store %arg16[%c0_173, %c0_174, %c0_175], %164 {strides = array<i32>} : memref<1x10x8xf32, #tpu.memory_space<vmem>>, vector<1x10x8xf32>,
    return
  }
  func.func @transform_0(%arg0: i32) -> (i32, i32, i32) {
    %c0_i32 = arith.constant 0 : i32
    %c0_i32_0 = arith.constant 0 : i32
    %c0_i32_1 = arith.constant 0 : i32
    return %arg0, %c0_i32, %c0_i32_0 : i32, i32, i32
  }
  func.func @transform_1(%arg0: i32) -> (i32, i32) {
    %c0_i32 = arith.constant 0 : i32
    %c0_i32_0 = arith.constant 0 : i32
    %c0_i32_1 = arith.constant 0 : i32
    return %c0_i32, %c0_i32_0 : i32, i32
  }
  func.func @transform_2(%arg0: i32) -> (i32, i32) {
    %c0_i32 = arith.constant 0 : i32
    %c0_i32_0 = arith.constant 0 : i32
    %c0_i32_1 = arith.constant 0 : i32
    return %c0_i32, %c0_i32_0 : i32, i32
  }
  func.func @transform_3(%arg0: i32) -> (i32, i32) {
    %c0_i32 = arith.constant 0 : i32
    %c0_i32_0 = arith.constant 0 : i32
    %c0_i32_1 = arith.constant 0 : i32
    return %c0_i32, %c0_i32_0 : i32, i32
  }
  func.func @transform_4(%arg0: i32) -> (i32, i32) {
    %c0_i32 = arith.constant 0 : i32
    %c0_i32_0 = arith.constant 0 : i32
    %c0_i32_1 = arith.constant 0 : i32
    return %c0_i32, %c0_i32_0 : i32, i32
  }
  func.func @transform_5(%arg0: i32) -> (i32, i32) {
    %c0_i32 = arith.constant 0 : i32
    %c0_i32_0 = arith.constant 0 : i32
    %c0_i32_1 = arith.constant 0 : i32
    return %c0_i32, %c0_i32_0 : i32, i32
  }
  func.func @transform_6(%arg0: i32) -> (i32, i32) {
    %c0_i32 = arith.constant 0 : i32
    %c0_i32_0 = arith.constant 0 : i32
    %c0_i32_1 = arith.constant 0 : i32
    return %c0_i32, %c0_i32_0 : i32, i32
  }
  func.func @transform_7(%arg0: i32) -> (i32, i32) {
    %c0_i32 = arith.constant 0 : i32
    %c0_i32_0 = arith.constant 0 : i32
    %c0_i32_1 = arith.constant 0 : i32
    return %c0_i32, %c0_i32_0 : i32, i32
  }
  func.func @transform_8(%arg0: i32) -> (i32, i32) {
    %c0_i32 = arith.constant 0 : i32
    %c0_i32_0 = arith.constant 0 : i32
    %c0_i32_1 = arith.constant 0 : i32
    return %c0_i32, %c0_i32_0 : i32, i32
  }
  func.func @transform_9(%arg0: i32) -> (i32, i32, i32) {
    %c0_i32 = arith.constant 0 : i32
    %c0_i32_0 = arith.constant 0 : i32
    %c0_i32_1 = arith.constant 0 : i32
    %c0_i32_2 = arith.constant 0 : i32
    return %c0_i32, %c0_i32_0, %c0_i32_1 : i32, i32, i32
  }
  func.func @transform_10(%arg0: i32) -> (i32, i32) {
    %c0_i32 = arith.constant 0 : i32
    %c0_i32_0 = arith.constant 0 : i32
    %c0_i32_1 = arith.constant 0 : i32
    return %c0_i32, %c0_i32_0 : i32, i32
  }
  func.func @transform_11(%arg0: i32) -> (i32, i32) {
    %c0_i32 = arith.constant 0 : i32
    %c0_i32_0 = arith.constant 0 : i32
    %c0_i32_1 = arith.constant 0 : i32
    return %c0_i32, %c0_i32_0 : i32, i32
  }
  func.func @transform_12(%arg0: i32) -> (i32, i32) {
    %c0_i32 = arith.constant 0 : i32
    %c0_i32_0 = arith.constant 0 : i32
    %c0_i32_1 = arith.constant 0 : i32
    return %c0_i32, %c0_i32_0 : i32, i32
  }
  func.func @transform_13(%arg0: i32) -> (i32, i32) {
    %c0_i32 = arith.constant 0 : i32
    %c0_i32_0 = arith.constant 0 : i32
    %c0_i32_1 = arith.constant 0 : i32
    return %c0_i32, %c0_i32_0 : i32, i32
  }
  func.func @transform_14(%arg0: i32) -> (i32, i32) {
    %c0_i32 = arith.constant 0 : i32
    %c0_i32_0 = arith.constant 0 : i32
    %c0_i32_1 = arith.constant 0 : i32
    return %c0_i32, %c0_i32_0 : i32, i32
  }
  func.func @transform_15(%arg0: i32) -> (i32, i32, i32) {
    %c0_i32 = arith.constant 0 : i32
    %c0_i32_0 = arith.constant 0 : i32
    %c0_i32_1 = arith.constant 0 : i32
    return %arg0, %c0_i32, %c0_i32_0 : i32, i32, i32
  }
}

</mosaic_0001>

<llo_original>
// kernel: cnn_forward.1
$region0: #{cnn_forward.1}
  #allocation0 [shape = 'u32[]', space=smem, size = 0x4, offset = 0x4, fixed_abs, tag = 'smem constant byte address 0x4 - core index']
  #allocation1 [shape = 'u32[144,128]{1,0:T(1,128)}', space=vmem, size = 0x12000, scoped, tag = 'internal scratch']
  #allocation2 [shape = 'f32[160,224]{1,0:T(8,128)}', space=vmem, size = 0x28000, scoped, tag = 'scratch operand']
  #allocation3 [shape = 'f32[540,112]{1,0:T(8,128)}', space=vmem, size = 0x44000, scoped, tag = 'scratch operand']
  #allocation4 [shape = 'f32[168,144]{1,0:T(8,128)}', space=vmem, size = 0x2a000, scoped, tag = 'scratch operand']
  #allocation5 [shape = 'f32[108,144]{1,0:T(8,128)}', space=vmem, size = 0x1c000, scoped, tag = 'scratch operand']
  #allocation6 [shape = 'f32[224,56]{1,0:T(8,128)}', space=vmem, size = 0x1c000, scoped, tag = 'scratch operand']
  %s0 = inlined_call_operand.vmem [shape: f32[1,32,256], index: 0, kind: input, shape index: {}]
  %s1 = inlined_call_operand.vmem [shape: f32[168,160], index: 1, kind: input, shape index: {}]
  %s2 = inlined_call_operand.vmem [shape: f32[168,1], index: 2, kind: input, shape index: {}]
  %s3 = inlined_call_operand.vmem [shape: f32[216,144], index: 3, kind: input, shape index: {}]
  %s4 = inlined_call_operand.vmem [shape: f32[108,167], index: 4, kind: input, shape index: {}]
  %s5 = inlined_call_operand.vmem [shape: f32[224,540], index: 5, kind: input, shape index: {}]
  %s6 = inlined_call_operand.vmem [shape: f32[224,1], index: 6, kind: input, shape index: {}]
  %s7 = inlined_call_operand.vmem [shape: f32[104,56], index: 7, kind: input, shape index: {}]
  %s8 = inlined_call_operand.vmem [shape: f32[112,223], index: 8, kind: input, shape index: {}]
  %s9 = inlined_call_operand.vmem [shape: f32[7,120,112], index: 9, kind: input, shape index: {}]
  %s10 = inlined_call_operand.vmem [shape: f32[120,1], index: 10, kind: input, shape index: {}]
  %s11 = inlined_call_operand.vmem [shape: f32[84,120], index: 11, kind: input, shape index: {}]
  %s12 = inlined_call_operand.vmem [shape: f32[84,1], index: 12, kind: input, shape index: {}]
  %s13 = inlined_call_operand.vmem [shape: f32[10,84], index: 13, kind: input, shape index: {}]
  %s14 = inlined_call_operand.vmem [shape: f32[10,1], index: 14, kind: input, shape index: {}]
  %s15 = inlined_call_operand.vmem [shape: f32[1,10,8], index: 15, kind: output, shape index: {}]
  %s16 = sld [smem:[#allocation0]]
  $region70: #{cnn_forward.1} parent=0
    _
  %s18 = ssub.s32 1, %s16
  %s19 = scalar_select 0, %s18, %s16
  // Predicated region
  $region2: #{cnn_forward.1} parent=0 // pred_check
    _
  $region3: #{cnn_forward.1} parent=0 // pred_check_branch
    %21 = sbr.rel (0) target = $region5
  $region4: #{cnn_forward.1} parent=0 // pred_region
    _
  $region5: #{cnn_forward.1} parent=0 // pred_fallthru
    _
  // Predicated region
  $region6: #{cnn_forward.1} parent=0 // pred_check
    _
  $region7: #{cnn_forward.1} parent=0 // pred_check_branch
    %23 = sbr.rel (0) target = $region9
  $region8: #{cnn_forward.1} parent=0 // pred_region
    _
  $region9: #{cnn_forward.1} parent=0 // pred_fallthru
    _
  // Predicated region
  $region10: #{cnn_forward.1} parent=0 // pred_check
    _
  $region11: #{cnn_forward.1} parent=0 // pred_check_branch
    %25 = sbr.rel (0) target = $region13
  $region12: #{cnn_forward.1} parent=0 // pred_region
    _
  $region13: #{cnn_forward.1} parent=0 // pred_fallthru
    _
  // Predicated region
  $region14: #{cnn_forward.1} parent=0 // pred_check
    _
  $region15: #{cnn_forward.1} parent=0 // pred_check_branch
    %27 = sbr.rel (0) target = $region17
  $region16: #{cnn_forward.1} parent=0 // pred_region
    _
  $region17: #{cnn_forward.1} parent=0 // pred_fallthru
    _
  // Predicated region
  $region18: #{cnn_forward.1} parent=0 // pred_check
    _
  $region19: #{cnn_forward.1} parent=0 // pred_check_branch
    %29 = sbr.rel (0) target = $region21
  $region20: #{cnn_forward.1} parent=0 // pred_region
    _
  $region21: #{cnn_forward.1} parent=0 // pred_fallthru
    _
  // Predicated region
  $region22: #{cnn_forward.1} parent=0 // pred_check
    _
  $region23: #{cnn_forward.1} parent=0 // pred_check_branch
    %31 = sbr.rel (0) target = $region25
  $region24: #{cnn_forward.1} parent=0 // pred_region
    _
  $region25: #{cnn_forward.1} parent=0 // pred_fallthru
    _
  // Predicated region
  $region26: #{cnn_forward.1} parent=0 // pred_check
    _
  $region27: #{cnn_forward.1} parent=0 // pred_check_branch
    %33 = sbr.rel (0) target = $region29
  $region28: #{cnn_forward.1} parent=0 // pred_region
    _
  $region29: #{cnn_forward.1} parent=0 // pred_fallthru
    _
  // Predicated region
  $region30: #{cnn_forward.1} parent=0 // pred_check
    _
  $region31: #{cnn_forward.1} parent=0 // pred_check_branch
    %35 = sbr.rel (0) target = $region33
  $region32: #{cnn_forward.1} parent=0 // pred_region
    _
  $region33: #{cnn_forward.1} parent=0 // pred_fallthru
    _
  // Predicated region
  $region34: #{cnn_forward.1} parent=0 // pred_check
    _
  $region35: #{cnn_forward.1} parent=0 // pred_check_branch
    %37 = sbr.rel (0) target = $region37
  $region36: #{cnn_forward.1} parent=0 // pred_region
    _
  $region37: #{cnn_forward.1} parent=0 // pred_fallthru
    _
  // Predicated region
  $region38: #{cnn_forward.1} parent=0 // pred_check
    _
  $region39: #{cnn_forward.1} parent=0 // pred_check_branch
    %39 = sbr.rel (0) target = $region41
  $region40: #{cnn_forward.1} parent=0 // pred_region
    _
  $region41: #{cnn_forward.1} parent=0 // pred_fallthru
    _
  // Predicated region
  $region42: #{cnn_forward.1} parent=0 // pred_check
    _
  $region43: #{cnn_forward.1} parent=0 // pred_check_branch
    %41 = sbr.rel (0) target = $region45
  $region44: #{cnn_forward.1} parent=0 // pred_region
    _
  $region45: #{cnn_forward.1} parent=0 // pred_fallthru
    _
  // Predicated region
  $region46: #{cnn_forward.1} parent=0 // pred_check
    _
  $region47: #{cnn_forward.1} parent=0 // pred_check_branch
    %43 = sbr.rel (0) target = $region49
  $region48: #{cnn_forward.1} parent=0 // pred_region
    _
  $region49: #{cnn_forward.1} parent=0 // pred_fallthru
    _
  // Predicated region
  $region50: #{cnn_forward.1} parent=0 // pred_check
    _
  $region51: #{cnn_forward.1} parent=0 // pred_check_branch
    %45 = sbr.rel (0) target = $region53
  $region52: #{cnn_forward.1} parent=0 // pred_region
    _
  $region53: #{cnn_forward.1} parent=0 // pred_fallthru
    _
  // Predicated region
  $region54: #{cnn_forward.1} parent=0 // pred_check
    _
  $region55: #{cnn_forward.1} parent=0 // pred_check_branch
    %47 = sbr.rel (0) target = $region57
  $region56: #{cnn_forward.1} parent=0 // pred_region
    _
  $region57: #{cnn_forward.1} parent=0 // pred_fallthru
    _
  // Predicated region
  $region58: #{cnn_forward.1} parent=0 // pred_check
    _
  $region59: #{cnn_forward.1} parent=0 // pred_check_branch
    %49 = sbr.rel (0) target = $region61
  $region60: #{cnn_forward.1} parent=0 // pred_region
    _
  $region61: #{cnn_forward.1} parent=0 // pred_fallthru
    _
  %v50 = vld [vmem:[%s0] sm:$0xff]
  %v51 = vld [vmem:[%s0 + $0x8] sm:$0xff]
  %v52 = vld [vmem:[%s0 + $0x10] sm:$0xff]
  %v53 = vld [vmem:[%s0 + $0x18] sm:$0xff]
  %v54 = vld [vmem:[%s0 + $0x20] sm:$0xff]
  %v55 = vld [vmem:[%s0 + $0x28] sm:$0xff]
  %v56 = vld [vmem:[%s0 + $0x30] sm:$0xff]
  %v57 = vld [vmem:[%s0 + $0x38] sm:$0xff]
  %58 = vst [vmem:[#allocation2] sm:$0xff] %v50
  %vm59 = vcmask 785408
  %60 = vst.msk [vmem:[#allocation2 + $0x8] sm:$0xff] %vm59, %v51
  %61 = vst [vmem:[#allocation2 + $0x10] sm:$0xff] %v52
  %62 = vst.msk [vmem:[#allocation2 + $0x18] sm:$0xff] %vm59, %v53
  %63 = vst [vmem:[#allocation2 + $0x20] sm:$0xff] %v54
  %64 = vst.msk [vmem:[#allocation2 + $0x28] sm:$0xff] %vm59, %v55
  %65 = vst [vmem:[#allocation2 + $0x30] sm:$0xff] %v56
  %66 = vst.msk [vmem:[#allocation2 + $0x38] sm:$0xff] %vm59, %v57
  %75 = vrot.lane.b32.xlu0 %v50, 120
  %v76 = vpop.permute.xlu0 %75
  %77 = vrot.lane.b32.xlu0 %v51, 120
  %v78 = vpop.permute.xlu0 %77
  %79 = vrot.lane.b32.xlu0 %v52, 120
  %v80 = vpop.permute.xlu0 %79
  %81 = vrot.lane.b32.xlu0 %v53, 120
  %v82 = vpop.permute.xlu0 %81
  %83 = vrot.lane.b32.xlu0 %v54, 120
  %v84 = vpop.permute.xlu0 %83
  %85 = vrot.lane.b32.xlu0 %v55, 120
  %v86 = vpop.permute.xlu0 %85
  %87 = vrot.lane.b32.xlu0 %v56, 120
  %v88 = vpop.permute.xlu0 %87
  %89 = vrot.lane.b32.xlu0 %v57, 120
  %v90 = vpop.permute.xlu0 %89
  %vm91 = vcmask 982016
  %v92 = vsel %vm91, %v76, %v78
  %v93 = vsel %vm91, %v80, %v82
  %v94 = vsel %vm91, %v84, %v86
  %v95 = vsel %vm91, %v88, %v90
  %104 = vst [vmem:[#allocation2 + $0x40] sm:$0xff] %v92
  %105 = vst.msk [vmem:[#allocation2 + $0x48] sm:$0xff] %vm59, %v78
  %106 = vst [vmem:[#allocation2 + $0x50] sm:$0xff] %v93
  %107 = vst.msk [vmem:[#allocation2 + $0x58] sm:$0xff] %vm59, %v82
  %108 = vst [vmem:[#allocation2 + $0x60] sm:$0xff] %v94
  %109 = vst.msk [vmem:[#allocation2 + $0x68] sm:$0xff] %vm59, %v86
  %110 = vst [vmem:[#allocation2 + $0x70] sm:$0xff] %v95
  %111 = vst.msk [vmem:[#allocation2 + $0x78] sm:$0xff] %vm59, %v90
  %112 = vrot.lane.b32.xlu0 %v50, 112
  %v113 = vpop.permute.xlu0 %112
  %114 = vrot.lane.b32.xlu0 %v51, 112
  %v115 = vpop.permute.xlu0 %114
  %116 = vrot.lane.b32.xlu0 %v52, 112
  %v117 = vpop.permute.xlu0 %116
  %118 = vrot.lane.b32.xlu0 %v53, 112
  %v119 = vpop.permute.xlu0 %118
  %120 = vrot.lane.b32.xlu0 %v54, 112
  %v121 = vpop.permute.xlu0 %120
  %122 = vrot.lane.b32.xlu0 %v55, 112
  %v123 = vpop.permute.xlu0 %122
  %124 = vrot.lane.b32.xlu0 %v56, 112
  %v125 = vpop.permute.xlu0 %124
  %126 = vrot.lane.b32.xlu0 %v57, 112
  %v127 = vpop.permute.xlu0 %126
  %vm128 = vcmask 916480
  %v129 = vsel %vm128, %v113, %v115
  %v130 = vsel %vm128, %v117, %v119
  %v131 = vsel %vm128, %v121, %v123
  %v132 = vsel %vm128, %v125, %v127
  %141 = vst [vmem:[#allocation2 + $0x80] sm:$0xff] %v129
  %142 = vst.msk [vmem:[#allocation2 + $0x88] sm:$0xff] %vm59, %v115
  %143 = vst [vmem:[#allocation2 + $0x90] sm:$0xff] %v130
  %144 = vst.msk [vmem:[#allocation2 + $0x98] sm:$0xff] %vm59, %v119
  %145 = vst [vmem:[#allocation2 + $0xa0] sm:$0xff] %v131
  %146 = vst.msk [vmem:[#allocation2 + $0xa8] sm:$0xff] %vm59, %v123
  %147 = vst [vmem:[#allocation2 + $0xb0] sm:$0xff] %v132
  %148 = vst.msk [vmem:[#allocation2 + $0xb8] sm:$0xff] %vm59, %v127
  %149 = vrot.lane.b32.xlu0 %v50, 104
  %v150 = vpop.permute.xlu0 %149
  %151 = vrot.lane.b32.xlu0 %v51, 104
  %v152 = vpop.permute.xlu0 %151
  %153 = vrot.lane.b32.xlu0 %v52, 104
  %v154 = vpop.permute.xlu0 %153
  %155 = vrot.lane.b32.xlu0 %v53, 104
  %v156 = vpop.permute.xlu0 %155
  %157 = vrot.lane.b32.xlu0 %v54, 104
  %v158 = vpop.permute.xlu0 %157
  %159 = vrot.lane.b32.xlu0 %v55, 104
  %v160 = vpop.permute.xlu0 %159
  %161 = vrot.lane.b32.xlu0 %v56, 104
  %v162 = vpop.permute.xlu0 %161
  %163 = vrot.lane.b32.xlu0 %v57, 104
  %v164 = vpop.permute.xlu0 %163
  %vm165 = vcmask 850944
  %v166 = vsel %vm165, %v150, %v152
  %v167 = vsel %vm165, %v154, %v156
  %v168 = vsel %vm165, %v158, %v160
  %v169 = vsel %vm165, %v162, %v164
  %178 = vst [vmem:[#allocation2 + $0xc0] sm:$0xff] %v166
  %179 = vst.msk [vmem:[#allocation2 + $0xc8] sm:$0xff] %vm59, %v152
  %180 = vst [vmem:[#allocation2 + $0xd0] sm:$0xff] %v167
  %181 = vst.msk [vmem:[#allocation2 + $0xd8] sm:$0xff] %vm59, %v156
  %182 = vst [vmem:[#allocation2 + $0xe0] sm:$0xff] %v168
  %183 = vst.msk [vmem:[#allocation2 + $0xe8] sm:$0xff] %vm59, %v160
  %184 = vst [vmem:[#allocation2 + $0xf0] sm:$0xff] %v169
  %185 = vst.msk [vmem:[#allocation2 + $0xf8] sm:$0xff] %vm59, %v164
  %186 = vrot.lane.b32.xlu0 %v50, 96
  %v187 = vpop.permute.xlu0 %186
  %188 = vrot.lane.b32.xlu0 %v51, 96
  %v189 = vpop.permute.xlu0 %188
  %190 = vrot.lane.b32.xlu0 %v52, 96
  %v191 = vpop.permute.xlu0 %190
  %192 = vrot.lane.b32.xlu0 %v53, 96
  %v193 = vpop.permute.xlu0 %192
  %194 = vrot.lane.b32.xlu0 %v54, 96
  %v195 = vpop.permute.xlu0 %194
  %196 = vrot.lane.b32.xlu0 %v55, 96
  %v197 = vpop.permute.xlu0 %196
  %198 = vrot.lane.b32.xlu0 %v56, 96
  %v199 = vpop.permute.xlu0 %198
  %200 = vrot.lane.b32.xlu0 %v57, 96
  %v201 = vpop.permute.xlu0 %200
  %v202 = vsel %vm59, %v187, %v189
  %v203 = vsel %vm59, %v191, %v193
  %v204 = vsel %vm59, %v195, %v197
  %v205 = vsel %vm59, %v199, %v201
  %214 = vst [vmem:[#allocation2 + $0x100] sm:$0xff] %v202
  %215 = vst.msk [vmem:[#allocation2 + $0x108] sm:$0xff] %vm59, %v189
  %216 = vst [vmem:[#allocation2 + $0x110] sm:$0xff] %v203
  %217 = vst.msk [vmem:[#allocation2 + $0x118] sm:$0xff] %vm59, %v193
  %218 = vst [vmem:[#allocation2 + $0x120] sm:$0xff] %v204
  %219 = vst.msk [vmem:[#allocation2 + $0x128] sm:$0xff] %vm59, %v197
  %220 = vst [vmem:[#allocation2 + $0x130] sm:$0xff] %v205
  %221 = vst.msk [vmem:[#allocation2 + $0x138] sm:$0xff] %vm59, %v201
  %v222 = vld [vmem:[%s1] sm:$0xff]
  %v223 = vld [vmem:[%s1 + $0x8] sm:$0xff]
  %v224 = vld [vmem:[%s1 + $0x10] sm:$0xff]
  %v225 = vld [vmem:[%s1 + $0x18] sm:$0xff]
  %v226 = vld [vmem:[%s1 + $0x20] sm:$0xff]
  %v227 = vld [vmem:[%s1 + $0x28] sm:$0xff]
  %v228 = vld [vmem:[%s1 + $0x30] sm:$0xff]
  %v229 = vld [vmem:[%s1 + $0x38] sm:$0xff]
  %v230 = vld [vmem:[%s1 + $0x40] sm:$0xff]
  %v231 = vld [vmem:[%s1 + $0x48] sm:$0xff]
  %v232 = vld [vmem:[%s1 + $0x50] sm:$0xff]
  %v233 = vld [vmem:[%s1 + $0x58] sm:$0xff]
  %v234 = vld [vmem:[%s1 + $0x60] sm:$0xff]
  %v235 = vld [vmem:[%s1 + $0x68] sm:$0xff]
  %v236 = vld [vmem:[%s1 + $0x70] sm:$0xff]
  %v237 = vld [vmem:[%s1 + $0x78] sm:$0xff]
  %v238 = vld [vmem:[%s1 + $0x80] sm:$0xff]
  %v239 = vld [vmem:[%s1 + $0x88] sm:$0xff]
  %v240 = vld [vmem:[%s1 + $0x90] sm:$0xff]
  %v241 = vld [vmem:[%s1 + $0x98] sm:$0xff]
  %v242 = vld [vmem:[%s1 + $0xa0] sm:$0xff]
  %v243 = vld [vmem:[%s1 + $0xa8] sm:$0xff]
  %v244 = vld [vmem:[%s1 + $0xb0] sm:$0xff]
  %v245 = vld [vmem:[%s1 + $0xb8] sm:$0xff]
  %v246 = vld [vmem:[%s1 + $0xc0] sm:$0xff]
  %v247 = vld [vmem:[%s1 + $0xc8] sm:$0xff]
  %v248 = vld [vmem:[%s1 + $0xd0] sm:$0xff]
  %v249 = vld [vmem:[%s1 + $0xd8] sm:$0xff]
  %v250 = vld [vmem:[%s1 + $0xe0] sm:$0xff]
  %v251 = vld [vmem:[%s1 + $0xe8] sm:$0xff]
  %v252 = vld [vmem:[%s1 + $0xf0] sm:$0xff]
  %v253 = vld [vmem:[%s1 + $0xf8] sm:$0xff]
  %v254 = vld [vmem:[%s1 + $0x100] sm:$0xff]
  %v255 = vld [vmem:[%s1 + $0x108] sm:$0xff]
  %v256 = vld [vmem:[%s1 + $0x110] sm:$0xff]
  %v257 = vld [vmem:[%s1 + $0x118] sm:$0xff]
  %v258 = vld [vmem:[%s1 + $0x120] sm:$0xff]
  %v259 = vld [vmem:[%s1 + $0x128] sm:$0xff]
  %v260 = vld [vmem:[%s1 + $0x130] sm:$0xff]
  %v261 = vld [vmem:[%s1 + $0x138] sm:$0xff]
  %v262 = vld [vmem:[%s1 + $0x140] sm:$0xff]
  %v263 = vld [vmem:[%s1 + $0x148] sm:$0xff]
  %v264 = vld [vmem:[#allocation2] sm:$0xff]
  %v265 = vld [vmem:[#allocation2 + $0x8] sm:$0xff]
  %v266 = vld [vmem:[#allocation2 + $0x10] sm:$0xff]
  %v267 = vld [vmem:[#allocation2 + $0x18] sm:$0xff]
  %v268 = vld [vmem:[#allocation2 + $0x20] sm:$0xff]
  %v269 = vld [vmem:[#allocation2 + $0x28] sm:$0xff]
  %v270 = vld [vmem:[#allocation2 + $0x30] sm:$0xff]
  %v271 = vld [vmem:[#allocation2 + $0x38] sm:$0xff]
  %v272 = vld [vmem:[#allocation2 + $0x40] sm:$0xff]
  %v273 = vld [vmem:[#allocation2 + $0x48] sm:$0xff]
  %v274 = vld [vmem:[#allocation2 + $0x50] sm:$0xff]
  %v275 = vld [vmem:[#allocation2 + $0x58] sm:$0xff]
  %v276 = vld [vmem:[#allocation2 + $0x60] sm:$0xff]
  %v277 = vld [vmem:[#allocation2 + $0x68] sm:$0xff]
  %v278 = vld [vmem:[#allocation2 + $0x70] sm:$0xff]
  %v279 = vld [vmem:[#allocation2 + $0x78] sm:$0xff]
  %v280 = vld [vmem:[#allocation2 + $0x80] sm:$0xff]
  %v281 = vld [vmem:[#allocation2 + $0x88] sm:$0xff]
  %v282 = vld [vmem:[#allocation2 + $0x90] sm:$0xff]
  %v283 = vld [vmem:[#allocation2 + $0x98] sm:$0xff]
  %v284 = vld [vmem:[#allocation2 + $0xa0] sm:$0xff]
  %v285 = vld [vmem:[#allocation2 + $0xa8] sm:$0xff]
  %v286 = vld [vmem:[#allocation2 + $0xb0] sm:$0xff]
  %v287 = vld [vmem:[#allocation2 + $0xb8] sm:$0xff]
  %v288 = vld [vmem:[#allocation2 + $0xc0] sm:$0xff]
  %v289 = vld [vmem:[#allocation2 + $0xc8] sm:$0xff]
  %v290 = vld [vmem:[#allocation2 + $0xd0] sm:$0xff]
  %v291 = vld [vmem:[#allocation2 + $0xd8] sm:$0xff]
  %v292 = vld [vmem:[#allocation2 + $0xe0] sm:$0xff]
  %v293 = vld [vmem:[#allocation2 + $0xe8] sm:$0xff]
  %v294 = vld [vmem:[#allocation2 + $0xf0] sm:$0xff]
  %v295 = vld [vmem:[#allocation2 + $0xf8] sm:$0xff]
  %v296 = vld [vmem:[#allocation2 + $0x100] sm:$0xff]
  %v297 = vld [vmem:[#allocation2 + $0x108] sm:$0xff]
  %v298 = vld [vmem:[#allocation2 + $0x110] sm:$0xff]
  %v299 = vld [vmem:[#allocation2 + $0x118] sm:$0xff]
  %v300 = vld [vmem:[#allocation2 + $0x120] sm:$0xff]
  %v301 = vld [vmem:[#allocation2 + $0x128] sm:$0xff]
  %v302 = vld [vmem:[#allocation2 + $0x130] sm:$0xff]
  %v303 = vld [vmem:[#allocation2 + $0x138] sm:$0xff]
  %v304 = vld [vmem:[%s2] sm:$0xff]
  %v305 = vld [vmem:[%s2 + $0x8] sm:$0xff]
  %v306 = vld [vmem:[%s2 + $0x10] sm:$0xff]
  %v307 = vld [vmem:[%s2 + $0x18] sm:$0xff]
  %v308 = vld [vmem:[%s2 + $0x20] sm:$0xff]
  %v309 = vld [vmem:[%s2 + $0x28] sm:$0xff]
  %v310 = vld [vmem:[%s2 + $0x30] sm:$0xff]
  %v311 = vld [vmem:[%s2 + $0x38] sm:$0xff]
  %v312 = vld [vmem:[%s2 + $0x40] sm:$0xff]
  %v313 = vld [vmem:[%s2 + $0x48] sm:$0xff]
  %v314 = vld [vmem:[%s2 + $0x50] sm:$0xff]
  %v315 = vld [vmem:[%s2 + $0x58] sm:$0xff]
  %v316 = vld [vmem:[%s2 + $0x60] sm:$0xff]
  %v317 = vld [vmem:[%s2 + $0x68] sm:$0xff]
  %v318 = vld [vmem:[%s2 + $0x70] sm:$0xff]
  %v319 = vld [vmem:[%s2 + $0x78] sm:$0xff]
  %v320 = vld [vmem:[%s2 + $0x80] sm:$0xff]
  %v321 = vld [vmem:[%s2 + $0x88] sm:$0xff]
  %v322 = vld [vmem:[%s2 + $0x90] sm:$0xff]
  %v323 = vld [vmem:[%s2 + $0x98] sm:$0xff]
  %v324 = vld [vmem:[%s2 + $0xa0] sm:$0xff]
  %326 = vset.pattern.permute.xlu0 0
  %327 = vperm.xlu0 %326, %v304
  %v328 = vpop.permute.xlu0 %327
  %331 = vset.pattern.permute.xlu0 0
  %332 = vperm.xlu0 %331, %v305
  %v333 = vpop.permute.xlu0 %332
  %336 = vset.pattern.permute.xlu0 0
  %337 = vperm.xlu0 %336, %v306
  %v338 = vpop.permute.xlu0 %337
  %341 = vset.pattern.permute.xlu0 0
  %342 = vperm.xlu0 %341, %v307
  %v343 = vpop.permute.xlu0 %342
  %346 = vset.pattern.permute.xlu0 0
  %347 = vperm.xlu0 %346, %v308
  %v348 = vpop.permute.xlu0 %347
  %351 = vset.pattern.permute.xlu0 0
  %352 = vperm.xlu0 %351, %v309
  %v353 = vpop.permute.xlu0 %352
  %356 = vset.pattern.permute.xlu0 0
  %357 = vperm.xlu0 %356, %v310
  %v358 = vpop.permute.xlu0 %357
  %361 = vset.pattern.permute.xlu0 0
  %362 = vperm.xlu0 %361, %v311
  %v363 = vpop.permute.xlu0 %362
  %366 = vset.pattern.permute.xlu0 0
  %367 = vperm.xlu0 %366, %v312
  %v368 = vpop.permute.xlu0 %367
  %371 = vset.pattern.permute.xlu0 0
  %372 = vperm.xlu0 %371, %v313
  %v373 = vpop.permute.xlu0 %372
  %376 = vset.pattern.permute.xlu0 0
  %377 = vperm.xlu0 %376, %v314
  %v378 = vpop.permute.xlu0 %377
  %381 = vset.pattern.permute.xlu0 0
  %382 = vperm.xlu0 %381, %v315
  %v383 = vpop.permute.xlu0 %382
  %386 = vset.pattern.permute.xlu0 0
  %387 = vperm.xlu0 %386, %v316
  %v388 = vpop.permute.xlu0 %387
  %391 = vset.pattern.permute.xlu0 0
  %392 = vperm.xlu0 %391, %v317
  %v393 = vpop.permute.xlu0 %392
  %396 = vset.pattern.permute.xlu0 0
  %397 = vperm.xlu0 %396, %v318
  %v398 = vpop.permute.xlu0 %397
  %401 = vset.pattern.permute.xlu0 0
  %402 = vperm.xlu0 %401, %v319
  %v403 = vpop.permute.xlu0 %402
  %406 = vset.pattern.permute.xlu0 0
  %407 = vperm.xlu0 %406, %v320
  %v408 = vpop.permute.xlu0 %407
  %411 = vset.pattern.permute.xlu0 0
  %412 = vperm.xlu0 %411, %v321
  %v413 = vpop.permute.xlu0 %412
  %416 = vset.pattern.permute.xlu0 0
  %417 = vperm.xlu0 %416, %v322
  %v418 = vpop.permute.xlu0 %417
  %421 = vset.pattern.permute.xlu0 0
  %422 = vperm.xlu0 %421, %v323
  %v423 = vpop.permute.xlu0 %422
  %426 = vset.pattern.permute.xlu0 0
  %427 = vperm.xlu0 %426, %v324
  %v428 = vpop.permute.xlu0 %427
  %vm430 = vcmask 261120
  %v432 = vsel %vm430, %v223, 0
  %v435 = vsel %vm430, %v225, 0
  %v438 = vsel %vm430, %v227, 0
  %v441 = vsel %vm430, %v229, 0
  %v444 = vsel %vm430, %v231, 0
  %v447 = vsel %vm430, %v233, 0
  %v450 = vsel %vm430, %v235, 0
  %v453 = vsel %vm430, %v237, 0
  %v456 = vsel %vm430, %v239, 0
  %v459 = vsel %vm430, %v241, 0
  %v462 = vsel %vm430, %v243, 0
  %v465 = vsel %vm430, %v245, 0
  %v468 = vsel %vm430, %v247, 0
  %v471 = vsel %vm430, %v249, 0
  %v474 = vsel %vm430, %v251, 0
  %v477 = vsel %vm430, %v253, 0
  %v480 = vsel %vm430, %v255, 0
  %v483 = vsel %vm430, %v257, 0
  %v486 = vsel %vm430, %v259, 0
  %v489 = vsel %vm430, %v261, 0
  %v492 = vsel %vm430, %v263, 0
  %494 = vmatprep.subr.mxu0 %v265
  %495 = vmatpush1.msra.mxu0 %v264
  %496 = vmatprep.subr.mxu0 %v267
  %497 = vmatpush1.msra.mxu0 %v266
  %498 = vmatprep.subr.mxu0 %v269
  %499 = vmatpush1.msra.mxu0 %v268
  %500 = vmatprep.subr.mxu0 %v271
  %501 = vmatpush1.msra.mxu0 %v270
  %502 = vmatprep.subr.mxu0 %v273
  %503 = vmatpush1.msra.mxu0 %v272
  %504 = vmatprep.subr.mxu0 %v275
  %505 = vmatpush1.msra.mxu0 %v274
  %506 = vmatprep.subr.mxu0 %v277
  %507 = vmatpush1.msra.mxu0 %v276
  %508 = vmatprep.subr.mxu0 %v279
  %509 = vmatpush1.msra.mxu0 %v278
  %510 = vmatprep.subr.mxu0 %v281
  %511 = vmatpush1.msra.mxu0 %v280
  %512 = vmatprep.subr.mxu0 %v283
  %513 = vmatpush1.msra.mxu0 %v282
  %514 = vmatprep.subr.mxu0 %v285
  %515 = vmatpush1.msra.mxu0 %v284
  %516 = vmatprep.subr.mxu0 %v287
  %517 = vmatpush1.msra.mxu0 %v286
  %518 = vmatprep.subr.mxu0 %v289
  %519 = vmatpush1.msra.mxu0 %v288
  %520 = vmatprep.subr.mxu0 %v291
  %521 = vmatpush1.msra.mxu0 %v290
  %522 = vmatprep.subr.mxu0 %v293
  %523 = vmatpush1.msra.mxu0 %v292
  %524 = vmatprep.subr.mxu0 %v295
  %525 = vmatpush1.msra.mxu0 %v294
  %526 = vmatprep.subr.mxu0 %v297
  %527 = vmatpush1.msra.mxu0 %v296
  %528 = vmatprep.subr.mxu0 %v299
  %529 = vmatpush1.msra.mxu0 %v298
  %530 = vmatprep.subr.mxu0 %v301
  %531 = vmatpush1.msra.mxu0 %v300
  %532 = vmatprep.subr.mxu0 %v303
  %533 = vmatpush1.msra.mxu0 %v302
  %534 = vmatprep.subr.mxu0 0.0
  %535 = vmatpush1.msra.mxu0 0.0
  %536 = vmatprep.subr.mxu0 0.0
  %537 = vmatpush1.msra.mxu0 0.0
  %538 = vmatprep.subr.mxu0 0.0
  %539 = vmatpush1.msra.mxu0 0.0
  %540 = vmatprep.subr.mxu0 0.0
  %541 = vmatpush1.msra.mxu0 0.0
  %542 = vmatprep.subr.mxu0 0.0
  %543 = vmatpush1.msra.mxu0 0.0
  %544 = vmatprep.subr.mxu0 0.0
  %545 = vmatpush1.msra.mxu0 0.0
  %546 = vmatprep.subr.mxu0 0.0
  %547 = vmatpush1.msra.mxu0 0.0
  %548 = vmatprep.subr.mxu0 0.0
  %549 = vmatpush1.msra.mxu0 0.0
  %550 = vmatprep.subr.mxu0 0.0
  %551 = vmatpush1.msra.mxu0 0.0
  %552 = vmatprep.subr.mxu0 0.0
  %553 = vmatpush1.msra.mxu0 0.0
  %554 = vmatprep.subr.mxu0 0.0
  %555 = vmatpush1.msra.mxu0 0.0
  %556 = vmatprep.subr.mxu0 0.0
  %557 = vmatpush1.msra.mxu0 0.0
  %558 = vmatprep.mubr.f32.mxu0 %v432
  %559 = vmatmul.mubr.f32.gmra.mrb[0].mxu0 %v222
  %v560 = vpop.f32.mrb[0].mxu0
  %v561 = vadd.f32 %v328, %v560
  %v562 = vpop.f32.mrb[0].mxu0
  %v563 = vadd.f32 %v328, %v562
  %564 = vmatprep.mubr.f32.mxu0 %v435
  %565 = vmatmul.mubr.f32.gmra.mrb[0].mxu0 %v224
  %v566 = vpop.f32.mrb[0].mxu0
  %v567 = vadd.f32 %v333, %v566
  %v568 = vpop.f32.mrb[0].mxu0
  %v569 = vadd.f32 %v333, %v568
  %570 = vmatprep.mubr.f32.mxu0 %v438
  %571 = vmatmul.mubr.f32.gmra.mrb[0].mxu0 %v226
  %v572 = vpop.f32.mrb[0].mxu0
  %v573 = vadd.f32 %v338, %v572
  %v574 = vpop.f32.mrb[0].mxu0
  %v575 = vadd.f32 %v338, %v574
  %576 = vmatprep.mubr.f32.mxu0 %v441
  %577 = vmatmul.mubr.f32.gmra.mrb[0].mxu0 %v228
  %v578 = vpop.f32.mrb[0].mxu0
  %v579 = vadd.f32 %v343, %v578
  %v580 = vpop.f32.mrb[0].mxu0
  %v581 = vadd.f32 %v343, %v580
  %582 = vmatprep.mubr.f32.mxu0 %v444
  %583 = vmatmul.mubr.f32.gmra.mrb[0].mxu0 %v230
  %v584 = vpop.f32.mrb[0].mxu0
  %v585 = vadd.f32 %v348, %v584
  %v586 = vpop.f32.mrb[0].mxu0
  %v587 = vadd.f32 %v348, %v586
  %588 = vmatprep.mubr.f32.mxu0 %v447
  %589 = vmatmul.mubr.f32.gmra.mrb[0].mxu0 %v232
  %v590 = vpop.f32.mrb[0].mxu0
  %v591 = vadd.f32 %v353, %v590
  %v592 = vpop.f32.mrb[0].mxu0
  %v593 = vadd.f32 %v353, %v592
  %594 = vmatprep.mubr.f32.mxu0 %v450
  %595 = vmatmul.mubr.f32.gmra.mrb[0].mxu0 %v234
  %v596 = vpop.f32.mrb[0].mxu0
  %v597 = vadd.f32 %v358, %v596
  %v598 = vpop.f32.mrb[0].mxu0
  %v599 = vadd.f32 %v358, %v598
  %600 = vmatprep.mubr.f32.mxu0 %v453
  %601 = vmatmul.mubr.f32.gmra.mrb[0].mxu0 %v236
  %v602 = vpop.f32.mrb[0].mxu0
  %v603 = vadd.f32 %v363, %v602
  %v604 = vpop.f32.mrb[0].mxu0
  %v605 = vadd.f32 %v363, %v604
  %606 = vmatprep.mubr.f32.mxu0 %v456
  %607 = vmatmul.mubr.f32.gmra.mrb[0].mxu0 %v238
  %v608 = vpop.f32.mrb[0].mxu0
  %v609 = vadd.f32 %v368, %v608
  %v610 = vpop.f32.mrb[0].mxu0
  %v611 = vadd.f32 %v368, %v610
  %612 = vmatprep.mubr.f32.mxu0 %v459
  %613 = vmatmul.mubr.f32.gmra.mrb[0].mxu0 %v240
  %v614 = vpop.f32.mrb[0].mxu0
  %v615 = vadd.f32 %v373, %v614
  %v616 = vpop.f32.mrb[0].mxu0
  %v617 = vadd.f32 %v373, %v616
  %618 = vmatprep.mubr.f32.mxu0 %v462
  %619 = vmatmul.mubr.f32.gmra.mrb[0].mxu0 %v242
  %v620 = vpop.f32.mrb[0].mxu0
  %v621 = vadd.f32 %v378, %v620
  %v622 = vpop.f32.mrb[0].mxu0
  %v623 = vadd.f32 %v378, %v622
  %624 = vmatprep.mubr.f32.mxu0 %v465
  %625 = vmatmul.mubr.f32.gmra.mrb[0].mxu0 %v244
  %v626 = vpop.f32.mrb[0].mxu0
  %v627 = vadd.f32 %v383, %v626
  %v628 = vpop.f32.mrb[0].mxu0
  %v629 = vadd.f32 %v383, %v628
  %630 = vmatprep.mubr.f32.mxu0 %v468
  %631 = vmatmul.mubr.f32.gmra.mrb[0].mxu0 %v246
  %v632 = vpop.f32.mrb[0].mxu0
  %v633 = vadd.f32 %v388, %v632
  %v634 = vpop.f32.mrb[0].mxu0
  %v635 = vadd.f32 %v388, %v634
  %636 = vmatprep.mubr.f32.mxu0 %v471
  %637 = vmatmul.mubr.f32.gmra.mrb[0].mxu0 %v248
  %v638 = vpop.f32.mrb[0].mxu0
  %v639 = vadd.f32 %v393, %v638
  %v640 = vpop.f32.mrb[0].mxu0
  %v641 = vadd.f32 %v393, %v640
  %642 = vmatprep.mubr.f32.mxu0 %v474
  %643 = vmatmul.mubr.f32.gmra.mrb[0].mxu0 %v250
  %v644 = vpop.f32.mrb[0].mxu0
  %v645 = vadd.f32 %v398, %v644
  %v646 = vpop.f32.mrb[0].mxu0
  %v647 = vadd.f32 %v398, %v646
  %648 = vmatprep.mubr.f32.mxu0 %v477
  %649 = vmatmul.mubr.f32.gmra.mrb[0].mxu0 %v252
  %v650 = vpop.f32.mrb[0].mxu0
  %v651 = vadd.f32 %v403, %v650
  %v652 = vpop.f32.mrb[0].mxu0
  %v653 = vadd.f32 %v403, %v652
  %654 = vmatprep.mubr.f32.mxu0 %v480
  %655 = vmatmul.mubr.f32.gmra.mrb[0].mxu0 %v254
  %v656 = vpop.f32.mrb[0].mxu0
  %v657 = vadd.f32 %v408, %v656
  %v658 = vpop.f32.mrb[0].mxu0
  %v659 = vadd.f32 %v408, %v658
  %660 = vmatprep.mubr.f32.mxu0 %v483
  %661 = vmatmul.mubr.f32.gmra.mrb[0].mxu0 %v256
  %v662 = vpop.f32.mrb[0].mxu0
  %v663 = vadd.f32 %v413, %v662
  %v664 = vpop.f32.mrb[0].mxu0
  %v665 = vadd.f32 %v413, %v664
  %666 = vmatprep.mubr.f32.mxu0 %v486
  %667 = vmatmul.mubr.f32.gmra.mrb[0].mxu0 %v258
  %v668 = vpop.f32.mrb[0].mxu0
  %v669 = vadd.f32 %v418, %v668
  %v670 = vpop.f32.mrb[0].mxu0
  %v671 = vadd.f32 %v418, %v670
  %672 = vmatprep.mubr.f32.mxu0 %v489
  %673 = vmatmul.mubr.f32.gmra.mrb[0].mxu0 %v260
  %v674 = vpop.f32.mrb[0].mxu0
  %v675 = vadd.f32 %v423, %v674
  %v676 = vpop.f32.mrb[0].mxu0
  %v677 = vadd.f32 %v423, %v676
  %678 = vmatprep.mubr.f32.mxu0 %v492
  %679 = vmatmul.mubr.f32.gmra.mrb[0].mxu0 %v262
  %v680 = vpop.f32.mrb[0].mxu0
  %v681 = vadd.f32 %v428, %v680
  %v682 = vpop.f32.mrb[0].mxu0
  %v683 = vadd.f32 %v428, %v682
  %684 = vdwg.mxu0
  %v685 = vmax.f32 %v561, 0.0
  %v686 = vmax.f32 %v563, 0.0
  %v687 = vmax.f32 %v567, 0.0
  %v688 = vmax.f32 %v569, 0.0
  %v689 = vmax.f32 %v573, 0.0
  %v690 = vmax.f32 %v575, 0.0
  %v691 = vmax.f32 %v579, 0.0
  %v692 = vmax.f32 %v581, 0.0
  %v693 = vmax.f32 %v585, 0.0
  %v694 = vmax.f32 %v587, 0.0
  %v695 = vmax.f32 %v591, 0.0
  %v696 = vmax.f32 %v593, 0.0
  %v697 = vmax.f32 %v597, 0.0
  %v698 = vmax.f32 %v599, 0.0
  %v699 = vmax.f32 %v603, 0.0
  %v700 = vmax.f32 %v605, 0.0
  %v701 = vmax.f32 %v609, 0.0
  %v702 = vmax.f32 %v611, 0.0
  %v703 = vmax.f32 %v615, 0.0
  %v704 = vmax.f32 %v617, 0.0
  %v705 = vmax.f32 %v621, 0.0
  %v706 = vmax.f32 %v623, 0.0
  %v707 = vmax.f32 %v627, 0.0
  %v708 = vmax.f32 %v629, 0.0
  %v709 = vmax.f32 %v633, 0.0
  %v710 = vmax.f32 %v635, 0.0
  %v711 = vmax.f32 %v639, 0.0
  %v712 = vmax.f32 %v641, 0.0
  %v713 = vmax.f32 %v645, 0.0
  %v714 = vmax.f32 %v647, 0.0
  %v715 = vmax.f32 %v651, 0.0
  %v716 = vmax.f32 %v653, 0.0
  %v717 = vmax.f32 %v657, 0.0
  %v718 = vmax.f32 %v659, 0.0
  %v719 = vmax.f32 %v663, 0.0
  %v720 = vmax.f32 %v665, 0.0
  %v721 = vmax.f32 %v669, 0.0
  %v722 = vmax.f32 %v671, 0.0
  %v723 = vmax.f32 %v675, 0.0
  %v724 = vmax.f32 %v677, 0.0
  %v725 = vmax.f32 %v681, 0.0
  %v726 = vmax.f32 %v683, 0.0
  %769 = vrot.lane.b32.xlu0 %v685, 120
  %v770 = vpop.permute.xlu0 %769
  %771 = vrot.lane.b32.xlu0 %v686, 120
  %v772 = vpop.permute.xlu0 %771
  %773 = vrot.lane.b32.xlu0 %v687, 120
  %v774 = vpop.permute.xlu0 %773
  %775 = vrot.lane.b32.xlu0 %v688, 120
  %v776 = vpop.permute.xlu0 %775
  %777 = vrot.lane.b32.xlu0 %v689, 120
  %v778 = vpop.permute.xlu0 %777
  %779 = vrot.lane.b32.xlu0 %v690, 120
  %v780 = vpop.permute.xlu0 %779
  %781 = vrot.lane.b32.xlu0 %v691, 120
  %v782 = vpop.permute.xlu0 %781
  %783 = vrot.lane.b32.xlu0 %v692, 120
  %v784 = vpop.permute.xlu0 %783
  %785 = vrot.lane.b32.xlu0 %v693, 120
  %v786 = vpop.permute.xlu0 %785
  %787 = vrot.lane.b32.xlu0 %v694, 120
  %v788 = vpop.permute.xlu0 %787
  %789 = vrot.lane.b32.xlu0 %v695, 120
  %v790 = vpop.permute.xlu0 %789
  %791 = vrot.lane.b32.xlu0 %v696, 120
  %v792 = vpop.permute.xlu0 %791
  %793 = vrot.lane.b32.xlu0 %v697, 120
  %v794 = vpop.permute.xlu0 %793
  %795 = vrot.lane.b32.xlu0 %v698, 120
  %v796 = vpop.permute.xlu0 %795
  %797 = vrot.lane.b32.xlu0 %v699, 120
  %v798 = vpop.permute.xlu0 %797
  %799 = vrot.lane.b32.xlu0 %v700, 120
  %v800 = vpop.permute.xlu0 %799
  %801 = vrot.lane.b32.xlu0 %v701, 120
  %v802 = vpop.permute.xlu0 %801
  %803 = vrot.lane.b32.xlu0 %v702, 120
  %v804 = vpop.permute.xlu0 %803
  %805 = vrot.lane.b32.xlu0 %v703, 120
  %v806 = vpop.permute.xlu0 %805
  %807 = vrot.lane.b32.xlu0 %v704, 120
  %v808 = vpop.permute.xlu0 %807
  %809 = vrot.lane.b32.xlu0 %v705, 120
  %v810 = vpop.permute.xlu0 %809
  %811 = vrot.lane.b32.xlu0 %v706, 120
  %v812 = vpop.permute.xlu0 %811
  %813 = vrot.lane.b32.xlu0 %v707, 120
  %v814 = vpop.permute.xlu0 %813
  %815 = vrot.lane.b32.xlu0 %v708, 120
  %v816 = vpop.permute.xlu0 %815
  %817 = vrot.lane.b32.xlu0 %v709, 120
  %v818 = vpop.permute.xlu0 %817
  %819 = vrot.lane.b32.xlu0 %v710, 120
  %v820 = vpop.permute.xlu0 %819
  %821 = vrot.lane.b32.xlu0 %v711, 120
  %v822 = vpop.permute.xlu0 %821
  %823 = vrot.lane.b32.xlu0 %v712, 120
  %v824 = vpop.permute.xlu0 %823
  %825 = vrot.lane.b32.xlu0 %v713, 120
  %v826 = vpop.permute.xlu0 %825
  %827 = vrot.lane.b32.xlu0 %v714, 120
  %v828 = vpop.permute.xlu0 %827
  %829 = vrot.lane.b32.xlu0 %v715, 120
  %v830 = vpop.permute.xlu0 %829
  %831 = vrot.lane.b32.xlu0 %v716, 120
  %v832 = vpop.permute.xlu0 %831
  %833 = vrot.lane.b32.xlu0 %v717, 120
  %v834 = vpop.permute.xlu0 %833
  %835 = vrot.lane.b32.xlu0 %v718, 120
  %v836 = vpop.permute.xlu0 %835
  %837 = vrot.lane.b32.xlu0 %v719, 120
  %v838 = vpop.permute.xlu0 %837
  %839 = vrot.lane.b32.xlu0 %v720, 120
  %v840 = vpop.permute.xlu0 %839
  %841 = vrot.lane.b32.xlu0 %v721, 120
  %v842 = vpop.permute.xlu0 %841
  %843 = vrot.lane.b32.xlu0 %v722, 120
  %v844 = vpop.permute.xlu0 %843
  %845 = vrot.lane.b32.xlu0 %v723, 120
  %v846 = vpop.permute.xlu0 %845
  %847 = vrot.lane.b32.xlu0 %v724, 120
  %v848 = vpop.permute.xlu0 %847
  %849 = vrot.lane.b32.xlu0 %v725, 120
  %v850 = vpop.permute.xlu0 %849
  %851 = vrot.lane.b32.xlu0 %v726, 120
  %v852 = vpop.permute.xlu0 %851
  %v853 = vsel %vm91, %v770, %v772
  %v854 = vsel %vm91, %v774, %v776
  %v855 = vsel %vm91, %v778, %v780
  %v856 = vsel %vm91, %v782, %v784
  %v857 = vsel %vm91, %v786, %v788
  %v858 = vsel %vm91, %v790, %v792
  %v859 = vsel %vm91, %v794, %v796
  %v860 = vsel %vm91, %v798, %v800
  %v861 = vsel %vm91, %v802, %v804
  %v862 = vsel %vm91, %v806, %v808
  %v863 = vsel %vm91, %v810, %v812
  %v864 = vsel %vm91, %v814, %v816
  %v865 = vsel %vm91, %v818, %v820
  %v866 = vsel %vm91, %v822, %v824
  %v867 = vsel %vm91, %v826, %v828
  %v868 = vsel %vm91, %v830, %v832
  %v869 = vsel %vm91, %v834, %v836
  %v870 = vsel %vm91, %v838, %v840
  %v871 = vsel %vm91, %v842, %v844
  %v872 = vsel %vm91, %v846, %v848
  %v873 = vsel %vm91, %v850, %v852
  %v916 = vmax.f32 %v685, %v853
  %v917 = vmax.f32 %v686, %v772
  %v918 = vmax.f32 %v687, %v854
  %v919 = vmax.f32 %v688, %v776
  %v920 = vmax.f32 %v689, %v855
  %v921 = vmax.f32 %v690, %v780
  %v922 = vmax.f32 %v691, %v856
  %v923 = vmax.f32 %v692, %v784
  %v924 = vmax.f32 %v693, %v857
  %v925 = vmax.f32 %v694, %v788
  %v926 = vmax.f32 %v695, %v858
  %v927 = vmax.f32 %v696, %v792
  %v928 = vmax.f32 %v697, %v859
  %v929 = vmax.f32 %v698, %v796
  %v930 = vmax.f32 %v699, %v860
  %v931 = vmax.f32 %v700, %v800
  %v932 = vmax.f32 %v701, %v861
  %v933 = vmax.f32 %v702, %v804
  %v934 = vmax.f32 %v703, %v862
  %v935 = vmax.f32 %v704, %v808
  %v936 = vmax.f32 %v705, %v863
  %v937 = vmax.f32 %v706, %v812
  %v938 = vmax.f32 %v707, %v864
  %v939 = vmax.f32 %v708, %v816
  %v940 = vmax.f32 %v709, %v865
  %v941 = vmax.f32 %v710, %v820
  %v942 = vmax.f32 %v711, %v866
  %v943 = vmax.f32 %v712, %v824
  %v944 = vmax.f32 %v713, %v867
  %v945 = vmax.f32 %v714, %v828
  %v946 = vmax.f32 %v715, %v868
  %v947 = vmax.f32 %v716, %v832
  %v948 = vmax.f32 %v717, %v869
  %v949 = vmax.f32 %v718, %v836
  %v950 = vmax.f32 %v719, %v870
  %v951 = vmax.f32 %v720, %v840
  %v952 = vmax.f32 %v721, %v871
  %v953 = vmax.f32 %v722, %v844
  %v954 = vmax.f32 %v723, %v872
  %v955 = vmax.f32 %v724, %v848
  %v956 = vmax.f32 %v725, %v873
  %v957 = vmax.f32 %v726, %v852
  %v958 = vld [vmem:[%s3] sm:$0xff]
  %v959 = vld [vmem:[%s3 + $0x8] sm:$0xff]
  %v960 = vld [vmem:[%s3 + $0x10] sm:$0xff]
  %v961 = vld [vmem:[%s3 + $0x18] sm:$0xff]
  %v962 = vld [vmem:[%s3 + $0x20] sm:$0xff]
  %v963 = vld [vmem:[%s3 + $0x28] sm:$0xff]
  %v964 = vld [vmem:[%s3 + $0x30] sm:$0xff]
  %v965 = vld [vmem:[%s3 + $0x38] sm:$0xff]
  %v966 = vld [vmem:[%s3 + $0x40] sm:$0xff]
  %v967 = vld [vmem:[%s3 + $0x48] sm:$0xff]
  %v968 = vld [vmem:[%s3 + $0x50] sm:$0xff]
  %v969 = vld [vmem:[%s3 + $0x58] sm:$0xff]
  %v970 = vld [vmem:[%s3 + $0x60] sm:$0xff]
  %v971 = vld [vmem:[%s3 + $0x68] sm:$0xff]
  %v972 = vld [vmem:[%s3 + $0x70] sm:$0xff]
  %v973 = vld [vmem:[%s3 + $0x78] sm:$0xff]
  %v974 = vld [vmem:[%s3 + $0x80] sm:$0xff]
  %v975 = vld [vmem:[%s3 + $0x88] sm:$0xff]
  %v976 = vld [vmem:[%s3 + $0x90] sm:$0xff]
  %v977 = vld [vmem:[%s3 + $0x98] sm:$0xff]
  %v978 = vld [vmem:[%s3 + $0xa0] sm:$0xff]
  %v979 = vld [vmem:[%s3 + $0xa8] sm:$0xff]
  %v980 = vld [vmem:[%s3 + $0xb0] sm:$0xff]
  %v981 = vld [vmem:[%s3 + $0xb8] sm:$0xff]
  %v982 = vld [vmem:[%s3 + $0xc0] sm:$0xff]
  %v983 = vld [vmem:[%s3 + $0xc8] sm:$0xff]
  %v984 = vld [vmem:[%s3 + $0xd0] sm:$0xff]
  %v985 = vld [vmem:[%s3 + $0xd8] sm:$0xff]
  %v986 = vld [vmem:[%s3 + $0xe0] sm:$0xff]
  %v987 = vld [vmem:[%s3 + $0xe8] sm:$0xff]
  %v988 = vld [vmem:[%s3 + $0xf0] sm:$0xff]
  %v989 = vld [vmem:[%s3 + $0xf8] sm:$0xff]
  %v990 = vld [vmem:[%s3 + $0x100] sm:$0xff]
  %v991 = vld [vmem:[%s3 + $0x108] sm:$0xff]
  %v992 = vld [vmem:[%s3 + $0x110] sm:$0xff]
  %v993 = vld [vmem:[%s3 + $0x118] sm:$0xff]
  %v994 = vld [vmem:[%s3 + $0x120] sm:$0xff]
  %v995 = vld [vmem:[%s3 + $0x128] sm:$0xff]
  %v996 = vld [vmem:[%s3 + $0x130] sm:$0xff]
  %v997 = vld [vmem:[%s3 + $0x138] sm:$0xff]
  %v998 = vld [vmem:[%s3 + $0x140] sm:$0xff]
  %v999 = vld [vmem:[%s3 + $0x148] sm:$0xff]
  %v1000 = vld [vmem:[%s3 + $0x150] sm:$0xff]
  %v1001 = vld [vmem:[%s3 + $0x158] sm:$0xff]
  %v1002 = vld [vmem:[%s3 + $0x160] sm:$0xff]
  %v1003 = vld [vmem:[%s3 + $0x168] sm:$0xff]
  %v1004 = vld [vmem:[%s3 + $0x170] sm:$0xff]
  %v1005 = vld [vmem:[%s3 + $0x178] sm:$0xff]
  %v1006 = vld [vmem:[%s3 + $0x180] sm:$0xff]
  %v1007 = vld [vmem:[%s3 + $0x188] sm:$0xff]
  %v1008 = vld [vmem:[%s3 + $0x190] sm:$0xff]
  %v1009 = vld [vmem:[%s3 + $0x198] sm:$0xff]
  %v1010 = vld [vmem:[%s3 + $0x1a0] sm:$0xff]
  %v1011 = vld [vmem:[%s3 + $0x1a8] sm:$0xff]
  %vm1012 = vcmask 719872
  %v1014 = vsel %vm1012, %v917, 0
  %v1017 = vsel %vm1012, %v919, 0
  %v1020 = vsel %vm1012, %v921, 0
  %v1023 = vsel %vm1012, %v923, 0
  %v1026 = vsel %vm1012, %v925, 0
  %v1029 = vsel %vm1012, %v927, 0
  %v1032 = vsel %vm1012, %v929, 0
  %v1035 = vsel %vm1012, %v931, 0
  %v1038 = vsel %vm1012, %v933, 0
  %v1041 = vsel %vm1012, %v935, 0
  %v1044 = vsel %vm1012, %v937, 0
  %v1047 = vsel %vm1012, %v939, 0
  %v1050 = vsel %vm1012, %v941, 0
  %v1053 = vsel %vm1012, %v943, 0
  %v1056 = vsel %vm1012, %v945, 0
  %v1059 = vsel %vm1012, %v947, 0
  %v1062 = vsel %vm1012, %v949, 0
  %v1065 = vsel %vm1012, %v951, 0
  %v1068 = vsel %vm1012, %v953, 0
  %v1071 = vsel %vm1012, %v955, 0
  %v1074 = vsel %vm1012, %v957, 0
  %1076 = vmatprep.subr.mxu0 %v959
  %1077 = vmatpush1.msra.mxu0 %v958
  %1078 = vmatprep.subr.mxu0 %v961
  %1079 = vmatpush1.msra.mxu0 %v960
  %1080 = vmatprep.subr.mxu0 %v963
  %1081 = vmatpush1.msra.mxu0 %v962
  %1082 = vmatprep.subr.mxu0 %v965
  %1083 = vmatpush1.msra.mxu0 %v964
  %1084 = vmatprep.subr.mxu0 %v967
  %1085 = vmatpush1.msra.mxu0 %v966
  %1086 = vmatprep.subr.mxu0 %v969
  %1087 = vmatpush1.msra.mxu0 %v968
  %1088 = vmatprep.subr.mxu0 %v971
  %1089 = vmatpush1.msra.mxu0 %v970
  %1090 = vmatprep.subr.mxu0 %v973
  %1091 = vmatpush1.msra.mxu0 %v972
  %1092 = vmatprep.subr.mxu0 %v975
  %1093 = vmatpush1.msra.mxu0 %v974
  %1094 = vmatprep.subr.mxu0 %v977
  %1095 = vmatpush1.msra.mxu0 %v976
  %1096 = vmatprep.subr.mxu0 %v979
  %1097 = vmatpush1.msra.mxu0 %v978
  %1098 = vmatprep.subr.mxu0 %v981
  %1099 = vmatpush1.msra.mxu0 %v980
  %1100 = vmatprep.subr.mxu0 %v983
  %1101 = vmatpush1.msra.mxu0 %v982
  %1102 = vmatprep.subr.mxu0 %v985
  %1103 = vmatpush1.msra.mxu0 %v984
  %1104 = vmatprep.subr.mxu0 %v987
  %1105 = vmatpush1.msra.mxu0 %v986
  %1106 = vmatprep.subr.mxu0 %v989
  %1107 = vmatpush1.msra.mxu0 %v988
  %1108 = vmatprep.subr.mxu0 %v991
  %1109 = vmatpush1.msra.mxu0 %v990
  %1110 = vmatprep.subr.mxu0 %v993
  %1111 = vmatpush1.msra.mxu0 %v992
  %1112 = vmatprep.subr.mxu0 %v995
  %1113 = vmatpush1.msra.mxu0 %v994
  %1114 = vmatprep.subr.mxu0 %v997
  %1115 = vmatpush1.msra.mxu0 %v996
  %1116 = vmatprep.subr.mxu0 %v999
  %1117 = vmatpush1.msra.mxu0 %v998
  %1118 = vmatprep.subr.mxu0 %v1001
  %1119 = vmatpush1.msra.mxu0 %v1000
  %1120 = vmatprep.subr.mxu0 %v1003
  %1121 = vmatpush1.msra.mxu0 %v1002
  %1122 = vmatprep.subr.mxu0 %v1005
  %1123 = vmatpush1.msra.mxu0 %v1004
  %1124 = vmatprep.subr.mxu0 %v1007
  %1125 = vmatpush1.msra.mxu0 %v1006
  %1126 = vmatprep.subr.mxu0 %v1009
  %1127 = vmatpush1.msra.mxu0 %v1008
  %1128 = vmatprep.subr.mxu0 %v1011
  %1129 = vmatpush1.msra.mxu0 %v1010
  %1130 = vmatprep.subr.mxu0 0.0
  %1131 = vmatpush1.msra.mxu0 0.0
  %1132 = vmatprep.subr.mxu0 0.0
  %1133 = vmatpush1.msra.mxu0 0.0
  %1134 = vmatprep.subr.mxu0 0.0
  %1135 = vmatpush1.msra.mxu0 0.0
  %1136 = vmatprep.subr.mxu0 0.0
  %1137 = vmatpush1.msra.mxu0 0.0
  %1138 = vmatprep.subr.mxu0 0.0
  %1139 = vmatpush1.msra.mxu0 0.0
  %1140 = vmatprep.mubr.f32.mxu0 %v1014
  %1141 = vmatmul.mubr.f32.gmra.mrb[0].mxu0 %v916
  %v1142 = vpop.f32.mrb[0].mxu0
  %v1143 = vadd.f32 0.0, %v1142
  %v1144 = vpop.f32.mrb[0].mxu0
  %v1145 = vadd.f32 0.0, %v1144
  %1146 = vmatprep.mubr.f32.mxu0 %v1017
  %1147 = vmatmul.mubr.f32.gmra.mrb[0].mxu0 %v918
  %v1148 = vpop.f32.mrb[0].mxu0
  %v1149 = vadd.f32 0.0, %v1148
  %v1150 = vpop.f32.mrb[0].mxu0
  %v1151 = vadd.f32 0.0, %v1150
  %1152 = vmatprep.mubr.f32.mxu0 %v1020
  %1153 = vmatmul.mubr.f32.gmra.mrb[0].mxu0 %v920
  %v1154 = vpop.f32.mrb[0].mxu0
  %v1155 = vadd.f32 0.0, %v1154
  %v1156 = vpop.f32.mrb[0].mxu0
  %v1157 = vadd.f32 0.0, %v1156
  %1158 = vmatprep.mubr.f32.mxu0 %v1023
  %1159 = vmatmul.mubr.f32.gmra.mrb[0].mxu0 %v922
  %v1160 = vpop.f32.mrb[0].mxu0
  %v1161 = vadd.f32 0.0, %v1160
  %v1162 = vpop.f32.mrb[0].mxu0
  %v1163 = vadd.f32 0.0, %v1162
  %1164 = vmatprep.mubr.f32.mxu0 %v1026
  %1165 = vmatmul.mubr.f32.gmra.mrb[0].mxu0 %v924
  %v1166 = vpop.f32.mrb[0].mxu0
  %v1167 = vadd.f32 0.0, %v1166
  %v1168 = vpop.f32.mrb[0].mxu0
  %v1169 = vadd.f32 0.0, %v1168
  %1170 = vmatprep.mubr.f32.mxu0 %v1029
  %1171 = vmatmul.mubr.f32.gmra.mrb[0].mxu0 %v926
  %v1172 = vpop.f32.mrb[0].mxu0
  %v1173 = vadd.f32 0.0, %v1172
  %v1174 = vpop.f32.mrb[0].mxu0
  %v1175 = vadd.f32 0.0, %v1174
  %1176 = vmatprep.mubr.f32.mxu0 %v1032
  %1177 = vmatmul.mubr.f32.gmra.mrb[0].mxu0 %v928
  %v1178 = vpop.f32.mrb[0].mxu0
  %v1179 = vadd.f32 0.0, %v1178
  %v1180 = vpop.f32.mrb[0].mxu0
  %v1181 = vadd.f32 0.0, %v1180
  %1182 = vmatprep.mubr.f32.mxu0 %v1035
  %1183 = vmatmul.mubr.f32.gmra.mrb[0].mxu0 %v930
  %v1184 = vpop.f32.mrb[0].mxu0
  %v1185 = vadd.f32 0.0, %v1184
  %v1186 = vpop.f32.mrb[0].mxu0
  %v1187 = vadd.f32 0.0, %v1186
  %1188 = vmatprep.mubr.f32.mxu0 %v1038
  %1189 = vmatmul.mubr.f32.gmra.mrb[0].mxu0 %v932
  %v1190 = vpop.f32.mrb[0].mxu0
  %v1191 = vadd.f32 0.0, %v1190
  %v1192 = vpop.f32.mrb[0].mxu0
  %v1193 = vadd.f32 0.0, %v1192
  %1194 = vmatprep.mubr.f32.mxu0 %v1041
  %1195 = vmatmul.mubr.f32.gmra.mrb[0].mxu0 %v934
  %v1196 = vpop.f32.mrb[0].mxu0
  %v1197 = vadd.f32 0.0, %v1196
  %v1198 = vpop.f32.mrb[0].mxu0
  %v1199 = vadd.f32 0.0, %v1198
  %1200 = vmatprep.mubr.f32.mxu0 %v1044
  %1201 = vmatmul.mubr.f32.gmra.mrb[0].mxu0 %v936
  %v1202 = vpop.f32.mrb[0].mxu0
  %v1203 = vadd.f32 0.0, %v1202
  %v1204 = vpop.f32.mrb[0].mxu0
  %v1205 = vadd.f32 0.0, %v1204
  %1206 = vmatprep.mubr.f32.mxu0 %v1047
  %1207 = vmatmul.mubr.f32.gmra.mrb[0].mxu0 %v938
  %v1208 = vpop.f32.mrb[0].mxu0
  %v1209 = vadd.f32 0.0, %v1208
  %v1210 = vpop.f32.mrb[0].mxu0
  %v1211 = vadd.f32 0.0, %v1210
  %1212 = vmatprep.mubr.f32.mxu0 %v1050
  %1213 = vmatmul.mubr.f32.gmra.mrb[0].mxu0 %v940
  %v1214 = vpop.f32.mrb[0].mxu0
  %v1215 = vadd.f32 0.0, %v1214
  %v1216 = vpop.f32.mrb[0].mxu0
  %v1217 = vadd.f32 0.0, %v1216
  %1218 = vmatprep.mubr.f32.mxu0 %v1053
  %1219 = vmatmul.mubr.f32.gmra.mrb[0].mxu0 %v942
  %v1220 = vpop.f32.mrb[0].mxu0
  %v1221 = vadd.f32 0.0, %v1220
  %v1222 = vpop.f32.mrb[0].mxu0
  %v1223 = vadd.f32 0.0, %v1222
  %1224 = vmatprep.mubr.f32.mxu0 %v1056
  %1225 = vmatmul.mubr.f32.gmra.mrb[0].mxu0 %v944
  %v1226 = vpop.f32.mrb[0].mxu0
  %v1227 = vadd.f32 0.0, %v1226
  %v1228 = vpop.f32.mrb[0].mxu0
  %v1229 = vadd.f32 0.0, %v1228
  %1230 = vmatprep.mubr.f32.mxu0 %v1059
  %1231 = vmatmul.mubr.f32.gmra.mrb[0].mxu0 %v946
  %v1232 = vpop.f32.mrb[0].mxu0
  %v1233 = vadd.f32 0.0, %v1232
  %v1234 = vpop.f32.mrb[0].mxu0
  %v1235 = vadd.f32 0.0, %v1234
  %1236 = vmatprep.mubr.f32.mxu0 %v1062
  %1237 = vmatmul.mubr.f32.gmra.mrb[0].mxu0 %v948
  %v1238 = vpop.f32.mrb[0].mxu0
  %v1239 = vadd.f32 0.0, %v1238
  %v1240 = vpop.f32.mrb[0].mxu0
  %v1241 = vadd.f32 0.0, %v1240
  %1242 = vmatprep.mubr.f32.mxu0 %v1065
  %1243 = vmatmul.mubr.f32.gmra.mrb[0].mxu0 %v950
  %v1244 = vpop.f32.mrb[0].mxu0
  %v1245 = vadd.f32 0.0, %v1244
  %v1246 = vpop.f32.mrb[0].mxu0
  %v1247 = vadd.f32 0.0, %v1246
  %1248 = vmatprep.mubr.f32.mxu0 %v1068
  %1249 = vmatmul.mubr.f32.gmra.mrb[0].mxu0 %v952
  %v1250 = vpop.f32.mrb[0].mxu0
  %v1251 = vadd.f32 0.0, %v1250
  %v1252 = vpop.f32.mrb[0].mxu0
  %v1253 = vadd.f32 0.0, %v1252
  %1254 = vmatprep.mubr.f32.mxu0 %v1071
  %1255 = vmatmul.mubr.f32.gmra.mrb[0].mxu0 %v954
  %v1256 = vpop.f32.mrb[0].mxu0
  %v1257 = vadd.f32 0.0, %v1256
  %v1258 = vpop.f32.mrb[0].mxu0
  %v1259 = vadd.f32 0.0, %v1258
  %1260 = vmatprep.mubr.f32.mxu0 %v1074
  %1261 = vmatmul.mubr.f32.gmra.mrb[0].mxu0 %v956
  %v1262 = vpop.f32.mrb[0].mxu0
  %v1263 = vadd.f32 0.0, %v1262
  %v1264 = vpop.f32.mrb[0].mxu0
  %v1265 = vadd.f32 0.0, %v1264
  %1266 = vdwg.mxu0
  %1267 = vst [vmem:[#allocation4] sm:$0xff] %v1143
  %vm1268 = vcmask 130048
  %1269 = vst.msk [vmem:[#allocation4 + $0x8] sm:$0xff] %vm1268, %v1145
  %1270 = vst [vmem:[#allocation4 + $0x10] sm:$0xff] %v1149
  %1271 = vst.msk [vmem:[#allocation4 + $0x18] sm:$0xff] %vm1268, %v1151
  %1272 = vst [vmem:[#allocation4 + $0x20] sm:$0xff] %v1155
  %1273 = vst.msk [vmem:[#allocation4 + $0x28] sm:$0xff] %vm1268, %v1157
  %1274 = vst [vmem:[#allocation4 + $0x30] sm:$0xff] %v1161
  %1275 = vst.msk [vmem:[#allocation4 + $0x38] sm:$0xff] %vm1268, %v1163
  %1276 = vst [vmem:[#allocation4 + $0x40] sm:$0xff] %v1167
  %1277 = vst.msk [vmem:[#allocation4 + $0x48] sm:$0xff] %vm1268, %v1169
  %1278 = vst [vmem:[#allocation4 + $0x50] sm:$0xff] %v1173
  %1279 = vst.msk [vmem:[#allocation4 + $0x58] sm:$0xff] %vm1268, %v1175
  %1280 = vst [vmem:[#allocation4 + $0x60] sm:$0xff] %v1179
  %1281 = vst.msk [vmem:[#allocation4 + $0x68] sm:$0xff] %vm1268, %v1181
  %1282 = vst [vmem:[#allocation4 + $0x70] sm:$0xff] %v1185
  %1283 = vst.msk [vmem:[#allocation4 + $0x78] sm:$0xff] %vm1268, %v1187
  %1284 = vst [vmem:[#allocation4 + $0x80] sm:$0xff] %v1191
  %1285 = vst.msk [vmem:[#allocation4 + $0x88] sm:$0xff] %vm1268, %v1193
  %1286 = vst [vmem:[#allocation4 + $0x90] sm:$0xff] %v1197
  %1287 = vst.msk [vmem:[#allocation4 + $0x98] sm:$0xff] %vm1268, %v1199
  %1288 = vst [vmem:[#allocation4 + $0xa0] sm:$0xff] %v1203
  %1289 = vst.msk [vmem:[#allocation4 + $0xa8] sm:$0xff] %vm1268, %v1205
  %1290 = vst [vmem:[#allocation4 + $0xb0] sm:$0xff] %v1209
  %1291 = vst.msk [vmem:[#allocation4 + $0xb8] sm:$0xff] %vm1268, %v1211
  %1292 = vst [vmem:[#allocation4 + $0xc0] sm:$0xff] %v1215
  %1293 = vst.msk [vmem:[#allocation4 + $0xc8] sm:$0xff] %vm1268, %v1217
  %1294 = vst [vmem:[#allocation4 + $0xd0] sm:$0xff] %v1221
  %1295 = vst.msk [vmem:[#allocation4 + $0xd8] sm:$0xff] %vm1268, %v1223
  %1296 = vst [vmem:[#allocation4 + $0xe0] sm:$0xff] %v1227
  %1297 = vst.msk [vmem:[#allocation4 + $0xe8] sm:$0xff] %vm1268, %v1229
  %1298 = vst [vmem:[#allocation4 + $0xf0] sm:$0xff] %v1233
  %1299 = vst.msk [vmem:[#allocation4 + $0xf8] sm:$0xff] %vm1268, %v1235
  %1300 = vst [vmem:[#allocation4 + $0x100] sm:$0xff] %v1239
  %1301 = vst.msk [vmem:[#allocation4 + $0x108] sm:$0xff] %vm1268, %v1241
  %1302 = vst [vmem:[#allocation4 + $0x110] sm:$0xff] %v1245
  %1303 = vst.msk [vmem:[#allocation4 + $0x118] sm:$0xff] %vm1268, %v1247
  %1304 = vst [vmem:[#allocation4 + $0x120] sm:$0xff] %v1251
  %1305 = vst.msk [vmem:[#allocation4 + $0x128] sm:$0xff] %vm1268, %v1253
  %1306 = vst [vmem:[#allocation4 + $0x130] sm:$0xff] %v1257
  %1307 = vst.msk [vmem:[#allocation4 + $0x138] sm:$0xff] %vm1268, %v1259
  %1308 = vst [vmem:[#allocation4 + $0x140] sm:$0xff] %v1263
  %1309 = vst.msk [vmem:[#allocation4 + $0x148] sm:$0xff] %vm1268, %v1265
  %v1310 = vld [vmem:[#allocation4] sm:$0xff]
  %v1311 = vld [vmem:[#allocation4 + $0x8] sm:$0xff]
  %v1312 = vld [vmem:[#allocation4 + $0x10] sm:$0xff]
  %v1313 = vld [vmem:[#allocation4 + $0x18] sm:$0xff]
  %v1314 = vld [vmem:[#allocation4 + $0x20] sm:$0xff]
  %v1315 = vld [vmem:[#allocation4 + $0x28] sm:$0xff]
  %v1316 = vld [vmem:[#allocation4 + $0x30] sm:$0xff]
  %v1317 = vld [vmem:[#allocation4 + $0x38] sm:$0xff]
  %v1318 = vld [vmem:[#allocation4 + $0x40] sm:$0xff]
  %v1319 = vld [vmem:[#allocation4 + $0x48] sm:$0xff]
  %v1320 = vld [vmem:[#allocation4 + $0x50] sm:$0xff]
  %v1321 = vld [vmem:[#allocation4 + $0x58] sm:$0xff]
  %v1322 = vld [vmem:[#allocation4 + $0x60] sm:$0xff]
  %v1323 = vld [vmem:[#allocation4 + $0x68] sm:$0xff]
  %v1324 = vld [vmem:[#allocation4 + $0x70] sm:$0xff]
  %v1325 = vld [vmem:[#allocation4 + $0x78] sm:$0xff]
  %v1326 = vld [vmem:[#allocation4 + $0x80] sm:$0xff]
  %v1327 = vld [vmem:[#allocation4 + $0x88] sm:$0xff]
  %v1328 = vld [vmem:[#allocation4 + $0x90] sm:$0xff]
  %v1329 = vld [vmem:[#allocation4 + $0x98] sm:$0xff]
  %v1330 = vld [vmem:[#allocation4 + $0xa0] sm:$0xff]
  %v1331 = vld [vmem:[#allocation4 + $0xa8] sm:$0xff]
  %v1332 = vld [vmem:[#allocation4 + $0xb0] sm:$0xff]
  %v1333 = vld [vmem:[#allocation4 + $0xb8] sm:$0xff]
  %v1334 = vld [vmem:[#allocation4 + $0xc0] sm:$0xff]
  %v1335 = vld [vmem:[#allocation4 + $0xc8] sm:$0xff]
  %v1336 = vld [vmem:[#allocation4 + $0xd0] sm:$0xff]
  %v1337 = vld [vmem:[#allocation4 + $0xd8] sm:$0xff]
  %v1338 = vld [vmem:[#allocation4 + $0xe0] sm:$0xff]
  %v1339 = vld [vmem:[#allocation4 + $0xe8] sm:$0xff]
  %v1340 = vld [vmem:[#allocation4 + $0xf0] sm:$0xff]
  %v1341 = vld [vmem:[#allocation4 + $0xf8] sm:$0xff]
  %v1342 = vld [vmem:[#allocation4 + $0x100] sm:$0xff]
  %v1343 = vld [vmem:[#allocation4 + $0x108] sm:$0xff]
  %v1344 = vld [vmem:[#allocation4 + $0x110] sm:$0xff]
  %v1345 = vld [vmem:[#allocation4 + $0x118] sm:$0xff]
  %v1346 = vld [vmem:[#allocation4 + $0x120] sm:$0xff]
  %v1347 = vld [vmem:[#allocation4 + $0x128] sm:$0xff]
  %v1348 = vld [vmem:[#allocation4 + $0x130] sm:$0xff]
  %v1349 = vld [vmem:[#allocation4 + $0x138] sm:$0xff]
  %v1350 = vld [vmem:[#allocation4 + $0x140] sm:$0x7f]
  %v1351 = vld [vmem:[#allocation4 + $0x148] sm:$0x7f]
  %v1352 = vld [vmem:[#allocation4] sm:$0xfe]
  %v1353 = vld [vmem:[#allocation4 + $0x8] sm:$0xfe]
  %v1354 = vld [vmem:[#allocation4 + $0x140] sm:$0xff]
  %v1355 = vld [vmem:[#allocation4 + $0x148] sm:$0xff]
  %vm1398 = vcmask 1046528
  %v1399 = vrot.slane %v1352, 1
  %v1400 = vrot.slane %v1312, 1
  %v1401 = vsel %vm1398, %v1399, %v1400
  %v1402 = vrot.slane %v1353, 1
  %v1403 = vrot.slane %v1313, 1
  %v1404 = vsel %vm1398, %v1402, %v1403
  %v1405 = vrot.slane %v1314, 1
  %v1406 = vsel %vm1398, %v1400, %v1405
  %v1407 = vrot.slane %v1315, 1
  %v1408 = vsel %vm1398, %v1403, %v1407
  %v1409 = vrot.slane %v1316, 1
  %v1410 = vsel %vm1398, %v1405, %v1409
  %v1411 = vrot.slane %v1317, 1
  %v1412 = vsel %vm1398, %v1407, %v1411
  %v1413 = vrot.slane %v1318, 1
  %v1414 = vsel %vm1398, %v1409, %v1413
  %v1415 = vrot.slane %v1319, 1
  %v1416 = vsel %vm1398, %v1411, %v1415
  %v1417 = vrot.slane %v1320, 1
  %v1418 = vsel %vm1398, %v1413, %v1417
  %v1419 = vrot.slane %v1321, 1
  %v1420 = vsel %vm1398, %v1415, %v1419
  %v1421 = vrot.slane %v1322, 1
  %v1422 = vsel %vm1398, %v1417, %v1421
  %v1423 = vrot.slane %v1323, 1
  %v1424 = vsel %vm1398, %v1419, %v1423
  %v1425 = vrot.slane %v1324, 1
  %v1426 = vsel %vm1398, %v1421, %v1425
  %v1427 = vrot.slane %v1325, 1
  %v1428 = vsel %vm1398, %v1423, %v1427
  %v1429 = vrot.slane %v1326, 1
  %v1430 = vsel %vm1398, %v1425, %v1429
  %v1431 = vrot.slane %v1327, 1
  %v1432 = vsel %vm1398, %v1427, %v1431
  %v1433 = vrot.slane %v1328, 1
  %v1434 = vsel %vm1398, %v1429, %v1433
  %v1435 = vrot.slane %v1329, 1
  %v1436 = vsel %vm1398, %v1431, %v1435
  %v1437 = vrot.slane %v1330, 1
  %v1438 = vsel %vm1398, %v1433, %v1437
  %v1439 = vrot.slane %v1331, 1
  %v1440 = vsel %vm1398, %v1435, %v1439
  %v1441 = vrot.slane %v1332, 1
  %v1442 = vsel %vm1398, %v1437, %v1441
  %v1443 = vrot.slane %v1333, 1
  %v1444 = vsel %vm1398, %v1439, %v1443
  %v1445 = vrot.slane %v1334, 1
  %v1446 = vsel %vm1398, %v1441, %v1445
  %v1447 = vrot.slane %v1335, 1
  %v1448 = vsel %vm1398, %v1443, %v1447
  %v1449 = vrot.slane %v1336, 1
  %v1450 = vsel %vm1398, %v1445, %v1449
  %v1451 = vrot.slane %v1337, 1
  %v1452 = vsel %vm1398, %v1447, %v1451
  %v1453 = vrot.slane %v1338, 1
  %v1454 = vsel %vm1398, %v1449, %v1453
  %v1455 = vrot.slane %v1339, 1
  %v1456 = vsel %vm1398, %v1451, %v1455
  %v1457 = vrot.slane %v1340, 1
  %v1458 = vsel %vm1398, %v1453, %v1457
  %v1459 = vrot.slane %v1341, 1
  %v1460 = vsel %vm1398, %v1455, %v1459
  %v1461 = vrot.slane %v1342, 1
  %v1462 = vsel %vm1398, %v1457, %v1461
  %v1463 = vrot.slane %v1343, 1
  %v1464 = vsel %vm1398, %v1459, %v1463
  %v1465 = vrot.slane %v1344, 1
  %v1466 = vsel %vm1398, %v1461, %v1465
  %v1467 = vrot.slane %v1345, 1
  %v1468 = vsel %vm1398, %v1463, %v1467
  %v1469 = vrot.slane %v1346, 1
  %v1470 = vsel %vm1398, %v1465, %v1469
  %v1471 = vrot.slane %v1347, 1
  %v1472 = vsel %vm1398, %v1467, %v1471
  %v1473 = vrot.slane %v1348, 1
  %v1474 = vsel %vm1398, %v1469, %v1473
  %v1475 = vrot.slane %v1349, 1
  %v1476 = vsel %vm1398, %v1471, %v1475
  %v1477 = vrot.slane %v1354, 1
  %v1478 = vsel %vm1398, %v1473, %v1477
  %v1479 = vrot.slane %v1355, 1
  %v1480 = vsel %vm1398, %v1475, %v1479
  %v1523 = vmax.f32 %v1310, %v1401
  %v1524 = vmax.f32 %v1311, %v1404
  %v1525 = vmax.f32 %v1312, %v1406
  %v1526 = vmax.f32 %v1313, %v1408
  %v1527 = vmax.f32 %v1314, %v1410
  %v1528 = vmax.f32 %v1315, %v1412
  %v1529 = vmax.f32 %v1316, %v1414
  %v1530 = vmax.f32 %v1317, %v1416
  %v1531 = vmax.f32 %v1318, %v1418
  %v1532 = vmax.f32 %v1319, %v1420
  %v1533 = vmax.f32 %v1320, %v1422
  %v1534 = vmax.f32 %v1321, %v1424
  %v1535 = vmax.f32 %v1322, %v1426
  %v1536 = vmax.f32 %v1323, %v1428
  %v1537 = vmax.f32 %v1324, %v1430
  %v1538 = vmax.f32 %v1325, %v1432
  %v1539 = vmax.f32 %v1326, %v1434
  %v1540 = vmax.f32 %v1327, %v1436
  %v1541 = vmax.f32 %v1328, %v1438
  %v1542 = vmax.f32 %v1329, %v1440
  %v1543 = vmax.f32 %v1330, %v1442
  %v1544 = vmax.f32 %v1331, %v1444
  %v1545 = vmax.f32 %v1332, %v1446
  %v1546 = vmax.f32 %v1333, %v1448
  %v1547 = vmax.f32 %v1334, %v1450
  %v1548 = vmax.f32 %v1335, %v1452
  %v1549 = vmax.f32 %v1336, %v1454
  %v1550 = vmax.f32 %v1337, %v1456
  %v1551 = vmax.f32 %v1338, %v1458
  %v1552 = vmax.f32 %v1339, %v1460
  %v1553 = vmax.f32 %v1340, %v1462
  %v1554 = vmax.f32 %v1341, %v1464
  %v1555 = vmax.f32 %v1342, %v1466
  %v1556 = vmax.f32 %v1343, %v1468
  %v1557 = vmax.f32 %v1344, %v1470
  %v1558 = vmax.f32 %v1345, %v1472
  %v1559 = vmax.f32 %v1346, %v1474
  %v1560 = vmax.f32 %v1347, %v1476
  %v1561 = vmax.f32 %v1348, %v1478
  %v1562 = vmax.f32 %v1349, %v1480
  %v1563 = vmax.f32 %v1350, %v1477
  %v1564 = vmax.f32 %v1351, %v1479
  %v1565 = vld [vmem:[%s4] sm:$0xff]
  %v1566 = vld [vmem:[%s4 + $0x8] sm:$0xff]
  %v1567 = vld [vmem:[%s4 + $0x10] sm:$0xff]
  %v1568 = vld [vmem:[%s4 + $0x18] sm:$0xff]
  %v1569 = vld [vmem:[%s4 + $0x20] sm:$0xff]
  %v1570 = vld [vmem:[%s4 + $0x28] sm:$0xff]
  %v1571 = vld [vmem:[%s4 + $0x30] sm:$0xff]
  %v1572 = vld [vmem:[%s4 + $0x38] sm:$0xff]
  %v1573 = vld [vmem:[%s4 + $0x40] sm:$0xff]
  %v1574 = vld [vmem:[%s4 + $0x48] sm:$0xff]
  %v1575 = vld [vmem:[%s4 + $0x50] sm:$0xff]
  %v1576 = vld [vmem:[%s4 + $0x58] sm:$0xff]
  %v1577 = vld [vmem:[%s4 + $0x60] sm:$0xff]
  %v1578 = vld [vmem:[%s4 + $0x68] sm:$0xff]
  %v1579 = vld [vmem:[%s4 + $0x70] sm:$0xff]
  %v1580 = vld [vmem:[%s4 + $0x78] sm:$0xff]
  %v1581 = vld [vmem:[%s4 + $0x80] sm:$0xff]
  %v1582 = vld [vmem:[%s4 + $0x88] sm:$0xff]
  %v1583 = vld [vmem:[%s4 + $0x90] sm:$0xff]
  %v1584 = vld [vmem:[%s4 + $0x98] sm:$0xff]
  %v1585 = vld [vmem:[%s4 + $0xa0] sm:$0xff]
  %v1586 = vld [vmem:[%s4 + $0xa8] sm:$0xff]
  %v1587 = vld [vmem:[%s4 + $0xb0] sm:$0xff]
  %v1588 = vld [vmem:[%s4 + $0xb8] sm:$0xff]
  %v1589 = vld [vmem:[%s4 + $0xc0] sm:$0xff]
  %v1590 = vld [vmem:[%s4 + $0xc8] sm:$0xff]
  %v1591 = vld [vmem:[%s4 + $0xd0] sm:$0xf]
  %v1592 = vld [vmem:[%s4 + $0xd8] sm:$0xf]
  %vm1593 = vcmask 318464
  %v1595 = vsel %vm1593, %v1566, 0
  %v1598 = vsel %vm1593, %v1568, 0
  %v1601 = vsel %vm1593, %v1570, 0
  %v1604 = vsel %vm1593, %v1572, 0
  %v1607 = vsel %vm1593, %v1574, 0
  %v1610 = vsel %vm1593, %v1576, 0
  %v1613 = vsel %vm1593, %v1578, 0
  %v1616 = vsel %vm1593, %v1580, 0
  %v1619 = vsel %vm1593, %v1582, 0
  %v1622 = vsel %vm1593, %v1584, 0
  %v1625 = vsel %vm1593, %v1586, 0
  %v1628 = vsel %vm1593, %v1588, 0
  %v1631 = vsel %vm1593, %v1590, 0
  %v1634 = vsel %vm1593, %v1592, 0
  %v1637 = vsel %vm1398, %v1563, 0
  %v1640 = vsel %vm1398, %v1564, 0
  %1642 = vmatprep.subr.mxu0 %v1524
  %1643 = vmatpush1.msra.mxu0 %v1523
  %1644 = vmatprep.subr.mxu0 %v1526
  %1645 = vmatpush1.msra.mxu0 %v1525
  %1646 = vmatprep.subr.mxu0 %v1528
  %1647 = vmatpush1.msra.mxu0 %v1527
  %1648 = vmatprep.subr.mxu0 %v1530
  %1649 = vmatpush1.msra.mxu0 %v1529
  %1650 = vmatprep.subr.mxu0 %v1532
  %1651 = vmatpush1.msra.mxu0 %v1531
  %1652 = vmatprep.subr.mxu0 %v1534
  %1653 = vmatpush1.msra.mxu0 %v1533
  %1654 = vmatprep.subr.mxu0 %v1536
  %1655 = vmatpush1.msra.mxu0 %v1535
  %1656 = vmatprep.subr.mxu0 %v1538
  %1657 = vmatpush1.msra.mxu0 %v1537
  %1658 = vmatprep.subr.mxu0 %v1540
  %1659 = vmatpush1.msra.mxu0 %v1539
  %1660 = vmatprep.subr.mxu0 %v1542
  %1661 = vmatpush1.msra.mxu0 %v1541
  %1662 = vmatprep.subr.mxu0 %v1544
  %1663 = vmatpush1.msra.mxu0 %v1543
  %1664 = vmatprep.subr.mxu0 %v1546
  %1665 = vmatpush1.msra.mxu0 %v1545
  %1666 = vmatprep.subr.mxu0 %v1548
  %1667 = vmatpush1.msra.mxu0 %v1547
  %1668 = vmatprep.subr.mxu0 %v1550
  %1669 = vmatpush1.msra.mxu0 %v1549
  %1670 = vmatprep.subr.mxu0 %v1552
  %1671 = vmatpush1.msra.mxu0 %v1551
  %1672 = vmatprep.subr.mxu0 %v1554
  %1673 = vmatpush1.msra.mxu0 %v1553
  %1674 = vmatprep.subr.mxu0 %v1556
  %1675 = vmatpush1.msra.mxu0 %v1555
  %1676 = vmatprep.subr.mxu0 %v1558
  %1677 = vmatpush1.msra.mxu0 %v1557
  %1678 = vmatprep.subr.mxu0 %v1560
  %1679 = vmatpush1.msra.mxu0 %v1559
  %1680 = vmatprep.subr.mxu0 %v1562
  %1681 = vmatpush1.msra.mxu0 %v1561
  %1682 = vmatprep.subr.mxu0 %v1640
  %1683 = vmatpush1.msra.mxu0 %v1637
  %1684 = vmatprep.subr.mxu0 0.0
  %1685 = vmatpush1.msra.mxu0 0.0
  %1686 = vmatprep.subr.mxu0 0.0
  %1687 = vmatpush1.msra.mxu0 0.0
  %1688 = vmatprep.subr.mxu0 0.0
  %1689 = vmatpush1.msra.mxu0 0.0
  %1690 = vmatprep.subr.mxu0 0.0
  %1691 = vmatpush1.msra.mxu0 0.0
  %1692 = vmatprep.subr.mxu0 0.0
  %1693 = vmatpush1.msra.mxu0 0.0
  %1694 = vmatprep.subr.mxu0 0.0
  %1695 = vmatpush1.msra.mxu0 0.0
  %1696 = vmatprep.subr.mxu0 0.0
  %1697 = vmatpush1.msra.mxu0 0.0
  %1698 = vmatprep.subr.mxu0 0.0
  %1699 = vmatpush1.msra.mxu0 0.0
  %1700 = vmatprep.subr.mxu0 0.0
  %1701 = vmatpush1.msra.mxu0 0.0
  %1702 = vmatprep.subr.mxu0 0.0
  %1703 = vmatpush1.msra.mxu0 0.0
  %1704 = vmatprep.subr.mxu0 0.0
  %1705 = vmatpush1.msra.mxu0 0.0
  %1706 = vmatprep.mubr.f32.mxu0 %v1595
  %1707 = vmatmul.mubr.f32.gmra.mrb[0].mxu0 %v1565
  %v1708 = vpop.f32.mrb[0].mxu0
  %v1709 = vadd.f32 0.0, %v1708
  %v1710 = vpop.f32.mrb[0].mxu0
  %v1711 = vadd.f32 0.0, %v1710
  %1712 = vmatprep.mubr.f32.mxu0 %v1598
  %1713 = vmatmul.mubr.f32.gmra.mrb[0].mxu0 %v1567
  %v1714 = vpop.f32.mrb[0].mxu0
  %v1715 = vadd.f32 0.0, %v1714
  %v1716 = vpop.f32.mrb[0].mxu0
  %v1717 = vadd.f32 0.0, %v1716
  %1718 = vmatprep.mubr.f32.mxu0 %v1601
  %1719 = vmatmul.mubr.f32.gmra.mrb[0].mxu0 %v1569
  %v1720 = vpop.f32.mrb[0].mxu0
  %v1721 = vadd.f32 0.0, %v1720
  %v1722 = vpop.f32.mrb[0].mxu0
  %v1723 = vadd.f32 0.0, %v1722
  %1724 = vmatprep.mubr.f32.mxu0 %v1604
  %1725 = vmatmul.mubr.f32.gmra.mrb[0].mxu0 %v1571
  %v1726 = vpop.f32.mrb[0].mxu0
  %v1727 = vadd.f32 0.0, %v1726
  %v1728 = vpop.f32.mrb[0].mxu0
  %v1729 = vadd.f32 0.0, %v1728
  %1730 = vmatprep.mubr.f32.mxu0 %v1607
  %1731 = vmatmul.mubr.f32.gmra.mrb[0].mxu0 %v1573
  %v1732 = vpop.f32.mrb[0].mxu0
  %v1733 = vadd.f32 0.0, %v1732
  %v1734 = vpop.f32.mrb[0].mxu0
  %v1735 = vadd.f32 0.0, %v1734
  %1736 = vmatprep.mubr.f32.mxu0 %v1610
  %1737 = vmatmul.mubr.f32.gmra.mrb[0].mxu0 %v1575
  %v1738 = vpop.f32.mrb[0].mxu0
  %v1739 = vadd.f32 0.0, %v1738
  %v1740 = vpop.f32.mrb[0].mxu0
  %v1741 = vadd.f32 0.0, %v1740
  %1742 = vmatprep.mubr.f32.mxu0 %v1613
  %1743 = vmatmul.mubr.f32.gmra.mrb[0].mxu0 %v1577
  %v1744 = vpop.f32.mrb[0].mxu0
  %v1745 = vadd.f32 0.0, %v1744
  %v1746 = vpop.f32.mrb[0].mxu0
  %v1747 = vadd.f32 0.0, %v1746
  %1748 = vmatprep.mubr.f32.mxu0 %v1616
  %1749 = vmatmul.mubr.f32.gmra.mrb[0].mxu0 %v1579
  %v1750 = vpop.f32.mrb[0].mxu0
  %v1751 = vadd.f32 0.0, %v1750
  %v1752 = vpop.f32.mrb[0].mxu0
  %v1753 = vadd.f32 0.0, %v1752
  %1754 = vmatprep.mubr.f32.mxu0 %v1619
  %1755 = vmatmul.mubr.f32.gmra.mrb[0].mxu0 %v1581
  %v1756 = vpop.f32.mrb[0].mxu0
  %v1757 = vadd.f32 0.0, %v1756
  %v1758 = vpop.f32.mrb[0].mxu0
  %v1759 = vadd.f32 0.0, %v1758
  %1760 = vmatprep.mubr.f32.mxu0 %v1622
  %1761 = vmatmul.mubr.f32.gmra.mrb[0].mxu0 %v1583
  %v1762 = vpop.f32.mrb[0].mxu0
  %v1763 = vadd.f32 0.0, %v1762
  %v1764 = vpop.f32.mrb[0].mxu0
  %v1765 = vadd.f32 0.0, %v1764
  %1766 = vmatprep.mubr.f32.mxu0 %v1625
  %1767 = vmatmul.mubr.f32.gmra.mrb[0].mxu0 %v1585
  %v1768 = vpop.f32.mrb[0].mxu0
  %v1769 = vadd.f32 0.0, %v1768
  %v1770 = vpop.f32.mrb[0].mxu0
  %v1771 = vadd.f32 0.0, %v1770
  %1772 = vmatprep.mubr.f32.mxu0 %v1628
  %1773 = vmatmul.mubr.f32.gmra.mrb[0].mxu0 %v1587
  %v1774 = vpop.f32.mrb[0].mxu0
  %v1775 = vadd.f32 0.0, %v1774
  %v1776 = vpop.f32.mrb[0].mxu0
  %v1777 = vadd.f32 0.0, %v1776
  %1778 = vmatprep.mubr.f32.mxu0 %v1631
  %1779 = vmatmul.mubr.f32.gmra.mrb[0].mxu0 %v1589
  %v1780 = vpop.f32.mrb[0].mxu0
  %v1781 = vadd.f32 0.0, %v1780
  %v1782 = vpop.f32.mrb[0].mxu0
  %v1783 = vadd.f32 0.0, %v1782
  %1784 = vmatprep.mubr.f32.mxu0 %v1634
  %1785 = vmatmul.mubr.f32.gmra.mrb[0].mxu0 %v1591
  %v1786 = vpop.f32.mrb[0].mxu0
  %v1787 = vadd.f32 0.0, %v1786
  %v1788 = vpop.f32.mrb[0].mxu0
  %v1789 = vadd.f32 0.0, %v1788
  %1790 = vdwg.mxu0
  %1791 = vst [vmem:[#allocation5] sm:$0xff] %v1709
  %1792 = vst.msk [vmem:[#allocation5 + $0x8] sm:$0xff] %vm1268, %v1711
  %1793 = vst [vmem:[#allocation5 + $0x10] sm:$0xff] %v1715
  %1794 = vst.msk [vmem:[#allocation5 + $0x18] sm:$0xff] %vm1268, %v1717
  %1795 = vst [vmem:[#allocation5 + $0x20] sm:$0xff] %v1721
  %1796 = vst.msk [vmem:[#allocation5 + $0x28] sm:$0xff] %vm1268, %v1723
  %1797 = vst [vmem:[#allocation5 + $0x30] sm:$0xff] %v1727
  %1798 = vst.msk [vmem:[#allocation5 + $0x38] sm:$0xff] %vm1268, %v1729
  %1799 = vst [vmem:[#allocation5 + $0x40] sm:$0xff] %v1733
  %1800 = vst.msk [vmem:[#allocation5 + $0x48] sm:$0xff] %vm1268, %v1735
  %1801 = vst [vmem:[#allocation5 + $0x50] sm:$0xff] %v1739
  %1802 = vst.msk [vmem:[#allocation5 + $0x58] sm:$0xff] %vm1268, %v1741
  %1803 = vst [vmem:[#allocation5 + $0x60] sm:$0xff] %v1745
  %1804 = vst.msk [vmem:[#allocation5 + $0x68] sm:$0xff] %vm1268, %v1747
  %1805 = vst [vmem:[#allocation5 + $0x70] sm:$0xff] %v1751
  %1806 = vst.msk [vmem:[#allocation5 + $0x78] sm:$0xff] %vm1268, %v1753
  %1807 = vst [vmem:[#allocation5 + $0x80] sm:$0xff] %v1757
  %1808 = vst.msk [vmem:[#allocation5 + $0x88] sm:$0xff] %vm1268, %v1759
  %1809 = vst [vmem:[#allocation5 + $0x90] sm:$0xff] %v1763
  %1810 = vst.msk [vmem:[#allocation5 + $0x98] sm:$0xff] %vm1268, %v1765
  %1811 = vst [vmem:[#allocation5 + $0xa0] sm:$0xff] %v1769
  %1812 = vst.msk [vmem:[#allocation5 + $0xa8] sm:$0xff] %vm1268, %v1771
  %1813 = vst [vmem:[#allocation5 + $0xb0] sm:$0xff] %v1775
  %1814 = vst.msk [vmem:[#allocation5 + $0xb8] sm:$0xff] %vm1268, %v1777
  %1815 = vst [vmem:[#allocation5 + $0xc0] sm:$0xff] %v1781
  %1816 = vst.msk [vmem:[#allocation5 + $0xc8] sm:$0xff] %vm1268, %v1783
  %1817 = vst [vmem:[#allocation5 + $0xd0] sm:$0xf] %v1787
  %vm1818 = vcmask 125952
  %1819 = vst.msk [vmem:[#allocation5 + $0xd8] sm:$0xf] %vm1818, %v1789
  %v1820 = vld [vmem:[#allocation5] sm:$0xff]
  %v1821 = vld [vmem:[#allocation5 + $0x10] sm:$0xff]
  %v1822 = vld [vmem:[#allocation5 + $0x20] sm:$0x3]
  %1823 = vst.msk [vmem:[#allocation3] sm:$0xff] %vm128, %v1820
  %1824 = vst.msk [vmem:[#allocation3 + $0x8] sm:$0xff] %vm128, %v1821
  %vm1825 = vcmask 910336
  %1826 = vst.msk [vmem:[#allocation3 + $0x10] sm:$0x3] %vm1825, %v1822
  %v1827 = vld [vmem:[#allocation5] sm:$0xff]
  %v1828 = vld [vmem:[#allocation5 + $0x10] sm:$0xff]
  %v1829 = vld [vmem:[#allocation5 + $0x20] sm:$0x3]
  %1833 = vrot.lane.b32.xlu0 %v1827, 120
  %v1834 = vpop.permute.xlu0 %1833
  %1835 = vrot.lane.b32.xlu0 %v1828, 120
  %v1836 = vpop.permute.xlu0 %1835
  %1837 = vrot.lane.b32.xlu0 %v1829, 120
  %v1838 = vpop.permute.xlu0 %1837
  %1842 = vst.msk [vmem:[#allocation3 + $0x12] sm:$0xff] %vm128, %v1834
  %1843 = vst.msk [vmem:[#allocation3 + $0x1a] sm:$0xff] %vm128, %v1836
  %1844 = vst.msk [vmem:[#allocation3 + $0x22] sm:$0x3] %vm1825, %v1838
  %v1845 = vld [vmem:[#allocation5] sm:$0xff]
  %v1846 = vld [vmem:[#allocation5 + $0x10] sm:$0xff]
  %v1847 = vld [vmem:[#allocation5 + $0x20] sm:$0x3]
  %1851 = vrot.lane.b32.xlu0 %v1845, 112
  %v1852 = vpop.permute.xlu0 %1851
  %1853 = vrot.lane.b32.xlu0 %v1846, 112
  %v1854 = vpop.permute.xlu0 %1853
  %1855 = vrot.lane.b32.xlu0 %v1847, 112
  %v1856 = vpop.permute.xlu0 %1855
  %1860 = vst.msk [vmem:[#allocation3 + $0x24] sm:$0xff] %vm128, %v1852
  %1861 = vst.msk [vmem:[#allocation3 + $0x2c] sm:$0xff] %vm128, %v1854
  %1862 = vst.msk [vmem:[#allocation3 + $0x34] sm:$0x3] %vm1825, %v1856
  %v1863 = vld [vmem:[#allocation5] sm:$0xff]
  %v1864 = vld [vmem:[#allocation5 + $0x8] sm:$0xff]
  %v1865 = vld [vmem:[#allocation5 + $0x10] sm:$0xff]
  %v1866 = vld [vmem:[#allocation5 + $0x18] sm:$0xff]
  %v1867 = vld [vmem:[#allocation5 + $0x20] sm:$0x3]
  %v1868 = vld [vmem:[#allocation5 + $0x28] sm:$0x3]
  %1875 = vrot.lane.b32.xlu0 %v1863, 104
  %v1876 = vpop.permute.xlu0 %1875
  %1877 = vrot.lane.b32.xlu0 %v1864, 104
  %v1878 = vpop.permute.xlu0 %1877
  %1879 = vrot.lane.b32.xlu0 %v1865, 104
  %v1880 = vpop.permute.xlu0 %1879
  %1881 = vrot.lane.b32.xlu0 %v1866, 104
  %v1882 = vpop.permute.xlu0 %1881
  %1883 = vrot.lane.b32.xlu0 %v1867, 104
  %v1884 = vpop.permute.xlu0 %1883
  %1885 = vrot.lane.b32.xlu0 %v1868, 104
  %v1886 = vpop.permute.xlu0 %1885
  %v1887 = vsel %vm165, %v1876, %v1878
  %v1888 = vsel %vm165, %v1880, %v1882
  %v1889 = vsel %vm165, %v1884, %v1886
  %1893 = vst.msk [vmem:[#allocation3 + $0x36] sm:$0xff] %vm128, %v1887
  %1894 = vst.msk [vmem:[#allocation3 + $0x3e] sm:$0xff] %vm128, %v1888
  %1895 = vst.msk [vmem:[#allocation3 + $0x46] sm:$0x3] %vm1825, %v1889
  %v1896 = vld [vmem:[#allocation5] sm:$0xff]
  %v1897 = vld [vmem:[#allocation5 + $0x8] sm:$0xff]
  %v1898 = vld [vmem:[#allocation5 + $0x10] sm:$0xff]
  %v1899 = vld [vmem:[#allocation5 + $0x18] sm:$0xff]
  %v1900 = vld [vmem:[#allocation5 + $0x20] sm:$0x3]
  %v1901 = vld [vmem:[#allocation5 + $0x28] sm:$0x3]
  %1908 = vrot.lane.b32.xlu0 %v1896, 96
  %v1909 = vpop.permute.xlu0 %1908
  %1910 = vrot.lane.b32.xlu0 %v1897, 96
  %v1911 = vpop.permute.xlu0 %1910
  %1912 = vrot.lane.b32.xlu0 %v1898, 96
  %v1913 = vpop.permute.xlu0 %1912
  %1914 = vrot.lane.b32.xlu0 %v1899, 96
  %v1915 = vpop.permute.xlu0 %1914
  %1916 = vrot.lane.b32.xlu0 %v1900, 96
  %v1917 = vpop.permute.xlu0 %1916
  %1918 = vrot.lane.b32.xlu0 %v1901, 96
  %v1919 = vpop.permute.xlu0 %1918
  %v1920 = vsel %vm59, %v1909, %v1911
  %v1921 = vsel %vm59, %v1913, %v1915
  %v1922 = vsel %vm59, %v1917, %v1919
  %1926 = vst.msk [vmem:[#allocation3 + $0x48] sm:$0xff] %vm128, %v1920
  %1927 = vst.msk [vmem:[#allocation3 + $0x50] sm:$0xff] %vm128, %v1921
  %1928 = vst.msk [vmem:[#allocation3 + $0x58] sm:$0x3] %vm1825, %v1922
  %v1929 = vld [vmem:[#allocation5 + $0x20] sm:$0xfc]
  %v1930 = vld [vmem:[#allocation5 + $0x30] sm:$0xff]
  %v1931 = vld [vmem:[#allocation5 + $0x40] sm:$0xf]
  %vm1932 = vcmask 916482
  %1933 = vst.msk [vmem:[#allocation3 + $0x58] sm:$0xfc] %vm1932, %v1929
  %1934 = vst.msk [vmem:[#allocation3 + $0x60] sm:$0xff] %vm128, %v1930
  %vm1935 = vcmask 912384
  %1936 = vst.msk [vmem:[#allocation3 + $0x68] sm:$0xf] %vm1935, %v1931
  %v1937 = vld [vmem:[#allocation5 + $0x20] sm:$0xfc]
  %v1938 = vld [vmem:[#allocation5 + $0x30] sm:$0xff]
  %v1939 = vld [vmem:[#allocation5 + $0x40] sm:$0xf]
  %1943 = vrot.lane.b32.xlu0 %v1937, 120
  %v1944 = vpop.permute.xlu0 %1943
  %1945 = vrot.lane.b32.xlu0 %v1938, 120
  %v1946 = vpop.permute.xlu0 %1945
  %1947 = vrot.lane.b32.xlu0 %v1939, 120
  %v1948 = vpop.permute.xlu0 %1947
  %1952 = vst.msk [vmem:[#allocation3 + $0x6a] sm:$0xfc] %vm1932, %v1944
  %1953 = vst.msk [vmem:[#allocation3 + $0x72] sm:$0xff] %vm128, %v1946
  %1954 = vst.msk [vmem:[#allocation3 + $0x7a] sm:$0xf] %vm1935, %v1948
  %v1955 = vld [vmem:[#allocation5 + $0x20] sm:$0xfc]
  %v1956 = vld [vmem:[#allocation5 + $0x30] sm:$0xff]
  %v1957 = vld [vmem:[#allocation5 + $0x40] sm:$0xf]
  %1961 = vrot.lane.b32.xlu0 %v1955, 112
  %v1962 = vpop.permute.xlu0 %1961
  %1963 = vrot.lane.b32.xlu0 %v1956, 112
  %v1964 = vpop.permute.xlu0 %1963
  %1965 = vrot.lane.b32.xlu0 %v1957, 112
  %v1966 = vpop.permute.xlu0 %1965
  %1970 = vst.msk [vmem:[#allocation3 + $0x7c] sm:$0xfc] %vm1932, %v1962
  %1971 = vst.msk [vmem:[#allocation3 + $0x84] sm:$0xff] %vm128, %v1964
  %1972 = vst.msk [vmem:[#allocation3 + $0x8c] sm:$0xf] %vm1935, %v1966
  %v1973 = vld [vmem:[#allocation5 + $0x20] sm:$0xfc]
  %v1974 = vld [vmem:[#allocation5 + $0x28] sm:$0xfc]
  %v1975 = vld [vmem:[#allocation5 + $0x30] sm:$0xff]
  %v1976 = vld [vmem:[#allocation5 + $0x38] sm:$0xff]
  %v1977 = vld [vmem:[#allocation5 + $0x40] sm:$0xf]
  %v1978 = vld [vmem:[#allocation5 + $0x48] sm:$0xf]
  %1985 = vrot.lane.b32.xlu0 %v1973, 104
  %v1986 = vpop.permute.xlu0 %1985
  %1987 = vrot.lane.b32.xlu0 %v1974, 104
  %v1988 = vpop.permute.xlu0 %1987
  %1989 = vrot.lane.b32.xlu0 %v1975, 104
  %v1990 = vpop.permute.xlu0 %1989
  %1991 = vrot.lane.b32.xlu0 %v1976, 104
  %v1992 = vpop.permute.xlu0 %1991
  %1993 = vrot.lane.b32.xlu0 %v1977, 104
  %v1994 = vpop.permute.xlu0 %1993
  %1995 = vrot.lane.b32.xlu0 %v1978, 104
  %v1996 = vpop.permute.xlu0 %1995
  %v1997 = vsel %vm165, %v1986, %v1988
  %v1998 = vsel %vm165, %v1990, %v1992
  %v1999 = vsel %vm165, %v1994, %v1996
  %2003 = vst.msk [vmem:[#allocation3 + $0x8e] sm:$0xfc] %vm1932, %v1997
  %2004 = vst.msk [vmem:[#allocation3 + $0x96] sm:$0xff] %vm128, %v1998
  %2005 = vst.msk [vmem:[#allocation3 + $0x9e] sm:$0xf] %vm1935, %v1999
  %v2006 = vld [vmem:[#allocation5 + $0x20] sm:$0xfc]
  %v2007 = vld [vmem:[#allocation5 + $0x28] sm:$0xfc]
  %v2008 = vld [vmem:[#allocation5 + $0x30] sm:$0xff]
  %v2009 = vld [vmem:[#allocation5 + $0x38] sm:$0xff]
  %v2010 = vld [vmem:[#allocation5 + $0x40] sm:$0xf]
  %v2011 = vld [vmem:[#allocation5 + $0x48] sm:$0xf]
  %2018 = vrot.lane.b32.xlu0 %v2006, 96
  %v2019 = vpop.permute.xlu0 %2018
  %2020 = vrot.lane.b32.xlu0 %v2007, 96
  %v2021 = vpop.permute.xlu0 %2020
  %2022 = vrot.lane.b32.xlu0 %v2008, 96
  %v2023 = vpop.permute.xlu0 %2022
  %2024 = vrot.lane.b32.xlu0 %v2009, 96
  %v2025 = vpop.permute.xlu0 %2024
  %2026 = vrot.lane.b32.xlu0 %v2010, 96
  %v2027 = vpop.permute.xlu0 %2026
  %2028 = vrot.lane.b32.xlu0 %v2011, 96
  %v2029 = vpop.permute.xlu0 %2028
  %v2030 = vsel %vm59, %v2019, %v2021
  %v2031 = vsel %vm59, %v2023, %v2025
  %v2032 = vsel %vm59, %v2027, %v2029
  %2036 = vst.msk [vmem:[#allocation3 + $0xa0] sm:$0xfc] %vm1932, %v2030
  %2037 = vst.msk [vmem:[#allocation3 + $0xa8] sm:$0xff] %vm128, %v2031
  %2038 = vst.msk [vmem:[#allocation3 + $0xb0] sm:$0xf] %vm1935, %v2032
  %v2039 = vld [vmem:[#allocation5 + $0x40] sm:$0xf0]
  %v2040 = vld [vmem:[#allocation5 + $0x50] sm:$0xff]
  %v2041 = vld [vmem:[#allocation5 + $0x60] sm:$0x3f]
  %vm2042 = vcmask 916484
  %2043 = vst.msk [vmem:[#allocation3 + $0xb0] sm:$0xf0] %vm2042, %v2039
  %2044 = vst.msk [vmem:[#allocation3 + $0xb8] sm:$0xff] %vm128, %v2040
  %vm2045 = vcmask 914432
  %2046 = vst.msk [vmem:[#allocation3 + $0xc0] sm:$0x3f] %vm2045, %v2041
  %v2047 = vld [vmem:[#allocation5 + $0x40] sm:$0xf0]
  %v2048 = vld [vmem:[#allocation5 + $0x50] sm:$0xff]
  %v2049 = vld [vmem:[#allocation5 + $0x60] sm:$0x3f]
  %2053 = vrot.lane.b32.xlu0 %v2047, 120
  %v2054 = vpop.permute.xlu0 %2053
  %2055 = vrot.lane.b32.xlu0 %v2048, 120
  %v2056 = vpop.permute.xlu0 %2055
  %2057 = vrot.lane.b32.xlu0 %v2049, 120
  %v2058 = vpop.permute.xlu0 %2057
  %2062 = vst.msk [vmem:[#allocation3 + $0xc2] sm:$0xf0] %vm2042, %v2054
  %2063 = vst.msk [vmem:[#allocation3 + $0xca] sm:$0xff] %vm128, %v2056
  %2064 = vst.msk [vmem:[#allocation3 + $0xd2] sm:$0x3f] %vm2045, %v2058
  %v2065 = vld [vmem:[#allocation5 + $0x40] sm:$0xf0]
  %v2066 = vld [vmem:[#allocation5 + $0x50] sm:$0xff]
  %v2067 = vld [vmem:[#allocation5 + $0x60] sm:$0x3f]
  %2071 = vrot.lane.b32.xlu0 %v2065, 112
  %v2072 = vpop.permute.xlu0 %2071
  %2073 = vrot.lane.b32.xlu0 %v2066, 112
  %v2074 = vpop.permute.xlu0 %2073
  %2075 = vrot.lane.b32.xlu0 %v2067, 112
  %v2076 = vpop.permute.xlu0 %2075
  %2080 = vst.msk [vmem:[#allocation3 + $0xd4] sm:$0xf0] %vm2042, %v2072
  %2081 = vst.msk [vmem:[#allocation3 + $0xdc] sm:$0xff] %vm128, %v2074
  %2082 = vst.msk [vmem:[#allocation3 + $0xe4] sm:$0x3f] %vm2045, %v2076
  %v2083 = vld [vmem:[#allocation5 + $0x40] sm:$0xf0]
  %v2084 = vld [vmem:[#allocation5 + $0x48] sm:$0xf0]
  %v2085 = vld [vmem:[#allocation5 + $0x50] sm:$0xff]
  %v2086 = vld [vmem:[#allocation5 + $0x58] sm:$0xff]
  %v2087 = vld [vmem:[#allocation5 + $0x60] sm:$0x3f]
  %v2088 = vld [vmem:[#allocation5 + $0x68] sm:$0x3f]
  %2095 = vrot.lane.b32.xlu0 %v2083, 104
  %v2096 = vpop.permute.xlu0 %2095
  %2097 = vrot.lane.b32.xlu0 %v2084, 104
  %v2098 = vpop.permute.xlu0 %2097
  %2099 = vrot.lane.b32.xlu0 %v2085, 104
  %v2100 = vpop.permute.xlu0 %2099
  %2101 = vrot.lane.b32.xlu0 %v2086, 104
  %v2102 = vpop.permute.xlu0 %2101
  %2103 = vrot.lane.b32.xlu0 %v2087, 104
  %v2104 = vpop.permute.xlu0 %2103
  %2105 = vrot.lane.b32.xlu0 %v2088, 104
  %v2106 = vpop.permute.xlu0 %2105
  %v2107 = vsel %vm165, %v2096, %v2098
  %v2108 = vsel %vm165, %v2100, %v2102
  %v2109 = vsel %vm165, %v2104, %v2106
  %2113 = vst.msk [vmem:[#allocation3 + $0xe6] sm:$0xf0] %vm2042, %v2107
  %2114 = vst.msk [vmem:[#allocation3 + $0xee] sm:$0xff] %vm128, %v2108
  %2115 = vst.msk [vmem:[#allocation3 + $0xf6] sm:$0x3f] %vm2045, %v2109
  %v2116 = vld [vmem:[#allocation5 + $0x40] sm:$0xf0]
  %v2117 = vld [vmem:[#allocation5 + $0x48] sm:$0xf0]
  %v2118 = vld [vmem:[#allocation5 + $0x50] sm:$0xff]
  %v2119 = vld [vmem:[#allocation5 + $0x58] sm:$0xff]
  %v2120 = vld [vmem:[#allocation5 + $0x60] sm:$0x3f]
  %v2121 = vld [vmem:[#allocation5 + $0x68] sm:$0x3f]
  %2128 = vrot.lane.b32.xlu0 %v2116, 96
  %v2129 = vpop.permute.xlu0 %2128
  %2130 = vrot.lane.b32.xlu0 %v2117, 96
  %v2131 = vpop.permute.xlu0 %2130
  %2132 = vrot.lane.b32.xlu0 %v2118, 96
  %v2133 = vpop.permute.xlu0 %2132
  %2134 = vrot.lane.b32.xlu0 %v2119, 96
  %v2135 = vpop.permute.xlu0 %2134
  %2136 = vrot.lane.b32.xlu0 %v2120, 96
  %v2137 = vpop.permute.xlu0 %2136
  %2138 = vrot.lane.b32.xlu0 %v2121, 96
  %v2139 = vpop.permute.xlu0 %2138
  %v2140 = vsel %vm59, %v2129, %v2131
  %v2141 = vsel %vm59, %v2133, %v2135
  %v2142 = vsel %vm59, %v2137, %v2139
  %2146 = vst.msk [vmem:[#allocation3 + $0xf8] sm:$0xf0] %vm2042, %v2140
  %2147 = vst.msk [vmem:[#allocation3 + $0x100] sm:$0xff] %vm128, %v2141
  %2148 = vst.msk [vmem:[#allocation3 + $0x108] sm:$0x3f] %vm2045, %v2142
  %v2149 = vld [vmem:[#allocation5 + $0x60] sm:$0xc0]
  %v2150 = vld [vmem:[#allocation5 + $0x70] sm:$0xff]
  %v2151 = vld [vmem:[#allocation5 + $0x80] sm:$0xff]
  %vm2152 = vcmask 916486
  %2153 = vst.msk [vmem:[#allocation3 + $0x108] sm:$0xc0] %vm2152, %v2149
  %2154 = vst.msk [vmem:[#allocation3 + $0x110] sm:$0xff] %vm128, %v2150
  %2155 = vst.msk [vmem:[#allocation3 + $0x118] sm:$0xff] %vm128, %v2151
  %v2156 = vld [vmem:[#allocation5 + $0x60] sm:$0xc0]
  %v2157 = vld [vmem:[#allocation5 + $0x70] sm:$0xff]
  %v2158 = vld [vmem:[#allocation5 + $0x80] sm:$0xff]
  %2162 = vrot.lane.b32.xlu0 %v2156, 120
  %v2163 = vpop.permute.xlu0 %2162
  %2164 = vrot.lane.b32.xlu0 %v2157, 120
  %v2165 = vpop.permute.xlu0 %2164
  %2166 = vrot.lane.b32.xlu0 %v2158, 120
  %v2167 = vpop.permute.xlu0 %2166
  %2171 = vst.msk [vmem:[#allocation3 + $0x11a] sm:$0xc0] %vm2152, %v2163
  %2172 = vst.msk [vmem:[#allocation3 + $0x122] sm:$0xff] %vm128, %v2165
  %2173 = vst.msk [vmem:[#allocation3 + $0x12a] sm:$0xff] %vm128, %v2167
  %v2174 = vld [vmem:[#allocation5 + $0x60] sm:$0xc0]
  %v2175 = vld [vmem:[#allocation5 + $0x70] sm:$0xff]
  %v2176 = vld [vmem:[#allocation5 + $0x80] sm:$0xff]
  %2180 = vrot.lane.b32.xlu0 %v2174, 112
  %v2181 = vpop.permute.xlu0 %2180
  %2182 = vrot.lane.b32.xlu0 %v2175, 112
  %v2183 = vpop.permute.xlu0 %2182
  %2184 = vrot.lane.b32.xlu0 %v2176, 112
  %v2185 = vpop.permute.xlu0 %2184
  %2189 = vst.msk [vmem:[#allocation3 + $0x12c] sm:$0xc0] %vm2152, %v2181
  %2190 = vst.msk [vmem:[#allocation3 + $0x134] sm:$0xff] %vm128, %v2183
  %2191 = vst.msk [vmem:[#allocation3 + $0x13c] sm:$0xff] %vm128, %v2185
  %v2192 = vld [vmem:[#allocation5 + $0x60] sm:$0xc0]
  %v2193 = vld [vmem:[#allocation5 + $0x68] sm:$0xc0]
  %v2194 = vld [vmem:[#allocation5 + $0x70] sm:$0xff]
  %v2195 = vld [vmem:[#allocation5 + $0x78] sm:$0xff]
  %v2196 = vld [vmem:[#allocation5 + $0x80] sm:$0xff]
  %v2197 = vld [vmem:[#allocation5 + $0x88] sm:$0xff]
  %2204 = vrot.lane.b32.xlu0 %v2192, 104
  %v2205 = vpop.permute.xlu0 %2204
  %2206 = vrot.lane.b32.xlu0 %v2193, 104
  %v2207 = vpop.permute.xlu0 %2206
  %2208 = vrot.lane.b32.xlu0 %v2194, 104
  %v2209 = vpop.permute.xlu0 %2208
  %2210 = vrot.lane.b32.xlu0 %v2195, 104
  %v2211 = vpop.permute.xlu0 %2210
  %2212 = vrot.lane.b32.xlu0 %v2196, 104
  %v2213 = vpop.permute.xlu0 %2212
  %2214 = vrot.lane.b32.xlu0 %v2197, 104
  %v2215 = vpop.permute.xlu0 %2214
  %v2216 = vsel %vm165, %v2205, %v2207
  %v2217 = vsel %vm165, %v2209, %v2211
  %v2218 = vsel %vm165, %v2213, %v2215
  %2222 = vst.msk [vmem:[#allocation3 + $0x13e] sm:$0xc0] %vm2152, %v2216
  %2223 = vst.msk [vmem:[#allocation3 + $0x146] sm:$0xff] %vm128, %v2217
  %2224 = vst.msk [vmem:[#allocation3 + $0x14e] sm:$0xff] %vm128, %v2218
  %v2225 = vld [vmem:[#allocation5 + $0x60] sm:$0xc0]
  %v2226 = vld [vmem:[#allocation5 + $0x68] sm:$0xc0]
  %v2227 = vld [vmem:[#allocation5 + $0x70] sm:$0xff]
  %v2228 = vld [vmem:[#allocation5 + $0x78] sm:$0xff]
  %v2229 = vld [vmem:[#allocation5 + $0x80] sm:$0xff]
  %v2230 = vld [vmem:[#allocation5 + $0x88] sm:$0xff]
  %2237 = vrot.lane.b32.xlu0 %v2225, 96
  %v2238 = vpop.permute.xlu0 %2237
  %2239 = vrot.lane.b32.xlu0 %v2226, 96
  %v2240 = vpop.permute.xlu0 %2239
  %2241 = vrot.lane.b32.xlu0 %v2227, 96
  %v2242 = vpop.permute.xlu0 %2241
  %2243 = vrot.lane.b32.xlu0 %v2228, 96
  %v2244 = vpop.permute.xlu0 %2243
  %2245 = vrot.lane.b32.xlu0 %v2229, 96
  %v2246 = vpop.permute.xlu0 %2245
  %2247 = vrot.lane.b32.xlu0 %v2230, 96
  %v2248 = vpop.permute.xlu0 %2247
  %v2249 = vsel %vm59, %v2238, %v2240
  %v2250 = vsel %vm59, %v2242, %v2244
  %v2251 = vsel %vm59, %v2246, %v2248
  %2255 = vst.msk [vmem:[#allocation3 + $0x150] sm:$0xc0] %vm2152, %v2249
  %2256 = vst.msk [vmem:[#allocation3 + $0x158] sm:$0xff] %vm128, %v2250
  %2257 = vst.msk [vmem:[#allocation3 + $0x160] sm:$0xff] %vm128, %v2251
  %v2258 = vld [vmem:[#allocation5 + $0x90] sm:$0xff]
  %v2259 = vld [vmem:[#allocation5 + $0xa0] sm:$0xff]
  %v2260 = vld [vmem:[#allocation5 + $0xb0] sm:$0x3]
  %2261 = vst.msk [vmem:[#allocation3 + $0x168] sm:$0xff] %vm128, %v2258
  %2262 = vst.msk [vmem:[#allocation3 + $0x170] sm:$0xff] %vm128, %v2259
  %2263 = vst.msk [vmem:[#allocation3 + $0x178] sm:$0x3] %vm1825, %v2260
  %v2264 = vld [vmem:[#allocation5 + $0x90] sm:$0xff]
  %v2265 = vld [vmem:[#allocation5 + $0xa0] sm:$0xff]
  %v2266 = vld [vmem:[#allocation5 + $0xb0] sm:$0x3]
  %2270 = vrot.lane.b32.xlu0 %v2264, 120
  %v2271 = vpop.permute.xlu0 %2270
  %2272 = vrot.lane.b32.xlu0 %v2265, 120
  %v2273 = vpop.permute.xlu0 %2272
  %2274 = vrot.lane.b32.xlu0 %v2266, 120
  %v2275 = vpop.permute.xlu0 %2274
  %2279 = vst.msk [vmem:[#allocation3 + $0x17a] sm:$0xff] %vm128, %v2271
  %2280 = vst.msk [vmem:[#allocation3 + $0x182] sm:$0xff] %vm128, %v2273
  %2281 = vst.msk [vmem:[#allocation3 + $0x18a] sm:$0x3] %vm1825, %v2275
  %v2282 = vld [vmem:[#allocation5 + $0x90] sm:$0xff]
  %v2283 = vld [vmem:[#allocation5 + $0xa0] sm:$0xff]
  %v2284 = vld [vmem:[#allocation5 + $0xb0] sm:$0x3]
  %2288 = vrot.lane.b32.xlu0 %v2282, 112
  %v2289 = vpop.permute.xlu0 %2288
  %2290 = vrot.lane.b32.xlu0 %v2283, 112
  %v2291 = vpop.permute.xlu0 %2290
  %2292 = vrot.lane.b32.xlu0 %v2284, 112
  %v2293 = vpop.permute.xlu0 %2292
  %2297 = vst.msk [vmem:[#allocation3 + $0x18c] sm:$0xff] %vm128, %v2289
  %2298 = vst.msk [vmem:[#allocation3 + $0x194] sm:$0xff] %vm128, %v2291
  %2299 = vst.msk [vmem:[#allocation3 + $0x19c] sm:$0x3] %vm1825, %v2293
  %v2300 = vld [vmem:[#allocation5 + $0x90] sm:$0xff]
  %v2301 = vld [vmem:[#allocation5 + $0x98] sm:$0xff]
  %v2302 = vld [vmem:[#allocation5 + $0xa0] sm:$0xff]
  %v2303 = vld [vmem:[#allocation5 + $0xa8] sm:$0xff]
  %v2304 = vld [vmem:[#allocation5 + $0xb0] sm:$0x3]
  %v2305 = vld [vmem:[#allocation5 + $0xb8] sm:$0x3]
  %2312 = vrot.lane.b32.xlu0 %v2300, 104
  %v2313 = vpop.permute.xlu0 %2312
  %2314 = vrot.lane.b32.xlu0 %v2301, 104
  %v2315 = vpop.permute.xlu0 %2314
  %2316 = vrot.lane.b32.xlu0 %v2302, 104
  %v2317 = vpop.permute.xlu0 %2316
  %2318 = vrot.lane.b32.xlu0 %v2303, 104
  %v2319 = vpop.permute.xlu0 %2318
  %2320 = vrot.lane.b32.xlu0 %v2304, 104
  %v2321 = vpop.permute.xlu0 %2320
  %2322 = vrot.lane.b32.xlu0 %v2305, 104
  %v2323 = vpop.permute.xlu0 %2322
  %v2324 = vsel %vm165, %v2313, %v2315
  %v2325 = vsel %vm165, %v2317, %v2319
  %v2326 = vsel %vm165, %v2321, %v2323
  %2330 = vst.msk [vmem:[#allocation3 + $0x19e] sm:$0xff] %vm128, %v2324
  %2331 = vst.msk [vmem:[#allocation3 + $0x1a6] sm:$0xff] %vm128, %v2325
  %2332 = vst.msk [vmem:[#allocation3 + $0x1ae] sm:$0x3] %vm1825, %v2326
  %v2333 = vld [vmem:[#allocation5 + $0x90] sm:$0xff]
  %v2334 = vld [vmem:[#allocation5 + $0x98] sm:$0xff]
  %v2335 = vld [vmem:[#allocation5 + $0xa0] sm:$0xff]
  %v2336 = vld [vmem:[#allocation5 + $0xa8] sm:$0xff]
  %v2337 = vld [vmem:[#allocation5 + $0xb0] sm:$0x3]
  %v2338 = vld [vmem:[#allocation5 + $0xb8] sm:$0x3]
  %2345 = vrot.lane.b32.xlu0 %v2333, 96
  %v2346 = vpop.permute.xlu0 %2345
  %2347 = vrot.lane.b32.xlu0 %v2334, 96
  %v2348 = vpop.permute.xlu0 %2347
  %2349 = vrot.lane.b32.xlu0 %v2335, 96
  %v2350 = vpop.permute.xlu0 %2349
  %2351 = vrot.lane.b32.xlu0 %v2336, 96
  %v2352 = vpop.permute.xlu0 %2351
  %2353 = vrot.lane.b32.xlu0 %v2337, 96
  %v2354 = vpop.permute.xlu0 %2353
  %2355 = vrot.lane.b32.xlu0 %v2338, 96
  %v2356 = vpop.permute.xlu0 %2355
  %v2357 = vsel %vm59, %v2346, %v2348
  %v2358 = vsel %vm59, %v2350, %v2352
  %v2359 = vsel %vm59, %v2354, %v2356
  %2363 = vst.msk [vmem:[#allocation3 + $0x1b0] sm:$0xff] %vm128, %v2357
  %2364 = vst.msk [vmem:[#allocation3 + $0x1b8] sm:$0xff] %vm128, %v2358
  %2365 = vst.msk [vmem:[#allocation3 + $0x1c0] sm:$0x3] %vm1825, %v2359
  %v2366 = vld [vmem:[#allocation5 + $0xb0] sm:$0xfc]
  %v2367 = vld [vmem:[#allocation5 + $0xc0] sm:$0xff]
  %v2368 = vld [vmem:[#allocation5 + $0xd0] sm:$0xf]
  %2369 = vst.msk [vmem:[#allocation3 + $0x1c0] sm:$0xfc] %vm1932, %v2366
  %2370 = vst.msk [vmem:[#allocation3 + $0x1c8] sm:$0xff] %vm128, %v2367
  %2371 = vst.msk [vmem:[#allocation3 + $0x1d0] sm:$0xf] %vm1935, %v2368
  %v2372 = vld [vmem:[#allocation5 + $0xb0] sm:$0xfc]
  %v2373 = vld [vmem:[#allocation5 + $0xc0] sm:$0xff]
  %v2374 = vld [vmem:[#allocation5 + $0xd0] sm:$0xf]
  %2378 = vrot.lane.b32.xlu0 %v2372, 120
  %v2379 = vpop.permute.xlu0 %2378
  %2380 = vrot.lane.b32.xlu0 %v2373, 120
  %v2381 = vpop.permute.xlu0 %2380
  %2382 = vrot.lane.b32.xlu0 %v2374, 120
  %v2383 = vpop.permute.xlu0 %2382
  %2387 = vst.msk [vmem:[#allocation3 + $0x1d2] sm:$0xfc] %vm1932, %v2379
  %2388 = vst.msk [vmem:[#allocation3 + $0x1da] sm:$0xff] %vm128, %v2381
  %2389 = vst.msk [vmem:[#allocation3 + $0x1e2] sm:$0xf] %vm1935, %v2383
  %v2390 = vld [vmem:[#allocation5 + $0xb0] sm:$0xfc]
  %v2391 = vld [vmem:[#allocation5 + $0xc0] sm:$0xff]
  %v2392 = vld [vmem:[#allocation5 + $0xd0] sm:$0xf]
  %2396 = vrot.lane.b32.xlu0 %v2390, 112
  %v2397 = vpop.permute.xlu0 %2396
  %2398 = vrot.lane.b32.xlu0 %v2391, 112
  %v2399 = vpop.permute.xlu0 %2398
  %2400 = vrot.lane.b32.xlu0 %v2392, 112
  %v2401 = vpop.permute.xlu0 %2400
  %2405 = vst.msk [vmem:[#allocation3 + $0x1e4] sm:$0xfc] %vm1932, %v2397
  %2406 = vst.msk [vmem:[#allocation3 + $0x1ec] sm:$0xff] %vm128, %v2399
  %2407 = vst.msk [vmem:[#allocation3 + $0x1f4] sm:$0xf] %vm1935, %v2401
  %v2408 = vld [vmem:[#allocation5 + $0xb0] sm:$0xfc]
  %v2409 = vld [vmem:[#allocation5 + $0xb8] sm:$0xfc]
  %v2410 = vld [vmem:[#allocation5 + $0xc0] sm:$0xff]
  %v2411 = vld [vmem:[#allocation5 + $0xc8] sm:$0xff]
  %v2412 = vld [vmem:[#allocation5 + $0xd0] sm:$0xf]
  %v2413 = vld [vmem:[#allocation5 + $0xd8] sm:$0xf]
  %2420 = vrot.lane.b32.xlu0 %v2408, 104
  %v2421 = vpop.permute.xlu0 %2420
  %2422 = vrot.lane.b32.xlu0 %v2409, 104
  %v2423 = vpop.permute.xlu0 %2422
  %2424 = vrot.lane.b32.xlu0 %v2410, 104
  %v2425 = vpop.permute.xlu0 %2424
  %2426 = vrot.lane.b32.xlu0 %v2411, 104
  %v2427 = vpop.permute.xlu0 %2426
  %2428 = vrot.lane.b32.xlu0 %v2412, 104
  %v2429 = vpop.permute.xlu0 %2428
  %2430 = vrot.lane.b32.xlu0 %v2413, 104
  %v2431 = vpop.permute.xlu0 %2430
  %v2432 = vsel %vm165, %v2421, %v2423
  %v2433 = vsel %vm165, %v2425, %v2427
  %v2434 = vsel %vm165, %v2429, %v2431
  %2438 = vst.msk [vmem:[#allocation3 + $0x1f6] sm:$0xfc] %vm1932, %v2432
  %2439 = vst.msk [vmem:[#allocation3 + $0x1fe] sm:$0xff] %vm128, %v2433
  %2440 = vst.msk [vmem:[#allocation3 + $0x206] sm:$0xf] %vm1935, %v2434
  %v2441 = vld [vmem:[#allocation5 + $0xb0] sm:$0xfc]
  %v2442 = vld [vmem:[#allocation5 + $0xb8] sm:$0xfc]
  %v2443 = vld [vmem:[#allocation5 + $0xc0] sm:$0xff]
  %v2444 = vld [vmem:[#allocation5 + $0xc8] sm:$0xff]
  %v2445 = vld [vmem:[#allocation5 + $0xd0] sm:$0xf]
  %v2446 = vld [vmem:[#allocation5 + $0xd8] sm:$0xf]
  %2453 = vrot.lane.b32.xlu0 %v2441, 96
  %v2454 = vpop.permute.xlu0 %2453
  %2455 = vrot.lane.b32.xlu0 %v2442, 96
  %v2456 = vpop.permute.xlu0 %2455
  %2457 = vrot.lane.b32.xlu0 %v2443, 96
  %v2458 = vpop.permute.xlu0 %2457
  %2459 = vrot.lane.b32.xlu0 %v2444, 96
  %v2460 = vpop.permute.xlu0 %2459
  %2461 = vrot.lane.b32.xlu0 %v2445, 96
  %v2462 = vpop.permute.xlu0 %2461
  %2463 = vrot.lane.b32.xlu0 %v2446, 96
  %v2464 = vpop.permute.xlu0 %2463
  %v2465 = vsel %vm59, %v2454, %v2456
  %v2466 = vsel %vm59, %v2458, %v2460
  %v2467 = vsel %vm59, %v2462, %v2464
  %2471 = vst.msk [vmem:[#allocation3 + $0x208] sm:$0xfc] %vm1932, %v2465
  %2472 = vst.msk [vmem:[#allocation3 + $0x210] sm:$0xff] %vm128, %v2466
  %2473 = vst.msk [vmem:[#allocation3 + $0x218] sm:$0xf] %vm1935, %v2467
  %v2474 = vld [vmem:[%s5] sm:$0xff]
  %v2475 = vld [vmem:[%s5 + $0x8] sm:$0xff]
  %v2476 = vld [vmem:[%s5 + $0x10] sm:$0xff]
  %v2477 = vld [vmem:[%s5 + $0x18] sm:$0xff]
  %v2478 = vld [vmem:[%s5 + $0x20] sm:$0xff]
  %v2479 = vld [vmem:[%s5 + $0x28] sm:$0xff]
  %v2480 = vld [vmem:[%s5 + $0x30] sm:$0xff]
  %v2481 = vld [vmem:[%s5 + $0x38] sm:$0xff]
  %v2482 = vld [vmem:[%s5 + $0x40] sm:$0xff]
  %v2483 = vld [vmem:[%s5 + $0x48] sm:$0xff]
  %v2484 = vld [vmem:[%s5 + $0x50] sm:$0xff]
  %v2485 = vld [vmem:[%s5 + $0x58] sm:$0xff]
  %v2486 = vld [vmem:[%s5 + $0x60] sm:$0xff]
  %v2487 = vld [vmem:[%s5 + $0x68] sm:$0xff]
  %v2488 = vld [vmem:[%s5 + $0x70] sm:$0xff]
  %v2489 = vld [vmem:[%s5 + $0x78] sm:$0xff]
  %v2490 = vld [vmem:[%s5 + $0x80] sm:$0xff]
  %v2491 = vld [vmem:[%s5 + $0x88] sm:$0xff]
  %v2492 = vld [vmem:[%s5 + $0x90] sm:$0xff]
  %v2493 = vld [vmem:[%s5 + $0x98] sm:$0xff]
  %v2494 = vld [vmem:[%s5 + $0xa0] sm:$0xff]
  %v2495 = vld [vmem:[%s5 + $0xa8] sm:$0xff]
  %v2496 = vld [vmem:[%s5 + $0xb0] sm:$0xff]
  %v2497 = vld [vmem:[%s5 + $0xb8] sm:$0xff]
  %v2498 = vld [vmem:[%s5 + $0xc0] sm:$0xff]
  %v2499 = vld [vmem:[%s5 + $0xc8] sm:$0xff]
  %v2500 = vld [vmem:[%s5 + $0xd0] sm:$0xff]
  %v2501 = vld [vmem:[%s5 + $0xd8] sm:$0xff]
  %v2502 = vld [vmem:[%s5 + $0xe0] sm:$0xff]
  %v2503 = vld [vmem:[%s5 + $0xe8] sm:$0xff]
  %v2504 = vld [vmem:[%s5 + $0xf0] sm:$0xff]
  %v2505 = vld [vmem:[%s5 + $0xf8] sm:$0xff]
  %v2506 = vld [vmem:[%s5 + $0x100] sm:$0xff]
  %v2507 = vld [vmem:[%s5 + $0x108] sm:$0xff]
  %v2508 = vld [vmem:[%s5 + $0x110] sm:$0xff]
  %v2509 = vld [vmem:[%s5 + $0x118] sm:$0xff]
  %v2510 = vld [vmem:[%s5 + $0x120] sm:$0xff]
  %v2511 = vld [vmem:[%s5 + $0x128] sm:$0xff]
  %v2512 = vld [vmem:[%s5 + $0x130] sm:$0xff]
  %v2513 = vld [vmem:[%s5 + $0x138] sm:$0xff]
  %v2514 = vld [vmem:[%s5 + $0x140] sm:$0xff]
  %v2515 = vld [vmem:[%s5 + $0x148] sm:$0xff]
  %v2516 = vld [vmem:[%s5 + $0x150] sm:$0xff]
  %v2517 = vld [vmem:[%s5 + $0x158] sm:$0xff]
  %v2518 = vld [vmem:[%s5 + $0x160] sm:$0xff]
  %v2519 = vld [vmem:[%s5 + $0x168] sm:$0xff]
  %v2520 = vld [vmem:[%s5 + $0x170] sm:$0xff]
  %v2521 = vld [vmem:[%s5 + $0x178] sm:$0xff]
  %v2522 = vld [vmem:[%s5 + $0x180] sm:$0xff]
  %v2523 = vld [vmem:[%s5 + $0x188] sm:$0xff]
  %v2524 = vld [vmem:[%s5 + $0x190] sm:$0xff]
  %v2525 = vld [vmem:[%s5 + $0x198] sm:$0xff]
  %v2526 = vld [vmem:[%s5 + $0x1a0] sm:$0xff]
  %v2527 = vld [vmem:[%s5 + $0x1a8] sm:$0xff]
  %v2528 = vld [vmem:[%s5 + $0x1b0] sm:$0xff]
  %v2529 = vld [vmem:[%s5 + $0x1b8] sm:$0xff]
  %v2530 = vld [vmem:[%s5 + $0x1c0] sm:$0xff]
  %v2531 = vld [vmem:[%s5 + $0x1c8] sm:$0xff]
  %v2532 = vld [vmem:[%s5 + $0x1d0] sm:$0xff]
  %v2533 = vld [vmem:[%s5 + $0x1d8] sm:$0xff]
  %v2534 = vld [vmem:[%s5 + $0x1e0] sm:$0xff]
  %v2535 = vld [vmem:[%s5 + $0x1e8] sm:$0xff]
  %v2536 = vld [vmem:[%s5 + $0x1f0] sm:$0xff]
  %v2537 = vld [vmem:[%s5 + $0x1f8] sm:$0xff]
  %v2538 = vld [vmem:[%s5 + $0x200] sm:$0xff]
  %v2539 = vld [vmem:[%s5 + $0x208] sm:$0xff]
  %v2540 = vld [vmem:[%s5 + $0x210] sm:$0xff]
  %v2541 = vld [vmem:[%s5 + $0x218] sm:$0xff]
  %v2542 = vld [vmem:[%s5 + $0x220] sm:$0xff]
  %v2543 = vld [vmem:[%s5 + $0x228] sm:$0xff]
  %v2544 = vld [vmem:[%s5 + $0x230] sm:$0xff]
  %v2545 = vld [vmem:[%s5 + $0x238] sm:$0xff]
  %v2546 = vld [vmem:[%s5 + $0x240] sm:$0xff]
  %v2547 = vld [vmem:[%s5 + $0x248] sm:$0xff]
  %v2548 = vld [vmem:[%s5 + $0x250] sm:$0xff]
  %v2549 = vld [vmem:[%s5 + $0x258] sm:$0xff]
  %v2550 = vld [vmem:[%s5 + $0x260] sm:$0xff]
  %v2551 = vld [vmem:[%s5 + $0x268] sm:$0xff]
  %v2552 = vld [vmem:[%s5 + $0x270] sm:$0xff]
  %v2553 = vld [vmem:[%s5 + $0x278] sm:$0xff]
  %v2554 = vld [vmem:[%s5 + $0x280] sm:$0xff]
  %v2555 = vld [vmem:[%s5 + $0x288] sm:$0xff]
  %v2556 = vld [vmem:[%s5 + $0x290] sm:$0xff]
  %v2557 = vld [vmem:[%s5 + $0x298] sm:$0xff]
  %v2558 = vld [vmem:[%s5 + $0x2a0] sm:$0xff]
  %v2559 = vld [vmem:[%s5 + $0x2a8] sm:$0xff]
  %v2560 = vld [vmem:[%s5 + $0x2b0] sm:$0xff]
  %v2561 = vld [vmem:[%s5 + $0x2b8] sm:$0xff]
  %v2562 = vld [vmem:[%s5 + $0x2c0] sm:$0xff]
  %v2563 = vld [vmem:[%s5 + $0x2c8] sm:$0xff]
  %v2564 = vld [vmem:[%s5 + $0x2d0] sm:$0xff]
  %v2565 = vld [vmem:[%s5 + $0x2d8] sm:$0xff]
  %v2566 = vld [vmem:[%s5 + $0x2e0] sm:$0xff]
  %v2567 = vld [vmem:[%s5 + $0x2e8] sm:$0xff]
  %v2568 = vld [vmem:[%s5 + $0x2f0] sm:$0xff]
  %v2569 = vld [vmem:[%s5 + $0x2f8] sm:$0xff]
  %v2570 = vld [vmem:[%s5 + $0x300] sm:$0xff]
  %v2571 = vld [vmem:[%s5 + $0x308] sm:$0xff]
  %v2572 = vld [vmem:[%s5 + $0x310] sm:$0xff]
  %v2573 = vld [vmem:[%s5 + $0x318] sm:$0xff]
  %v2574 = vld [vmem:[%s5 + $0x320] sm:$0xff]
  %v2575 = vld [vmem:[%s5 + $0x328] sm:$0xff]
  %v2576 = vld [vmem:[%s5 + $0x330] sm:$0xff]
  %v2577 = vld [vmem:[%s5 + $0x338] sm:$0xff]
  %v2578 = vld [vmem:[%s5 + $0x340] sm:$0xff]
  %v2579 = vld [vmem:[%s5 + $0x348] sm:$0xff]
  %v2580 = vld [vmem:[%s5 + $0x350] sm:$0xff]
  %v2581 = vld [vmem:[%s5 + $0x358] sm:$0xff]
  %v2582 = vld [vmem:[%s5 + $0x360] sm:$0xff]
  %v2583 = vld [vmem:[%s5 + $0x368] sm:$0xff]
  %v2584 = vld [vmem:[%s5 + $0x370] sm:$0xff]
  %v2585 = vld [vmem:[%s5 + $0x378] sm:$0xff]
  %v2586 = vld [vmem:[%s5 + $0x380] sm:$0xff]
  %v2587 = vld [vmem:[%s5 + $0x388] sm:$0xff]
  %v2588 = vld [vmem:[%s5 + $0x390] sm:$0xff]
  %v2589 = vld [vmem:[%s5 + $0x398] sm:$0xff]
  %v2590 = vld [vmem:[%s5 + $0x3a0] sm:$0xff]
  %v2591 = vld [vmem:[%s5 + $0x3a8] sm:$0xff]
  %v2592 = vld [vmem:[%s5 + $0x3b0] sm:$0xff]
  %v2593 = vld [vmem:[%s5 + $0x3b8] sm:$0xff]
  %v2594 = vld [vmem:[%s5 + $0x3c0] sm:$0xff]
  %v2595 = vld [vmem:[%s5 + $0x3c8] sm:$0xff]
  %v2596 = vld [vmem:[%s5 + $0x3d0] sm:$0xff]
  %v2597 = vld [vmem:[%s5 + $0x3d8] sm:$0xff]
  %v2598 = vld [vmem:[%s5 + $0x3e0] sm:$0xff]
  %v2599 = vld [vmem:[%s5 + $0x3e8] sm:$0xff]
  %v2600 = vld [vmem:[%s5 + $0x3f0] sm:$0xff]
  %v2601 = vld [vmem:[%s5 + $0x3f8] sm:$0xff]
  %v2602 = vld [vmem:[%s5 + $0x400] sm:$0xff]
  %v2603 = vld [vmem:[%s5 + $0x408] sm:$0xff]
  %v2604 = vld [vmem:[%s5 + $0x410] sm:$0xff]
  %v2605 = vld [vmem:[%s5 + $0x418] sm:$0xff]
  %v2606 = vld [vmem:[%s5 + $0x420] sm:$0xff]
  %v2607 = vld [vmem:[%s5 + $0x428] sm:$0xff]
  %v2608 = vld [vmem:[%s5 + $0x430] sm:$0xff]
  %v2609 = vld [vmem:[%s5 + $0x438] sm:$0xff]
  %v2610 = vld [vmem:[%s5 + $0x440] sm:$0xff]
  %v2611 = vld [vmem:[%s5 + $0x448] sm:$0xff]
  %v2612 = vld [vmem:[%s5 + $0x450] sm:$0xff]
  %v2613 = vld [vmem:[%s5 + $0x458] sm:$0xff]
  %v2614 = vld [vmem:[#allocation3] sm:$0xff]
  %v2615 = vld [vmem:[#allocation3 + $0x8] sm:$0xff]
  %v2616 = vld [vmem:[#allocation3 + $0x10] sm:$0xff]
  %v2617 = vld [vmem:[#allocation3 + $0x18] sm:$0xff]
  %v2618 = vld [vmem:[#allocation3 + $0x20] sm:$0xff]
  %v2619 = vld [vmem:[#allocation3 + $0x28] sm:$0xff]
  %v2620 = vld [vmem:[#allocation3 + $0x30] sm:$0xff]
  %v2621 = vld [vmem:[#allocation3 + $0x38] sm:$0xff]
  %v2622 = vld [vmem:[#allocation3 + $0x40] sm:$0xff]
  %v2623 = vld [vmem:[#allocation3 + $0x48] sm:$0xff]
  %v2624 = vld [vmem:[#allocation3 + $0x50] sm:$0xff]
  %v2625 = vld [vmem:[#allocation3 + $0x58] sm:$0xff]
  %v2626 = vld [vmem:[#allocation3 + $0x60] sm:$0xff]
  %v2627 = vld [vmem:[#allocation3 + $0x68] sm:$0xff]
  %v2628 = vld [vmem:[#allocation3 + $0x70] sm:$0xff]
  %v2629 = vld [vmem:[#allocation3 + $0x78] sm:$0xff]
  %v2630 = vld [vmem:[#allocation3 + $0x80] sm:$0xff]
  %v2631 = vld [vmem:[#allocation3 + $0x88] sm:$0xff]
  %v2632 = vld [vmem:[#allocation3 + $0x90] sm:$0xff]
  %v2633 = vld [vmem:[#allocation3 + $0x98] sm:$0xff]
  %v2634 = vld [vmem:[#allocation3 + $0xa0] sm:$0xff]
  %v2635 = vld [vmem:[#allocation3 + $0xa8] sm:$0xff]
  %v2636 = vld [vmem:[#allocation3 + $0xb0] sm:$0xff]
  %v2637 = vld [vmem:[#allocation3 + $0xb8] sm:$0xff]
  %v2638 = vld [vmem:[#allocation3 + $0xc0] sm:$0xff]
  %v2639 = vld [vmem:[#allocation3 + $0xc8] sm:$0xff]
  %v2640 = vld [vmem:[#allocation3 + $0xd0] sm:$0xff]
  %v2641 = vld [vmem:[#allocation3 + $0xd8] sm:$0xff]
  %v2642 = vld [vmem:[#allocation3 + $0xe0] sm:$0xff]
  %v2643 = vld [vmem:[#allocation3 + $0xe8] sm:$0xff]
  %v2644 = vld [vmem:[#allocation3 + $0xf0] sm:$0xff]
  %v2645 = vld [vmem:[#allocation3 + $0xf8] sm:$0xff]
  %v2646 = vld [vmem:[#allocation3 + $0x100] sm:$0xff]
  %v2647 = vld [vmem:[#allocation3 + $0x108] sm:$0xff]
  %v2648 = vld [vmem:[#allocation3 + $0x110] sm:$0xff]
  %v2649 = vld [vmem:[#allocation3 + $0x118] sm:$0xff]
  %v2650 = vld [vmem:[#allocation3 + $0x120] sm:$0xff]
  %v2651 = vld [vmem:[#allocation3 + $0x128] sm:$0xff]
  %v2652 = vld [vmem:[#allocation3 + $0x130] sm:$0xff]
  %v2653 = vld [vmem:[#allocation3 + $0x138] sm:$0xff]
  %v2654 = vld [vmem:[#allocation3 + $0x140] sm:$0xff]
  %v2655 = vld [vmem:[#allocation3 + $0x148] sm:$0xff]
  %v2656 = vld [vmem:[#allocation3 + $0x150] sm:$0xff]
  %v2657 = vld [vmem:[#allocation3 + $0x158] sm:$0xff]
  %v2658 = vld [vmem:[#allocation3 + $0x160] sm:$0xff]
  %v2659 = vld [vmem:[#allocation3 + $0x168] sm:$0xff]
  %v2660 = vld [vmem:[#allocation3 + $0x170] sm:$0xff]
  %v2661 = vld [vmem:[#allocation3 + $0x178] sm:$0xff]
  %v2662 = vld [vmem:[#allocation3 + $0x180] sm:$0xff]
  %v2663 = vld [vmem:[#allocation3 + $0x188] sm:$0xff]
  %v2664 = vld [vmem:[#allocation3 + $0x190] sm:$0xff]
  %v2665 = vld [vmem:[#allocation3 + $0x198] sm:$0xff]
  %v2666 = vld [vmem:[#allocation3 + $0x1a0] sm:$0xff]
  %v2667 = vld [vmem:[#allocation3 + $0x1a8] sm:$0xff]
  %v2668 = vld [vmem:[#allocation3 + $0x1b0] sm:$0xff]
  %v2669 = vld [vmem:[#allocation3 + $0x1b8] sm:$0xff]
  %v2670 = vld [vmem:[#allocation3 + $0x1c0] sm:$0xff]
  %v2671 = vld [vmem:[#allocation3 + $0x1c8] sm:$0xff]
  %v2672 = vld [vmem:[#allocation3 + $0x1d0] sm:$0xff]
  %v2673 = vld [vmem:[#allocation3 + $0x1d8] sm:$0xff]
  %v2674 = vld [vmem:[#allocation3 + $0x1e0] sm:$0xff]
  %v2675 = vld [vmem:[#allocation3 + $0x1e8] sm:$0xff]
  %v2676 = vld [vmem:[#allocation3 + $0x1f0] sm:$0xff]
  %v2677 = vld [vmem:[#allocation3 + $0x1f8] sm:$0xff]
  %v2678 = vld [vmem:[#allocation3 + $0x200] sm:$0xff]
  %v2679 = vld [vmem:[#allocation3 + $0x208] sm:$0xff]
  %v2680 = vld [vmem:[#allocation3 + $0x210] sm:$0xff]
  %v2681 = vld [vmem:[#allocation3 + $0x218] sm:$0xf]
  %v2682 = vld [vmem:[%s6] sm:$0xff]
  %v2683 = vld [vmem:[%s6 + $0x8] sm:$0xff]
  %v2684 = vld [vmem:[%s6 + $0x10] sm:$0xff]
  %v2685 = vld [vmem:[%s6 + $0x18] sm:$0xff]
  %v2686 = vld [vmem:[%s6 + $0x20] sm:$0xff]
  %v2687 = vld [vmem:[%s6 + $0x28] sm:$0xff]
  %v2688 = vld [vmem:[%s6 + $0x30] sm:$0xff]
  %v2689 = vld [vmem:[%s6 + $0x38] sm:$0xff]
  %v2690 = vld [vmem:[%s6 + $0x40] sm:$0xff]
  %v2691 = vld [vmem:[%s6 + $0x48] sm:$0xff]
  %v2692 = vld [vmem:[%s6 + $0x50] sm:$0xff]
  %v2693 = vld [vmem:[%s6 + $0x58] sm:$0xff]
  %v2694 = vld [vmem:[%s6 + $0x60] sm:$0xff]
  %v2695 = vld [vmem:[%s6 + $0x68] sm:$0xff]
  %v2696 = vld [vmem:[%s6 + $0x70] sm:$0xff]
  %v2697 = vld [vmem:[%s6 + $0x78] sm:$0xff]
  %v2698 = vld [vmem:[%s6 + $0x80] sm:$0xff]
  %v2699 = vld [vmem:[%s6 + $0x88] sm:$0xff]
  %v2700 = vld [vmem:[%s6 + $0x90] sm:$0xff]
  %v2701 = vld [vmem:[%s6 + $0x98] sm:$0xff]
  %v2702 = vld [vmem:[%s6 + $0xa0] sm:$0xff]
  %v2703 = vld [vmem:[%s6 + $0xa8] sm:$0xff]
  %v2704 = vld [vmem:[%s6 + $0xb0] sm:$0xff]
  %v2705 = vld [vmem:[%s6 + $0xb8] sm:$0xff]
  %v2706 = vld [vmem:[%s6 + $0xc0] sm:$0xff]
  %v2707 = vld [vmem:[%s6 + $0xc8] sm:$0xff]
  %v2708 = vld [vmem:[%s6 + $0xd0] sm:$0xff]
  %v2709 = vld [vmem:[%s6 + $0xd8] sm:$0xff]
  %2711 = vset.pattern.permute.xlu0 0
  %2712 = vperm.xlu0 %2711, %v2682
  %v2713 = vpop.permute.xlu0 %2712
  %2716 = vset.pattern.permute.xlu0 0
  %2717 = vperm.xlu0 %2716, %v2683
  %v2718 = vpop.permute.xlu0 %2717
  %2721 = vset.pattern.permute.xlu0 0
  %2722 = vperm.xlu0 %2721, %v2684
  %v2723 = vpop.permute.xlu0 %2722
  %2726 = vset.pattern.permute.xlu0 0
  %2727 = vperm.xlu0 %2726, %v2685
  %v2728 = vpop.permute.xlu0 %2727
  %2731 = vset.pattern.permute.xlu0 0
  %2732 = vperm.xlu0 %2731, %v2686
  %v2733 = vpop.permute.xlu0 %2732
  %2736 = vset.pattern.permute.xlu0 0
  %2737 = vperm.xlu0 %2736, %v2687
  %v2738 = vpop.permute.xlu0 %2737
  %2741 = vset.pattern.permute.xlu0 0
  %2742 = vperm.xlu0 %2741, %v2688
  %v2743 = vpop.permute.xlu0 %2742
  %2746 = vset.pattern.permute.xlu0 0
  %2747 = vperm.xlu0 %2746, %v2689
  %v2748 = vpop.permute.xlu0 %2747
  %2751 = vset.pattern.permute.xlu0 0
  %2752 = vperm.xlu0 %2751, %v2690
  %v2753 = vpop.permute.xlu0 %2752
  %2756 = vset.pattern.permute.xlu0 0
  %2757 = vperm.xlu0 %2756, %v2691
  %v2758 = vpop.permute.xlu0 %2757
  %2761 = vset.pattern.permute.xlu0 0
  %2762 = vperm.xlu0 %2761, %v2692
  %v2763 = vpop.permute.xlu0 %2762
  %2766 = vset.pattern.permute.xlu0 0
  %2767 = vperm.xlu0 %2766, %v2693
  %v2768 = vpop.permute.xlu0 %2767
  %2771 = vset.pattern.permute.xlu0 0
  %2772 = vperm.xlu0 %2771, %v2694
  %v2773 = vpop.permute.xlu0 %2772
  %2776 = vset.pattern.permute.xlu0 0
  %2777 = vperm.xlu0 %2776, %v2695
  %v2778 = vpop.permute.xlu0 %2777
  %2781 = vset.pattern.permute.xlu0 0
  %2782 = vperm.xlu0 %2781, %v2696
  %v2783 = vpop.permute.xlu0 %2782
  %2786 = vset.pattern.permute.xlu0 0
  %2787 = vperm.xlu0 %2786, %v2697
  %v2788 = vpop.permute.xlu0 %2787
  %2791 = vset.pattern.permute.xlu0 0
  %2792 = vperm.xlu0 %2791, %v2698
  %v2793 = vpop.permute.xlu0 %2792
  %2796 = vset.pattern.permute.xlu0 0
  %2797 = vperm.xlu0 %2796, %v2699
  %v2798 = vpop.permute.xlu0 %2797
  %2801 = vset.pattern.permute.xlu0 0
  %2802 = vperm.xlu0 %2801, %v2700
  %v2803 = vpop.permute.xlu0 %2802
  %2806 = vset.pattern.permute.xlu0 0
  %2807 = vperm.xlu0 %2806, %v2701
  %v2808 = vpop.permute.xlu0 %2807
  %2811 = vset.pattern.permute.xlu0 0
  %2812 = vperm.xlu0 %2811, %v2702
  %v2813 = vpop.permute.xlu0 %2812
  %2816 = vset.pattern.permute.xlu0 0
  %2817 = vperm.xlu0 %2816, %v2703
  %v2818 = vpop.permute.xlu0 %2817
  %2821 = vset.pattern.permute.xlu0 0
  %2822 = vperm.xlu0 %2821, %v2704
  %v2823 = vpop.permute.xlu0 %2822
  %2826 = vset.pattern.permute.xlu0 0
  %2827 = vperm.xlu0 %2826, %v2705
  %v2828 = vpop.permute.xlu0 %2827
  %2831 = vset.pattern.permute.xlu0 0
  %2832 = vperm.xlu0 %2831, %v2706
  %v2833 = vpop.permute.xlu0 %2832
  %2836 = vset.pattern.permute.xlu0 0
  %2837 = vperm.xlu0 %2836, %v2707
  %v2838 = vpop.permute.xlu0 %2837
  %2841 = vset.pattern.permute.xlu0 0
  %2842 = vperm.xlu0 %2841, %v2708
  %v2843 = vpop.permute.xlu0 %2842
  %2846 = vset.pattern.permute.xlu0 0
  %2847 = vperm.xlu0 %2846, %v2709
  %v2848 = vpop.permute.xlu0 %2847
  %vm2850 = vcmask 228352
  %v2852 = vsel %vm2850, %v2478, 0
  %v2855 = vsel %vm2850, %v2483, 0
  %v2858 = vsel %vm2850, %v2488, 0
  %v2861 = vsel %vm2850, %v2493, 0
  %v2864 = vsel %vm2850, %v2498, 0
  %v2867 = vsel %vm2850, %v2503, 0
  %v2870 = vsel %vm2850, %v2508, 0
  %v2873 = vsel %vm2850, %v2513, 0
  %v2876 = vsel %vm2850, %v2518, 0
  %v2879 = vsel %vm2850, %v2523, 0
  %v2882 = vsel %vm2850, %v2528, 0
  %v2885 = vsel %vm2850, %v2533, 0
  %v2888 = vsel %vm2850, %v2538, 0
  %v2891 = vsel %vm2850, %v2543, 0
  %v2894 = vsel %vm2850, %v2548, 0
  %v2897 = vsel %vm2850, %v2553, 0
  %v2900 = vsel %vm2850, %v2558, 0
  %v2903 = vsel %vm2850, %v2563, 0
  %v2906 = vsel %vm2850, %v2568, 0
  %v2909 = vsel %vm2850, %v2573, 0
  %v2912 = vsel %vm2850, %v2578, 0
  %v2915 = vsel %vm2850, %v2583, 0
  %v2918 = vsel %vm2850, %v2588, 0
  %v2921 = vsel %vm2850, %v2593, 0
  %v2924 = vsel %vm2850, %v2598, 0
  %v2927 = vsel %vm2850, %v2603, 0
  %v2930 = vsel %vm2850, %v2608, 0
  %v2933 = vsel %vm2850, %v2613, 0
  %vm2935 = vcmask 1043456
  %v2937 = vsel %vm2935, %v2681, 0
  %2939 = vmatprep.subr.mxu0 0.0
  %2940 = vmatpush1.msra.mxu0 %v2614
  %2941 = vmatprep.subr.mxu0 0.0
  %2942 = vmatpush1.msra.mxu0 %v2615
  %2943 = vmatprep.subr.mxu0 0.0
  %2944 = vmatpush1.msra.mxu0 %v2616
  %2945 = vmatprep.subr.mxu0 0.0
  %2946 = vmatpush1.msra.mxu0 %v2617
  %2947 = vmatprep.subr.mxu0 0.0
  %2948 = vmatpush1.msra.mxu0 %v2618
  %2949 = vmatprep.subr.mxu0 0.0
  %2950 = vmatpush1.msra.mxu0 %v2619
  %2951 = vmatprep.subr.mxu0 0.0
  %2952 = vmatpush1.msra.mxu0 %v2620
  %2953 = vmatprep.subr.mxu0 0.0
  %2954 = vmatpush1.msra.mxu0 %v2621
  %2955 = vmatprep.subr.mxu0 0.0
  %2956 = vmatpush1.msra.mxu0 %v2622
  %2957 = vmatprep.subr.mxu0 0.0
  %2958 = vmatpush1.msra.mxu0 %v2623
  %2959 = vmatprep.subr.mxu0 0.0
  %2960 = vmatpush1.msra.mxu0 %v2624
  %2961 = vmatprep.subr.mxu0 0.0
  %2962 = vmatpush1.msra.mxu0 %v2625
  %2963 = vmatprep.subr.mxu0 0.0
  %2964 = vmatpush1.msra.mxu0 %v2626
  %2965 = vmatprep.subr.mxu0 0.0
  %2966 = vmatpush1.msra.mxu0 %v2627
  %2967 = vmatprep.subr.mxu0 0.0
  %2968 = vmatpush1.msra.mxu0 %v2628
  %2969 = vmatprep.subr.mxu0 0.0
  %2970 = vmatpush1.msra.mxu0 %v2629
  %2971 = vmatprep.subr.mxu0 0.0
  %2972 = vmatpush1.msra.mxu0 %v2630
  %2973 = vmatprep.subr.mxu0 0.0
  %2974 = vmatpush1.msra.mxu0 %v2631
  %2975 = vmatprep.subr.mxu0 0.0
  %2976 = vmatpush1.msra.mxu0 %v2632
  %2977 = vmatprep.subr.mxu0 0.0
  %2978 = vmatpush1.msra.mxu0 %v2633
  %2979 = vmatprep.subr.mxu0 0.0
  %2980 = vmatpush1.msra.mxu0 %v2634
  %2981 = vmatprep.subr.mxu0 0.0
  %2982 = vmatpush1.msra.mxu0 %v2635
  %2983 = vmatprep.subr.mxu0 0.0
  %2984 = vmatpush1.msra.mxu0 %v2636
  %2985 = vmatprep.subr.mxu0 0.0
  %2986 = vmatpush1.msra.mxu0 %v2637
  %2987 = vmatprep.subr.mxu0 0.0
  %2988 = vmatpush1.msra.mxu0 %v2638
  %2989 = vmatprep.subr.mxu0 0.0
  %2990 = vmatpush1.msra.mxu0 %v2639
  %2991 = vmatprep.subr.mxu0 0.0
  %2992 = vmatpush1.msra.mxu0 %v2640
  %2993 = vmatprep.subr.mxu0 0.0
  %2994 = vmatpush1.msra.mxu0 %v2641
  %2995 = vmatprep.subr.mxu0 0.0
  %2996 = vmatpush1.msra.mxu0 %v2642
  %2997 = vmatprep.subr.mxu0 0.0
  %2998 = vmatpush1.msra.mxu0 %v2643
  %2999 = vmatprep.subr.mxu0 0.0
  %3000 = vmatpush1.msra.mxu0 %v2644
  %3001 = vmatprep.subr.mxu0 0.0
  %3002 = vmatpush1.msra.mxu0 %v2645
  %3003 = vmatprep.mubr.f32.mxu0 %v2475
  %3004 = vmatmul.mubr.f32.gmra.mrb[0].mxu0 %v2474
  %v3005 = vpop.f32.mrb[0].mxu0
  %v3006 = vadd.f32 %v2713, %v3005
  %v3007 = vpop.f32.mrb[0].mxu0
  %3008 = vmatprep.mubr.f32.mxu0 %v2480
  %3009 = vmatmul.mubr.f32.gmra.mrb[0].mxu0 %v2479
  %v3010 = vpop.f32.mrb[0].mxu0
  %v3011 = vadd.f32 %v2718, %v3010
  %v3012 = vpop.f32.mrb[0].mxu0
  %3013 = vmatprep.mubr.f32.mxu0 %v2485
  %3014 = vmatmul.mubr.f32.gmra.mrb[0].mxu0 %v2484
  %v3015 = vpop.f32.mrb[0].mxu0
  %v3016 = vadd.f32 %v2723, %v3015
  %v3017 = vpop.f32.mrb[0].mxu0
  %3018 = vmatprep.mubr.f32.mxu0 %v2490
  %3019 = vmatmul.mubr.f32.gmra.mrb[0].mxu0 %v2489
  %v3020 = vpop.f32.mrb[0].mxu0
  %v3021 = vadd.f32 %v2728, %v3020
  %v3022 = vpop.f32.mrb[0].mxu0
  %3023 = vmatprep.mubr.f32.mxu0 %v2495
  %3024 = vmatmul.mubr.f32.gmra.mrb[0].mxu0 %v2494
  %v3025 = vpop.f32.mrb[0].mxu0
  %v3026 = vadd.f32 %v2733, %v3025
  %v3027 = vpop.f32.mrb[0].mxu0
  %3028 = vmatprep.mubr.f32.mxu0 %v2500
  %3029 = vmatmul.mubr.f32.gmra.mrb[0].mxu0 %v2499
  %v3030 = vpop.f32.mrb[0].mxu0
  %v3031 = vadd.f32 %v2738, %v3030
  %v3032 = vpop.f32.mrb[0].mxu0
  %3033 = vmatprep.mubr.f32.mxu0 %v2505
  %3034 = vmatmul.mubr.f32.gmra.mrb[0].mxu0 %v2504
  %v3035 = vpop.f32.mrb[0].mxu0
  %v3036 = vadd.f32 %v2743, %v3035
  %v3037 = vpop.f32.mrb[0].mxu0
  %3038 = vmatprep.mubr.f32.mxu0 %v2510
  %3039 = vmatmul.mubr.f32.gmra.mrb[0].mxu0 %v2509
  %v3040 = vpop.f32.mrb[0].mxu0
  %v3041 = vadd.f32 %v2748, %v3040
  %v3042 = vpop.f32.mrb[0].mxu0
  %3043 = vmatprep.mubr.f32.mxu0 %v2515
  %3044 = vmatmul.mubr.f32.gmra.mrb[0].mxu0 %v2514
  %v3045 = vpop.f32.mrb[0].mxu0
  %v3046 = vadd.f32 %v2753, %v3045
  %v3047 = vpop.f32.mrb[0].mxu0
  %3048 = vmatprep.mubr.f32.mxu0 %v2520
  %3049 = vmatmul.mubr.f32.gmra.mrb[0].mxu0 %v2519
  %v3050 = vpop.f32.mrb[0].mxu0
  %v3051 = vadd.f32 %v2758, %v3050
  %v3052 = vpop.f32.mrb[0].mxu0
  %3053 = vmatprep.mubr.f32.mxu0 %v2525
  %3054 = vmatmul.mubr.f32.gmra.mrb[0].mxu0 %v2524
  %v3055 = vpop.f32.mrb[0].mxu0
  %v3056 = vadd.f32 %v2763, %v3055
  %v3057 = vpop.f32.mrb[0].mxu0
  %3058 = vmatprep.mubr.f32.mxu0 %v2530
  %3059 = vmatmul.mubr.f32.gmra.mrb[0].mxu0 %v2529
  %v3060 = vpop.f32.mrb[0].mxu0
  %v3061 = vadd.f32 %v2768, %v3060
  %v3062 = vpop.f32.mrb[0].mxu0
  %3063 = vmatprep.mubr.f32.mxu0 %v2535
  %3064 = vmatmul.mubr.f32.gmra.mrb[0].mxu0 %v2534
  %v3065 = vpop.f32.mrb[0].mxu0
  %v3066 = vadd.f32 %v2773, %v3065
  %v3067 = vpop.f32.mrb[0].mxu0
  %3068 = vmatprep.mubr.f32.mxu0 %v2540
  %3069 = vmatmul.mubr.f32.gmra.mrb[0].mxu0 %v2539
  %v3070 = vpop.f32.mrb[0].mxu0
  %v3071 = vadd.f32 %v2778, %v3070
  %v3072 = vpop.f32.mrb[0].mxu0
  %3073 = vmatprep.mubr.f32.mxu0 %v2545
  %3074 = vmatmul.mubr.f32.gmra.mrb[0].mxu0 %v2544
  %v3075 = vpop.f32.mrb[0].mxu0
  %v3076 = vadd.f32 %v2783, %v3075
  %v3077 = vpop.f32.mrb[0].mxu0
  %3078 = vmatprep.mubr.f32.mxu0 %v2550
  %3079 = vmatmul.mubr.f32.gmra.mrb[0].mxu0 %v2549
  %v3080 = vpop.f32.mrb[0].mxu0
  %v3081 = vadd.f32 %v2788, %v3080
  %v3082 = vpop.f32.mrb[0].mxu0
  %3083 = vmatprep.mubr.f32.mxu0 %v2555
  %3084 = vmatmul.mubr.f32.gmra.mrb[0].mxu0 %v2554
  %v3085 = vpop.f32.mrb[0].mxu0
  %v3086 = vadd.f32 %v2793, %v3085
  %v3087 = vpop.f32.mrb[0].mxu0
  %3088 = vmatprep.mubr.f32.mxu0 %v2560
  %3089 = vmatmul.mubr.f32.gmra.mrb[0].mxu0 %v2559
  %v3090 = vpop.f32.mrb[0].mxu0
  %v3091 = vadd.f32 %v2798, %v3090
  %v3092 = vpop.f32.mrb[0].mxu0
  %3093 = vmatprep.mubr.f32.mxu0 %v2565
  %3094 = vmatmul.mubr.f32.gmra.mrb[0].mxu0 %v2564
  %v3095 = vpop.f32.mrb[0].mxu0
  %v3096 = vadd.f32 %v2803, %v3095
  %v3097 = vpop.f32.mrb[0].mxu0
  %3098 = vmatprep.mubr.f32.mxu0 %v2570
  %3099 = vmatmul.mubr.f32.gmra.mrb[0].mxu0 %v2569
  %v3100 = vpop.f32.mrb[0].mxu0
  %v3101 = vadd.f32 %v2808, %v3100
  %v3102 = vpop.f32.mrb[0].mxu0
  %3103 = vmatprep.mubr.f32.mxu0 %v2575
  %3104 = vmatmul.mubr.f32.gmra.mrb[0].mxu0 %v2574
  %v3105 = vpop.f32.mrb[0].mxu0
  %v3106 = vadd.f32 %v2813, %v3105
  %v3107 = vpop.f32.mrb[0].mxu0
  %3108 = vmatprep.mubr.f32.mxu0 %v2580
  %3109 = vmatmul.mubr.f32.gmra.mrb[0].mxu0 %v2579
  %v3110 = vpop.f32.mrb[0].mxu0
  %v3111 = vadd.f32 %v2818, %v3110
  %v3112 = vpop.f32.mrb[0].mxu0
  %3113 = vmatprep.mubr.f32.mxu0 %v2585
  %3114 = vmatmul.mubr.f32.gmra.mrb[0].mxu0 %v2584
  %v3115 = vpop.f32.mrb[0].mxu0
  %v3116 = vadd.f32 %v2823, %v3115
  %v3117 = vpop.f32.mrb[0].mxu0
  %3118 = vmatprep.mubr.f32.mxu0 %v2590
  %3119 = vmatmul.mubr.f32.gmra.mrb[0].mxu0 %v2589
  %v3120 = vpop.f32.mrb[0].mxu0
  %v3121 = vadd.f32 %v2828, %v3120
  %v3122 = vpop.f32.mrb[0].mxu0
  %3123 = vmatprep.mubr.f32.mxu0 %v2595
  %3124 = vmatmul.mubr.f32.gmra.mrb[0].mxu0 %v2594
  %v3125 = vpop.f32.mrb[0].mxu0
  %v3126 = vadd.f32 %v2833, %v3125
  %v3127 = vpop.f32.mrb[0].mxu0
  %3128 = vmatprep.mubr.f32.mxu0 %v2600
  %3129 = vmatmul.mubr.f32.gmra.mrb[0].mxu0 %v2599
  %v3130 = vpop.f32.mrb[0].mxu0
  %v3131 = vadd.f32 %v2838, %v3130
  %v3132 = vpop.f32.mrb[0].mxu0
  %3133 = vmatprep.mubr.f32.mxu0 %v2605
  %3134 = vmatmul.mubr.f32.gmra.mrb[0].mxu0 %v2604
  %v3135 = vpop.f32.mrb[0].mxu0
  %v3136 = vadd.f32 %v2843, %v3135
  %v3137 = vpop.f32.mrb[0].mxu0
  %3138 = vmatprep.mubr.f32.mxu0 %v2610
  %3139 = vmatmul.mubr.f32.gmra.mrb[0].mxu0 %v2609
  %v3140 = vpop.f32.mrb[0].mxu0
  %v3141 = vadd.f32 %v2848, %v3140
  %v3142 = vpop.f32.mrb[0].mxu0
  %3143 = vdwg.mxu0
  %3144 = vmatprep.subr.mxu0 0.0
  %3145 = vmatpush1.msra.mxu0 %v2646
  %3146 = vmatprep.subr.mxu0 0.0
  %3147 = vmatpush1.msra.mxu0 %v2647
  %3148 = vmatprep.subr.mxu0 0.0
  %3149 = vmatpush1.msra.mxu0 %v2648
  %3150 = vmatprep.subr.mxu0 0.0
  %3151 = vmatpush1.msra.mxu0 %v2649
  %3152 = vmatprep.subr.mxu0 0.0
  %3153 = vmatpush1.msra.mxu0 %v2650
  %3154 = vmatprep.subr.mxu0 0.0
  %3155 = vmatpush1.msra.mxu0 %v2651
  %3156 = vmatprep.subr.mxu0 0.0
  %3157 = vmatpush1.msra.mxu0 %v2652
  %3158 = vmatprep.subr.mxu0 0.0
  %3159 = vmatpush1.msra.mxu0 %v2653
  %3160 = vmatprep.subr.mxu0 0.0
  %3161 = vmatpush1.msra.mxu0 %v2654
  %3162 = vmatprep.subr.mxu0 0.0
  %3163 = vmatpush1.msra.mxu0 %v2655
  %3164 = vmatprep.subr.mxu0 0.0
  %3165 = vmatpush1.msra.mxu0 %v2656
  %3166 = vmatprep.subr.mxu0 0.0
  %3167 = vmatpush1.msra.mxu0 %v2657
  %3168 = vmatprep.subr.mxu0 0.0
  %3169 = vmatpush1.msra.mxu0 %v2658
  %3170 = vmatprep.subr.mxu0 0.0
  %3171 = vmatpush1.msra.mxu0 %v2659
  %3172 = vmatprep.subr.mxu0 0.0
  %3173 = vmatpush1.msra.mxu0 %v2660
  %3174 = vmatprep.subr.mxu0 0.0
  %3175 = vmatpush1.msra.mxu0 %v2661
  %3176 = vmatprep.subr.mxu0 0.0
  %3177 = vmatpush1.msra.mxu0 %v2662
  %3178 = vmatprep.subr.mxu0 0.0
  %3179 = vmatpush1.msra.mxu0 %v2663
  %3180 = vmatprep.subr.mxu0 0.0
  %3181 = vmatpush1.msra.mxu0 %v2664
  %3182 = vmatprep.subr.mxu0 0.0
  %3183 = vmatpush1.msra.mxu0 %v2665
  %3184 = vmatprep.subr.mxu0 0.0
  %3185 = vmatpush1.msra.mxu0 %v2666
  %3186 = vmatprep.subr.mxu0 0.0
  %3187 = vmatpush1.msra.mxu0 %v2667
  %3188 = vmatprep.subr.mxu0 0.0
  %3189 = vmatpush1.msra.mxu0 %v2668
  %3190 = vmatprep.subr.mxu0 0.0
  %3191 = vmatpush1.msra.mxu0 %v2669
  %3192 = vmatprep.subr.mxu0 0.0
  %3193 = vmatpush1.msra.mxu0 %v2670
  %3194 = vmatprep.subr.mxu0 0.0
  %3195 = vmatpush1.msra.mxu0 %v2671
  %3196 = vmatprep.subr.mxu0 0.0
  %3197 = vmatpush1.msra.mxu0 %v2672
  %3198 = vmatprep.subr.mxu0 0.0
  %3199 = vmatpush1.msra.mxu0 %v2673
  %3200 = vmatprep.subr.mxu0 0.0
  %3201 = vmatpush1.msra.mxu0 %v2674
  %3202 = vmatprep.subr.mxu0 0.0
  %3203 = vmatpush1.msra.mxu0 %v2675
  %3204 = vmatprep.subr.mxu0 0.0
  %3205 = vmatpush1.msra.mxu0 %v2676
  %3206 = vmatprep.subr.mxu0 0.0
  %3207 = vmatpush1.msra.mxu0 %v2677
  %3208 = vmatprep.mubr.f32.mxu0 %v2477
  %3209 = vmatmul.mubr.f32.gmra.mrb[0].mxu0 %v2476
  %v3210 = vpop.f32.mrb[0].mxu0
  %v3211 = vadd.f32 %v3006, %v3210
  %v3212 = vpop.f32.mrb[0].mxu0
  %3213 = vmatprep.mubr.f32.mxu0 %v2482
  %3214 = vmatmul.mubr.f32.gmra.mrb[0].mxu0 %v2481
  %v3215 = vpop.f32.mrb[0].mxu0
  %v3216 = vadd.f32 %v3011, %v3215
  %v3217 = vpop.f32.mrb[0].mxu0
  %3218 = vmatprep.mubr.f32.mxu0 %v2487
  %3219 = vmatmul.mubr.f32.gmra.mrb[0].mxu0 %v2486
  %v3220 = vpop.f32.mrb[0].mxu0
  %v3221 = vadd.f32 %v3016, %v3220
  %v3222 = vpop.f32.mrb[0].mxu0
  %3223 = vmatprep.mubr.f32.mxu0 %v2492
  %3224 = vmatmul.mubr.f32.gmra.mrb[0].mxu0 %v2491
  %v3225 = vpop.f32.mrb[0].mxu0
  %v3226 = vadd.f32 %v3021, %v3225
  %v3227 = vpop.f32.mrb[0].mxu0
  %3228 = vmatprep.mubr.f32.mxu0 %v2497
  %3229 = vmatmul.mubr.f32.gmra.mrb[0].mxu0 %v2496
  %v3230 = vpop.f32.mrb[0].mxu0
  %v3231 = vadd.f32 %v3026, %v3230
  %v3232 = vpop.f32.mrb[0].mxu0
  %3233 = vmatprep.mubr.f32.mxu0 %v2502
  %3234 = vmatmul.mubr.f32.gmra.mrb[0].mxu0 %v2501
  %v3235 = vpop.f32.mrb[0].mxu0
  %v3236 = vadd.f32 %v3031, %v3235
  %v3237 = vpop.f32.mrb[0].mxu0
  %3238 = vmatprep.mubr.f32.mxu0 %v2507
  %3239 = vmatmul.mubr.f32.gmra.mrb[0].mxu0 %v2506
  %v3240 = vpop.f32.mrb[0].mxu0
  %v3241 = vadd.f32 %v3036, %v3240
  %v3242 = vpop.f32.mrb[0].mxu0
  %3243 = vmatprep.mubr.f32.mxu0 %v2512
  %3244 = vmatmul.mubr.f32.gmra.mrb[0].mxu0 %v2511
  %v3245 = vpop.f32.mrb[0].mxu0
  %v3246 = vadd.f32 %v3041, %v3245
  %v3247 = vpop.f32.mrb[0].mxu0
  %3248 = vmatprep.mubr.f32.mxu0 %v2517
  %3249 = vmatmul.mubr.f32.gmra.mrb[0].mxu0 %v2516
  %v3250 = vpop.f32.mrb[0].mxu0
  %v3251 = vadd.f32 %v3046, %v3250
  %v3252 = vpop.f32.mrb[0].mxu0
  %3253 = vmatprep.mubr.f32.mxu0 %v2522
  %3254 = vmatmul.mubr.f32.gmra.mrb[0].mxu0 %v2521
  %v3255 = vpop.f32.mrb[0].mxu0
  %v3256 = vadd.f32 %v3051, %v3255
  %v3257 = vpop.f32.mrb[0].mxu0
  %3258 = vmatprep.mubr.f32.mxu0 %v2527
  %3259 = vmatmul.mubr.f32.gmra.mrb[0].mxu0 %v2526
  %v3260 = vpop.f32.mrb[0].mxu0
  %v3261 = vadd.f32 %v3056, %v3260
  %v3262 = vpop.f32.mrb[0].mxu0
  %3263 = vmatprep.mubr.f32.mxu0 %v2532
  %3264 = vmatmul.mubr.f32.gmra.mrb[0].mxu0 %v2531
  %v3265 = vpop.f32.mrb[0].mxu0
  %v3266 = vadd.f32 %v3061, %v3265
  %v3267 = vpop.f32.mrb[0].mxu0
  %3268 = vmatprep.mubr.f32.mxu0 %v2537
  %3269 = vmatmul.mubr.f32.gmra.mrb[0].mxu0 %v2536
  %v3270 = vpop.f32.mrb[0].mxu0
  %v3271 = vadd.f32 %v3066, %v3270
  %v3272 = vpop.f32.mrb[0].mxu0
  %3273 = vmatprep.mubr.f32.mxu0 %v2542
  %3274 = vmatmul.mubr.f32.gmra.mrb[0].mxu0 %v2541
  %v3275 = vpop.f32.mrb[0].mxu0
  %v3276 = vadd.f32 %v3071, %v3275
  %v3277 = vpop.f32.mrb[0].mxu0
  %3278 = vmatprep.mubr.f32.mxu0 %v2547
  %3279 = vmatmul.mubr.f32.gmra.mrb[0].mxu0 %v2546
  %v3280 = vpop.f32.mrb[0].mxu0
  %v3281 = vadd.f32 %v3076, %v3280
  %v3282 = vpop.f32.mrb[0].mxu0
  %3283 = vmatprep.mubr.f32.mxu0 %v2552
  %3284 = vmatmul.mubr.f32.gmra.mrb[0].mxu0 %v2551
  %v3285 = vpop.f32.mrb[0].mxu0
  %v3286 = vadd.f32 %v3081, %v3285
  %v3287 = vpop.f32.mrb[0].mxu0
  %3288 = vmatprep.mubr.f32.mxu0 %v2557
  %3289 = vmatmul.mubr.f32.gmra.mrb[0].mxu0 %v2556
  %v3290 = vpop.f32.mrb[0].mxu0
  %v3291 = vadd.f32 %v3086, %v3290
  %v3292 = vpop.f32.mrb[0].mxu0
  %3293 = vmatprep.mubr.f32.mxu0 %v2562
  %3294 = vmatmul.mubr.f32.gmra.mrb[0].mxu0 %v2561
  %v3295 = vpop.f32.mrb[0].mxu0
  %v3296 = vadd.f32 %v3091, %v3295
  %v3297 = vpop.f32.mrb[0].mxu0
  %3298 = vmatprep.mubr.f32.mxu0 %v2567
  %3299 = vmatmul.mubr.f32.gmra.mrb[0].mxu0 %v2566
  %v3300 = vpop.f32.mrb[0].mxu0
  %v3301 = vadd.f32 %v3096, %v3300
  %v3302 = vpop.f32.mrb[0].mxu0
  %3303 = vmatprep.mubr.f32.mxu0 %v2572
  %3304 = vmatmul.mubr.f32.gmra.mrb[0].mxu0 %v2571
  %v3305 = vpop.f32.mrb[0].mxu0
  %v3306 = vadd.f32 %v3101, %v3305
  %v3307 = vpop.f32.mrb[0].mxu0
  %3308 = vmatprep.mubr.f32.mxu0 %v2577
  %3309 = vmatmul.mubr.f32.gmra.mrb[0].mxu0 %v2576
  %v3310 = vpop.f32.mrb[0].mxu0
  %v3311 = vadd.f32 %v3106, %v3310
  %v3312 = vpop.f32.mrb[0].mxu0
  %3313 = vmatprep.mubr.f32.mxu0 %v2582
  %3314 = vmatmul.mubr.f32.gmra.mrb[0].mxu0 %v2581
  %v3315 = vpop.f32.mrb[0].mxu0
  %v3316 = vadd.f32 %v3111, %v3315
  %v3317 = vpop.f32.mrb[0].mxu0
  %3318 = vmatprep.mubr.f32.mxu0 %v2587
  %3319 = vmatmul.mubr.f32.gmra.mrb[0].mxu0 %v2586
  %v3320 = vpop.f32.mrb[0].mxu0
  %v3321 = vadd.f32 %v3116, %v3320
  %v3322 = vpop.f32.mrb[0].mxu0
  %3323 = vmatprep.mubr.f32.mxu0 %v2592
  %3324 = vmatmul.mubr.f32.gmra.mrb[0].mxu0 %v2591
  %v3325 = vpop.f32.mrb[0].mxu0
  %v3326 = vadd.f32 %v3121, %v3325
  %v3327 = vpop.f32.mrb[0].mxu0
  %3328 = vmatprep.mubr.f32.mxu0 %v2597
  %3329 = vmatmul.mubr.f32.gmra.mrb[0].mxu0 %v2596
  %v3330 = vpop.f32.mrb[0].mxu0
  %v3331 = vadd.f32 %v3126, %v3330
  %v3332 = vpop.f32.mrb[0].mxu0
  %3333 = vmatprep.mubr.f32.mxu0 %v2602
  %3334 = vmatmul.mubr.f32.gmra.mrb[0].mxu0 %v2601
  %v3335 = vpop.f32.mrb[0].mxu0
  %v3336 = vadd.f32 %v3131, %v3335
  %v3337 = vpop.f32.mrb[0].mxu0
  %3338 = vmatprep.mubr.f32.mxu0 %v2607
  %3339 = vmatmul.mubr.f32.gmra.mrb[0].mxu0 %v2606
  %v3340 = vpop.f32.mrb[0].mxu0
  %v3341 = vadd.f32 %v3136, %v3340
  %v3342 = vpop.f32.mrb[0].mxu0
  %3343 = vmatprep.mubr.f32.mxu0 %v2612
  %3344 = vmatmul.mubr.f32.gmra.mrb[0].mxu0 %v2611
  %v3345 = vpop.f32.mrb[0].mxu0
  %v3346 = vadd.f32 %v3141, %v3345
  %v3347 = vpop.f32.mrb[0].mxu0
  %3348 = vdwg.mxu0
  %3349 = vmatprep.subr.mxu0 0.0
  %3350 = vmatpush1.msra.mxu0 %v2678
  %3351 = vmatprep.subr.mxu0 0.0
  %3352 = vmatpush1.msra.mxu0 %v2679
  %3353 = vmatprep.subr.mxu0 0.0
  %3354 = vmatpush1.msra.mxu0 %v2680
  %3355 = vmatprep.subr.mxu0 0.0
  %3356 = vmatpush1.msra.mxu0 %v2937
  %3357 = vmatprep.subr.mxu0 0.0
  %3358 = vmatpush1.msra.mxu0 0.0
  %3359 = vmatprep.subr.mxu0 0.0
  %3360 = vmatpush1.msra.mxu0 0.0
  %3361 = vmatprep.subr.mxu0 0.0
  %3362 = vmatpush1.msra.mxu0 0.0
  %3363 = vmatprep.subr.mxu0 0.0
  %3364 = vmatpush1.msra.mxu0 0.0
  %3365 = vmatprep.subr.mxu0 0.0
  %3366 = vmatpush1.msra.mxu0 0.0
  %3367 = vmatprep.subr.mxu0 0.0
  %3368 = vmatpush1.msra.mxu0 0.0
  %3369 = vmatprep.subr.mxu0 0.0
  %3370 = vmatpush1.msra.mxu0 0.0
  %3371 = vmatprep.subr.mxu0 0.0
  %3372 = vmatpush1.msra.mxu0 0.0
  %3373 = vmatprep.subr.mxu0 0.0
  %3374 = vmatpush1.msra.mxu0 0.0
  %3375 = vmatprep.subr.mxu0 0.0
  %3376 = vmatpush1.msra.mxu0 0.0
  %3377 = vmatprep.subr.mxu0 0.0
  %3378 = vmatpush1.msra.mxu0 0.0
  %3379 = vmatprep.subr.mxu0 0.0
  %3380 = vmatpush1.msra.mxu0 0.0
  %3381 = vmatprep.subr.mxu0 0.0
  %3382 = vmatpush1.msra.mxu0 0.0
  %3383 = vmatprep.subr.mxu0 0.0
  %3384 = vmatpush1.msra.mxu0 0.0
  %3385 = vmatprep.subr.mxu0 0.0
  %3386 = vmatpush1.msra.mxu0 0.0
  %3387 = vmatprep.subr.mxu0 0.0
  %3388 = vmatpush1.msra.mxu0 0.0
  %3389 = vmatprep.subr.mxu0 0.0
  %3390 = vmatpush1.msra.mxu0 0.0
  %3391 = vmatprep.subr.mxu0 0.0
  %3392 = vmatpush1.msra.mxu0 0.0
  %3393 = vmatprep.subr.mxu0 0.0
  %3394 = vmatpush1.msra.mxu0 0.0
  %3395 = vmatprep.subr.mxu0 0.0
  %3396 = vmatpush1.msra.mxu0 0.0
  %3397 = vmatprep.subr.mxu0 0.0
  %3398 = vmatpush1.msra.mxu0 0.0
  %3399 = vmatprep.subr.mxu0 0.0
  %3400 = vmatpush1.msra.mxu0 0.0
  %3401 = vmatprep.subr.mxu0 0.0
  %3402 = vmatpush1.msra.mxu0 0.0
  %3403 = vmatprep.subr.mxu0 0.0
  %3404 = vmatpush1.msra.mxu0 0.0
  %3405 = vmatprep.subr.mxu0 0.0
  %3406 = vmatpush1.msra.mxu0 0.0
  %3407 = vmatprep.subr.mxu0 0.0
  %3408 = vmatpush1.msra.mxu0 0.0
  %3409 = vmatprep.subr.mxu0 0.0
  %3410 = vmatpush1.msra.mxu0 0.0
  %3411 = vmatprep.subr.mxu0 0.0
  %3412 = vmatpush1.msra.mxu0 0.0
  %3413 = vmatprep.mubr.f32.mxu0 0.0
  %3414 = vmatmul.mubr.f32.gmra.mrb[0].mxu0 %v2852
  %v3415 = vpop.f32.mrb[0].mxu0
  %v3416 = vadd.f32 %v3211, %v3415
  %v3417 = vpop.f32.mrb[0].mxu0
  %3418 = vmatprep.mubr.f32.mxu0 0.0
  %3419 = vmatmul.mubr.f32.gmra.mrb[0].mxu0 %v2855
  %v3420 = vpop.f32.mrb[0].mxu0
  %v3421 = vadd.f32 %v3216, %v3420
  %v3422 = vpop.f32.mrb[0].mxu0
  %3423 = vmatprep.mubr.f32.mxu0 0.0
  %3424 = vmatmul.mubr.f32.gmra.mrb[0].mxu0 %v2858
  %v3425 = vpop.f32.mrb[0].mxu0
  %v3426 = vadd.f32 %v3221, %v3425
  %v3427 = vpop.f32.mrb[0].mxu0
  %3428 = vmatprep.mubr.f32.mxu0 0.0
  %3429 = vmatmul.mubr.f32.gmra.mrb[0].mxu0 %v2861
  %v3430 = vpop.f32.mrb[0].mxu0
  %v3431 = vadd.f32 %v3226, %v3430
  %v3432 = vpop.f32.mrb[0].mxu0
  %3433 = vmatprep.mubr.f32.mxu0 0.0
  %3434 = vmatmul.mubr.f32.gmra.mrb[0].mxu0 %v2864
  %v3435 = vpop.f32.mrb[0].mxu0
  %v3436 = vadd.f32 %v3231, %v3435
  %v3437 = vpop.f32.mrb[0].mxu0
  %3438 = vmatprep.mubr.f32.mxu0 0.0
  %3439 = vmatmul.mubr.f32.gmra.mrb[0].mxu0 %v2867
  %v3440 = vpop.f32.mrb[0].mxu0
  %v3441 = vadd.f32 %v3236, %v3440
  %v3442 = vpop.f32.mrb[0].mxu0
  %3443 = vmatprep.mubr.f32.mxu0 0.0
  %3444 = vmatmul.mubr.f32.gmra.mrb[0].mxu0 %v2870
  %v3445 = vpop.f32.mrb[0].mxu0
  %v3446 = vadd.f32 %v3241, %v3445
  %v3447 = vpop.f32.mrb[0].mxu0
  %3448 = vmatprep.mubr.f32.mxu0 0.0
  %3449 = vmatmul.mubr.f32.gmra.mrb[0].mxu0 %v2873
  %v3450 = vpop.f32.mrb[0].mxu0
  %v3451 = vadd.f32 %v3246, %v3450
  %v3452 = vpop.f32.mrb[0].mxu0
  %3453 = vmatprep.mubr.f32.mxu0 0.0
  %3454 = vmatmul.mubr.f32.gmra.mrb[0].mxu0 %v2876
  %v3455 = vpop.f32.mrb[0].mxu0
  %v3456 = vadd.f32 %v3251, %v3455
  %v3457 = vpop.f32.mrb[0].mxu0
  %3458 = vmatprep.mubr.f32.mxu0 0.0
  %3459 = vmatmul.mubr.f32.gmra.mrb[0].mxu0 %v2879
  %v3460 = vpop.f32.mrb[0].mxu0
  %v3461 = vadd.f32 %v3256, %v3460
  %v3462 = vpop.f32.mrb[0].mxu0
  %3463 = vmatprep.mubr.f32.mxu0 0.0
  %3464 = vmatmul.mubr.f32.gmra.mrb[0].mxu0 %v2882
  %v3465 = vpop.f32.mrb[0].mxu0
  %v3466 = vadd.f32 %v3261, %v3465
  %v3467 = vpop.f32.mrb[0].mxu0
  %3468 = vmatprep.mubr.f32.mxu0 0.0
  %3469 = vmatmul.mubr.f32.gmra.mrb[0].mxu0 %v2885
  %v3470 = vpop.f32.mrb[0].mxu0
  %v3471 = vadd.f32 %v3266, %v3470
  %v3472 = vpop.f32.mrb[0].mxu0
  %3473 = vmatprep.mubr.f32.mxu0 0.0
  %3474 = vmatmul.mubr.f32.gmra.mrb[0].mxu0 %v2888
  %v3475 = vpop.f32.mrb[0].mxu0
  %v3476 = vadd.f32 %v3271, %v3475
  %v3477 = vpop.f32.mrb[0].mxu0
  %3478 = vmatprep.mubr.f32.mxu0 0.0
  %3479 = vmatmul.mubr.f32.gmra.mrb[0].mxu0 %v2891
  %v3480 = vpop.f32.mrb[0].mxu0
  %v3481 = vadd.f32 %v3276, %v3480
  %v3482 = vpop.f32.mrb[0].mxu0
  %3483 = vmatprep.mubr.f32.mxu0 0.0
  %3484 = vmatmul.mubr.f32.gmra.mrb[0].mxu0 %v2894
  %v3485 = vpop.f32.mrb[0].mxu0
  %v3486 = vadd.f32 %v3281, %v3485
  %v3487 = vpop.f32.mrb[0].mxu0
  %3488 = vmatprep.mubr.f32.mxu0 0.0
  %3489 = vmatmul.mubr.f32.gmra.mrb[0].mxu0 %v2897
  %v3490 = vpop.f32.mrb[0].mxu0
  %v3491 = vadd.f32 %v3286, %v3490
  %v3492 = vpop.f32.mrb[0].mxu0
  %3493 = vmatprep.mubr.f32.mxu0 0.0
  %3494 = vmatmul.mubr.f32.gmra.mrb[0].mxu0 %v2900
  %v3495 = vpop.f32.mrb[0].mxu0
  %v3496 = vadd.f32 %v3291, %v3495
  %v3497 = vpop.f32.mrb[0].mxu0
  %3498 = vmatprep.mubr.f32.mxu0 0.0
  %3499 = vmatmul.mubr.f32.gmra.mrb[0].mxu0 %v2903
  %v3500 = vpop.f32.mrb[0].mxu0
  %v3501 = vadd.f32 %v3296, %v3500
  %v3502 = vpop.f32.mrb[0].mxu0
  %3503 = vmatprep.mubr.f32.mxu0 0.0
  %3504 = vmatmul.mubr.f32.gmra.mrb[0].mxu0 %v2906
  %v3505 = vpop.f32.mrb[0].mxu0
  %v3506 = vadd.f32 %v3301, %v3505
  %v3507 = vpop.f32.mrb[0].mxu0
  %3508 = vmatprep.mubr.f32.mxu0 0.0
  %3509 = vmatmul.mubr.f32.gmra.mrb[0].mxu0 %v2909
  %v3510 = vpop.f32.mrb[0].mxu0
  %v3511 = vadd.f32 %v3306, %v3510
  %v3512 = vpop.f32.mrb[0].mxu0
  %3513 = vmatprep.mubr.f32.mxu0 0.0
  %3514 = vmatmul.mubr.f32.gmra.mrb[0].mxu0 %v2912
  %v3515 = vpop.f32.mrb[0].mxu0
  %v3516 = vadd.f32 %v3311, %v3515
  %v3517 = vpop.f32.mrb[0].mxu0
  %3518 = vmatprep.mubr.f32.mxu0 0.0
  %3519 = vmatmul.mubr.f32.gmra.mrb[0].mxu0 %v2915
  %v3520 = vpop.f32.mrb[0].mxu0
  %v3521 = vadd.f32 %v3316, %v3520
  %v3522 = vpop.f32.mrb[0].mxu0
  %3523 = vmatprep.mubr.f32.mxu0 0.0
  %3524 = vmatmul.mubr.f32.gmra.mrb[0].mxu0 %v2918
  %v3525 = vpop.f32.mrb[0].mxu0
  %v3526 = vadd.f32 %v3321, %v3525
  %v3527 = vpop.f32.mrb[0].mxu0
  %3528 = vmatprep.mubr.f32.mxu0 0.0
  %3529 = vmatmul.mubr.f32.gmra.mrb[0].mxu0 %v2921
  %v3530 = vpop.f32.mrb[0].mxu0
  %v3531 = vadd.f32 %v3326, %v3530
  %v3532 = vpop.f32.mrb[0].mxu0
  %3533 = vmatprep.mubr.f32.mxu0 0.0
  %3534 = vmatmul.mubr.f32.gmra.mrb[0].mxu0 %v2924
  %v3535 = vpop.f32.mrb[0].mxu0
  %v3536 = vadd.f32 %v3331, %v3535
  %v3537 = vpop.f32.mrb[0].mxu0
  %3538 = vmatprep.mubr.f32.mxu0 0.0
  %3539 = vmatmul.mubr.f32.gmra.mrb[0].mxu0 %v2927
  %v3540 = vpop.f32.mrb[0].mxu0
  %v3541 = vadd.f32 %v3336, %v3540
  %v3542 = vpop.f32.mrb[0].mxu0
  %3543 = vmatprep.mubr.f32.mxu0 0.0
  %3544 = vmatmul.mubr.f32.gmra.mrb[0].mxu0 %v2930
  %v3545 = vpop.f32.mrb[0].mxu0
  %v3546 = vadd.f32 %v3341, %v3545
  %v3547 = vpop.f32.mrb[0].mxu0
  %3548 = vmatprep.mubr.f32.mxu0 0.0
  %3549 = vmatmul.mubr.f32.gmra.mrb[0].mxu0 %v2933
  %v3550 = vpop.f32.mrb[0].mxu0
  %v3551 = vadd.f32 %v3346, %v3550
  %v3552 = vpop.f32.mrb[0].mxu0
  %3553 = vdwg.mxu0
  %v3554 = vmax.f32 %v3416, 0.0
  %v3555 = vmax.f32 %v3421, 0.0
  %v3556 = vmax.f32 %v3426, 0.0
  %v3557 = vmax.f32 %v3431, 0.0
  %v3558 = vmax.f32 %v3436, 0.0
  %v3559 = vmax.f32 %v3441, 0.0
  %v3560 = vmax.f32 %v3446, 0.0
  %v3561 = vmax.f32 %v3451, 0.0
  %v3562 = vmax.f32 %v3456, 0.0
  %v3563 = vmax.f32 %v3461, 0.0
  %v3564 = vmax.f32 %v3466, 0.0
  %v3565 = vmax.f32 %v3471, 0.0
  %v3566 = vmax.f32 %v3476, 0.0
  %v3567 = vmax.f32 %v3481, 0.0
  %v3568 = vmax.f32 %v3486, 0.0
  %v3569 = vmax.f32 %v3491, 0.0
  %v3570 = vmax.f32 %v3496, 0.0
  %v3571 = vmax.f32 %v3501, 0.0
  %v3572 = vmax.f32 %v3506, 0.0
  %v3573 = vmax.f32 %v3511, 0.0
  %v3574 = vmax.f32 %v3516, 0.0
  %v3575 = vmax.f32 %v3521, 0.0
  %v3576 = vmax.f32 %v3526, 0.0
  %v3577 = vmax.f32 %v3531, 0.0
  %v3578 = vmax.f32 %v3536, 0.0
  %v3579 = vmax.f32 %v3541, 0.0
  %v3580 = vmax.f32 %v3546, 0.0
  %v3581 = vmax.f32 %v3551, 0.0
  %3610 = vrot.lane.b32.xlu0 %v3554, 120
  %v3611 = vpop.permute.xlu0 %3610
  %3612 = vrot.lane.b32.xlu0 %v3555, 120
  %v3613 = vpop.permute.xlu0 %3612
  %3614 = vrot.lane.b32.xlu0 %v3556, 120
  %v3615 = vpop.permute.xlu0 %3614
  %3616 = vrot.lane.b32.xlu0 %v3557, 120
  %v3617 = vpop.permute.xlu0 %3616
  %3618 = vrot.lane.b32.xlu0 %v3558, 120
  %v3619 = vpop.permute.xlu0 %3618
  %3620 = vrot.lane.b32.xlu0 %v3559, 120
  %v3621 = vpop.permute.xlu0 %3620
  %3622 = vrot.lane.b32.xlu0 %v3560, 120
  %v3623 = vpop.permute.xlu0 %3622
  %3624 = vrot.lane.b32.xlu0 %v3561, 120
  %v3625 = vpop.permute.xlu0 %3624
  %3626 = vrot.lane.b32.xlu0 %v3562, 120
  %v3627 = vpop.permute.xlu0 %3626
  %3628 = vrot.lane.b32.xlu0 %v3563, 120
  %v3629 = vpop.permute.xlu0 %3628
  %3630 = vrot.lane.b32.xlu0 %v3564, 120
  %v3631 = vpop.permute.xlu0 %3630
  %3632 = vrot.lane.b32.xlu0 %v3565, 120
  %v3633 = vpop.permute.xlu0 %3632
  %3634 = vrot.lane.b32.xlu0 %v3566, 120
  %v3635 = vpop.permute.xlu0 %3634
  %3636 = vrot.lane.b32.xlu0 %v3567, 120
  %v3637 = vpop.permute.xlu0 %3636
  %3638 = vrot.lane.b32.xlu0 %v3568, 120
  %v3639 = vpop.permute.xlu0 %3638
  %3640 = vrot.lane.b32.xlu0 %v3569, 120
  %v3641 = vpop.permute.xlu0 %3640
  %3642 = vrot.lane.b32.xlu0 %v3570, 120
  %v3643 = vpop.permute.xlu0 %3642
  %3644 = vrot.lane.b32.xlu0 %v3571, 120
  %v3645 = vpop.permute.xlu0 %3644
  %3646 = vrot.lane.b32.xlu0 %v3572, 120
  %v3647 = vpop.permute.xlu0 %3646
  %3648 = vrot.lane.b32.xlu0 %v3573, 120
  %v3649 = vpop.permute.xlu0 %3648
  %3650 = vrot.lane.b32.xlu0 %v3574, 120
  %v3651 = vpop.permute.xlu0 %3650
  %3652 = vrot.lane.b32.xlu0 %v3575, 120
  %v3653 = vpop.permute.xlu0 %3652
  %3654 = vrot.lane.b32.xlu0 %v3576, 120
  %v3655 = vpop.permute.xlu0 %3654
  %3656 = vrot.lane.b32.xlu0 %v3577, 120
  %v3657 = vpop.permute.xlu0 %3656
  %3658 = vrot.lane.b32.xlu0 %v3578, 120
  %v3659 = vpop.permute.xlu0 %3658
  %3660 = vrot.lane.b32.xlu0 %v3579, 120
  %v3661 = vpop.permute.xlu0 %3660
  %3662 = vrot.lane.b32.xlu0 %v3580, 120
  %v3663 = vpop.permute.xlu0 %3662
  %3664 = vrot.lane.b32.xlu0 %v3581, 120
  %v3665 = vpop.permute.xlu0 %3664
  %v3694 = vmax.f32 %v3554, %v3611
  %v3695 = vmax.f32 %v3555, %v3613
  %v3696 = vmax.f32 %v3556, %v3615
  %v3697 = vmax.f32 %v3557, %v3617
  %v3698 = vmax.f32 %v3558, %v3619
  %v3699 = vmax.f32 %v3559, %v3621
  %v3700 = vmax.f32 %v3560, %v3623
  %v3701 = vmax.f32 %v3561, %v3625
  %v3702 = vmax.f32 %v3562, %v3627
  %v3703 = vmax.f32 %v3563, %v3629
  %v3704 = vmax.f32 %v3564, %v3631
  %v3705 = vmax.f32 %v3565, %v3633
  %v3706 = vmax.f32 %v3566, %v3635
  %v3707 = vmax.f32 %v3567, %v3637
  %v3708 = vmax.f32 %v3568, %v3639
  %v3709 = vmax.f32 %v3569, %v3641
  %v3710 = vmax.f32 %v3570, %v3643
  %v3711 = vmax.f32 %v3571, %v3645
  %v3712 = vmax.f32 %v3572, %v3647
  %v3713 = vmax.f32 %v3573, %v3649
  %v3714 = vmax.f32 %v3574, %v3651
  %v3715 = vmax.f32 %v3575, %v3653
  %v3716 = vmax.f32 %v3576, %v3655
  %v3717 = vmax.f32 %v3577, %v3657
  %v3718 = vmax.f32 %v3578, %v3659
  %v3719 = vmax.f32 %v3579, %v3661
  %v3720 = vmax.f32 %v3580, %v3663
  %v3721 = vmax.f32 %v3581, %v3665
  %v3722 = vld [vmem:[%s7] sm:$0xff]
  %v3723 = vld [vmem:[%s7 + $0x8] sm:$0xff]
  %v3724 = vld [vmem:[%s7 + $0x10] sm:$0xff]
  %v3725 = vld [vmem:[%s7 + $0x18] sm:$0xff]
  %v3726 = vld [vmem:[%s7 + $0x20] sm:$0xff]
  %v3727 = vld [vmem:[%s7 + $0x28] sm:$0xff]
  %v3728 = vld [vmem:[%s7 + $0x30] sm:$0xff]
  %v3729 = vld [vmem:[%s7 + $0x38] sm:$0xff]
  %v3730 = vld [vmem:[%s7 + $0x40] sm:$0xff]
  %v3731 = vld [vmem:[%s7 + $0x48] sm:$0xff]
  %v3732 = vld [vmem:[%s7 + $0x50] sm:$0xff]
  %v3733 = vld [vmem:[%s7 + $0x58] sm:$0xff]
  %v3734 = vld [vmem:[%s7 + $0x60] sm:$0xff]
  %v3736 = vsel %vm165, %v3694, 0
  %v3739 = vsel %vm165, %v3695, 0
  %v3742 = vsel %vm165, %v3696, 0
  %v3745 = vsel %vm165, %v3697, 0
  %v3748 = vsel %vm165, %v3698, 0
  %v3751 = vsel %vm165, %v3699, 0
  %v3754 = vsel %vm165, %v3700, 0
  %v3757 = vsel %vm165, %v3701, 0
  %v3760 = vsel %vm165, %v3702, 0
  %v3763 = vsel %vm165, %v3703, 0
  %v3766 = vsel %vm165, %v3704, 0
  %v3769 = vsel %vm165, %v3705, 0
  %v3772 = vsel %vm165, %v3706, 0
  %v3775 = vsel %vm165, %v3707, 0
  %v3778 = vsel %vm165, %v3708, 0
  %v3781 = vsel %vm165, %v3709, 0
  %v3784 = vsel %vm165, %v3710, 0
  %v3787 = vsel %vm165, %v3711, 0
  %v3790 = vsel %vm165, %v3712, 0
  %v3793 = vsel %vm165, %v3713, 0
  %v3796 = vsel %vm165, %v3714, 0
  %v3799 = vsel %vm165, %v3715, 0
  %v3802 = vsel %vm165, %v3716, 0
  %v3805 = vsel %vm165, %v3717, 0
  %v3808 = vsel %vm165, %v3718, 0
  %v3811 = vsel %vm165, %v3719, 0
  %v3814 = vsel %vm165, %v3720, 0
  %v3817 = vsel %vm165, %v3721, 0
  %3819 = vmatprep.subr.mxu0 0.0
  %3820 = vmatpush1.msra.mxu0 %v3722
  %3821 = vmatprep.subr.mxu0 0.0
  %3822 = vmatpush1.msra.mxu0 %v3723
  %3823 = vmatprep.subr.mxu0 0.0
  %3824 = vmatpush1.msra.mxu0 %v3724
  %3825 = vmatprep.subr.mxu0 0.0
  %3826 = vmatpush1.msra.mxu0 %v3725
  %3827 = vmatprep.subr.mxu0 0.0
  %3828 = vmatpush1.msra.mxu0 %v3726
  %3829 = vmatprep.subr.mxu0 0.0
  %3830 = vmatpush1.msra.mxu0 %v3727
  %3831 = vmatprep.subr.mxu0 0.0
  %3832 = vmatpush1.msra.mxu0 %v3728
  %3833 = vmatprep.subr.mxu0 0.0
  %3834 = vmatpush1.msra.mxu0 %v3729
  %3835 = vmatprep.subr.mxu0 0.0
  %3836 = vmatpush1.msra.mxu0 %v3730
  %3837 = vmatprep.subr.mxu0 0.0
  %3838 = vmatpush1.msra.mxu0 %v3731
  %3839 = vmatprep.subr.mxu0 0.0
  %3840 = vmatpush1.msra.mxu0 %v3732
  %3841 = vmatprep.subr.mxu0 0.0
  %3842 = vmatpush1.msra.mxu0 %v3733
  %3843 = vmatprep.subr.mxu0 0.0
  %3844 = vmatpush1.msra.mxu0 %v3734
  %3845 = vmatprep.subr.mxu0 0.0
  %3846 = vmatpush1.msra.mxu0 0.0
  %3847 = vmatprep.subr.mxu0 0.0
  %3848 = vmatpush1.msra.mxu0 0.0
  %3849 = vmatprep.subr.mxu0 0.0
  %3850 = vmatpush1.msra.mxu0 0.0
  %3851 = vmatprep.subr.mxu0 0.0
  %3852 = vmatpush1.msra.mxu0 0.0
  %3853 = vmatprep.subr.mxu0 0.0
  %3854 = vmatpush1.msra.mxu0 0.0
  %3855 = vmatprep.subr.mxu0 0.0
  %3856 = vmatpush1.msra.mxu0 0.0
  %3857 = vmatprep.subr.mxu0 0.0
  %3858 = vmatpush1.msra.mxu0 0.0
  %3859 = vmatprep.subr.mxu0 0.0
  %3860 = vmatpush1.msra.mxu0 0.0
  %3861 = vmatprep.subr.mxu0 0.0
  %3862 = vmatpush1.msra.mxu0 0.0
  %3863 = vmatprep.subr.mxu0 0.0
  %3864 = vmatpush1.msra.mxu0 0.0
  %3865 = vmatprep.subr.mxu0 0.0
  %3866 = vmatpush1.msra.mxu0 0.0
  %3867 = vmatprep.subr.mxu0 0.0
  %3868 = vmatpush1.msra.mxu0 0.0
  %3869 = vmatprep.subr.mxu0 0.0
  %3870 = vmatpush1.msra.mxu0 0.0
  %3871 = vmatprep.subr.mxu0 0.0
  %3872 = vmatpush1.msra.mxu0 0.0
  %3873 = vmatprep.subr.mxu0 0.0
  %3874 = vmatpush1.msra.mxu0 0.0
  %3875 = vmatprep.subr.mxu0 0.0
  %3876 = vmatpush1.msra.mxu0 0.0
  %3877 = vmatprep.subr.mxu0 0.0
  %3878 = vmatpush1.msra.mxu0 0.0
  %3879 = vmatprep.subr.mxu0 0.0
  %3880 = vmatpush1.msra.mxu0 0.0
  %3881 = vmatprep.subr.mxu0 0.0
  %3882 = vmatpush1.msra.mxu0 0.0
  %3883 = vmatprep.mubr.f32.mxu0 0.0
  %3884 = vmatmul.mubr.f32.gmra.mrb[0].mxu0 %v3736
  %v3885 = vpop.f32.mrb[0].mxu0
  %v3886 = vadd.f32 0.0, %v3885
  %v3887 = vpop.f32.mrb[0].mxu0
  %3888 = vmatprep.mubr.f32.mxu0 0.0
  %3889 = vmatmul.mubr.f32.gmra.mrb[0].mxu0 %v3739
  %v3890 = vpop.f32.mrb[0].mxu0
  %v3891 = vadd.f32 0.0, %v3890
  %v3892 = vpop.f32.mrb[0].mxu0
  %3893 = vmatprep.mubr.f32.mxu0 0.0
  %3894 = vmatmul.mubr.f32.gmra.mrb[0].mxu0 %v3742
  %v3895 = vpop.f32.mrb[0].mxu0
  %v3896 = vadd.f32 0.0, %v3895
  %v3897 = vpop.f32.mrb[0].mxu0
  %3898 = vmatprep.mubr.f32.mxu0 0.0
  %3899 = vmatmul.mubr.f32.gmra.mrb[0].mxu0 %v3745
  %v3900 = vpop.f32.mrb[0].mxu0
  %v3901 = vadd.f32 0.0, %v3900
  %v3902 = vpop.f32.mrb[0].mxu0
  %3903 = vmatprep.mubr.f32.mxu0 0.0
  %3904 = vmatmul.mubr.f32.gmra.mrb[0].mxu0 %v3748
  %v3905 = vpop.f32.mrb[0].mxu0
  %v3906 = vadd.f32 0.0, %v3905
  %v3907 = vpop.f32.mrb[0].mxu0
  %3908 = vmatprep.mubr.f32.mxu0 0.0
  %3909 = vmatmul.mubr.f32.gmra.mrb[0].mxu0 %v3751
  %v3910 = vpop.f32.mrb[0].mxu0
  %v3911 = vadd.f32 0.0, %v3910
  %v3912 = vpop.f32.mrb[0].mxu0
  %3913 = vmatprep.mubr.f32.mxu0 0.0
  %3914 = vmatmul.mubr.f32.gmra.mrb[0].mxu0 %v3754
  %v3915 = vpop.f32.mrb[0].mxu0
  %v3916 = vadd.f32 0.0, %v3915
  %v3917 = vpop.f32.mrb[0].mxu0
  %3918 = vmatprep.mubr.f32.mxu0 0.0
  %3919 = vmatmul.mubr.f32.gmra.mrb[0].mxu0 %v3757
  %v3920 = vpop.f32.mrb[0].mxu0
  %v3921 = vadd.f32 0.0, %v3920
  %v3922 = vpop.f32.mrb[0].mxu0
  %3923 = vmatprep.mubr.f32.mxu0 0.0
  %3924 = vmatmul.mubr.f32.gmra.mrb[0].mxu0 %v3760
  %v3925 = vpop.f32.mrb[0].mxu0
  %v3926 = vadd.f32 0.0, %v3925
  %v3927 = vpop.f32.mrb[0].mxu0
  %3928 = vmatprep.mubr.f32.mxu0 0.0
  %3929 = vmatmul.mubr.f32.gmra.mrb[0].mxu0 %v3763
  %v3930 = vpop.f32.mrb[0].mxu0
  %v3931 = vadd.f32 0.0, %v3930
  %v3932 = vpop.f32.mrb[0].mxu0
  %3933 = vmatprep.mubr.f32.mxu0 0.0
  %3934 = vmatmul.mubr.f32.gmra.mrb[0].mxu0 %v3766
  %v3935 = vpop.f32.mrb[0].mxu0
  %v3936 = vadd.f32 0.0, %v3935
  %v3937 = vpop.f32.mrb[0].mxu0
  %3938 = vmatprep.mubr.f32.mxu0 0.0
  %3939 = vmatmul.mubr.f32.gmra.mrb[0].mxu0 %v3769
  %v3940 = vpop.f32.mrb[0].mxu0
  %v3941 = vadd.f32 0.0, %v3940
  %v3942 = vpop.f32.mrb[0].mxu0
  %3943 = vmatprep.mubr.f32.mxu0 0.0
  %3944 = vmatmul.mubr.f32.gmra.mrb[0].mxu0 %v3772
  %v3945 = vpop.f32.mrb[0].mxu0
  %v3946 = vadd.f32 0.0, %v3945
  %v3947 = vpop.f32.mrb[0].mxu0
  %3948 = vmatprep.mubr.f32.mxu0 0.0
  %3949 = vmatmul.mubr.f32.gmra.mrb[0].mxu0 %v3775
  %v3950 = vpop.f32.mrb[0].mxu0
  %v3951 = vadd.f32 0.0, %v3950
  %v3952 = vpop.f32.mrb[0].mxu0
  %3953 = vmatprep.mubr.f32.mxu0 0.0
  %3954 = vmatmul.mubr.f32.gmra.mrb[0].mxu0 %v3778
  %v3955 = vpop.f32.mrb[0].mxu0
  %v3956 = vadd.f32 0.0, %v3955
  %v3957 = vpop.f32.mrb[0].mxu0
  %3958 = vmatprep.mubr.f32.mxu0 0.0
  %3959 = vmatmul.mubr.f32.gmra.mrb[0].mxu0 %v3781
  %v3960 = vpop.f32.mrb[0].mxu0
  %v3961 = vadd.f32 0.0, %v3960
  %v3962 = vpop.f32.mrb[0].mxu0
  %3963 = vmatprep.mubr.f32.mxu0 0.0
  %3964 = vmatmul.mubr.f32.gmra.mrb[0].mxu0 %v3784
  %v3965 = vpop.f32.mrb[0].mxu0
  %v3966 = vadd.f32 0.0, %v3965
  %v3967 = vpop.f32.mrb[0].mxu0
  %3968 = vmatprep.mubr.f32.mxu0 0.0
  %3969 = vmatmul.mubr.f32.gmra.mrb[0].mxu0 %v3787
  %v3970 = vpop.f32.mrb[0].mxu0
  %v3971 = vadd.f32 0.0, %v3970
  %v3972 = vpop.f32.mrb[0].mxu0
  %3973 = vmatprep.mubr.f32.mxu0 0.0
  %3974 = vmatmul.mubr.f32.gmra.mrb[0].mxu0 %v3790
  %v3975 = vpop.f32.mrb[0].mxu0
  %v3976 = vadd.f32 0.0, %v3975
  %v3977 = vpop.f32.mrb[0].mxu0
  %3978 = vmatprep.mubr.f32.mxu0 0.0
  %3979 = vmatmul.mubr.f32.gmra.mrb[0].mxu0 %v3793
  %v3980 = vpop.f32.mrb[0].mxu0
  %v3981 = vadd.f32 0.0, %v3980
  %v3982 = vpop.f32.mrb[0].mxu0
  %3983 = vmatprep.mubr.f32.mxu0 0.0
  %3984 = vmatmul.mubr.f32.gmra.mrb[0].mxu0 %v3796
  %v3985 = vpop.f32.mrb[0].mxu0
  %v3986 = vadd.f32 0.0, %v3985
  %v3987 = vpop.f32.mrb[0].mxu0
  %3988 = vmatprep.mubr.f32.mxu0 0.0
  %3989 = vmatmul.mubr.f32.gmra.mrb[0].mxu0 %v3799
  %v3990 = vpop.f32.mrb[0].mxu0
  %v3991 = vadd.f32 0.0, %v3990
  %v3992 = vpop.f32.mrb[0].mxu0
  %3993 = vmatprep.mubr.f32.mxu0 0.0
  %3994 = vmatmul.mubr.f32.gmra.mrb[0].mxu0 %v3802
  %v3995 = vpop.f32.mrb[0].mxu0
  %v3996 = vadd.f32 0.0, %v3995
  %v3997 = vpop.f32.mrb[0].mxu0
  %3998 = vmatprep.mubr.f32.mxu0 0.0
  %3999 = vmatmul.mubr.f32.gmra.mrb[0].mxu0 %v3805
  %v4000 = vpop.f32.mrb[0].mxu0
  %v4001 = vadd.f32 0.0, %v4000
  %v4002 = vpop.f32.mrb[0].mxu0
  %4003 = vmatprep.mubr.f32.mxu0 0.0
  %4004 = vmatmul.mubr.f32.gmra.mrb[0].mxu0 %v3808
  %v4005 = vpop.f32.mrb[0].mxu0
  %v4006 = vadd.f32 0.0, %v4005
  %v4007 = vpop.f32.mrb[0].mxu0
  %4008 = vmatprep.mubr.f32.mxu0 0.0
  %4009 = vmatmul.mubr.f32.gmra.mrb[0].mxu0 %v3811
  %v4010 = vpop.f32.mrb[0].mxu0
  %v4011 = vadd.f32 0.0, %v4010
  %v4012 = vpop.f32.mrb[0].mxu0
  %4013 = vmatprep.mubr.f32.mxu0 0.0
  %4014 = vmatmul.mubr.f32.gmra.mrb[0].mxu0 %v3814
  %v4015 = vpop.f32.mrb[0].mxu0
  %v4016 = vadd.f32 0.0, %v4015
  %v4017 = vpop.f32.mrb[0].mxu0
  %4018 = vmatprep.mubr.f32.mxu0 0.0
  %4019 = vmatmul.mubr.f32.gmra.mrb[0].mxu0 %v3817
  %v4020 = vpop.f32.mrb[0].mxu0
  %v4021 = vadd.f32 0.0, %v4020
  %v4022 = vpop.f32.mrb[0].mxu0
  %4023 = vdwg.mxu0
  %vm4024 = vcmask 457728
  %4025 = vst.msk [vmem:[#allocation6] sm:$0xff] %vm4024, %v3886
  %4026 = vst.msk [vmem:[#allocation6 + $0x8] sm:$0xff] %vm4024, %v3891
  %4027 = vst.msk [vmem:[#allocation6 + $0x10] sm:$0xff] %vm4024, %v3896
  %4028 = vst.msk [vmem:[#allocation6 + $0x18] sm:$0xff] %vm4024, %v3901
  %4029 = vst.msk [vmem:[#allocation6 + $0x20] sm:$0xff] %vm4024, %v3906
  %4030 = vst.msk [vmem:[#allocation6 + $0x28] sm:$0xff] %vm4024, %v3911
  %4031 = vst.msk [vmem:[#allocation6 + $0x30] sm:$0xff] %vm4024, %v3916
  %4032 = vst.msk [vmem:[#allocation6 + $0x38] sm:$0xff] %vm4024, %v3921
  %4033 = vst.msk [vmem:[#allocation6 + $0x40] sm:$0xff] %vm4024, %v3926
  %4034 = vst.msk [vmem:[#allocation6 + $0x48] sm:$0xff] %vm4024, %v3931
  %4035 = vst.msk [vmem:[#allocation6 + $0x50] sm:$0xff] %vm4024, %v3936
  %4036 = vst.msk [vmem:[#allocation6 + $0x58] sm:$0xff] %vm4024, %v3941
  %4037 = vst.msk [vmem:[#allocation6 + $0x60] sm:$0xff] %vm4024, %v3946
  %4038 = vst.msk [vmem:[#allocation6 + $0x68] sm:$0xff] %vm4024, %v3951
  %4039 = vst.msk [vmem:[#allocation6 + $0x70] sm:$0xff] %vm4024, %v3956
  %4040 = vst.msk [vmem:[#allocation6 + $0x78] sm:$0xff] %vm4024, %v3961
  %4041 = vst.msk [vmem:[#allocation6 + $0x80] sm:$0xff] %vm4024, %v3966
  %4042 = vst.msk [vmem:[#allocation6 + $0x88] sm:$0xff] %vm4024, %v3971
  %4043 = vst.msk [vmem:[#allocation6 + $0x90] sm:$0xff] %vm4024, %v3976
  %4044 = vst.msk [vmem:[#allocation6 + $0x98] sm:$0xff] %vm4024, %v3981
  %4045 = vst.msk [vmem:[#allocation6 + $0xa0] sm:$0xff] %vm4024, %v3986
  %4046 = vst.msk [vmem:[#allocation6 + $0xa8] sm:$0xff] %vm4024, %v3991
  %4047 = vst.msk [vmem:[#allocation6 + $0xb0] sm:$0xff] %vm4024, %v3996
  %4048 = vst.msk [vmem:[#allocation6 + $0xb8] sm:$0xff] %vm4024, %v4001
  %4049 = vst.msk [vmem:[#allocation6 + $0xc0] sm:$0xff] %vm4024, %v4006
  %4050 = vst.msk [vmem:[#allocation6 + $0xc8] sm:$0xff] %vm4024, %v4011
  %4051 = vst.msk [vmem:[#allocation6 + $0xd0] sm:$0xff] %vm4024, %v4016
  %4052 = vst.msk [vmem:[#allocation6 + $0xd8] sm:$0xff] %vm4024, %v4021
  %v4053 = vld [vmem:[#allocation6] sm:$0xff]
  %v4054 = vld [vmem:[#allocation6 + $0x8] sm:$0xff]
  %v4055 = vld [vmem:[#allocation6 + $0x10] sm:$0xff]
  %v4056 = vld [vmem:[#allocation6 + $0x18] sm:$0xff]
  %v4057 = vld [vmem:[#allocation6 + $0x20] sm:$0xff]
  %v4058 = vld [vmem:[#allocation6 + $0x28] sm:$0xff]
  %v4059 = vld [vmem:[#allocation6 + $0x30] sm:$0xff]
  %v4060 = vld [vmem:[#allocation6 + $0x38] sm:$0xff]
  %v4061 = vld [vmem:[#allocation6 + $0x40] sm:$0xff]
  %v4062 = vld [vmem:[#allocation6 + $0x48] sm:$0xff]
  %v4063 = vld [vmem:[#allocation6 + $0x50] sm:$0xff]
  %v4064 = vld [vmem:[#allocation6 + $0x58] sm:$0xff]
  %v4065 = vld [vmem:[#allocation6 + $0x60] sm:$0xff]
  %v4066 = vld [vmem:[#allocation6 + $0x68] sm:$0xff]
  %v4067 = vld [vmem:[#allocation6 + $0x70] sm:$0xff]
  %v4068 = vld [vmem:[#allocation6 + $0x78] sm:$0xff]
  %v4069 = vld [vmem:[#allocation6 + $0x80] sm:$0xff]
  %v4070 = vld [vmem:[#allocation6 + $0x88] sm:$0xff]
  %v4071 = vld [vmem:[#allocation6 + $0x90] sm:$0xff]
  %v4072 = vld [vmem:[#allocation6 + $0x98] sm:$0xff]
  %v4073 = vld [vmem:[#allocation6 + $0xa0] sm:$0xff]
  %v4074 = vld [vmem:[#allocation6 + $0xa8] sm:$0xff]
  %v4075 = vld [vmem:[#allocation6 + $0xb0] sm:$0xff]
  %v4076 = vld [vmem:[#allocation6 + $0xb8] sm:$0xff]
  %v4077 = vld [vmem:[#allocation6 + $0xc0] sm:$0xff]
  %v4078 = vld [vmem:[#allocation6 + $0xc8] sm:$0xff]
  %v4079 = vld [vmem:[#allocation6 + $0xd0] sm:$0xff]
  %v4080 = vld [vmem:[#allocation6 + $0xd8] sm:$0x7f]
  %v4081 = vld [vmem:[#allocation6 + $0x1] sm:$0xff]
  %v4082 = vld [vmem:[#allocation6 + $0x9] sm:$0xff]
  %v4083 = vld [vmem:[#allocation6 + $0x11] sm:$0xff]
  %v4084 = vld [vmem:[#allocation6 + $0x19] sm:$0xff]
  %v4085 = vld [vmem:[#allocation6 + $0x21] sm:$0xff]
  %v4086 = vld [vmem:[#allocation6 + $0x29] sm:$0xff]
  %v4087 = vld [vmem:[#allocation6 + $0x31] sm:$0xff]
  %v4088 = vld [vmem:[#allocation6 + $0x39] sm:$0xff]
  %v4089 = vld [vmem:[#allocation6 + $0x41] sm:$0xff]
  %v4090 = vld [vmem:[#allocation6 + $0x49] sm:$0xff]
  %v4091 = vld [vmem:[#allocation6 + $0x51] sm:$0xff]
  %v4092 = vld [vmem:[#allocation6 + $0x59] sm:$0xff]
  %v4093 = vld [vmem:[#allocation6 + $0x61] sm:$0xff]
  %v4094 = vld [vmem:[#allocation6 + $0x69] sm:$0xff]
  %v4095 = vld [vmem:[#allocation6 + $0x71] sm:$0xff]
  %v4096 = vld [vmem:[#allocation6 + $0x79] sm:$0xff]
  %v4097 = vld [vmem:[#allocation6 + $0x81] sm:$0xff]
  %v4098 = vld [vmem:[#allocation6 + $0x89] sm:$0xff]
  %v4099 = vld [vmem:[#allocation6 + $0x91] sm:$0xff]
  %v4100 = vld [vmem:[#allocation6 + $0x99] sm:$0xff]
  %v4101 = vld [vmem:[#allocation6 + $0xa1] sm:$0xff]
  %v4102 = vld [vmem:[#allocation6 + $0xa9] sm:$0xff]
  %v4103 = vld [vmem:[#allocation6 + $0xb1] sm:$0xff]
  %v4104 = vld [vmem:[#allocation6 + $0xb9] sm:$0xff]
  %v4105 = vld [vmem:[#allocation6 + $0xc1] sm:$0xff]
  %v4106 = vld [vmem:[#allocation6 + $0xc9] sm:$0xff]
  %v4107 = vld [vmem:[#allocation6 + $0xd1] sm:$0xff]
  %v4108 = vld [vmem:[#allocation6 + $0xd9] sm:$0x7f]
  %v4109 = vmax.f32 %v4053, %v4081
  %v4110 = vmax.f32 %v4054, %v4082
  %v4111 = vmax.f32 %v4055, %v4083
  %v4112 = vmax.f32 %v4056, %v4084
  %v4113 = vmax.f32 %v4057, %v4085
  %v4114 = vmax.f32 %v4058, %v4086
  %v4115 = vmax.f32 %v4059, %v4087
  %v4116 = vmax.f32 %v4060, %v4088
  %v4117 = vmax.f32 %v4061, %v4089
  %v4118 = vmax.f32 %v4062, %v4090
  %v4119 = vmax.f32 %v4063, %v4091
  %v4120 = vmax.f32 %v4064, %v4092
  %v4121 = vmax.f32 %v4065, %v4093
  %v4122 = vmax.f32 %v4066, %v4094
  %v4123 = vmax.f32 %v4067, %v4095
  %v4124 = vmax.f32 %v4068, %v4096
  %v4125 = vmax.f32 %v4069, %v4097
  %v4126 = vmax.f32 %v4070, %v4098
  %v4127 = vmax.f32 %v4071, %v4099
  %v4128 = vmax.f32 %v4072, %v4100
  %v4129 = vmax.f32 %v4073, %v4101
  %v4130 = vmax.f32 %v4074, %v4102
  %v4131 = vmax.f32 %v4075, %v4103
  %v4132 = vmax.f32 %v4076, %v4104
  %v4133 = vmax.f32 %v4077, %v4105
  %v4134 = vmax.f32 %v4078, %v4106
  %v4135 = vmax.f32 %v4079, %v4107
  %v4136 = vmax.f32 %v4080, %v4108
  %v4137 = vld [vmem:[%s8] sm:$0xff]
  %v4138 = vld [vmem:[%s8 + $0x8] sm:$0xff]
  %v4139 = vld [vmem:[%s8 + $0x10] sm:$0xff]
  %v4140 = vld [vmem:[%s8 + $0x18] sm:$0xff]
  %v4141 = vld [vmem:[%s8 + $0x20] sm:$0xff]
  %v4142 = vld [vmem:[%s8 + $0x28] sm:$0xff]
  %v4143 = vld [vmem:[%s8 + $0x30] sm:$0xff]
  %v4144 = vld [vmem:[%s8 + $0x38] sm:$0xff]
  %v4145 = vld [vmem:[%s8 + $0x40] sm:$0xff]
  %v4146 = vld [vmem:[%s8 + $0x48] sm:$0xff]
  %v4147 = vld [vmem:[%s8 + $0x50] sm:$0xff]
  %v4148 = vld [vmem:[%s8 + $0x58] sm:$0xff]
  %v4149 = vld [vmem:[%s8 + $0x60] sm:$0xff]
  %v4150 = vld [vmem:[%s8 + $0x68] sm:$0xff]
  %v4151 = vld [vmem:[%s8 + $0x70] sm:$0xff]
  %v4152 = vld [vmem:[%s8 + $0x78] sm:$0xff]
  %v4153 = vld [vmem:[%s8 + $0x80] sm:$0xff]
  %v4154 = vld [vmem:[%s8 + $0x88] sm:$0xff]
  %v4155 = vld [vmem:[%s8 + $0x90] sm:$0xff]
  %v4156 = vld [vmem:[%s8 + $0x98] sm:$0xff]
  %v4157 = vld [vmem:[%s8 + $0xa0] sm:$0xff]
  %v4158 = vld [vmem:[%s8 + $0xa8] sm:$0xff]
  %v4159 = vld [vmem:[%s8 + $0xb0] sm:$0xff]
  %v4160 = vld [vmem:[%s8 + $0xb8] sm:$0xff]
  %v4161 = vld [vmem:[%s8 + $0xc0] sm:$0xff]
  %v4162 = vld [vmem:[%s8 + $0xc8] sm:$0xff]
  %v4163 = vld [vmem:[%s8 + $0xd0] sm:$0xff]
  %v4164 = vld [vmem:[%s8 + $0xd8] sm:$0xff]
  %vm4165 = vcmask 777216
  %v4167 = vsel %vm4165, %v4138, 0
  %v4170 = vsel %vm4165, %v4140, 0
  %v4173 = vsel %vm4165, %v4142, 0
  %v4176 = vsel %vm4165, %v4144, 0
  %v4179 = vsel %vm4165, %v4146, 0
  %v4182 = vsel %vm4165, %v4148, 0
  %v4185 = vsel %vm4165, %v4150, 0
  %v4188 = vsel %vm4165, %v4152, 0
  %v4191 = vsel %vm4165, %v4154, 0
  %v4194 = vsel %vm4165, %v4156, 0
  %v4197 = vsel %vm4165, %v4158, 0
  %v4200 = vsel %vm4165, %v4160, 0
  %v4203 = vsel %vm4165, %v4162, 0
  %v4206 = vsel %vm4165, %v4164, 0
  %v4209 = vsel %vm1398, %v4136, 0
  %4211 = vmatprep.subr.mxu0 0.0
  %4212 = vmatpush1.msra.mxu0 %v4109
  %4213 = vmatprep.subr.mxu0 0.0
  %4214 = vmatpush1.msra.mxu0 %v4110
  %4215 = vmatprep.subr.mxu0 0.0
  %4216 = vmatpush1.msra.mxu0 %v4111
  %4217 = vmatprep.subr.mxu0 0.0
  %4218 = vmatpush1.msra.mxu0 %v4112
  %4219 = vmatprep.subr.mxu0 0.0
  %4220 = vmatpush1.msra.mxu0 %v4113
  %4221 = vmatprep.subr.mxu0 0.0
  %4222 = vmatpush1.msra.mxu0 %v4114
  %4223 = vmatprep.subr.mxu0 0.0
  %4224 = vmatpush1.msra.mxu0 %v4115
  %4225 = vmatprep.subr.mxu0 0.0
  %4226 = vmatpush1.msra.mxu0 %v4116
  %4227 = vmatprep.subr.mxu0 0.0
  %4228 = vmatpush1.msra.mxu0 %v4117
  %4229 = vmatprep.subr.mxu0 0.0
  %4230 = vmatpush1.msra.mxu0 %v4118
  %4231 = vmatprep.subr.mxu0 0.0
  %4232 = vmatpush1.msra.mxu0 %v4119
  %4233 = vmatprep.subr.mxu0 0.0
  %4234 = vmatpush1.msra.mxu0 %v4120
  %4235 = vmatprep.subr.mxu0 0.0
  %4236 = vmatpush1.msra.mxu0 %v4121
  %4237 = vmatprep.subr.mxu0 0.0
  %4238 = vmatpush1.msra.mxu0 %v4122
  %4239 = vmatprep.subr.mxu0 0.0
  %4240 = vmatpush1.msra.mxu0 %v4123
  %4241 = vmatprep.subr.mxu0 0.0
  %4242 = vmatpush1.msra.mxu0 %v4124
  %4243 = vmatprep.subr.mxu0 0.0
  %4244 = vmatpush1.msra.mxu0 %v4125
  %4245 = vmatprep.subr.mxu0 0.0
  %4246 = vmatpush1.msra.mxu0 %v4126
  %4247 = vmatprep.subr.mxu0 0.0
  %4248 = vmatpush1.msra.mxu0 %v4127
  %4249 = vmatprep.subr.mxu0 0.0
  %4250 = vmatpush1.msra.mxu0 %v4128
  %4251 = vmatprep.subr.mxu0 0.0
  %4252 = vmatpush1.msra.mxu0 %v4129
  %4253 = vmatprep.subr.mxu0 0.0
  %4254 = vmatpush1.msra.mxu0 %v4130
  %4255 = vmatprep.subr.mxu0 0.0
  %4256 = vmatpush1.msra.mxu0 %v4131
  %4257 = vmatprep.subr.mxu0 0.0
  %4258 = vmatpush1.msra.mxu0 %v4132
  %4259 = vmatprep.subr.mxu0 0.0
  %4260 = vmatpush1.msra.mxu0 %v4133
  %4261 = vmatprep.subr.mxu0 0.0
  %4262 = vmatpush1.msra.mxu0 %v4134
  %4263 = vmatprep.subr.mxu0 0.0
  %4264 = vmatpush1.msra.mxu0 %v4135
  %4265 = vmatprep.subr.mxu0 0.0
  %4266 = vmatpush1.msra.mxu0 %v4209
  %4267 = vmatprep.subr.mxu0 0.0
  %4268 = vmatpush1.msra.mxu0 0.0
  %4269 = vmatprep.subr.mxu0 0.0
  %4270 = vmatpush1.msra.mxu0 0.0
  %4271 = vmatprep.subr.mxu0 0.0
  %4272 = vmatpush1.msra.mxu0 0.0
  %4273 = vmatprep.subr.mxu0 0.0
  %4274 = vmatpush1.msra.mxu0 0.0
  %4275 = vmatprep.mubr.f32.mxu0 %v4167
  %4276 = vmatmul.mubr.f32.gmra.mrb[0].mxu0 %v4137
  %v4277 = vpop.f32.mrb[0].mxu0
  %v4278 = vadd.f32 0.0, %v4277
  %v4279 = vpop.f32.mrb[0].mxu0
  %4280 = vmatprep.mubr.f32.mxu0 %v4170
  %4281 = vmatmul.mubr.f32.gmra.mrb[0].mxu0 %v4139
  %v4282 = vpop.f32.mrb[0].mxu0
  %v4283 = vadd.f32 0.0, %v4282
  %v4284 = vpop.f32.mrb[0].mxu0
  %4285 = vmatprep.mubr.f32.mxu0 %v4173
  %4286 = vmatmul.mubr.f32.gmra.mrb[0].mxu0 %v4141
  %v4287 = vpop.f32.mrb[0].mxu0
  %v4288 = vadd.f32 0.0, %v4287
  %v4289 = vpop.f32.mrb[0].mxu0
  %4290 = vmatprep.mubr.f32.mxu0 %v4176
  %4291 = vmatmul.mubr.f32.gmra.mrb[0].mxu0 %v4143
  %v4292 = vpop.f32.mrb[0].mxu0
  %v4293 = vadd.f32 0.0, %v4292
  %v4294 = vpop.f32.mrb[0].mxu0
  %4295 = vmatprep.mubr.f32.mxu0 %v4179
  %4296 = vmatmul.mubr.f32.gmra.mrb[0].mxu0 %v4145
  %v4297 = vpop.f32.mrb[0].mxu0
  %v4298 = vadd.f32 0.0, %v4297
  %v4299 = vpop.f32.mrb[0].mxu0
  %4300 = vmatprep.mubr.f32.mxu0 %v4182
  %4301 = vmatmul.mubr.f32.gmra.mrb[0].mxu0 %v4147
  %v4302 = vpop.f32.mrb[0].mxu0
  %v4303 = vadd.f32 0.0, %v4302
  %v4304 = vpop.f32.mrb[0].mxu0
  %4305 = vmatprep.mubr.f32.mxu0 %v4185
  %4306 = vmatmul.mubr.f32.gmra.mrb[0].mxu0 %v4149
  %v4307 = vpop.f32.mrb[0].mxu0
  %v4308 = vadd.f32 0.0, %v4307
  %v4309 = vpop.f32.mrb[0].mxu0
  %4310 = vmatprep.mubr.f32.mxu0 %v4188
  %4311 = vmatmul.mubr.f32.gmra.mrb[0].mxu0 %v4151
  %v4312 = vpop.f32.mrb[0].mxu0
  %v4313 = vadd.f32 0.0, %v4312
  %v4314 = vpop.f32.mrb[0].mxu0
  %4315 = vmatprep.mubr.f32.mxu0 %v4191
  %4316 = vmatmul.mubr.f32.gmra.mrb[0].mxu0 %v4153
  %v4317 = vpop.f32.mrb[0].mxu0
  %v4318 = vadd.f32 0.0, %v4317
  %v4319 = vpop.f32.mrb[0].mxu0
  %4320 = vmatprep.mubr.f32.mxu0 %v4194
  %4321 = vmatmul.mubr.f32.gmra.mrb[0].mxu0 %v4155
  %v4322 = vpop.f32.mrb[0].mxu0
  %v4323 = vadd.f32 0.0, %v4322
  %v4324 = vpop.f32.mrb[0].mxu0
  %4325 = vmatprep.mubr.f32.mxu0 %v4197
  %4326 = vmatmul.mubr.f32.gmra.mrb[0].mxu0 %v4157
  %v4327 = vpop.f32.mrb[0].mxu0
  %v4328 = vadd.f32 0.0, %v4327
  %v4329 = vpop.f32.mrb[0].mxu0
  %4330 = vmatprep.mubr.f32.mxu0 %v4200
  %4331 = vmatmul.mubr.f32.gmra.mrb[0].mxu0 %v4159
  %v4332 = vpop.f32.mrb[0].mxu0
  %v4333 = vadd.f32 0.0, %v4332
  %v4334 = vpop.f32.mrb[0].mxu0
  %4335 = vmatprep.mubr.f32.mxu0 %v4203
  %4336 = vmatmul.mubr.f32.gmra.mrb[0].mxu0 %v4161
  %v4337 = vpop.f32.mrb[0].mxu0
  %v4338 = vadd.f32 0.0, %v4337
  %v4339 = vpop.f32.mrb[0].mxu0
  %4340 = vmatprep.mubr.f32.mxu0 %v4206
  %4341 = vmatmul.mubr.f32.gmra.mrb[0].mxu0 %v4163
  %v4342 = vpop.f32.mrb[0].mxu0
  %v4343 = vadd.f32 0.0, %v4342
  %v4344 = vpop.f32.mrb[0].mxu0
  %4345 = vdwg.mxu0
  %v4346 = vld [vmem:[%s9] sm:$0xff]
  %v4347 = vld [vmem:[%s9 + $0x8] sm:$0xff]
  %v4348 = vld [vmem:[%s9 + $0x10] sm:$0xff]
  %v4349 = vld [vmem:[%s9 + $0x18] sm:$0xff]
  %v4350 = vld [vmem:[%s9 + $0x20] sm:$0xff]
  %v4351 = vld [vmem:[%s9 + $0x28] sm:$0xff]
  %v4352 = vld [vmem:[%s9 + $0x30] sm:$0xff]
  %v4353 = vld [vmem:[%s9 + $0x38] sm:$0xff]
  %v4354 = vld [vmem:[%s9 + $0x40] sm:$0xff]
  %v4355 = vld [vmem:[%s9 + $0x48] sm:$0xff]
  %v4356 = vld [vmem:[%s9 + $0x50] sm:$0xff]
  %v4357 = vld [vmem:[%s9 + $0x58] sm:$0xff]
  %v4358 = vld [vmem:[%s9 + $0x60] sm:$0xff]
  %v4359 = vld [vmem:[%s9 + $0x68] sm:$0xff]
  %v4360 = vld [vmem:[%s9 + $0x70] sm:$0xff]
  %s4361 = scalar_lea.vmem %s9, 120
  %v4362 = vld [vmem:[%s4361] sm:$0xff]
  %v4363 = vld [vmem:[%s4361 + $0x8] sm:$0xff]
  %v4364 = vld [vmem:[%s4361 + $0x10] sm:$0xff]
  %v4365 = vld [vmem:[%s4361 + $0x18] sm:$0xff]
  %v4366 = vld [vmem:[%s4361 + $0x20] sm:$0xff]
  %v4367 = vld [vmem:[%s4361 + $0x28] sm:$0xff]
  %v4368 = vld [vmem:[%s4361 + $0x30] sm:$0xff]
  %v4369 = vld [vmem:[%s4361 + $0x38] sm:$0xff]
  %v4370 = vld [vmem:[%s4361 + $0x40] sm:$0xff]
  %v4371 = vld [vmem:[%s4361 + $0x48] sm:$0xff]
  %v4372 = vld [vmem:[%s4361 + $0x50] sm:$0xff]
  %v4373 = vld [vmem:[%s4361 + $0x58] sm:$0xff]
  %v4374 = vld [vmem:[%s4361 + $0x60] sm:$0xff]
  %v4375 = vld [vmem:[%s4361 + $0x68] sm:$0xff]
  %v4376 = vld [vmem:[%s4361 + $0x70] sm:$0xff]
  %4391 = vrot.lane.b32.xlu0 %v4278, 120
  %v4392 = vpop.permute.xlu0 %4391
  %4393 = vrot.lane.b32.xlu0 %v4283, 120
  %v4394 = vpop.permute.xlu0 %4393
  %4395 = vrot.lane.b32.xlu0 %v4288, 120
  %v4396 = vpop.permute.xlu0 %4395
  %4397 = vrot.lane.b32.xlu0 %v4293, 120
  %v4398 = vpop.permute.xlu0 %4397
  %4399 = vrot.lane.b32.xlu0 %v4298, 120
  %v4400 = vpop.permute.xlu0 %4399
  %4401 = vrot.lane.b32.xlu0 %v4303, 120
  %v4402 = vpop.permute.xlu0 %4401
  %4403 = vrot.lane.b32.xlu0 %v4308, 120
  %v4404 = vpop.permute.xlu0 %4403
  %4405 = vrot.lane.b32.xlu0 %v4313, 120
  %v4406 = vpop.permute.xlu0 %4405
  %4407 = vrot.lane.b32.xlu0 %v4318, 120
  %v4408 = vpop.permute.xlu0 %4407
  %4409 = vrot.lane.b32.xlu0 %v4323, 120
  %v4410 = vpop.permute.xlu0 %4409
  %4411 = vrot.lane.b32.xlu0 %v4328, 120
  %v4412 = vpop.permute.xlu0 %4411
  %4413 = vrot.lane.b32.xlu0 %v4333, 120
  %v4414 = vpop.permute.xlu0 %4413
  %4415 = vrot.lane.b32.xlu0 %v4338, 120
  %v4416 = vpop.permute.xlu0 %4415
  %4417 = vrot.lane.b32.xlu0 %v4343, 120
  %v4418 = vpop.permute.xlu0 %4417
  %v4434 = vsel %vm128, %v4362, 0
  %v4437 = vsel %vm128, %v4363, 0
  %v4440 = vsel %vm128, %v4364, 0
  %v4443 = vsel %vm128, %v4365, 0
  %v4446 = vsel %vm128, %v4366, 0
  %v4449 = vsel %vm128, %v4367, 0
  %v4452 = vsel %vm128, %v4368, 0
  %v4455 = vsel %vm128, %v4369, 0
  %v4458 = vsel %vm128, %v4370, 0
  %v4461 = vsel %vm128, %v4371, 0
  %v4464 = vsel %vm128, %v4372, 0
  %v4467 = vsel %vm128, %v4373, 0
  %v4470 = vsel %vm128, %v4374, 0
  %v4473 = vsel %vm128, %v4375, 0
  %v4476 = vsel %vm128, %v4376, 0
  %4478 = vmatprep.subr.mxu0 0.0
  %4479 = vmatpush1.msra.mxu0 %v4392
  %4480 = vmatprep.subr.mxu0 0.0
  %4481 = vmatpush1.msra.mxu0 %v4394
  %4482 = vmatprep.subr.mxu0 0.0
  %4483 = vmatpush1.msra.mxu0 %v4396
  %4484 = vmatprep.subr.mxu0 0.0
  %4485 = vmatpush1.msra.mxu0 %v4398
  %4486 = vmatprep.subr.mxu0 0.0
  %4487 = vmatpush1.msra.mxu0 %v4400
  %4488 = vmatprep.subr.mxu0 0.0
  %4489 = vmatpush1.msra.mxu0 %v4402
  %4490 = vmatprep.subr.mxu0 0.0
  %4491 = vmatpush1.msra.mxu0 %v4404
  %4492 = vmatprep.subr.mxu0 0.0
  %4493 = vmatpush1.msra.mxu0 %v4406
  %4494 = vmatprep.subr.mxu0 0.0
  %4495 = vmatpush1.msra.mxu0 %v4408
  %4496 = vmatprep.subr.mxu0 0.0
  %4497 = vmatpush1.msra.mxu0 %v4410
  %4498 = vmatprep.subr.mxu0 0.0
  %4499 = vmatpush1.msra.mxu0 %v4412
  %4500 = vmatprep.subr.mxu0 0.0
  %4501 = vmatpush1.msra.mxu0 %v4414
  %4502 = vmatprep.subr.mxu0 0.0
  %4503 = vmatpush1.msra.mxu0 %v4416
  %4504 = vmatprep.subr.mxu0 0.0
  %4505 = vmatpush1.msra.mxu0 %v4418
  %4506 = vmatprep.subr.mxu0 0.0
  %4507 = vmatpush1.msra.mxu0 0.0
  %4508 = vmatprep.subr.mxu0 0.0
  %4509 = vmatpush1.msra.mxu0 0.0
  %4510 = vmatprep.subr.mxu0 0.0
  %4511 = vmatpush1.msra.mxu0 0.0
  %4512 = vmatprep.subr.mxu0 0.0
  %4513 = vmatpush1.msra.mxu0 0.0
  %4514 = vmatprep.subr.mxu0 0.0
  %4515 = vmatpush1.msra.mxu0 0.0
  %4516 = vmatprep.subr.mxu0 0.0
  %4517 = vmatpush1.msra.mxu0 0.0
  %4518 = vmatprep.subr.mxu0 0.0
  %4519 = vmatpush1.msra.mxu0 0.0
  %4520 = vmatprep.subr.mxu0 0.0
  %4521 = vmatpush1.msra.mxu0 0.0
  %4522 = vmatprep.subr.mxu0 0.0
  %4523 = vmatpush1.msra.mxu0 0.0
  %4524 = vmatprep.subr.mxu0 0.0
  %4525 = vmatpush1.msra.mxu0 0.0
  %4526 = vmatprep.subr.mxu0 0.0
  %4527 = vmatpush1.msra.mxu0 0.0
  %4528 = vmatprep.subr.mxu0 0.0
  %4529 = vmatpush1.msra.mxu0 0.0
  %4530 = vmatprep.subr.mxu0 0.0
  %4531 = vmatpush1.msra.mxu0 0.0
  %4532 = vmatprep.subr.mxu0 0.0
  %4533 = vmatpush1.msra.mxu0 0.0
  %4534 = vmatprep.subr.mxu0 0.0
  %4535 = vmatpush1.msra.mxu0 0.0
  %4536 = vmatprep.subr.mxu0 0.0
  %4537 = vmatpush1.msra.mxu0 0.0
  %4538 = vmatprep.subr.mxu0 0.0
  %4539 = vmatpush1.msra.mxu0 0.0
  %4540 = vmatprep.subr.mxu0 0.0
  %4541 = vmatpush1.msra.mxu0 0.0
  %4542 = vmatprep.mubr.f32.mxu0 0.0
  %4543 = vmatmul.mubr.f32.gmra.mrb[0].mxu0 %v4434
  %v4544 = vpop.f32.mrb[0].mxu0
  %v4545 = vadd.f32 0.0, %v4544
  %v4546 = vpop.f32.mrb[0].mxu0
  %4547 = vmatprep.mubr.f32.mxu0 0.0
  %4548 = vmatmul.mubr.f32.gmra.mrb[0].mxu0 %v4437
  %v4549 = vpop.f32.mrb[0].mxu0
  %v4550 = vadd.f32 0.0, %v4549
  %v4551 = vpop.f32.mrb[0].mxu0
  %4552 = vmatprep.mubr.f32.mxu0 0.0
  %4553 = vmatmul.mubr.f32.gmra.mrb[0].mxu0 %v4440
  %v4554 = vpop.f32.mrb[0].mxu0
  %v4555 = vadd.f32 0.0, %v4554
  %v4556 = vpop.f32.mrb[0].mxu0
  %4557 = vmatprep.mubr.f32.mxu0 0.0
  %4558 = vmatmul.mubr.f32.gmra.mrb[0].mxu0 %v4443
  %v4559 = vpop.f32.mrb[0].mxu0
  %v4560 = vadd.f32 0.0, %v4559
  %v4561 = vpop.f32.mrb[0].mxu0
  %4562 = vmatprep.mubr.f32.mxu0 0.0
  %4563 = vmatmul.mubr.f32.gmra.mrb[0].mxu0 %v4446
  %v4564 = vpop.f32.mrb[0].mxu0
  %v4565 = vadd.f32 0.0, %v4564
  %v4566 = vpop.f32.mrb[0].mxu0
  %4567 = vmatprep.mubr.f32.mxu0 0.0
  %4568 = vmatmul.mubr.f32.gmra.mrb[0].mxu0 %v4449
  %v4569 = vpop.f32.mrb[0].mxu0
  %v4570 = vadd.f32 0.0, %v4569
  %v4571 = vpop.f32.mrb[0].mxu0
  %4572 = vmatprep.mubr.f32.mxu0 0.0
  %4573 = vmatmul.mubr.f32.gmra.mrb[0].mxu0 %v4452
  %v4574 = vpop.f32.mrb[0].mxu0
  %v4575 = vadd.f32 0.0, %v4574
  %v4576 = vpop.f32.mrb[0].mxu0
  %4577 = vmatprep.mubr.f32.mxu0 0.0
  %4578 = vmatmul.mubr.f32.gmra.mrb[0].mxu0 %v4455
  %v4579 = vpop.f32.mrb[0].mxu0
  %v4580 = vadd.f32 0.0, %v4579
  %v4581 = vpop.f32.mrb[0].mxu0
  %4582 = vmatprep.mubr.f32.mxu0 0.0
  %4583 = vmatmul.mubr.f32.gmra.mrb[0].mxu0 %v4458
  %v4584 = vpop.f32.mrb[0].mxu0
  %v4585 = vadd.f32 0.0, %v4584
  %v4586 = vpop.f32.mrb[0].mxu0
  %4587 = vmatprep.mubr.f32.mxu0 0.0
  %4588 = vmatmul.mubr.f32.gmra.mrb[0].mxu0 %v4461
  %v4589 = vpop.f32.mrb[0].mxu0
  %v4590 = vadd.f32 0.0, %v4589
  %v4591 = vpop.f32.mrb[0].mxu0
  %4592 = vmatprep.mubr.f32.mxu0 0.0
  %4593 = vmatmul.mubr.f32.gmra.mrb[0].mxu0 %v4464
  %v4594 = vpop.f32.mrb[0].mxu0
  %v4595 = vadd.f32 0.0, %v4594
  %v4596 = vpop.f32.mrb[0].mxu0
  %4597 = vmatprep.mubr.f32.mxu0 0.0
  %4598 = vmatmul.mubr.f32.gmra.mrb[0].mxu0 %v4467
  %v4599 = vpop.f32.mrb[0].mxu0
  %v4600 = vadd.f32 0.0, %v4599
  %v4601 = vpop.f32.mrb[0].mxu0
  %4602 = vmatprep.mubr.f32.mxu0 0.0
  %4603 = vmatmul.mubr.f32.gmra.mrb[0].mxu0 %v4470
  %v4604 = vpop.f32.mrb[0].mxu0
  %v4605 = vadd.f32 0.0, %v4604
  %v4606 = vpop.f32.mrb[0].mxu0
  %4607 = vmatprep.mubr.f32.mxu0 0.0
  %4608 = vmatmul.mubr.f32.gmra.mrb[0].mxu0 %v4473
  %v4609 = vpop.f32.mrb[0].mxu0
  %v4610 = vadd.f32 0.0, %v4609
  %v4611 = vpop.f32.mrb[0].mxu0
  %4612 = vmatprep.mubr.f32.mxu0 0.0
  %4613 = vmatmul.mubr.f32.gmra.mrb[0].mxu0 %v4476
  %v4614 = vpop.f32.mrb[0].mxu0
  %v4615 = vadd.f32 0.0, %v4614
  %v4616 = vpop.f32.mrb[0].mxu0
  %4617 = vdwg.mxu0
  %v4619 = vsel %vm128, %v4346, 0
  %v4622 = vsel %vm128, %v4347, 0
  %v4625 = vsel %vm128, %v4348, 0
  %v4628 = vsel %vm128, %v4349, 0
  %v4631 = vsel %vm128, %v4350, 0
  %v4634 = vsel %vm128, %v4351, 0
  %v4637 = vsel %vm128, %v4352, 0
  %v4640 = vsel %vm128, %v4353, 0
  %v4643 = vsel %vm128, %v4354, 0
  %v4646 = vsel %vm128, %v4355, 0
  %v4649 = vsel %vm128, %v4356, 0
  %v4652 = vsel %vm128, %v4357, 0
  %v4655 = vsel %vm128, %v4358, 0
  %v4658 = vsel %vm128, %v4359, 0
  %v4661 = vsel %vm128, %v4360, 0
  %4663 = vmatprep.subr.mxu0 0.0
  %4664 = vmatpush1.msra.mxu0 %v4278
  %4665 = vmatprep.subr.mxu0 0.0
  %4666 = vmatpush1.msra.mxu0 %v4283
  %4667 = vmatprep.subr.mxu0 0.0
  %4668 = vmatpush1.msra.mxu0 %v4288
  %4669 = vmatprep.subr.mxu0 0.0
  %4670 = vmatpush1.msra.mxu0 %v4293
  %4671 = vmatprep.subr.mxu0 0.0
  %4672 = vmatpush1.msra.mxu0 %v4298
  %4673 = vmatprep.subr.mxu0 0.0
  %4674 = vmatpush1.msra.mxu0 %v4303
  %4675 = vmatprep.subr.mxu0 0.0
  %4676 = vmatpush1.msra.mxu0 %v4308
  %4677 = vmatprep.subr.mxu0 0.0
  %4678 = vmatpush1.msra.mxu0 %v4313
  %4679 = vmatprep.subr.mxu0 0.0
  %4680 = vmatpush1.msra.mxu0 %v4318
  %4681 = vmatprep.subr.mxu0 0.0
  %4682 = vmatpush1.msra.mxu0 %v4323
  %4683 = vmatprep.subr.mxu0 0.0
  %4684 = vmatpush1.msra.mxu0 %v4328
  %4685 = vmatprep.subr.mxu0 0.0
  %4686 = vmatpush1.msra.mxu0 %v4333
  %4687 = vmatprep.subr.mxu0 0.0
  %4688 = vmatpush1.msra.mxu0 %v4338
  %4689 = vmatprep.subr.mxu0 0.0
  %4690 = vmatpush1.msra.mxu0 %v4343
  %4691 = vmatprep.subr.mxu0 0.0
  %4692 = vmatpush1.msra.mxu0 0.0
  %4693 = vmatprep.subr.mxu0 0.0
  %4694 = vmatpush1.msra.mxu0 0.0
  %4695 = vmatprep.subr.mxu0 0.0
  %4696 = vmatpush1.msra.mxu0 0.0
  %4697 = vmatprep.subr.mxu0 0.0
  %4698 = vmatpush1.msra.mxu0 0.0
  %4699 = vmatprep.subr.mxu0 0.0
  %4700 = vmatpush1.msra.mxu0 0.0
  %4701 = vmatprep.subr.mxu0 0.0
  %4702 = vmatpush1.msra.mxu0 0.0
  %4703 = vmatprep.subr.mxu0 0.0
  %4704 = vmatpush1.msra.mxu0 0.0
  %4705 = vmatprep.subr.mxu0 0.0
  %4706 = vmatpush1.msra.mxu0 0.0
  %4707 = vmatprep.subr.mxu0 0.0
  %4708 = vmatpush1.msra.mxu0 0.0
  %4709 = vmatprep.subr.mxu0 0.0
  %4710 = vmatpush1.msra.mxu0 0.0
  %4711 = vmatprep.subr.mxu0 0.0
  %4712 = vmatpush1.msra.mxu0 0.0
  %4713 = vmatprep.subr.mxu0 0.0
  %4714 = vmatpush1.msra.mxu0 0.0
  %4715 = vmatprep.subr.mxu0 0.0
  %4716 = vmatpush1.msra.mxu0 0.0
  %4717 = vmatprep.subr.mxu0 0.0
  %4718 = vmatpush1.msra.mxu0 0.0
  %4719 = vmatprep.subr.mxu0 0.0
  %4720 = vmatpush1.msra.mxu0 0.0
  %4721 = vmatprep.subr.mxu0 0.0
  %4722 = vmatpush1.msra.mxu0 0.0
  %4723 = vmatprep.subr.mxu0 0.0
  %4724 = vmatpush1.msra.mxu0 0.0
  %4725 = vmatprep.subr.mxu0 0.0
  %4726 = vmatpush1.msra.mxu0 0.0
  %4727 = vmatprep.mubr.f32.mxu0 0.0
  %4728 = vmatmul.mubr.f32.gmra.mrb[0].mxu0 %v4619
  %v4729 = vpop.f32.mrb[0].mxu0
  %v4730 = vadd.f32 %v4545, %v4729
  %v4731 = vpop.f32.mrb[0].mxu0
  %4732 = vmatprep.mubr.f32.mxu0 0.0
  %4733 = vmatmul.mubr.f32.gmra.mrb[0].mxu0 %v4622
  %v4734 = vpop.f32.mrb[0].mxu0
  %v4735 = vadd.f32 %v4550, %v4734
  %v4736 = vpop.f32.mrb[0].mxu0
  %4737 = vmatprep.mubr.f32.mxu0 0.0
  %4738 = vmatmul.mubr.f32.gmra.mrb[0].mxu0 %v4625
  %v4739 = vpop.f32.mrb[0].mxu0
  %v4740 = vadd.f32 %v4555, %v4739
  %v4741 = vpop.f32.mrb[0].mxu0
  %4742 = vmatprep.mubr.f32.mxu0 0.0
  %4743 = vmatmul.mubr.f32.gmra.mrb[0].mxu0 %v4628
  %v4744 = vpop.f32.mrb[0].mxu0
  %v4745 = vadd.f32 %v4560, %v4744
  %v4746 = vpop.f32.mrb[0].mxu0
  %4747 = vmatprep.mubr.f32.mxu0 0.0
  %4748 = vmatmul.mubr.f32.gmra.mrb[0].mxu0 %v4631
  %v4749 = vpop.f32.mrb[0].mxu0
  %v4750 = vadd.f32 %v4565, %v4749
  %v4751 = vpop.f32.mrb[0].mxu0
  %4752 = vmatprep.mubr.f32.mxu0 0.0
  %4753 = vmatmul.mubr.f32.gmra.mrb[0].mxu0 %v4634
  %v4754 = vpop.f32.mrb[0].mxu0
  %v4755 = vadd.f32 %v4570, %v4754
  %v4756 = vpop.f32.mrb[0].mxu0
  %4757 = vmatprep.mubr.f32.mxu0 0.0
  %4758 = vmatmul.mubr.f32.gmra.mrb[0].mxu0 %v4637
  %v4759 = vpop.f32.mrb[0].mxu0
  %v4760 = vadd.f32 %v4575, %v4759
  %v4761 = vpop.f32.mrb[0].mxu0
  %4762 = vmatprep.mubr.f32.mxu0 0.0
  %4763 = vmatmul.mubr.f32.gmra.mrb[0].mxu0 %v4640
  %v4764 = vpop.f32.mrb[0].mxu0
  %v4765 = vadd.f32 %v4580, %v4764
  %v4766 = vpop.f32.mrb[0].mxu0
  %4767 = vmatprep.mubr.f32.mxu0 0.0
  %4768 = vmatmul.mubr.f32.gmra.mrb[0].mxu0 %v4643
  %v4769 = vpop.f32.mrb[0].mxu0
  %v4770 = vadd.f32 %v4585, %v4769
  %v4771 = vpop.f32.mrb[0].mxu0
  %4772 = vmatprep.mubr.f32.mxu0 0.0
  %4773 = vmatmul.mubr.f32.gmra.mrb[0].mxu0 %v4646
  %v4774 = vpop.f32.mrb[0].mxu0
  %v4775 = vadd.f32 %v4590, %v4774
  %v4776 = vpop.f32.mrb[0].mxu0
  %4777 = vmatprep.mubr.f32.mxu0 0.0
  %4778 = vmatmul.mubr.f32.gmra.mrb[0].mxu0 %v4649
  %v4779 = vpop.f32.mrb[0].mxu0
  %v4780 = vadd.f32 %v4595, %v4779
  %v4781 = vpop.f32.mrb[0].mxu0
  %4782 = vmatprep.mubr.f32.mxu0 0.0
  %4783 = vmatmul.mubr.f32.gmra.mrb[0].mxu0 %v4652
  %v4784 = vpop.f32.mrb[0].mxu0
  %v4785 = vadd.f32 %v4600, %v4784
  %v4786 = vpop.f32.mrb[0].mxu0
  %4787 = vmatprep.mubr.f32.mxu0 0.0
  %4788 = vmatmul.mubr.f32.gmra.mrb[0].mxu0 %v4655
  %v4789 = vpop.f32.mrb[0].mxu0
  %v4790 = vadd.f32 %v4605, %v4789
  %v4791 = vpop.f32.mrb[0].mxu0
  %4792 = vmatprep.mubr.f32.mxu0 0.0
  %4793 = vmatmul.mubr.f32.gmra.mrb[0].mxu0 %v4658
  %v4794 = vpop.f32.mrb[0].mxu0
  %v4795 = vadd.f32 %v4610, %v4794
  %v4796 = vpop.f32.mrb[0].mxu0
  %4797 = vmatprep.mubr.f32.mxu0 0.0
  %4798 = vmatmul.mubr.f32.gmra.mrb[0].mxu0 %v4661
  %v4799 = vpop.f32.mrb[0].mxu0
  %v4800 = vadd.f32 %v4615, %v4799
  %v4801 = vpop.f32.mrb[0].mxu0
  %4802 = vdwg.mxu0
  %s4803 = scalar_lea.vmem %s9, 240
  %v4804 = vld [vmem:[%s4803] sm:$0xff]
  %v4805 = vld [vmem:[%s4803 + $0x8] sm:$0xff]
  %v4806 = vld [vmem:[%s4803 + $0x10] sm:$0xff]
  %v4807 = vld [vmem:[%s4803 + $0x18] sm:$0xff]
  %v4808 = vld [vmem:[%s4803 + $0x20] sm:$0xff]
  %v4809 = vld [vmem:[%s4803 + $0x28] sm:$0xff]
  %v4810 = vld [vmem:[%s4803 + $0x30] sm:$0xff]
  %v4811 = vld [vmem:[%s4803 + $0x38] sm:$0xff]
  %v4812 = vld [vmem:[%s4803 + $0x40] sm:$0xff]
  %v4813 = vld [vmem:[%s4803 + $0x48] sm:$0xff]
  %v4814 = vld [vmem:[%s4803 + $0x50] sm:$0xff]
  %v4815 = vld [vmem:[%s4803 + $0x58] sm:$0xff]
  %v4816 = vld [vmem:[%s4803 + $0x60] sm:$0xff]
  %v4817 = vld [vmem:[%s4803 + $0x68] sm:$0xff]
  %v4818 = vld [vmem:[%s4803 + $0x70] sm:$0xff]
  %4819 = vrot.lane.b32.xlu0 %v4278, 112
  %v4820 = vpop.permute.xlu0 %4819
  %4821 = vrot.lane.b32.xlu0 %v4283, 112
  %v4822 = vpop.permute.xlu0 %4821
  %4823 = vrot.lane.b32.xlu0 %v4288, 112
  %v4824 = vpop.permute.xlu0 %4823
  %4825 = vrot.lane.b32.xlu0 %v4293, 112
  %v4826 = vpop.permute.xlu0 %4825
  %4827 = vrot.lane.b32.xlu0 %v4298, 112
  %v4828 = vpop.permute.xlu0 %4827
  %4829 = vrot.lane.b32.xlu0 %v4303, 112
  %v4830 = vpop.permute.xlu0 %4829
  %4831 = vrot.lane.b32.xlu0 %v4308, 112
  %v4832 = vpop.permute.xlu0 %4831
  %4833 = vrot.lane.b32.xlu0 %v4313, 112
  %v4834 = vpop.permute.xlu0 %4833
  %4835 = vrot.lane.b32.xlu0 %v4318, 112
  %v4836 = vpop.permute.xlu0 %4835
  %4837 = vrot.lane.b32.xlu0 %v4323, 112
  %v4838 = vpop.permute.xlu0 %4837
  %4839 = vrot.lane.b32.xlu0 %v4328, 112
  %v4840 = vpop.permute.xlu0 %4839
  %4841 = vrot.lane.b32.xlu0 %v4333, 112
  %v4842 = vpop.permute.xlu0 %4841
  %4843 = vrot.lane.b32.xlu0 %v4338, 112
  %v4844 = vpop.permute.xlu0 %4843
  %4845 = vrot.lane.b32.xlu0 %v4343, 112
  %v4846 = vpop.permute.xlu0 %4845
  %v4862 = vsel %vm128, %v4804, 0
  %v4865 = vsel %vm128, %v4805, 0
  %v4868 = vsel %vm128, %v4806, 0
  %v4871 = vsel %vm128, %v4807, 0
  %v4874 = vsel %vm128, %v4808, 0
  %v4877 = vsel %vm128, %v4809, 0
  %v4880 = vsel %vm128, %v4810, 0
  %v4883 = vsel %vm128, %v4811, 0
  %v4886 = vsel %vm128, %v4812, 0
  %v4889 = vsel %vm128, %v4813, 0
  %v4892 = vsel %vm128, %v4814, 0
  %v4895 = vsel %vm128, %v4815, 0
  %v4898 = vsel %vm128, %v4816, 0
  %v4901 = vsel %vm128, %v4817, 0
  %v4904 = vsel %vm128, %v4818, 0
  %4906 = vmatprep.subr.mxu0 0.0
  %4907 = vmatpush1.msra.mxu0 %v4820
  %4908 = vmatprep.subr.mxu0 0.0
  %4909 = vmatpush1.msra.mxu0 %v4822
  %4910 = vmatprep.subr.mxu0 0.0
  %4911 = vmatpush1.msra.mxu0 %v4824
  %4912 = vmatprep.subr.mxu0 0.0
  %4913 = vmatpush1.msra.mxu0 %v4826
  %4914 = vmatprep.subr.mxu0 0.0
  %4915 = vmatpush1.msra.mxu0 %v4828
  %4916 = vmatprep.subr.mxu0 0.0
  %4917 = vmatpush1.msra.mxu0 %v4830
  %4918 = vmatprep.subr.mxu0 0.0
  %4919 = vmatpush1.msra.mxu0 %v4832
  %4920 = vmatprep.subr.mxu0 0.0
  %4921 = vmatpush1.msra.mxu0 %v4834
  %4922 = vmatprep.subr.mxu0 0.0
  %4923 = vmatpush1.msra.mxu0 %v4836
  %4924 = vmatprep.subr.mxu0 0.0
  %4925 = vmatpush1.msra.mxu0 %v4838
  %4926 = vmatprep.subr.mxu0 0.0
  %4927 = vmatpush1.msra.mxu0 %v4840
  %4928 = vmatprep.subr.mxu0 0.0
  %4929 = vmatpush1.msra.mxu0 %v4842
  %4930 = vmatprep.subr.mxu0 0.0
  %4931 = vmatpush1.msra.mxu0 %v4844
  %4932 = vmatprep.subr.mxu0 0.0
  %4933 = vmatpush1.msra.mxu0 %v4846
  %4934 = vmatprep.subr.mxu0 0.0
  %4935 = vmatpush1.msra.mxu0 0.0
  %4936 = vmatprep.subr.mxu0 0.0
  %4937 = vmatpush1.msra.mxu0 0.0
  %4938 = vmatprep.subr.mxu0 0.0
  %4939 = vmatpush1.msra.mxu0 0.0
  %4940 = vmatprep.subr.mxu0 0.0
  %4941 = vmatpush1.msra.mxu0 0.0
  %4942 = vmatprep.subr.mxu0 0.0
  %4943 = vmatpush1.msra.mxu0 0.0
  %4944 = vmatprep.subr.mxu0 0.0
  %4945 = vmatpush1.msra.mxu0 0.0
  %4946 = vmatprep.subr.mxu0 0.0
  %4947 = vmatpush1.msra.mxu0 0.0
  %4948 = vmatprep.subr.mxu0 0.0
  %4949 = vmatpush1.msra.mxu0 0.0
  %4950 = vmatprep.subr.mxu0 0.0
  %4951 = vmatpush1.msra.mxu0 0.0
  %4952 = vmatprep.subr.mxu0 0.0
  %4953 = vmatpush1.msra.mxu0 0.0
  %4954 = vmatprep.subr.mxu0 0.0
  %4955 = vmatpush1.msra.mxu0 0.0
  %4956 = vmatprep.subr.mxu0 0.0
  %4957 = vmatpush1.msra.mxu0 0.0
  %4958 = vmatprep.subr.mxu0 0.0
  %4959 = vmatpush1.msra.mxu0 0.0
  %4960 = vmatprep.subr.mxu0 0.0
  %4961 = vmatpush1.msra.mxu0 0.0
  %4962 = vmatprep.subr.mxu0 0.0
  %4963 = vmatpush1.msra.mxu0 0.0
  %4964 = vmatprep.subr.mxu0 0.0
  %4965 = vmatpush1.msra.mxu0 0.0
  %4966 = vmatprep.subr.mxu0 0.0
  %4967 = vmatpush1.msra.mxu0 0.0
  %4968 = vmatprep.subr.mxu0 0.0
  %4969 = vmatpush1.msra.mxu0 0.0
  %4970 = vmatprep.mubr.f32.mxu0 0.0
  %4971 = vmatmul.mubr.f32.gmra.mrb[0].mxu0 %v4862
  %v4972 = vpop.f32.mrb[0].mxu0
  %v4973 = vadd.f32 0.0, %v4972
  %v4974 = vpop.f32.mrb[0].mxu0
  %4975 = vmatprep.mubr.f32.mxu0 0.0
  %4976 = vmatmul.mubr.f32.gmra.mrb[0].mxu0 %v4865
  %v4977 = vpop.f32.mrb[0].mxu0
  %v4978 = vadd.f32 0.0, %v4977
  %v4979 = vpop.f32.mrb[0].mxu0
  %4980 = vmatprep.mubr.f32.mxu0 0.0
  %4981 = vmatmul.mubr.f32.gmra.mrb[0].mxu0 %v4868
  %v4982 = vpop.f32.mrb[0].mxu0
  %v4983 = vadd.f32 0.0, %v4982
  %v4984 = vpop.f32.mrb[0].mxu0
  %4985 = vmatprep.mubr.f32.mxu0 0.0
  %4986 = vmatmul.mubr.f32.gmra.mrb[0].mxu0 %v4871
  %v4987 = vpop.f32.mrb[0].mxu0
  %v4988 = vadd.f32 0.0, %v4987
  %v4989 = vpop.f32.mrb[0].mxu0
  %4990 = vmatprep.mubr.f32.mxu0 0.0
  %4991 = vmatmul.mubr.f32.gmra.mrb[0].mxu0 %v4874
  %v4992 = vpop.f32.mrb[0].mxu0
  %v4993 = vadd.f32 0.0, %v4992
  %v4994 = vpop.f32.mrb[0].mxu0
  %4995 = vmatprep.mubr.f32.mxu0 0.0
  %4996 = vmatmul.mubr.f32.gmra.mrb[0].mxu0 %v4877
  %v4997 = vpop.f32.mrb[0].mxu0
  %v4998 = vadd.f32 0.0, %v4997
  %v4999 = vpop.f32.mrb[0].mxu0
  %5000 = vmatprep.mubr.f32.mxu0 0.0
  %5001 = vmatmul.mubr.f32.gmra.mrb[0].mxu0 %v4880
  %v5002 = vpop.f32.mrb[0].mxu0
  %v5003 = vadd.f32 0.0, %v5002
  %v5004 = vpop.f32.mrb[0].mxu0
  %5005 = vmatprep.mubr.f32.mxu0 0.0
  %5006 = vmatmul.mubr.f32.gmra.mrb[0].mxu0 %v4883
  %v5007 = vpop.f32.mrb[0].mxu0
  %v5008 = vadd.f32 0.0, %v5007
  %v5009 = vpop.f32.mrb[0].mxu0
  %5010 = vmatprep.mubr.f32.mxu0 0.0
  %5011 = vmatmul.mubr.f32.gmra.mrb[0].mxu0 %v4886
  %v5012 = vpop.f32.mrb[0].mxu0
  %v5013 = vadd.f32 0.0, %v5012
  %v5014 = vpop.f32.mrb[0].mxu0
  %5015 = vmatprep.mubr.f32.mxu0 0.0
  %5016 = vmatmul.mubr.f32.gmra.mrb[0].mxu0 %v4889
  %v5017 = vpop.f32.mrb[0].mxu0
  %v5018 = vadd.f32 0.0, %v5017
  %v5019 = vpop.f32.mrb[0].mxu0
  %5020 = vmatprep.mubr.f32.mxu0 0.0
  %5021 = vmatmul.mubr.f32.gmra.mrb[0].mxu0 %v4892
  %v5022 = vpop.f32.mrb[0].mxu0
  %v5023 = vadd.f32 0.0, %v5022
  %v5024 = vpop.f32.mrb[0].mxu0
  %5025 = vmatprep.mubr.f32.mxu0 0.0
  %5026 = vmatmul.mubr.f32.gmra.mrb[0].mxu0 %v4895
  %v5027 = vpop.f32.mrb[0].mxu0
  %v5028 = vadd.f32 0.0, %v5027
  %v5029 = vpop.f32.mrb[0].mxu0
  %5030 = vmatprep.mubr.f32.mxu0 0.0
  %5031 = vmatmul.mubr.f32.gmra.mrb[0].mxu0 %v4898
  %v5032 = vpop.f32.mrb[0].mxu0
  %v5033 = vadd.f32 0.0, %v5032
  %v5034 = vpop.f32.mrb[0].mxu0
  %5035 = vmatprep.mubr.f32.mxu0 0.0
  %5036 = vmatmul.mubr.f32.gmra.mrb[0].mxu0 %v4901
  %v5037 = vpop.f32.mrb[0].mxu0
  %v5038 = vadd.f32 0.0, %v5037
  %v5039 = vpop.f32.mrb[0].mxu0
  %5040 = vmatprep.mubr.f32.mxu0 0.0
  %5041 = vmatmul.mubr.f32.gmra.mrb[0].mxu0 %v4904
  %v5042 = vpop.f32.mrb[0].mxu0
  %v5043 = vadd.f32 0.0, %v5042
  %v5044 = vpop.f32.mrb[0].mxu0
  %5045 = vdwg.mxu0
  %v5046 = vadd.f32 %v4730, %v4973
  %v5047 = vadd.f32 %v4735, %v4978
  %v5048 = vadd.f32 %v4740, %v4983
  %v5049 = vadd.f32 %v4745, %v4988
  %v5050 = vadd.f32 %v4750, %v4993
  %v5051 = vadd.f32 %v4755, %v4998
  %v5052 = vadd.f32 %v4760, %v5003
  %v5053 = vadd.f32 %v4765, %v5008
  %v5054 = vadd.f32 %v4770, %v5013
  %v5055 = vadd.f32 %v4775, %v5018
  %v5056 = vadd.f32 %v4780, %v5023
  %v5057 = vadd.f32 %v4785, %v5028
  %v5058 = vadd.f32 %v4790, %v5033
  %v5059 = vadd.f32 %v4795, %v5038
  %v5060 = vadd.f32 %v4800, %v5043
  %s5061 = scalar_lea.vmem %s9, 360
  %v5062 = vld [vmem:[%s5061] sm:$0xff]
  %v5063 = vld [vmem:[%s5061 + $0x8] sm:$0xff]
  %v5064 = vld [vmem:[%s5061 + $0x10] sm:$0xff]
  %v5065 = vld [vmem:[%s5061 + $0x18] sm:$0xff]
  %v5066 = vld [vmem:[%s5061 + $0x20] sm:$0xff]
  %v5067 = vld [vmem:[%s5061 + $0x28] sm:$0xff]
  %v5068 = vld [vmem:[%s5061 + $0x30] sm:$0xff]
  %v5069 = vld [vmem:[%s5061 + $0x38] sm:$0xff]
  %v5070 = vld [vmem:[%s5061 + $0x40] sm:$0xff]
  %v5071 = vld [vmem:[%s5061 + $0x48] sm:$0xff]
  %v5072 = vld [vmem:[%s5061 + $0x50] sm:$0xff]
  %v5073 = vld [vmem:[%s5061 + $0x58] sm:$0xff]
  %v5074 = vld [vmem:[%s5061 + $0x60] sm:$0xff]
  %v5075 = vld [vmem:[%s5061 + $0x68] sm:$0xff]
  %v5076 = vld [vmem:[%s5061 + $0x70] sm:$0xff]
  %5077 = vrot.lane.b32.xlu0 %v4278, 104
  %v5078 = vpop.permute.xlu0 %5077
  %5079 = vrot.lane.b32.xlu0 %v4283, 104
  %v5080 = vpop.permute.xlu0 %5079
  %5081 = vrot.lane.b32.xlu0 %v4288, 104
  %v5082 = vpop.permute.xlu0 %5081
  %5083 = vrot.lane.b32.xlu0 %v4293, 104
  %v5084 = vpop.permute.xlu0 %5083
  %5085 = vrot.lane.b32.xlu0 %v4298, 104
  %v5086 = vpop.permute.xlu0 %5085
  %5087 = vrot.lane.b32.xlu0 %v4303, 104
  %v5088 = vpop.permute.xlu0 %5087
  %5089 = vrot.lane.b32.xlu0 %v4308, 104
  %v5090 = vpop.permute.xlu0 %5089
  %5091 = vrot.lane.b32.xlu0 %v4313, 104
  %v5092 = vpop.permute.xlu0 %5091
  %5093 = vrot.lane.b32.xlu0 %v4318, 104
  %v5094 = vpop.permute.xlu0 %5093
  %5095 = vrot.lane.b32.xlu0 %v4323, 104
  %v5096 = vpop.permute.xlu0 %5095
  %5097 = vrot.lane.b32.xlu0 %v4328, 104
  %v5098 = vpop.permute.xlu0 %5097
  %5099 = vrot.lane.b32.xlu0 %v4333, 104
  %v5100 = vpop.permute.xlu0 %5099
  %5101 = vrot.lane.b32.xlu0 %v4338, 104
  %v5102 = vpop.permute.xlu0 %5101
  %5103 = vrot.lane.b32.xlu0 %v4343, 104
  %v5104 = vpop.permute.xlu0 %5103
  %v5120 = vsel %vm128, %v5062, 0
  %v5123 = vsel %vm128, %v5063, 0
  %v5126 = vsel %vm128, %v5064, 0
  %v5129 = vsel %vm128, %v5065, 0
  %v5132 = vsel %vm128, %v5066, 0
  %v5135 = vsel %vm128, %v5067, 0
  %v5138 = vsel %vm128, %v5068, 0
  %v5141 = vsel %vm128, %v5069, 0
  %v5144 = vsel %vm128, %v5070, 0
  %v5147 = vsel %vm128, %v5071, 0
  %v5150 = vsel %vm128, %v5072, 0
  %v5153 = vsel %vm128, %v5073, 0
  %v5156 = vsel %vm128, %v5074, 0
  %v5159 = vsel %vm128, %v5075, 0
  %v5162 = vsel %vm128, %v5076, 0
  %5164 = vmatprep.subr.mxu0 0.0
  %5165 = vmatpush1.msra.mxu0 %v5078
  %5166 = vmatprep.subr.mxu0 0.0
  %5167 = vmatpush1.msra.mxu0 %v5080
  %5168 = vmatprep.subr.mxu0 0.0
  %5169 = vmatpush1.msra.mxu0 %v5082
  %5170 = vmatprep.subr.mxu0 0.0
  %5171 = vmatpush1.msra.mxu0 %v5084
  %5172 = vmatprep.subr.mxu0 0.0
  %5173 = vmatpush1.msra.mxu0 %v5086
  %5174 = vmatprep.subr.mxu0 0.0
  %5175 = vmatpush1.msra.mxu0 %v5088
  %5176 = vmatprep.subr.mxu0 0.0
  %5177 = vmatpush1.msra.mxu0 %v5090
  %5178 = vmatprep.subr.mxu0 0.0
  %5179 = vmatpush1.msra.mxu0 %v5092
  %5180 = vmatprep.subr.mxu0 0.0
  %5181 = vmatpush1.msra.mxu0 %v5094
  %5182 = vmatprep.subr.mxu0 0.0
  %5183 = vmatpush1.msra.mxu0 %v5096
  %5184 = vmatprep.subr.mxu0 0.0
  %5185 = vmatpush1.msra.mxu0 %v5098
  %5186 = vmatprep.subr.mxu0 0.0
  %5187 = vmatpush1.msra.mxu0 %v5100
  %5188 = vmatprep.subr.mxu0 0.0
  %5189 = vmatpush1.msra.mxu0 %v5102
  %5190 = vmatprep.subr.mxu0 0.0
  %5191 = vmatpush1.msra.mxu0 %v5104
  %5192 = vmatprep.subr.mxu0 0.0
  %5193 = vmatpush1.msra.mxu0 0.0
  %5194 = vmatprep.subr.mxu0 0.0
  %5195 = vmatpush1.msra.mxu0 0.0
  %5196 = vmatprep.subr.mxu0 0.0
  %5197 = vmatpush1.msra.mxu0 0.0
  %5198 = vmatprep.subr.mxu0 0.0
  %5199 = vmatpush1.msra.mxu0 0.0
  %5200 = vmatprep.subr.mxu0 0.0
  %5201 = vmatpush1.msra.mxu0 0.0
  %5202 = vmatprep.subr.mxu0 0.0
  %5203 = vmatpush1.msra.mxu0 0.0
  %5204 = vmatprep.subr.mxu0 0.0
  %5205 = vmatpush1.msra.mxu0 0.0
  %5206 = vmatprep.subr.mxu0 0.0
  %5207 = vmatpush1.msra.mxu0 0.0
  %5208 = vmatprep.subr.mxu0 0.0
  %5209 = vmatpush1.msra.mxu0 0.0
  %5210 = vmatprep.subr.mxu0 0.0
  %5211 = vmatpush1.msra.mxu0 0.0
  %5212 = vmatprep.subr.mxu0 0.0
  %5213 = vmatpush1.msra.mxu0 0.0
  %5214 = vmatprep.subr.mxu0 0.0
  %5215 = vmatpush1.msra.mxu0 0.0
  %5216 = vmatprep.subr.mxu0 0.0
  %5217 = vmatpush1.msra.mxu0 0.0
  %5218 = vmatprep.subr.mxu0 0.0
  %5219 = vmatpush1.msra.mxu0 0.0
  %5220 = vmatprep.subr.mxu0 0.0
  %5221 = vmatpush1.msra.mxu0 0.0
  %5222 = vmatprep.subr.mxu0 0.0
  %5223 = vmatpush1.msra.mxu0 0.0
  %5224 = vmatprep.subr.mxu0 0.0
  %5225 = vmatpush1.msra.mxu0 0.0
  %5226 = vmatprep.subr.mxu0 0.0
  %5227 = vmatpush1.msra.mxu0 0.0
  %5228 = vmatprep.mubr.f32.mxu0 0.0
  %5229 = vmatmul.mubr.f32.gmra.mrb[0].mxu0 %v5120
  %v5230 = vpop.f32.mrb[0].mxu0
  %v5231 = vadd.f32 0.0, %v5230
  %v5232 = vpop.f32.mrb[0].mxu0
  %5233 = vmatprep.mubr.f32.mxu0 0.0
  %5234 = vmatmul.mubr.f32.gmra.mrb[0].mxu0 %v5123
  %v5235 = vpop.f32.mrb[0].mxu0
  %v5236 = vadd.f32 0.0, %v5235
  %v5237 = vpop.f32.mrb[0].mxu0
  %5238 = vmatprep.mubr.f32.mxu0 0.0
  %5239 = vmatmul.mubr.f32.gmra.mrb[0].mxu0 %v5126
  %v5240 = vpop.f32.mrb[0].mxu0
  %v5241 = vadd.f32 0.0, %v5240
  %v5242 = vpop.f32.mrb[0].mxu0
  %5243 = vmatprep.mubr.f32.mxu0 0.0
  %5244 = vmatmul.mubr.f32.gmra.mrb[0].mxu0 %v5129
  %v5245 = vpop.f32.mrb[0].mxu0
  %v5246 = vadd.f32 0.0, %v5245
  %v5247 = vpop.f32.mrb[0].mxu0
  %5248 = vmatprep.mubr.f32.mxu0 0.0
  %5249 = vmatmul.mubr.f32.gmra.mrb[0].mxu0 %v5132
  %v5250 = vpop.f32.mrb[0].mxu0
  %v5251 = vadd.f32 0.0, %v5250
  %v5252 = vpop.f32.mrb[0].mxu0
  %5253 = vmatprep.mubr.f32.mxu0 0.0
  %5254 = vmatmul.mubr.f32.gmra.mrb[0].mxu0 %v5135
  %v5255 = vpop.f32.mrb[0].mxu0
  %v5256 = vadd.f32 0.0, %v5255
  %v5257 = vpop.f32.mrb[0].mxu0
  %5258 = vmatprep.mubr.f32.mxu0 0.0
  %5259 = vmatmul.mubr.f32.gmra.mrb[0].mxu0 %v5138
  %v5260 = vpop.f32.mrb[0].mxu0
  %v5261 = vadd.f32 0.0, %v5260
  %v5262 = vpop.f32.mrb[0].mxu0
  %5263 = vmatprep.mubr.f32.mxu0 0.0
  %5264 = vmatmul.mubr.f32.gmra.mrb[0].mxu0 %v5141
  %v5265 = vpop.f32.mrb[0].mxu0
  %v5266 = vadd.f32 0.0, %v5265
  %v5267 = vpop.f32.mrb[0].mxu0
  %5268 = vmatprep.mubr.f32.mxu0 0.0
  %5269 = vmatmul.mubr.f32.gmra.mrb[0].mxu0 %v5144
  %v5270 = vpop.f32.mrb[0].mxu0
  %v5271 = vadd.f32 0.0, %v5270
  %v5272 = vpop.f32.mrb[0].mxu0
  %5273 = vmatprep.mubr.f32.mxu0 0.0
  %5274 = vmatmul.mubr.f32.gmra.mrb[0].mxu0 %v5147
  %v5275 = vpop.f32.mrb[0].mxu0
  %v5276 = vadd.f32 0.0, %v5275
  %v5277 = vpop.f32.mrb[0].mxu0
  %5278 = vmatprep.mubr.f32.mxu0 0.0
  %5279 = vmatmul.mubr.f32.gmra.mrb[0].mxu0 %v5150
  %v5280 = vpop.f32.mrb[0].mxu0
  %v5281 = vadd.f32 0.0, %v5280
  %v5282 = vpop.f32.mrb[0].mxu0
  %5283 = vmatprep.mubr.f32.mxu0 0.0
  %5284 = vmatmul.mubr.f32.gmra.mrb[0].mxu0 %v5153
  %v5285 = vpop.f32.mrb[0].mxu0
  %v5286 = vadd.f32 0.0, %v5285
  %v5287 = vpop.f32.mrb[0].mxu0
  %5288 = vmatprep.mubr.f32.mxu0 0.0
  %5289 = vmatmul.mubr.f32.gmra.mrb[0].mxu0 %v5156
  %v5290 = vpop.f32.mrb[0].mxu0
  %v5291 = vadd.f32 0.0, %v5290
  %v5292 = vpop.f32.mrb[0].mxu0
  %5293 = vmatprep.mubr.f32.mxu0 0.0
  %5294 = vmatmul.mubr.f32.gmra.mrb[0].mxu0 %v5159
  %v5295 = vpop.f32.mrb[0].mxu0
  %v5296 = vadd.f32 0.0, %v5295
  %v5297 = vpop.f32.mrb[0].mxu0
  %5298 = vmatprep.mubr.f32.mxu0 0.0
  %5299 = vmatmul.mubr.f32.gmra.mrb[0].mxu0 %v5162
  %v5300 = vpop.f32.mrb[0].mxu0
  %v5301 = vadd.f32 0.0, %v5300
  %v5302 = vpop.f32.mrb[0].mxu0
  %5303 = vdwg.mxu0
  %v5304 = vadd.f32 %v5046, %v5231
  %v5305 = vadd.f32 %v5047, %v5236
  %v5306 = vadd.f32 %v5048, %v5241
  %v5307 = vadd.f32 %v5049, %v5246
  %v5308 = vadd.f32 %v5050, %v5251
  %v5309 = vadd.f32 %v5051, %v5256
  %v5310 = vadd.f32 %v5052, %v5261
  %v5311 = vadd.f32 %v5053, %v5266
  %v5312 = vadd.f32 %v5054, %v5271
  %v5313 = vadd.f32 %v5055, %v5276
  %v5314 = vadd.f32 %v5056, %v5281
  %v5315 = vadd.f32 %v5057, %v5286
  %v5316 = vadd.f32 %v5058, %v5291
  %v5317 = vadd.f32 %v5059, %v5296
  %v5318 = vadd.f32 %v5060, %v5301
  %s5319 = scalar_lea.vmem %s9, 480
  %v5320 = vld [vmem:[%s5319] sm:$0xff]
  %v5321 = vld [vmem:[%s5319 + $0x8] sm:$0xff]
  %v5322 = vld [vmem:[%s5319 + $0x10] sm:$0xff]
  %v5323 = vld [vmem:[%s5319 + $0x18] sm:$0xff]
  %v5324 = vld [vmem:[%s5319 + $0x20] sm:$0xff]
  %v5325 = vld [vmem:[%s5319 + $0x28] sm:$0xff]
  %v5326 = vld [vmem:[%s5319 + $0x30] sm:$0xff]
  %v5327 = vld [vmem:[%s5319 + $0x38] sm:$0xff]
  %v5328 = vld [vmem:[%s5319 + $0x40] sm:$0xff]
  %v5329 = vld [vmem:[%s5319 + $0x48] sm:$0xff]
  %v5330 = vld [vmem:[%s5319 + $0x50] sm:$0xff]
  %v5331 = vld [vmem:[%s5319 + $0x58] sm:$0xff]
  %v5332 = vld [vmem:[%s5319 + $0x60] sm:$0xff]
  %v5333 = vld [vmem:[%s5319 + $0x68] sm:$0xff]
  %v5334 = vld [vmem:[%s5319 + $0x70] sm:$0xff]
  %5335 = vrot.lane.b32.xlu0 %v4278, 96
  %v5336 = vpop.permute.xlu0 %5335
  %5337 = vrot.lane.b32.xlu0 %v4283, 96
  %v5338 = vpop.permute.xlu0 %5337
  %5339 = vrot.lane.b32.xlu0 %v4288, 96
  %v5340 = vpop.permute.xlu0 %5339
  %5341 = vrot.lane.b32.xlu0 %v4293, 96
  %v5342 = vpop.permute.xlu0 %5341
  %5343 = vrot.lane.b32.xlu0 %v4298, 96
  %v5344 = vpop.permute.xlu0 %5343
  %5345 = vrot.lane.b32.xlu0 %v4303, 96
  %v5346 = vpop.permute.xlu0 %5345
  %5347 = vrot.lane.b32.xlu0 %v4308, 96
  %v5348 = vpop.permute.xlu0 %5347
  %5349 = vrot.lane.b32.xlu0 %v4313, 96
  %v5350 = vpop.permute.xlu0 %5349
  %5351 = vrot.lane.b32.xlu0 %v4318, 96
  %v5352 = vpop.permute.xlu0 %5351
  %5353 = vrot.lane.b32.xlu0 %v4323, 96
  %v5354 = vpop.permute.xlu0 %5353
  %5355 = vrot.lane.b32.xlu0 %v4328, 96
  %v5356 = vpop.permute.xlu0 %5355
  %5357 = vrot.lane.b32.xlu0 %v4333, 96
  %v5358 = vpop.permute.xlu0 %5357
  %5359 = vrot.lane.b32.xlu0 %v4338, 96
  %v5360 = vpop.permute.xlu0 %5359
  %5361 = vrot.lane.b32.xlu0 %v4343, 96
  %v5362 = vpop.permute.xlu0 %5361
  %v5378 = vsel %vm128, %v5320, 0
  %v5381 = vsel %vm128, %v5321, 0
  %v5384 = vsel %vm128, %v5322, 0
  %v5387 = vsel %vm128, %v5323, 0
  %v5390 = vsel %vm128, %v5324, 0
  %v5393 = vsel %vm128, %v5325, 0
  %v5396 = vsel %vm128, %v5326, 0
  %v5399 = vsel %vm128, %v5327, 0
  %v5402 = vsel %vm128, %v5328, 0
  %v5405 = vsel %vm128, %v5329, 0
  %v5408 = vsel %vm128, %v5330, 0
  %v5411 = vsel %vm128, %v5331, 0
  %v5414 = vsel %vm128, %v5332, 0
  %v5417 = vsel %vm128, %v5333, 0
  %v5420 = vsel %vm128, %v5334, 0
  %5422 = vmatprep.subr.mxu0 0.0
  %5423 = vmatpush1.msra.mxu0 %v5336
  %5424 = vmatprep.subr.mxu0 0.0
  %5425 = vmatpush1.msra.mxu0 %v5338
  %5426 = vmatprep.subr.mxu0 0.0
  %5427 = vmatpush1.msra.mxu0 %v5340
  %5428 = vmatprep.subr.mxu0 0.0
  %5429 = vmatpush1.msra.mxu0 %v5342
  %5430 = vmatprep.subr.mxu0 0.0
  %5431 = vmatpush1.msra.mxu0 %v5344
  %5432 = vmatprep.subr.mxu0 0.0
  %5433 = vmatpush1.msra.mxu0 %v5346
  %5434 = vmatprep.subr.mxu0 0.0
  %5435 = vmatpush1.msra.mxu0 %v5348
  %5436 = vmatprep.subr.mxu0 0.0
  %5437 = vmatpush1.msra.mxu0 %v5350
  %5438 = vmatprep.subr.mxu0 0.0
  %5439 = vmatpush1.msra.mxu0 %v5352
  %5440 = vmatprep.subr.mxu0 0.0
  %5441 = vmatpush1.msra.mxu0 %v5354
  %5442 = vmatprep.subr.mxu0 0.0
  %5443 = vmatpush1.msra.mxu0 %v5356
  %5444 = vmatprep.subr.mxu0 0.0
  %5445 = vmatpush1.msra.mxu0 %v5358
  %5446 = vmatprep.subr.mxu0 0.0
  %5447 = vmatpush1.msra.mxu0 %v5360
  %5448 = vmatprep.subr.mxu0 0.0
  %5449 = vmatpush1.msra.mxu0 %v5362
  %5450 = vmatprep.subr.mxu0 0.0
  %5451 = vmatpush1.msra.mxu0 0.0
  %5452 = vmatprep.subr.mxu0 0.0
  %5453 = vmatpush1.msra.mxu0 0.0
  %5454 = vmatprep.subr.mxu0 0.0
  %5455 = vmatpush1.msra.mxu0 0.0
  %5456 = vmatprep.subr.mxu0 0.0
  %5457 = vmatpush1.msra.mxu0 0.0
  %5458 = vmatprep.subr.mxu0 0.0
  %5459 = vmatpush1.msra.mxu0 0.0
  %5460 = vmatprep.subr.mxu0 0.0
  %5461 = vmatpush1.msra.mxu0 0.0
  %5462 = vmatprep.subr.mxu0 0.0
  %5463 = vmatpush1.msra.mxu0 0.0
  %5464 = vmatprep.subr.mxu0 0.0
  %5465 = vmatpush1.msra.mxu0 0.0
  %5466 = vmatprep.subr.mxu0 0.0
  %5467 = vmatpush1.msra.mxu0 0.0
  %5468 = vmatprep.subr.mxu0 0.0
  %5469 = vmatpush1.msra.mxu0 0.0
  %5470 = vmatprep.subr.mxu0 0.0
  %5471 = vmatpush1.msra.mxu0 0.0
  %5472 = vmatprep.subr.mxu0 0.0
  %5473 = vmatpush1.msra.mxu0 0.0
  %5474 = vmatprep.subr.mxu0 0.0
  %5475 = vmatpush1.msra.mxu0 0.0
  %5476 = vmatprep.subr.mxu0 0.0
  %5477 = vmatpush1.msra.mxu0 0.0
  %5478 = vmatprep.subr.mxu0 0.0
  %5479 = vmatpush1.msra.mxu0 0.0
  %5480 = vmatprep.subr.mxu0 0.0
  %5481 = vmatpush1.msra.mxu0 0.0
  %5482 = vmatprep.subr.mxu0 0.0
  %5483 = vmatpush1.msra.mxu0 0.0
  %5484 = vmatprep.subr.mxu0 0.0
  %5485 = vmatpush1.msra.mxu0 0.0
  %5486 = vmatprep.mubr.f32.mxu0 0.0
  %5487 = vmatmul.mubr.f32.gmra.mrb[0].mxu0 %v5378
  %v5488 = vpop.f32.mrb[0].mxu0
  %v5489 = vadd.f32 0.0, %v5488
  %v5490 = vpop.f32.mrb[0].mxu0
  %5491 = vmatprep.mubr.f32.mxu0 0.0
  %5492 = vmatmul.mubr.f32.gmra.mrb[0].mxu0 %v5381
  %v5493 = vpop.f32.mrb[0].mxu0
  %v5494 = vadd.f32 0.0, %v5493
  %v5495 = vpop.f32.mrb[0].mxu0
  %5496 = vmatprep.mubr.f32.mxu0 0.0
  %5497 = vmatmul.mubr.f32.gmra.mrb[0].mxu0 %v5384
  %v5498 = vpop.f32.mrb[0].mxu0
  %v5499 = vadd.f32 0.0, %v5498
  %v5500 = vpop.f32.mrb[0].mxu0
  %5501 = vmatprep.mubr.f32.mxu0 0.0
  %5502 = vmatmul.mubr.f32.gmra.mrb[0].mxu0 %v5387
  %v5503 = vpop.f32.mrb[0].mxu0
  %v5504 = vadd.f32 0.0, %v5503
  %v5505 = vpop.f32.mrb[0].mxu0
  %5506 = vmatprep.mubr.f32.mxu0 0.0
  %5507 = vmatmul.mubr.f32.gmra.mrb[0].mxu0 %v5390
  %v5508 = vpop.f32.mrb[0].mxu0
  %v5509 = vadd.f32 0.0, %v5508
  %v5510 = vpop.f32.mrb[0].mxu0
  %5511 = vmatprep.mubr.f32.mxu0 0.0
  %5512 = vmatmul.mubr.f32.gmra.mrb[0].mxu0 %v5393
  %v5513 = vpop.f32.mrb[0].mxu0
  %v5514 = vadd.f32 0.0, %v5513
  %v5515 = vpop.f32.mrb[0].mxu0
  %5516 = vmatprep.mubr.f32.mxu0 0.0
  %5517 = vmatmul.mubr.f32.gmra.mrb[0].mxu0 %v5396
  %v5518 = vpop.f32.mrb[0].mxu0
  %v5519 = vadd.f32 0.0, %v5518
  %v5520 = vpop.f32.mrb[0].mxu0
  %5521 = vmatprep.mubr.f32.mxu0 0.0
  %5522 = vmatmul.mubr.f32.gmra.mrb[0].mxu0 %v5399
  %v5523 = vpop.f32.mrb[0].mxu0
  %v5524 = vadd.f32 0.0, %v5523
  %v5525 = vpop.f32.mrb[0].mxu0
  %5526 = vmatprep.mubr.f32.mxu0 0.0
  %5527 = vmatmul.mubr.f32.gmra.mrb[0].mxu0 %v5402
  %v5528 = vpop.f32.mrb[0].mxu0
  %v5529 = vadd.f32 0.0, %v5528
  %v5530 = vpop.f32.mrb[0].mxu0
  %5531 = vmatprep.mubr.f32.mxu0 0.0
  %5532 = vmatmul.mubr.f32.gmra.mrb[0].mxu0 %v5405
  %v5533 = vpop.f32.mrb[0].mxu0
  %v5534 = vadd.f32 0.0, %v5533
  %v5535 = vpop.f32.mrb[0].mxu0
  %5536 = vmatprep.mubr.f32.mxu0 0.0
  %5537 = vmatmul.mubr.f32.gmra.mrb[0].mxu0 %v5408
  %v5538 = vpop.f32.mrb[0].mxu0
  %v5539 = vadd.f32 0.0, %v5538
  %v5540 = vpop.f32.mrb[0].mxu0
  %5541 = vmatprep.mubr.f32.mxu0 0.0
  %5542 = vmatmul.mubr.f32.gmra.mrb[0].mxu0 %v5411
  %v5543 = vpop.f32.mrb[0].mxu0
  %v5544 = vadd.f32 0.0, %v5543
  %v5545 = vpop.f32.mrb[0].mxu0
  %5546 = vmatprep.mubr.f32.mxu0 0.0
  %5547 = vmatmul.mubr.f32.gmra.mrb[0].mxu0 %v5414
  %v5548 = vpop.f32.mrb[0].mxu0
  %v5549 = vadd.f32 0.0, %v5548
  %v5550 = vpop.f32.mrb[0].mxu0
  %5551 = vmatprep.mubr.f32.mxu0 0.0
  %5552 = vmatmul.mubr.f32.gmra.mrb[0].mxu0 %v5417
  %v5553 = vpop.f32.mrb[0].mxu0
  %v5554 = vadd.f32 0.0, %v5553
  %v5555 = vpop.f32.mrb[0].mxu0
  %5556 = vmatprep.mubr.f32.mxu0 0.0
  %5557 = vmatmul.mubr.f32.gmra.mrb[0].mxu0 %v5420
  %v5558 = vpop.f32.mrb[0].mxu0
  %v5559 = vadd.f32 0.0, %v5558
  %v5560 = vpop.f32.mrb[0].mxu0
  %5561 = vdwg.mxu0
  %v5562 = vadd.f32 %v5304, %v5489
  %v5563 = vadd.f32 %v5305, %v5494
  %v5564 = vadd.f32 %v5306, %v5499
  %v5565 = vadd.f32 %v5307, %v5504
  %v5566 = vadd.f32 %v5308, %v5509
  %v5567 = vadd.f32 %v5309, %v5514
  %v5568 = vadd.f32 %v5310, %v5519
  %v5569 = vadd.f32 %v5311, %v5524
  %v5570 = vadd.f32 %v5312, %v5529
  %v5571 = vadd.f32 %v5313, %v5534
  %v5572 = vadd.f32 %v5314, %v5539
  %v5573 = vadd.f32 %v5315, %v5544
  %v5574 = vadd.f32 %v5316, %v5549
  %v5575 = vadd.f32 %v5317, %v5554
  %v5576 = vadd.f32 %v5318, %v5559
  %s5577 = scalar_lea.vmem %s9, 600
  %v5578 = vld [vmem:[%s5577] sm:$0xff]
  %v5579 = vld [vmem:[%s5577 + $0x8] sm:$0xff]
  %v5580 = vld [vmem:[%s5577 + $0x10] sm:$0xff]
  %v5581 = vld [vmem:[%s5577 + $0x18] sm:$0xff]
  %v5582 = vld [vmem:[%s5577 + $0x20] sm:$0xff]
  %v5583 = vld [vmem:[%s5577 + $0x28] sm:$0xff]
  %v5584 = vld [vmem:[%s5577 + $0x30] sm:$0xff]
  %v5585 = vld [vmem:[%s5577 + $0x38] sm:$0xff]
  %v5586 = vld [vmem:[%s5577 + $0x40] sm:$0xff]
  %v5587 = vld [vmem:[%s5577 + $0x48] sm:$0xff]
  %v5588 = vld [vmem:[%s5577 + $0x50] sm:$0xff]
  %v5589 = vld [vmem:[%s5577 + $0x58] sm:$0xff]
  %v5590 = vld [vmem:[%s5577 + $0x60] sm:$0xff]
  %v5591 = vld [vmem:[%s5577 + $0x68] sm:$0xff]
  %v5592 = vld [vmem:[%s5577 + $0x70] sm:$0xff]
  %5593 = vrot.lane.b32.xlu0 %v4278, 88
  %v5594 = vpop.permute.xlu0 %5593
  %5595 = vrot.lane.b32.xlu0 %v4283, 88
  %v5596 = vpop.permute.xlu0 %5595
  %5597 = vrot.lane.b32.xlu0 %v4288, 88
  %v5598 = vpop.permute.xlu0 %5597
  %5599 = vrot.lane.b32.xlu0 %v4293, 88
  %v5600 = vpop.permute.xlu0 %5599
  %5601 = vrot.lane.b32.xlu0 %v4298, 88
  %v5602 = vpop.permute.xlu0 %5601
  %5603 = vrot.lane.b32.xlu0 %v4303, 88
  %v5604 = vpop.permute.xlu0 %5603
  %5605 = vrot.lane.b32.xlu0 %v4308, 88
  %v5606 = vpop.permute.xlu0 %5605
  %5607 = vrot.lane.b32.xlu0 %v4313, 88
  %v5608 = vpop.permute.xlu0 %5607
  %5609 = vrot.lane.b32.xlu0 %v4318, 88
  %v5610 = vpop.permute.xlu0 %5609
  %5611 = vrot.lane.b32.xlu0 %v4323, 88
  %v5612 = vpop.permute.xlu0 %5611
  %5613 = vrot.lane.b32.xlu0 %v4328, 88
  %v5614 = vpop.permute.xlu0 %5613
  %5615 = vrot.lane.b32.xlu0 %v4333, 88
  %v5616 = vpop.permute.xlu0 %5615
  %5617 = vrot.lane.b32.xlu0 %v4338, 88
  %v5618 = vpop.permute.xlu0 %5617
  %5619 = vrot.lane.b32.xlu0 %v4343, 88
  %v5620 = vpop.permute.xlu0 %5619
  %v5636 = vsel %vm128, %v5578, 0
  %v5639 = vsel %vm128, %v5579, 0
  %v5642 = vsel %vm128, %v5580, 0
  %v5645 = vsel %vm128, %v5581, 0
  %v5648 = vsel %vm128, %v5582, 0
  %v5651 = vsel %vm128, %v5583, 0
  %v5654 = vsel %vm128, %v5584, 0
  %v5657 = vsel %vm128, %v5585, 0
  %v5660 = vsel %vm128, %v5586, 0
  %v5663 = vsel %vm128, %v5587, 0
  %v5666 = vsel %vm128, %v5588, 0
  %v5669 = vsel %vm128, %v5589, 0
  %v5672 = vsel %vm128, %v5590, 0
  %v5675 = vsel %vm128, %v5591, 0
  %v5678 = vsel %vm128, %v5592, 0
  %5680 = vmatprep.subr.mxu0 0.0
  %5681 = vmatpush1.msra.mxu0 %v5594
  %5682 = vmatprep.subr.mxu0 0.0
  %5683 = vmatpush1.msra.mxu0 %v5596
  %5684 = vmatprep.subr.mxu0 0.0
  %5685 = vmatpush1.msra.mxu0 %v5598
  %5686 = vmatprep.subr.mxu0 0.0
  %5687 = vmatpush1.msra.mxu0 %v5600
  %5688 = vmatprep.subr.mxu0 0.0
  %5689 = vmatpush1.msra.mxu0 %v5602
  %5690 = vmatprep.subr.mxu0 0.0
  %5691 = vmatpush1.msra.mxu0 %v5604
  %5692 = vmatprep.subr.mxu0 0.0
  %5693 = vmatpush1.msra.mxu0 %v5606
  %5694 = vmatprep.subr.mxu0 0.0
  %5695 = vmatpush1.msra.mxu0 %v5608
  %5696 = vmatprep.subr.mxu0 0.0
  %5697 = vmatpush1.msra.mxu0 %v5610
  %5698 = vmatprep.subr.mxu0 0.0
  %5699 = vmatpush1.msra.mxu0 %v5612
  %5700 = vmatprep.subr.mxu0 0.0
  %5701 = vmatpush1.msra.mxu0 %v5614
  %5702 = vmatprep.subr.mxu0 0.0
  %5703 = vmatpush1.msra.mxu0 %v5616
  %5704 = vmatprep.subr.mxu0 0.0
  %5705 = vmatpush1.msra.mxu0 %v5618
  %5706 = vmatprep.subr.mxu0 0.0
  %5707 = vmatpush1.msra.mxu0 %v5620
  %5708 = vmatprep.subr.mxu0 0.0
  %5709 = vmatpush1.msra.mxu0 0.0
  %5710 = vmatprep.subr.mxu0 0.0
  %5711 = vmatpush1.msra.mxu0 0.0
  %5712 = vmatprep.subr.mxu0 0.0
  %5713 = vmatpush1.msra.mxu0 0.0
  %5714 = vmatprep.subr.mxu0 0.0
  %5715 = vmatpush1.msra.mxu0 0.0
  %5716 = vmatprep.subr.mxu0 0.0
  %5717 = vmatpush1.msra.mxu0 0.0
  %5718 = vmatprep.subr.mxu0 0.0
  %5719 = vmatpush1.msra.mxu0 0.0
  %5720 = vmatprep.subr.mxu0 0.0
  %5721 = vmatpush1.msra.mxu0 0.0
  %5722 = vmatprep.subr.mxu0 0.0
  %5723 = vmatpush1.msra.mxu0 0.0
  %5724 = vmatprep.subr.mxu0 0.0
  %5725 = vmatpush1.msra.mxu0 0.0
  %5726 = vmatprep.subr.mxu0 0.0
  %5727 = vmatpush1.msra.mxu0 0.0
  %5728 = vmatprep.subr.mxu0 0.0
  %5729 = vmatpush1.msra.mxu0 0.0
  %5730 = vmatprep.subr.mxu0 0.0
  %5731 = vmatpush1.msra.mxu0 0.0
  %5732 = vmatprep.subr.mxu0 0.0
  %5733 = vmatpush1.msra.mxu0 0.0
  %5734 = vmatprep.subr.mxu0 0.0
  %5735 = vmatpush1.msra.mxu0 0.0
  %5736 = vmatprep.subr.mxu0 0.0
  %5737 = vmatpush1.msra.mxu0 0.0
  %5738 = vmatprep.subr.mxu0 0.0
  %5739 = vmatpush1.msra.mxu0 0.0
  %5740 = vmatprep.subr.mxu0 0.0
  %5741 = vmatpush1.msra.mxu0 0.0
  %5742 = vmatprep.subr.mxu0 0.0
  %5743 = vmatpush1.msra.mxu0 0.0
  %5744 = vmatprep.mubr.f32.mxu0 0.0
  %5745 = vmatmul.mubr.f32.gmra.mrb[0].mxu0 %v5636
  %v5746 = vpop.f32.mrb[0].mxu0
  %v5747 = vadd.f32 0.0, %v5746
  %v5748 = vpop.f32.mrb[0].mxu0
  %5749 = vmatprep.mubr.f32.mxu0 0.0
  %5750 = vmatmul.mubr.f32.gmra.mrb[0].mxu0 %v5639
  %v5751 = vpop.f32.mrb[0].mxu0
  %v5752 = vadd.f32 0.0, %v5751
  %v5753 = vpop.f32.mrb[0].mxu0
  %5754 = vmatprep.mubr.f32.mxu0 0.0
  %5755 = vmatmul.mubr.f32.gmra.mrb[0].mxu0 %v5642
  %v5756 = vpop.f32.mrb[0].mxu0
  %v5757 = vadd.f32 0.0, %v5756
  %v5758 = vpop.f32.mrb[0].mxu0
  %5759 = vmatprep.mubr.f32.mxu0 0.0
  %5760 = vmatmul.mubr.f32.gmra.mrb[0].mxu0 %v5645
  %v5761 = vpop.f32.mrb[0].mxu0
  %v5762 = vadd.f32 0.0, %v5761
  %v5763 = vpop.f32.mrb[0].mxu0
  %5764 = vmatprep.mubr.f32.mxu0 0.0
  %5765 = vmatmul.mubr.f32.gmra.mrb[0].mxu0 %v5648
  %v5766 = vpop.f32.mrb[0].mxu0
  %v5767 = vadd.f32 0.0, %v5766
  %v5768 = vpop.f32.mrb[0].mxu0
  %5769 = vmatprep.mubr.f32.mxu0 0.0
  %5770 = vmatmul.mubr.f32.gmra.mrb[0].mxu0 %v5651
  %v5771 = vpop.f32.mrb[0].mxu0
  %v5772 = vadd.f32 0.0, %v5771
  %v5773 = vpop.f32.mrb[0].mxu0
  %5774 = vmatprep.mubr.f32.mxu0 0.0
  %5775 = vmatmul.mubr.f32.gmra.mrb[0].mxu0 %v5654
  %v5776 = vpop.f32.mrb[0].mxu0
  %v5777 = vadd.f32 0.0, %v5776
  %v5778 = vpop.f32.mrb[0].mxu0
  %5779 = vmatprep.mubr.f32.mxu0 0.0
  %5780 = vmatmul.mubr.f32.gmra.mrb[0].mxu0 %v5657
  %v5781 = vpop.f32.mrb[0].mxu0
  %v5782 = vadd.f32 0.0, %v5781
  %v5783 = vpop.f32.mrb[0].mxu0
  %5784 = vmatprep.mubr.f32.mxu0 0.0
  %5785 = vmatmul.mubr.f32.gmra.mrb[0].mxu0 %v5660
  %v5786 = vpop.f32.mrb[0].mxu0
  %v5787 = vadd.f32 0.0, %v5786
  %v5788 = vpop.f32.mrb[0].mxu0
  %5789 = vmatprep.mubr.f32.mxu0 0.0
  %5790 = vmatmul.mubr.f32.gmra.mrb[0].mxu0 %v5663
  %v5791 = vpop.f32.mrb[0].mxu0
  %v5792 = vadd.f32 0.0, %v5791
  %v5793 = vpop.f32.mrb[0].mxu0
  %5794 = vmatprep.mubr.f32.mxu0 0.0
  %5795 = vmatmul.mubr.f32.gmra.mrb[0].mxu0 %v5666
  %v5796 = vpop.f32.mrb[0].mxu0
  %v5797 = vadd.f32 0.0, %v5796
  %v5798 = vpop.f32.mrb[0].mxu0
  %5799 = vmatprep.mubr.f32.mxu0 0.0
  %5800 = vmatmul.mubr.f32.gmra.mrb[0].mxu0 %v5669
  %v5801 = vpop.f32.mrb[0].mxu0
  %v5802 = vadd.f32 0.0, %v5801
  %v5803 = vpop.f32.mrb[0].mxu0
  %5804 = vmatprep.mubr.f32.mxu0 0.0
  %5805 = vmatmul.mubr.f32.gmra.mrb[0].mxu0 %v5672
  %v5806 = vpop.f32.mrb[0].mxu0
  %v5807 = vadd.f32 0.0, %v5806
  %v5808 = vpop.f32.mrb[0].mxu0
  %5809 = vmatprep.mubr.f32.mxu0 0.0
  %5810 = vmatmul.mubr.f32.gmra.mrb[0].mxu0 %v5675
  %v5811 = vpop.f32.mrb[0].mxu0
  %v5812 = vadd.f32 0.0, %v5811
  %v5813 = vpop.f32.mrb[0].mxu0
  %5814 = vmatprep.mubr.f32.mxu0 0.0
  %5815 = vmatmul.mubr.f32.gmra.mrb[0].mxu0 %v5678
  %v5816 = vpop.f32.mrb[0].mxu0
  %v5817 = vadd.f32 0.0, %v5816
  %v5818 = vpop.f32.mrb[0].mxu0
  %5819 = vdwg.mxu0
  %v5820 = vadd.f32 %v5562, %v5747
  %v5821 = vadd.f32 %v5563, %v5752
  %v5822 = vadd.f32 %v5564, %v5757
  %v5823 = vadd.f32 %v5565, %v5762
  %v5824 = vadd.f32 %v5566, %v5767
  %v5825 = vadd.f32 %v5567, %v5772
  %v5826 = vadd.f32 %v5568, %v5777
  %v5827 = vadd.f32 %v5569, %v5782
  %v5828 = vadd.f32 %v5570, %v5787
  %v5829 = vadd.f32 %v5571, %v5792
  %v5830 = vadd.f32 %v5572, %v5797
  %v5831 = vadd.f32 %v5573, %v5802
  %v5832 = vadd.f32 %v5574, %v5807
  %v5833 = vadd.f32 %v5575, %v5812
  %v5834 = vadd.f32 %v5576, %v5817
  %s5835 = scalar_lea.vmem %s9, 720
  %v5836 = vld [vmem:[%s5835] sm:$0xff]
  %v5837 = vld [vmem:[%s5835 + $0x8] sm:$0xff]
  %v5838 = vld [vmem:[%s5835 + $0x10] sm:$0xff]
  %v5839 = vld [vmem:[%s5835 + $0x18] sm:$0xff]
  %v5840 = vld [vmem:[%s5835 + $0x20] sm:$0xff]
  %v5841 = vld [vmem:[%s5835 + $0x28] sm:$0xff]
  %v5842 = vld [vmem:[%s5835 + $0x30] sm:$0xff]
  %v5843 = vld [vmem:[%s5835 + $0x38] sm:$0xff]
  %v5844 = vld [vmem:[%s5835 + $0x40] sm:$0xff]
  %v5845 = vld [vmem:[%s5835 + $0x48] sm:$0xff]
  %v5846 = vld [vmem:[%s5835 + $0x50] sm:$0xff]
  %v5847 = vld [vmem:[%s5835 + $0x58] sm:$0xff]
  %v5848 = vld [vmem:[%s5835 + $0x60] sm:$0xff]
  %v5849 = vld [vmem:[%s5835 + $0x68] sm:$0xff]
  %v5850 = vld [vmem:[%s5835 + $0x70] sm:$0xff]
  %5851 = vrot.lane.b32.xlu0 %v4278, 80
  %v5852 = vpop.permute.xlu0 %5851
  %5853 = vrot.lane.b32.xlu0 %v4283, 80
  %v5854 = vpop.permute.xlu0 %5853
  %5855 = vrot.lane.b32.xlu0 %v4288, 80
  %v5856 = vpop.permute.xlu0 %5855
  %5857 = vrot.lane.b32.xlu0 %v4293, 80
  %v5858 = vpop.permute.xlu0 %5857
  %5859 = vrot.lane.b32.xlu0 %v4298, 80
  %v5860 = vpop.permute.xlu0 %5859
  %5861 = vrot.lane.b32.xlu0 %v4303, 80
  %v5862 = vpop.permute.xlu0 %5861
  %5863 = vrot.lane.b32.xlu0 %v4308, 80
  %v5864 = vpop.permute.xlu0 %5863
  %5865 = vrot.lane.b32.xlu0 %v4313, 80
  %v5866 = vpop.permute.xlu0 %5865
  %5867 = vrot.lane.b32.xlu0 %v4318, 80
  %v5868 = vpop.permute.xlu0 %5867
  %5869 = vrot.lane.b32.xlu0 %v4323, 80
  %v5870 = vpop.permute.xlu0 %5869
  %5871 = vrot.lane.b32.xlu0 %v4328, 80
  %v5872 = vpop.permute.xlu0 %5871
  %5873 = vrot.lane.b32.xlu0 %v4333, 80
  %v5874 = vpop.permute.xlu0 %5873
  %5875 = vrot.lane.b32.xlu0 %v4338, 80
  %v5876 = vpop.permute.xlu0 %5875
  %5877 = vrot.lane.b32.xlu0 %v4343, 80
  %v5878 = vpop.permute.xlu0 %5877
  %v5894 = vsel %vm128, %v5836, 0
  %v5897 = vsel %vm128, %v5837, 0
  %v5900 = vsel %vm128, %v5838, 0
  %v5903 = vsel %vm128, %v5839, 0
  %v5906 = vsel %vm128, %v5840, 0
  %v5909 = vsel %vm128, %v5841, 0
  %v5912 = vsel %vm128, %v5842, 0
  %v5915 = vsel %vm128, %v5843, 0
  %v5918 = vsel %vm128, %v5844, 0
  %v5921 = vsel %vm128, %v5845, 0
  %v5924 = vsel %vm128, %v5846, 0
  %v5927 = vsel %vm128, %v5847, 0
  %v5930 = vsel %vm128, %v5848, 0
  %v5933 = vsel %vm128, %v5849, 0
  %v5936 = vsel %vm128, %v5850, 0
  %5938 = vmatprep.subr.mxu0 0.0
  %5939 = vmatpush1.msra.mxu0 %v5852
  %5940 = vmatprep.subr.mxu0 0.0
  %5941 = vmatpush1.msra.mxu0 %v5854
  %5942 = vmatprep.subr.mxu0 0.0
  %5943 = vmatpush1.msra.mxu0 %v5856
  %5944 = vmatprep.subr.mxu0 0.0
  %5945 = vmatpush1.msra.mxu0 %v5858
  %5946 = vmatprep.subr.mxu0 0.0
  %5947 = vmatpush1.msra.mxu0 %v5860
  %5948 = vmatprep.subr.mxu0 0.0
  %5949 = vmatpush1.msra.mxu0 %v5862
  %5950 = vmatprep.subr.mxu0 0.0
  %5951 = vmatpush1.msra.mxu0 %v5864
  %5952 = vmatprep.subr.mxu0 0.0
  %5953 = vmatpush1.msra.mxu0 %v5866
  %5954 = vmatprep.subr.mxu0 0.0
  %5955 = vmatpush1.msra.mxu0 %v5868
  %5956 = vmatprep.subr.mxu0 0.0
  %5957 = vmatpush1.msra.mxu0 %v5870
  %5958 = vmatprep.subr.mxu0 0.0
  %5959 = vmatpush1.msra.mxu0 %v5872
  %5960 = vmatprep.subr.mxu0 0.0
  %5961 = vmatpush1.msra.mxu0 %v5874
  %5962 = vmatprep.subr.mxu0 0.0
  %5963 = vmatpush1.msra.mxu0 %v5876
  %5964 = vmatprep.subr.mxu0 0.0
  %5965 = vmatpush1.msra.mxu0 %v5878
  %5966 = vmatprep.subr.mxu0 0.0
  %5967 = vmatpush1.msra.mxu0 0.0
  %5968 = vmatprep.subr.mxu0 0.0
  %5969 = vmatpush1.msra.mxu0 0.0
  %5970 = vmatprep.subr.mxu0 0.0
  %5971 = vmatpush1.msra.mxu0 0.0
  %5972 = vmatprep.subr.mxu0 0.0
  %5973 = vmatpush1.msra.mxu0 0.0
  %5974 = vmatprep.subr.mxu0 0.0
  %5975 = vmatpush1.msra.mxu0 0.0
  %5976 = vmatprep.subr.mxu0 0.0
  %5977 = vmatpush1.msra.mxu0 0.0
  %5978 = vmatprep.subr.mxu0 0.0
  %5979 = vmatpush1.msra.mxu0 0.0
  %5980 = vmatprep.subr.mxu0 0.0
  %5981 = vmatpush1.msra.mxu0 0.0
  %5982 = vmatprep.subr.mxu0 0.0
  %5983 = vmatpush1.msra.mxu0 0.0
  %5984 = vmatprep.subr.mxu0 0.0
  %5985 = vmatpush1.msra.mxu0 0.0
  %5986 = vmatprep.subr.mxu0 0.0
  %5987 = vmatpush1.msra.mxu0 0.0
  %5988 = vmatprep.subr.mxu0 0.0
  %5989 = vmatpush1.msra.mxu0 0.0
  %5990 = vmatprep.subr.mxu0 0.0
  %5991 = vmatpush1.msra.mxu0 0.0
  %5992 = vmatprep.subr.mxu0 0.0
  %5993 = vmatpush1.msra.mxu0 0.0
  %5994 = vmatprep.subr.mxu0 0.0
  %5995 = vmatpush1.msra.mxu0 0.0
  %5996 = vmatprep.subr.mxu0 0.0
  %5997 = vmatpush1.msra.mxu0 0.0
  %5998 = vmatprep.subr.mxu0 0.0
  %5999 = vmatpush1.msra.mxu0 0.0
  %6000 = vmatprep.subr.mxu0 0.0
  %6001 = vmatpush1.msra.mxu0 0.0
  %6002 = vmatprep.mubr.f32.mxu0 0.0
  %6003 = vmatmul.mubr.f32.gmra.mrb[0].mxu0 %v5894
  %v6004 = vpop.f32.mrb[0].mxu0
  %v6005 = vadd.f32 0.0, %v6004
  %v6006 = vpop.f32.mrb[0].mxu0
  %6007 = vmatprep.mubr.f32.mxu0 0.0
  %6008 = vmatmul.mubr.f32.gmra.mrb[0].mxu0 %v5897
  %v6009 = vpop.f32.mrb[0].mxu0
  %v6010 = vadd.f32 0.0, %v6009
  %v6011 = vpop.f32.mrb[0].mxu0
  %6012 = vmatprep.mubr.f32.mxu0 0.0
  %6013 = vmatmul.mubr.f32.gmra.mrb[0].mxu0 %v5900
  %v6014 = vpop.f32.mrb[0].mxu0
  %v6015 = vadd.f32 0.0, %v6014
  %v6016 = vpop.f32.mrb[0].mxu0
  %6017 = vmatprep.mubr.f32.mxu0 0.0
  %6018 = vmatmul.mubr.f32.gmra.mrb[0].mxu0 %v5903
  %v6019 = vpop.f32.mrb[0].mxu0
  %v6020 = vadd.f32 0.0, %v6019
  %v6021 = vpop.f32.mrb[0].mxu0
  %6022 = vmatprep.mubr.f32.mxu0 0.0
  %6023 = vmatmul.mubr.f32.gmra.mrb[0].mxu0 %v5906
  %v6024 = vpop.f32.mrb[0].mxu0
  %v6025 = vadd.f32 0.0, %v6024
  %v6026 = vpop.f32.mrb[0].mxu0
  %6027 = vmatprep.mubr.f32.mxu0 0.0
  %6028 = vmatmul.mubr.f32.gmra.mrb[0].mxu0 %v5909
  %v6029 = vpop.f32.mrb[0].mxu0
  %v6030 = vadd.f32 0.0, %v6029
  %v6031 = vpop.f32.mrb[0].mxu0
  %6032 = vmatprep.mubr.f32.mxu0 0.0
  %6033 = vmatmul.mubr.f32.gmra.mrb[0].mxu0 %v5912
  %v6034 = vpop.f32.mrb[0].mxu0
  %v6035 = vadd.f32 0.0, %v6034
  %v6036 = vpop.f32.mrb[0].mxu0
  %6037 = vmatprep.mubr.f32.mxu0 0.0
  %6038 = vmatmul.mubr.f32.gmra.mrb[0].mxu0 %v5915
  %v6039 = vpop.f32.mrb[0].mxu0
  %v6040 = vadd.f32 0.0, %v6039
  %v6041 = vpop.f32.mrb[0].mxu0
  %6042 = vmatprep.mubr.f32.mxu0 0.0
  %6043 = vmatmul.mubr.f32.gmra.mrb[0].mxu0 %v5918
  %v6044 = vpop.f32.mrb[0].mxu0
  %v6045 = vadd.f32 0.0, %v6044
  %v6046 = vpop.f32.mrb[0].mxu0
  %6047 = vmatprep.mubr.f32.mxu0 0.0
  %6048 = vmatmul.mubr.f32.gmra.mrb[0].mxu0 %v5921
  %v6049 = vpop.f32.mrb[0].mxu0
  %v6050 = vadd.f32 0.0, %v6049
  %v6051 = vpop.f32.mrb[0].mxu0
  %6052 = vmatprep.mubr.f32.mxu0 0.0
  %6053 = vmatmul.mubr.f32.gmra.mrb[0].mxu0 %v5924
  %v6054 = vpop.f32.mrb[0].mxu0
  %v6055 = vadd.f32 0.0, %v6054
  %v6056 = vpop.f32.mrb[0].mxu0
  %6057 = vmatprep.mubr.f32.mxu0 0.0
  %6058 = vmatmul.mubr.f32.gmra.mrb[0].mxu0 %v5927
  %v6059 = vpop.f32.mrb[0].mxu0
  %v6060 = vadd.f32 0.0, %v6059
  %v6061 = vpop.f32.mrb[0].mxu0
  %6062 = vmatprep.mubr.f32.mxu0 0.0
  %6063 = vmatmul.mubr.f32.gmra.mrb[0].mxu0 %v5930
  %v6064 = vpop.f32.mrb[0].mxu0
  %v6065 = vadd.f32 0.0, %v6064
  %v6066 = vpop.f32.mrb[0].mxu0
  %6067 = vmatprep.mubr.f32.mxu0 0.0
  %6068 = vmatmul.mubr.f32.gmra.mrb[0].mxu0 %v5933
  %v6069 = vpop.f32.mrb[0].mxu0
  %v6070 = vadd.f32 0.0, %v6069
  %v6071 = vpop.f32.mrb[0].mxu0
  %6072 = vmatprep.mubr.f32.mxu0 0.0
  %6073 = vmatmul.mubr.f32.gmra.mrb[0].mxu0 %v5936
  %v6074 = vpop.f32.mrb[0].mxu0
  %v6075 = vadd.f32 0.0, %v6074
  %v6076 = vpop.f32.mrb[0].mxu0
  %6077 = vdwg.mxu0
  %v6078 = vadd.f32 %v5820, %v6005
  %v6079 = vadd.f32 %v5821, %v6010
  %v6080 = vadd.f32 %v5822, %v6015
  %v6081 = vadd.f32 %v5823, %v6020
  %v6082 = vadd.f32 %v5824, %v6025
  %v6083 = vadd.f32 %v5825, %v6030
  %v6084 = vadd.f32 %v5826, %v6035
  %v6085 = vadd.f32 %v5827, %v6040
  %v6086 = vadd.f32 %v5828, %v6045
  %v6087 = vadd.f32 %v5829, %v6050
  %v6088 = vadd.f32 %v5830, %v6055
  %v6089 = vadd.f32 %v5831, %v6060
  %v6090 = vadd.f32 %v5832, %v6065
  %v6091 = vadd.f32 %v5833, %v6070
  %v6092 = vadd.f32 %v5834, %v6075
  %v6093 = vld [vmem:[%s10] sm:$0xff]
  %v6094 = vld [vmem:[%s10 + $0x8] sm:$0xff]
  %v6095 = vld [vmem:[%s10 + $0x10] sm:$0xff]
  %v6096 = vld [vmem:[%s10 + $0x18] sm:$0xff]
  %v6097 = vld [vmem:[%s10 + $0x20] sm:$0xff]
  %v6098 = vld [vmem:[%s10 + $0x28] sm:$0xff]
  %v6099 = vld [vmem:[%s10 + $0x30] sm:$0xff]
  %v6100 = vld [vmem:[%s10 + $0x38] sm:$0xff]
  %v6101 = vld [vmem:[%s10 + $0x40] sm:$0xff]
  %v6102 = vld [vmem:[%s10 + $0x48] sm:$0xff]
  %v6103 = vld [vmem:[%s10 + $0x50] sm:$0xff]
  %v6104 = vld [vmem:[%s10 + $0x58] sm:$0xff]
  %v6105 = vld [vmem:[%s10 + $0x60] sm:$0xff]
  %v6106 = vld [vmem:[%s10 + $0x68] sm:$0xff]
  %v6107 = vld [vmem:[%s10 + $0x70] sm:$0xff]
  %6109 = vset.pattern.permute.xlu0 0
  %6110 = vperm.xlu0 %6109, %v6093
  %v6111 = vpop.permute.xlu0 %6110
  %6114 = vset.pattern.permute.xlu0 0
  %6115 = vperm.xlu0 %6114, %v6094
  %v6116 = vpop.permute.xlu0 %6115
  %6119 = vset.pattern.permute.xlu0 0
  %6120 = vperm.xlu0 %6119, %v6095
  %v6121 = vpop.permute.xlu0 %6120
  %6124 = vset.pattern.permute.xlu0 0
  %6125 = vperm.xlu0 %6124, %v6096
  %v6126 = vpop.permute.xlu0 %6125
  %6129 = vset.pattern.permute.xlu0 0
  %6130 = vperm.xlu0 %6129, %v6097
  %v6131 = vpop.permute.xlu0 %6130
  %6134 = vset.pattern.permute.xlu0 0
  %6135 = vperm.xlu0 %6134, %v6098
  %v6136 = vpop.permute.xlu0 %6135
  %6139 = vset.pattern.permute.xlu0 0
  %6140 = vperm.xlu0 %6139, %v6099
  %v6141 = vpop.permute.xlu0 %6140
  %6144 = vset.pattern.permute.xlu0 0
  %6145 = vperm.xlu0 %6144, %v6100
  %v6146 = vpop.permute.xlu0 %6145
  %6149 = vset.pattern.permute.xlu0 0
  %6150 = vperm.xlu0 %6149, %v6101
  %v6151 = vpop.permute.xlu0 %6150
  %6154 = vset.pattern.permute.xlu0 0
  %6155 = vperm.xlu0 %6154, %v6102
  %v6156 = vpop.permute.xlu0 %6155
  %6159 = vset.pattern.permute.xlu0 0
  %6160 = vperm.xlu0 %6159, %v6103
  %v6161 = vpop.permute.xlu0 %6160
  %6164 = vset.pattern.permute.xlu0 0
  %6165 = vperm.xlu0 %6164, %v6104
  %v6166 = vpop.permute.xlu0 %6165
  %6169 = vset.pattern.permute.xlu0 0
  %6170 = vperm.xlu0 %6169, %v6105
  %v6171 = vpop.permute.xlu0 %6170
  %6174 = vset.pattern.permute.xlu0 0
  %6175 = vperm.xlu0 %6174, %v6106
  %v6176 = vpop.permute.xlu0 %6175
  %6179 = vset.pattern.permute.xlu0 0
  %6180 = vperm.xlu0 %6179, %v6107
  %v6181 = vpop.permute.xlu0 %6180
  %v6183 = vadd.f32 %v6078, %v6111
  %v6184 = vadd.f32 %v6079, %v6116
  %v6185 = vadd.f32 %v6080, %v6121
  %v6186 = vadd.f32 %v6081, %v6126
  %v6187 = vadd.f32 %v6082, %v6131
  %v6188 = vadd.f32 %v6083, %v6136
  %v6189 = vadd.f32 %v6084, %v6141
  %v6190 = vadd.f32 %v6085, %v6146
  %v6191 = vadd.f32 %v6086, %v6151
  %v6192 = vadd.f32 %v6087, %v6156
  %v6193 = vadd.f32 %v6088, %v6161
  %v6194 = vadd.f32 %v6089, %v6166
  %v6195 = vadd.f32 %v6090, %v6171
  %v6196 = vadd.f32 %v6091, %v6176
  %v6197 = vadd.f32 %v6092, %v6181
  %v6198 = vmax.f32 %v6183, 0.0
  %v6199 = vmax.f32 %v6184, 0.0
  %v6200 = vmax.f32 %v6185, 0.0
  %v6201 = vmax.f32 %v6186, 0.0
  %v6202 = vmax.f32 %v6187, 0.0
  %v6203 = vmax.f32 %v6188, 0.0
  %v6204 = vmax.f32 %v6189, 0.0
  %v6205 = vmax.f32 %v6190, 0.0
  %v6206 = vmax.f32 %v6191, 0.0
  %v6207 = vmax.f32 %v6192, 0.0
  %v6208 = vmax.f32 %v6193, 0.0
  %v6209 = vmax.f32 %v6194, 0.0
  %v6210 = vmax.f32 %v6195, 0.0
  %v6211 = vmax.f32 %v6196, 0.0
  %v6212 = vmax.f32 %v6197, 0.0
  %v6213 = vld [vmem:[%s11] sm:$0xff]
  %v6214 = vld [vmem:[%s11 + $0x8] sm:$0xff]
  %v6215 = vld [vmem:[%s11 + $0x10] sm:$0xff]
  %v6216 = vld [vmem:[%s11 + $0x18] sm:$0xff]
  %v6217 = vld [vmem:[%s11 + $0x20] sm:$0xff]
  %v6218 = vld [vmem:[%s11 + $0x28] sm:$0xff]
  %v6219 = vld [vmem:[%s11 + $0x30] sm:$0xff]
  %v6220 = vld [vmem:[%s11 + $0x38] sm:$0xff]
  %v6221 = vld [vmem:[%s11 + $0x40] sm:$0xff]
  %v6222 = vld [vmem:[%s11 + $0x48] sm:$0xff]
  %v6223 = vld [vmem:[%s11 + $0x50] sm:$0xf]
  %v6224 = vld [vmem:[%s12] sm:$0xff]
  %v6225 = vld [vmem:[%s12 + $0x8] sm:$0xff]
  %v6226 = vld [vmem:[%s12 + $0x10] sm:$0xff]
  %v6227 = vld [vmem:[%s12 + $0x18] sm:$0xff]
  %v6228 = vld [vmem:[%s12 + $0x20] sm:$0xff]
  %v6229 = vld [vmem:[%s12 + $0x28] sm:$0xff]
  %v6230 = vld [vmem:[%s12 + $0x30] sm:$0xff]
  %v6231 = vld [vmem:[%s12 + $0x38] sm:$0xff]
  %v6232 = vld [vmem:[%s12 + $0x40] sm:$0xff]
  %v6233 = vld [vmem:[%s12 + $0x48] sm:$0xff]
  %v6234 = vld [vmem:[%s12 + $0x50] sm:$0xf]
  %6236 = vset.pattern.permute.xlu0 0
  %6237 = vperm.xlu0 %6236, %v6224
  %v6238 = vpop.permute.xlu0 %6237
  %6241 = vset.pattern.permute.xlu0 0
  %6242 = vperm.xlu0 %6241, %v6225
  %v6243 = vpop.permute.xlu0 %6242
  %6246 = vset.pattern.permute.xlu0 0
  %6247 = vperm.xlu0 %6246, %v6226
  %v6248 = vpop.permute.xlu0 %6247
  %6251 = vset.pattern.permute.xlu0 0
  %6252 = vperm.xlu0 %6251, %v6227
  %v6253 = vpop.permute.xlu0 %6252
  %6256 = vset.pattern.permute.xlu0 0
  %6257 = vperm.xlu0 %6256, %v6228
  %v6258 = vpop.permute.xlu0 %6257
  %6261 = vset.pattern.permute.xlu0 0
  %6262 = vperm.xlu0 %6261, %v6229
  %v6263 = vpop.permute.xlu0 %6262
  %6266 = vset.pattern.permute.xlu0 0
  %6267 = vperm.xlu0 %6266, %v6230
  %v6268 = vpop.permute.xlu0 %6267
  %6271 = vset.pattern.permute.xlu0 0
  %6272 = vperm.xlu0 %6271, %v6231
  %v6273 = vpop.permute.xlu0 %6272
  %6276 = vset.pattern.permute.xlu0 0
  %6277 = vperm.xlu0 %6276, %v6232
  %v6278 = vpop.permute.xlu0 %6277
  %6281 = vset.pattern.permute.xlu0 0
  %6282 = vperm.xlu0 %6281, %v6233
  %v6283 = vpop.permute.xlu0 %6282
  %6286 = vset.pattern.permute.xlu0 0
  %6287 = vperm.xlu0 %6286, %v6234
  %v6288 = vpop.permute.xlu0 %6287
  %v6291 = vsel %vm91, %v6213, 0
  %v6294 = vsel %vm91, %v6214, 0
  %v6297 = vsel %vm91, %v6215, 0
  %v6300 = vsel %vm91, %v6216, 0
  %v6303 = vsel %vm91, %v6217, 0
  %v6306 = vsel %vm91, %v6218, 0
  %v6309 = vsel %vm91, %v6219, 0
  %v6312 = vsel %vm91, %v6220, 0
  %v6315 = vsel %vm91, %v6221, 0
  %v6318 = vsel %vm91, %v6222, 0
  %v6321 = vsel %vm91, %v6223, 0
  %6323 = vmatprep.subr.mxu0 0.0
  %6324 = vmatpush1.msra.mxu0 %v6198
  %6325 = vmatprep.subr.mxu0 0.0
  %6326 = vmatpush1.msra.mxu0 %v6199
  %6327 = vmatprep.subr.mxu0 0.0
  %6328 = vmatpush1.msra.mxu0 %v6200
  %6329 = vmatprep.subr.mxu0 0.0
  %6330 = vmatpush1.msra.mxu0 %v6201
  %6331 = vmatprep.subr.mxu0 0.0
  %6332 = vmatpush1.msra.mxu0 %v6202
  %6333 = vmatprep.subr.mxu0 0.0
  %6334 = vmatpush1.msra.mxu0 %v6203
  %6335 = vmatprep.subr.mxu0 0.0
  %6336 = vmatpush1.msra.mxu0 %v6204
  %6337 = vmatprep.subr.mxu0 0.0
  %6338 = vmatpush1.msra.mxu0 %v6205
  %6339 = vmatprep.subr.mxu0 0.0
  %6340 = vmatpush1.msra.mxu0 %v6206
  %6341 = vmatprep.subr.mxu0 0.0
  %6342 = vmatpush1.msra.mxu0 %v6207
  %6343 = vmatprep.subr.mxu0 0.0
  %6344 = vmatpush1.msra.mxu0 %v6208
  %6345 = vmatprep.subr.mxu0 0.0
  %6346 = vmatpush1.msra.mxu0 %v6209
  %6347 = vmatprep.subr.mxu0 0.0
  %6348 = vmatpush1.msra.mxu0 %v6210
  %6349 = vmatprep.subr.mxu0 0.0
  %6350 = vmatpush1.msra.mxu0 %v6211
  %6351 = vmatprep.subr.mxu0 0.0
  %6352 = vmatpush1.msra.mxu0 %v6212
  %6353 = vmatprep.subr.mxu0 0.0
  %6354 = vmatpush1.msra.mxu0 0.0
  %6355 = vmatprep.subr.mxu0 0.0
  %6356 = vmatpush1.msra.mxu0 0.0
  %6357 = vmatprep.subr.mxu0 0.0
  %6358 = vmatpush1.msra.mxu0 0.0
  %6359 = vmatprep.subr.mxu0 0.0
  %6360 = vmatpush1.msra.mxu0 0.0
  %6361 = vmatprep.subr.mxu0 0.0
  %6362 = vmatpush1.msra.mxu0 0.0
  %6363 = vmatprep.subr.mxu0 0.0
  %6364 = vmatpush1.msra.mxu0 0.0
  %6365 = vmatprep.subr.mxu0 0.0
  %6366 = vmatpush1.msra.mxu0 0.0
  %6367 = vmatprep.subr.mxu0 0.0
  %6368 = vmatpush1.msra.mxu0 0.0
  %6369 = vmatprep.subr.mxu0 0.0
  %6370 = vmatpush1.msra.mxu0 0.0
  %6371 = vmatprep.subr.mxu0 0.0
  %6372 = vmatpush1.msra.mxu0 0.0
  %6373 = vmatprep.subr.mxu0 0.0
  %6374 = vmatpush1.msra.mxu0 0.0
  %6375 = vmatprep.subr.mxu0 0.0
  %6376 = vmatpush1.msra.mxu0 0.0
  %6377 = vmatprep.subr.mxu0 0.0
  %6378 = vmatpush1.msra.mxu0 0.0
  %6379 = vmatprep.subr.mxu0 0.0
  %6380 = vmatpush1.msra.mxu0 0.0
  %6381 = vmatprep.subr.mxu0 0.0
  %6382 = vmatpush1.msra.mxu0 0.0
  %6383 = vmatprep.subr.mxu0 0.0
  %6384 = vmatpush1.msra.mxu0 0.0
  %6385 = vmatprep.subr.mxu0 0.0
  %6386 = vmatpush1.msra.mxu0 0.0
  %6387 = vmatprep.mubr.f32.mxu0 0.0
  %6388 = vmatmul.mubr.f32.gmra.mrb[0].mxu0 %v6291
  %v6389 = vpop.f32.mrb[0].mxu0
  %v6390 = vadd.f32 %v6238, %v6389
  %v6391 = vpop.f32.mrb[0].mxu0
  %6392 = vmatprep.mubr.f32.mxu0 0.0
  %6393 = vmatmul.mubr.f32.gmra.mrb[0].mxu0 %v6294
  %v6394 = vpop.f32.mrb[0].mxu0
  %v6395 = vadd.f32 %v6243, %v6394
  %v6396 = vpop.f32.mrb[0].mxu0
  %6397 = vmatprep.mubr.f32.mxu0 0.0
  %6398 = vmatmul.mubr.f32.gmra.mrb[0].mxu0 %v6297
  %v6399 = vpop.f32.mrb[0].mxu0
  %v6400 = vadd.f32 %v6248, %v6399
  %v6401 = vpop.f32.mrb[0].mxu0
  %6402 = vmatprep.mubr.f32.mxu0 0.0
  %6403 = vmatmul.mubr.f32.gmra.mrb[0].mxu0 %v6300
  %v6404 = vpop.f32.mrb[0].mxu0
  %v6405 = vadd.f32 %v6253, %v6404
  %v6406 = vpop.f32.mrb[0].mxu0
  %6407 = vmatprep.mubr.f32.mxu0 0.0
  %6408 = vmatmul.mubr.f32.gmra.mrb[0].mxu0 %v6303
  %v6409 = vpop.f32.mrb[0].mxu0
  %v6410 = vadd.f32 %v6258, %v6409
  %v6411 = vpop.f32.mrb[0].mxu0
  %6412 = vmatprep.mubr.f32.mxu0 0.0
  %6413 = vmatmul.mubr.f32.gmra.mrb[0].mxu0 %v6306
  %v6414 = vpop.f32.mrb[0].mxu0
  %v6415 = vadd.f32 %v6263, %v6414
  %v6416 = vpop.f32.mrb[0].mxu0
  %6417 = vmatprep.mubr.f32.mxu0 0.0
  %6418 = vmatmul.mubr.f32.gmra.mrb[0].mxu0 %v6309
  %v6419 = vpop.f32.mrb[0].mxu0
  %v6420 = vadd.f32 %v6268, %v6419
  %v6421 = vpop.f32.mrb[0].mxu0
  %6422 = vmatprep.mubr.f32.mxu0 0.0
  %6423 = vmatmul.mubr.f32.gmra.mrb[0].mxu0 %v6312
  %v6424 = vpop.f32.mrb[0].mxu0
  %v6425 = vadd.f32 %v6273, %v6424
  %v6426 = vpop.f32.mrb[0].mxu0
  %6427 = vmatprep.mubr.f32.mxu0 0.0
  %6428 = vmatmul.mubr.f32.gmra.mrb[0].mxu0 %v6315
  %v6429 = vpop.f32.mrb[0].mxu0
  %v6430 = vadd.f32 %v6278, %v6429
  %v6431 = vpop.f32.mrb[0].mxu0
  %6432 = vmatprep.mubr.f32.mxu0 0.0
  %6433 = vmatmul.mubr.f32.gmra.mrb[0].mxu0 %v6318
  %v6434 = vpop.f32.mrb[0].mxu0
  %v6435 = vadd.f32 %v6283, %v6434
  %v6436 = vpop.f32.mrb[0].mxu0
  %6437 = vmatprep.mubr.f32.mxu0 0.0
  %6438 = vmatmul.mubr.f32.gmra.mrb[0].mxu0 %v6321
  %v6439 = vpop.f32.mrb[0].mxu0
  %v6440 = vadd.f32 %v6288, %v6439
  %v6441 = vpop.f32.mrb[0].mxu0
  %6442 = vdwg.mxu0
  %v6443 = vmax.f32 %v6390, 0.0
  %v6444 = vmax.f32 %v6395, 0.0
  %v6445 = vmax.f32 %v6400, 0.0
  %v6446 = vmax.f32 %v6405, 0.0
  %v6447 = vmax.f32 %v6410, 0.0
  %v6448 = vmax.f32 %v6415, 0.0
  %v6449 = vmax.f32 %v6420, 0.0
  %v6450 = vmax.f32 %v6425, 0.0
  %v6451 = vmax.f32 %v6430, 0.0
  %v6452 = vmax.f32 %v6435, 0.0
  %v6453 = vmax.f32 %v6440, 0.0
  %v6454 = vld [vmem:[%s13] sm:$0xff]
  %v6455 = vld [vmem:[%s13 + $0x8] sm:$0x3]
  %v6456 = vld [vmem:[%s14] sm:$0xff]
  %v6457 = vld [vmem:[%s14 + $0x8] sm:$0x3]
  %6459 = vset.pattern.permute.xlu0 0
  %6460 = vperm.xlu0 %6459, %v6456
  %v6461 = vpop.permute.xlu0 %6460
  %6464 = vset.pattern.permute.xlu0 0
  %6465 = vperm.xlu0 %6464, %v6457
  %v6466 = vpop.permute.xlu0 %6465
  %vm6468 = vcmask 687104
  %v6470 = vsel %vm6468, %v6454, 0
  %v6473 = vsel %vm6468, %v6455, 0
  %v6476 = vsel %vm2935, %v6453, 0
  %6478 = vmatprep.subr.mxu0 0.0
  %6479 = vmatpush1.msra.mxu0 %v6443
  %6480 = vmatprep.subr.mxu0 0.0
  %6481 = vmatpush1.msra.mxu0 %v6444
  %6482 = vmatprep.subr.mxu0 0.0
  %6483 = vmatpush1.msra.mxu0 %v6445
  %6484 = vmatprep.subr.mxu0 0.0
  %6485 = vmatpush1.msra.mxu0 %v6446
  %6486 = vmatprep.subr.mxu0 0.0
  %6487 = vmatpush1.msra.mxu0 %v6447
  %6488 = vmatprep.subr.mxu0 0.0
  %6489 = vmatpush1.msra.mxu0 %v6448
  %6490 = vmatprep.subr.mxu0 0.0
  %6491 = vmatpush1.msra.mxu0 %v6449
  %6492 = vmatprep.subr.mxu0 0.0
  %6493 = vmatpush1.msra.mxu0 %v6450
  %6494 = vmatprep.subr.mxu0 0.0
  %6495 = vmatpush1.msra.mxu0 %v6451
  %6496 = vmatprep.subr.mxu0 0.0
  %6497 = vmatpush1.msra.mxu0 %v6452
  %6498 = vmatprep.subr.mxu0 0.0
  %6499 = vmatpush1.msra.mxu0 %v6476
  %6500 = vmatprep.subr.mxu0 0.0
  %6501 = vmatpush1.msra.mxu0 0.0
  %6502 = vmatprep.subr.mxu0 0.0
  %6503 = vmatpush1.msra.mxu0 0.0
  %6504 = vmatprep.subr.mxu0 0.0
  %6505 = vmatpush1.msra.mxu0 0.0
  %6506 = vmatprep.subr.mxu0 0.0
  %6507 = vmatpush1.msra.mxu0 0.0
  %6508 = vmatprep.subr.mxu0 0.0
  %6509 = vmatpush1.msra.mxu0 0.0
  %6510 = vmatprep.subr.mxu0 0.0
  %6511 = vmatpush1.msra.mxu0 0.0
  %6512 = vmatprep.subr.mxu0 0.0
  %6513 = vmatpush1.msra.mxu0 0.0
  %6514 = vmatprep.subr.mxu0 0.0
  %6515 = vmatpush1.msra.mxu0 0.0
  %6516 = vmatprep.subr.mxu0 0.0
  %6517 = vmatpush1.msra.mxu0 0.0
  %6518 = vmatprep.subr.mxu0 0.0
  %6519 = vmatpush1.msra.mxu0 0.0
  %6520 = vmatprep.subr.mxu0 0.0
  %6521 = vmatpush1.msra.mxu0 0.0
  %6522 = vmatprep.subr.mxu0 0.0
  %6523 = vmatpush1.msra.mxu0 0.0
  %6524 = vmatprep.subr.mxu0 0.0
  %6525 = vmatpush1.msra.mxu0 0.0
  %6526 = vmatprep.subr.mxu0 0.0
  %6527 = vmatpush1.msra.mxu0 0.0
  %6528 = vmatprep.subr.mxu0 0.0
  %6529 = vmatpush1.msra.mxu0 0.0
  %6530 = vmatprep.subr.mxu0 0.0
  %6531 = vmatpush1.msra.mxu0 0.0
  %6532 = vmatprep.subr.mxu0 0.0
  %6533 = vmatpush1.msra.mxu0 0.0
  %6534 = vmatprep.subr.mxu0 0.0
  %6535 = vmatpush1.msra.mxu0 0.0
  %6536 = vmatprep.subr.mxu0 0.0
  %6537 = vmatpush1.msra.mxu0 0.0
  %6538 = vmatprep.subr.mxu0 0.0
  %6539 = vmatpush1.msra.mxu0 0.0
  %6540 = vmatprep.subr.mxu0 0.0
  %6541 = vmatpush1.msra.mxu0 0.0
  %6542 = vmatprep.mubr.f32.mxu0 0.0
  %6543 = vmatmul.mubr.f32.gmra.mrb[0].mxu0 %v6470
  %v6544 = vpop.f32.mrb[0].mxu0
  %v6545 = vadd.f32 %v6461, %v6544
  %v6546 = vpop.f32.mrb[0].mxu0
  %6547 = vmatprep.mubr.f32.mxu0 0.0
  %6548 = vmatmul.mubr.f32.gmra.mrb[0].mxu0 %v6473
  %v6549 = vpop.f32.mrb[0].mxu0
  %v6550 = vadd.f32 %v6466, %v6549
  %v6551 = vpop.f32.mrb[0].mxu0
  %6552 = vdwg.mxu0
  %vm6553 = vcmask 64512
  %6554 = vst.msk [vmem:[%s15] sm:$0xff] %vm6553, %v6545
  %vm6555 = vcmask 58368
  %6556 = vst.msk [vmem:[%s15 + $0x8] sm:$0x3] %vm6555, %v6550
  // Predicated region
  $region62: #{cnn_forward.1} parent=0 // pred_check
    _
  $region63: #{cnn_forward.1} parent=0 // pred_check_branch
    %6558 = sbr.rel (0) target = $region65
  $region64: #{cnn_forward.1} parent=0 // pred_region
    _
  $region65: #{cnn_forward.1} parent=0 // pred_fallthru
    _
  // Predicated region
  $region66: #{cnn_forward.1} parent=0 // pred_check
    _
  $region67: #{cnn_forward.1} parent=0 // pred_check_branch
    %6560 = sbr.rel (0) target = $region69
  $region68: #{cnn_forward.1} parent=0 // pred_region
    _
  $region69: #{cnn_forward.1} parent=0 // pred_fallthru
    _

</llo_original>
